<compile_context>
chip_gen: v7x
topology: tpu7x:2x2x1
jax: 0.10.0
libtpu: 0.0.40
codegen_flags: <defaults>
</compile_context>

<pallas_src>
import numpy as np
import jax
import jax.numpy as jnp
from jax.experimental import pallas as pl
from jax.experimental.pallas import tpu as pltpu

C = 70          # emb_dim / in_channels / out_channels of the PyTorch module
CP = 128        # channel dim zero-padded to a full lane width
L = 4           # number of PNA layers
N_AGG = 4       # aggregators: mean, min, max, std
N_SCALE = 3     # scalers: identity, amplification, attenuation
EPS_BN = 1e-5
EPS_STD = 1e-5
BIG = 1e30


def make_fused_net_kernel(avg_log_deg, n_pad, k_slots):
    """One PNA layer per grid step (+ pool/MLP finalize on the last step)."""
    inv_avg = float(1.0 / avg_log_deg)
    avg = float(avg_log_deg)
    NP, K = int(n_pad), int(k_slots)

    def kernel(x0_ref, gat_ref, eemb_ref, sel_ref, w_ref, b_ref, scale_ref,
               shift_ref, pool_ref, w1_ref, b1_ref, w2_ref, b2_ref, w3_ref,
               b3_ref, o_ref, x_ref, feats_ref):
        layer = pl.program_id(0)

        @pl.when(layer == 0)
        def _():
            x_ref[...] = x0_ref[...]            # node state init (VMEM resident)

        x = x_ref[...]                          # [NP, CP] f32 node features
        gat = gat_ref[...]                      # [K*NP, NP] bf16 one-hot(+self) gather
        sel = sel_ref[...]                      # [NP, K*NP] bf16 masked slot selection

        # ---- slot masks / in-degree / PNA scalers (derived from sel; cheap) ----
        deg = jnp.zeros((NP, 1), jnp.float32)
        biases = []
        for k in range(K):
            blk = sel[:, k * NP:(k + 1) * NP].astype(jnp.float32)
            mk = jnp.sum(blk, axis=-1, keepdims=True)      # exactly {0,1}
            biases.append((mk - 1.0) * BIG)                # 0 valid / -BIG invalid
            deg = deg + mk
        has = (deg > 0.0).astype(jnp.float32)
        d = jnp.maximum(deg, 1.0)
        rd = pl.reciprocal(d, approx=False)     # exact: feeds mean AND variance
        logd = jnp.log(d + 1.0)
        amp = logd * inv_avg                    # amplification scaler
        att = avg * pl.reciprocal(logd, approx=True)   # attenuation scaler (EUP)

        # ---- messages: relu(x_tgt + x_src + bond_emb); "+x_tgt" folded into gat ----
        xb = x.astype(jnp.bfloat16)
        msgs = jnp.maximum(
            jnp.dot(gat, xb, preferred_element_type=jnp.float32)
            + eemb_ref[...].astype(jnp.float32), 0.0)      # [K*NP, CP] f32

        # ---- sum / sum-of-squares on the MXU via the masked selection matrix ----
        msgs_b = msgs.astype(jnp.bfloat16)
        msq_b = (msgs * msgs).astype(jnp.bfloat16)
        msum = jnp.dot(sel, msgs_b, preferred_element_type=jnp.float32)   # [NP, CP]
        msq = jnp.dot(sel, msq_b, preferred_element_type=jnp.float32)

        # ---- min / max on the VPU with precomputed +/-BIG slot biases ----
        mmax = jnp.full((NP, CP), -BIG, jnp.float32)
        mmin = jnp.full((NP, CP), BIG, jnp.float32)
        for k in range(K):                                 # static unroll over slots
            m = msgs[k * NP:(k + 1) * NP, :]               # contiguous 128-row slice
            mmax = jnp.maximum(mmax, m + biases[k])
            mmin = jnp.minimum(mmin, m - biases[k])
        mmax = mmax * has
        mmin = mmin * has

        mean = msum * rd
        var = jnp.maximum(msq * rd - mean * mean, 0.0)
        std = jnp.sqrt(var + EPS_STD) * has     # deg==0 (padded/isolated) forced to 0

        # ---- aggregator concat written straight into the bf16 VMEM scratch slab ----
        feats_ref[:, 0 * CP:1 * CP] = mean.astype(jnp.bfloat16)
        feats_ref[:, 1 * CP:2 * CP] = mmin.astype(jnp.bfloat16)
        feats_ref[:, 2 * CP:3 * CP] = mmax.astype(jnp.bfloat16)
        feats_ref[:, 3 * CP:4 * CP] = std.astype(jnp.bfloat16)
        fb = feats_ref[...]                     # [NP, 4*CP] bf16

        # ---- post_nn: ONE wide bf16 MXU dot, then identity/amp/att combine ----
        r = jnp.dot(fb, w_ref[0], preferred_element_type=jnp.float32)   # [NP, 3*CP]
        y = (r[:, 0:CP] + amp * r[:, CP:2 * CP] + att * r[:, 2 * CP:3 * CP]
             + b_ref[0])
        # folded BatchNorm (eval) + ReLU + residual; padded lanes have scale=shift=0.
        y = jnp.maximum(y * scale_ref[0] + shift_ref[0], 0.0)
        x_ref[...] = y + x
        # F.dropout(p=0.3) is identity in eval mode -> omitted.

        # ---- last layer: global_mean_pool + MLP 70->35->17->1 (padded to 128) ----
        @pl.when(layer == L - 1)
        def _():
            pooled = jnp.dot(pool_ref[...], x_ref[...],
                             preferred_element_type=jnp.float32)        # [GP, CP]
            h = jnp.maximum(
                jnp.dot(pooled, w1_ref[...],
                        preferred_element_type=jnp.float32) + b1_ref[...], 0.0)
            h = jnp.maximum(
                jnp.dot(h, w2_ref[...],
                        preferred_element_type=jnp.float32) + b2_ref[...], 0.0)
            o_ref[...] = jnp.dot(h, w3_ref[...],
                                 preferred_element_type=jnp.float32) + b3_ref[...]

    return kernel


def build_net_call(avg_log_deg, n_pad, k_slots, g_pad):
    NP, K, GP = int(n_pad), int(k_slots), int(g_pad)
    kern = make_fused_net_kernel(avg_log_deg, NP, K)

    def const_spec(shape):
        return pl.BlockSpec(shape, lambda l: (0,) * len(shape))

    def layer_spec(shape):          # first dim indexed by the layer grid axis
        return pl.BlockSpec((1,) + shape[1:],
                            lambda l: (l,) + (0,) * (len(shape) - 1))

    in_specs = [
        const_spec((NP, CP)),                        # x0 (encoded node features)
        const_spec((K * NP, NP)),                    # gather matrix (bf16)
        const_spec((K * NP, CP)),                    # bond embeddings (bf16)
        const_spec((NP, K * NP)),                    # masked selection matrix (bf16)
        layer_spec((L, N_AGG * CP, N_SCALE * CP)),   # merged post_nn weights (bf16)
        layer_spec((L, 1, CP)),                      # post_nn bias
        layer_spec((L, 1, CP)),                      # folded BN scale
        layer_spec((L, 1, CP)),                      # folded BN shift
        const_spec((GP, NP)),                        # mean-pool matrix
        const_spec((CP, CP)), const_spec((1, CP)),   # MLP lin1 (70->35, padded)
        const_spec((CP, CP)), const_spec((1, CP)),   # MLP lin2 (35->17, padded)
        const_spec((CP, CP)), const_spec((1, CP)),   # MLP lin3 (17->1, padded)
    ]

    # Advisory cost estimate for XLA scheduling around the custom call.
    flops = (L * (2 * (K * NP) * NP * CP                       # gather matmul
                  + 2 * 2 * NP * (K * NP) * CP                 # sel msum/msq matmuls
                  + 2 * NP * (N_AGG * CP) * (N_SCALE * CP)     # merged post_nn dot
                  + 10 * K * NP * CP)                          # VPU message/minmax work
             + 2 * GP * NP * CP + 3 * 2 * GP * CP * CP)        # pool + MLP
    transcendentals = L * (NP * CP + 4 * NP)
    bytes_accessed = (NP * CP * 4 + (K * NP) * NP * 2 + (K * NP) * CP * 2
                      + NP * (K * NP) * 2
                      + L * (N_AGG * CP) * (N_SCALE * CP) * 2 + 3 * L * CP * 4
                      + GP * NP * 4 + 3 * (CP * CP + CP) * 4 + GP * CP * 4)

    return pl.pallas_call(
        kern,
        out_shape=jax.ShapeDtypeStruct((GP, CP), jnp.float32),
        grid=(L,),
        in_specs=in_specs,
        out_specs=const_spec((GP, CP)),
        scratch_shapes=[pltpu.VMEM((NP, CP), jnp.float32),          # node state x
                        pltpu.VMEM((NP, N_AGG * CP), jnp.bfloat16)],  # feats slab
        compiler_params=pltpu.CompilerParams(
            dimension_semantics=("arbitrary",),           # layers are sequential
            vmem_limit_bytes=16 * 1024 * 1024),
        cost_estimate=pl.CostEstimate(flops=int(flops),
                                      transcendentals=int(transcendentals),
                                      bytes_accessed=int(bytes_accessed)),
    )


def main():
    key = jax.random.PRNGKey(0)
    keys = iter(jax.random.split(key, 64))

    # ---- synthetic batch: 10 molecular graphs, 126 nodes, in-degree 3 each ----
    graph_sizes = [10, 14, 12, 16, 11, 13, 15, 9, 12, 14]
    N = sum(graph_sizes)          # 126 real nodes
    G = len(graph_sizes)          # 10 graphs
    K = 8                         # padded incoming-edge slots per node
    NP = 128                      # node rows padded to a full lane width
    GP = 16                       # graph rows padded to a sublane multiple

    src_list, tgt_list, batch = [], [], []
    offset = 0
    for g, n in enumerate(graph_sizes):
        for t in range(n):
            batch.append(g)
            for off in (1, 2, 5):
                src_list.append(offset + (t + off) % n)
                tgt_list.append(offset + t)
        offset += n
    E = len(src_list)
    edge_index = np.stack([np.asarray(src_list), np.asarray(tgt_list)])     # [2, E]

    # slot assignment: edge e -> next free incoming slot of its target node
    fill = np.zeros(NP, dtype=np.int32)
    slot_of_edge = np.zeros(E, dtype=np.int32)
    for e in range(E):
        t = tgt_list[e]
        slot_of_edge[e] = fill[t]
        fill[t] += 1
    assert int(fill.max()) <= K
    deg_np = fill.astype(np.float32)
    avg_log_deg = float(np.mean(np.log(deg_np[:N] + 1.0)))  # PNA 'log' degree stat

    # one-hot(+self) gather matrix, slot-major: row k*NP+v selects x_v + x_{nbr(v,k)}
    gat = np.zeros((K * NP, NP), np.float32)
    for v in range(NP):
        for k in range(K):
            gat[k * NP + v, v] += 1.0
    for e in range(E):
        gat[slot_of_edge[e] * NP + tgt_list[e], src_list[e]] += 1.0

    # masked slot-selection matrix: sel[v, k*NP + v] = 1 iff slot k of node v is used
    sel = np.zeros((NP, K * NP), np.float32)
    for e in range(E):
        sel[tgt_list[e], slot_of_edge[e] * NP + tgt_list[e]] = 1.0

    # ---- categorical atom / bond features ----
    ATOM_VOCABS = [10, 5, 7]
    BOND_VOCABS = [4, 3]
    x_int = jnp.concatenate(
        [jax.random.randint(next(keys), (N, 1), 0, v) for v in ATOM_VOCABS], axis=1)
    eattr_int = jnp.concatenate(
        [jax.random.randint(next(keys), (E, 1), 0, v) for v in BOND_VOCABS], axis=1)
    batch_arr = jnp.asarray(batch, dtype=jnp.int32)

    # ---- deterministic parameters ----
    atom_tables = [0.1 * jax.random.normal(next(keys), (v, C), jnp.float32)
                   for v in ATOM_VOCABS]
    bond_tables = [0.1 * jax.random.normal(next(keys), (v, C), jnp.float32)
                   for v in BOND_VOCABS]

    # post_nn Linear(12*70 -> 70) per layer, repacked as ONE [4*CP, 3*CP] bf16 slab
    # per layer: aggregator-major rows, scaler-major 128-lane column blocks.
    W_small = 0.05 * jax.random.normal(next(keys), (L, N_SCALE, N_AGG, C, C),
                                       jnp.float32)
    Wpad = jnp.zeros((L, N_SCALE, N_AGG, CP, CP), jnp.float32).at[..., :C, :C].set(
        W_small)
    W = jnp.transpose(Wpad, (0, 2, 3, 1, 4)).reshape(
        L, N_AGG * CP, N_SCALE * CP).astype(jnp.bfloat16)

    b = jnp.zeros((L, 1, CP), jnp.float32).at[:, :, :C].set(
        0.05 * jax.random.normal(next(keys), (L, 1, C), jnp.float32))

    gamma = 1.0 + 0.1 * jax.random.normal(next(keys), (L, 1, C), jnp.float32)
    beta = 0.1 * jax.random.normal(next(keys), (L, 1, C), jnp.float32)
    rmean = 0.1 * jax.random.normal(next(keys), (L, 1, C), jnp.float32)
    rvar = 1.0 + 0.1 * jax.random.uniform(next(keys), (L, 1, C), jnp.float32)
    scale_s = gamma / jnp.sqrt(rvar + EPS_BN)
    shift_s = beta - rmean * scale_s
    scale = jnp.zeros((L, 1, CP), jnp.float32).at[:, :, :C].set(scale_s)
    shift = jnp.zeros((L, 1, CP), jnp.float32).at[:, :, :C].set(shift_s)

    # MLP 70 -> 35 -> 17 -> 1, widths zero-padded to 128 lanes
    W1 = jnp.zeros((CP, CP), jnp.float32).at[:C, :35].set(
        0.1 * jax.random.normal(next(keys), (C, 35), jnp.float32))
    b1 = jnp.zeros((1, CP), jnp.float32).at[:, :35].set(
        0.1 * jax.random.normal(next(keys), (1, 35), jnp.float32))
    W2 = jnp.zeros((CP, CP), jnp.float32).at[:35, :17].set(
        0.1 * jax.random.normal(next(keys), (35, 17), jnp.float32))
    b2 = jnp.zeros((1, CP), jnp.float32).at[:, :17].set(
        0.1 * jax.random.normal(next(keys), (1, 17), jnp.float32))
    W3 = jnp.zeros((CP, CP), jnp.float32).at[:17, :1].set(
        0.1 * jax.random.normal(next(keys), (17, 1), jnp.float32))
    b3 = jnp.zeros((1, CP), jnp.float32).at[:, :1].set(
        0.1 * jax.random.normal(next(keys), (1, 1), jnp.float32))

    # ---- AtomEncoder / BondEncoder ----
    # TODO(synk): embedding-table lookups (gathers) stay in host JAX glue.
    x_emb = sum(tab[x_int[:, f]] for f, tab in enumerate(atom_tables))       # [N, C]
    x0 = jnp.zeros((NP, CP), jnp.float32).at[:N, :C].set(x_emb)

    e_emb = sum(tab[eattr_int[:, f]] for f, tab in enumerate(bond_tables))   # [E, C]
    e_emb_pad = jnp.zeros((E, CP), jnp.float32).at[:, :C].set(e_emb)
    rows = slot_of_edge.astype(np.int64) * NP + np.asarray(tgt_list)
    eemb_flat = jnp.zeros((K * NP, CP), jnp.float32).at[jnp.asarray(rows)].set(
        e_emb_pad).astype(jnp.bfloat16)

    # pooling matrix for global_mean_pool: P[g, v] = 1/|graph g| if batch[v] == g
    P = np.zeros((GP, NP), np.float32)
    off = 0
    for g, n in enumerate(graph_sizes):
        P[g, off:off + n] = 1.0 / n
        off += n

    net_call = build_net_call(avg_log_deg, NP, K, GP)
    out_full = net_call(x0,
                        jnp.asarray(gat, dtype=jnp.bfloat16),
                        eemb_flat,
                        jnp.asarray(sel, dtype=jnp.bfloat16),
                        W, b, scale, shift,
                        jnp.asarray(P), W1, b1, W2, b2, W3, b3)
    out_full = jax.block_until_ready(out_full)
    out = out_full[:G, :1]                       # [10, 1] graph-level predictions

    assert out.shape == (G, 1)
    assert bool(jnp.all(jnp.isfinite(out)))
    # edge_index / batch_arr define the graph; shapes documented for reference
    assert edge_index.shape == (2, E) and batch_arr.shape == (N,)
    print("KERNEL_OK")


if __name__ == "__main__":
    main()
</pallas_src>

<mosaic_0001>
module attributes {stable_mosaic.version = 11 : i64} {
  func.func @kernel(%arg0: i32, %arg1: memref<128x128xf32, #tpu.memory_space<vmem>>, %arg2: memref<1024x128xbf16, #tpu.memory_space<vmem>>, %arg3: memref<1024x128xbf16, #tpu.memory_space<vmem>>, %arg4: memref<128x1024xbf16, #tpu.memory_space<vmem>>, %arg5: memref<1x512x384xbf16, #tpu.memory_space<vmem>>, %arg6: memref<1x1x128xf32, #tpu.memory_space<vmem>>, %arg7: memref<1x1x128xf32, #tpu.memory_space<vmem>>, %arg8: memref<1x1x128xf32, #tpu.memory_space<vmem>>, %arg9: memref<16x128xf32, #tpu.memory_space<vmem>>, %arg10: memref<128x128xf32, #tpu.memory_space<vmem>>, %arg11: memref<1x128xf32, #tpu.memory_space<vmem>>, %arg12: memref<128x128xf32, #tpu.memory_space<vmem>>, %arg13: memref<1x128xf32, #tpu.memory_space<vmem>>, %arg14: memref<128x128xf32, #tpu.memory_space<vmem>>, %arg15: memref<1x128xf32, #tpu.memory_space<vmem>>, %arg16: memref<16x128xf32, #tpu.memory_space<vmem>>, %arg17: memref<128x128xf32, #tpu.memory_space<vmem>>, %arg18: memref<128x512xbf16, #tpu.memory_space<vmem>>) attributes {dimension_semantics = [#tpu.dimension_semantics<arbitrary>], iteration_bounds = array<i64: 4>, scalar_prefetch = 0 : i64, scratch_operands = 2 : i64, tpu.core_type = #tpu.core_type<tc>, window_params = [{pipeline_mode = #tpu.pipeline_mode<synchronous>, transform_indices = @transform_0, window_bounds = array<i64: 128, 128>}, {pipeline_mode = #tpu.pipeline_mode<synchronous>, transform_indices = @transform_1, window_bounds = array<i64: 1024, 128>}, {pipeline_mode = #tpu.pipeline_mode<synchronous>, transform_indices = @transform_2, window_bounds = array<i64: 1024, 128>}, {pipeline_mode = #tpu.pipeline_mode<synchronous>, transform_indices = @transform_3, window_bounds = array<i64: 128, 1024>}, {transform_indices = @transform_4, window_bounds = array<i64: 1, 512, 384>}, {transform_indices = @transform_5, window_bounds = array<i64: 1, 1, 128>}, {transform_indices = @transform_6, window_bounds = array<i64: 1, 1, 128>}, {transform_indices = @transform_7, window_bounds = array<i64: 1, 1, 128>}, {pipeline_mode = #tpu.pipeline_mode<synchronous>, transform_indices = @transform_8, window_bounds = array<i64: 16, 128>}, {pipeline_mode = #tpu.pipeline_mode<synchronous>, transform_indices = @transform_9, window_bounds = array<i64: 128, 128>}, {pipeline_mode = #tpu.pipeline_mode<synchronous>, transform_indices = @transform_10, window_bounds = array<i64: 1, 128>}, {pipeline_mode = #tpu.pipeline_mode<synchronous>, transform_indices = @transform_11, window_bounds = array<i64: 128, 128>}, {pipeline_mode = #tpu.pipeline_mode<synchronous>, transform_indices = @transform_12, window_bounds = array<i64: 1, 128>}, {pipeline_mode = #tpu.pipeline_mode<synchronous>, transform_indices = @transform_13, window_bounds = array<i64: 128, 128>}, {pipeline_mode = #tpu.pipeline_mode<synchronous>, transform_indices = @transform_14, window_bounds = array<i64: 1, 128>}, {pipeline_mode = #tpu.pipeline_mode<synchronous>, transform_indices = @transform_15, window_bounds = array<i64: 16, 128>}]} {
    %c0_i32 = arith.constant 0 : i32
    %0 = arith.cmpi eq, %arg0, %c0_i32 : i32
    %1 = arith.extui %0 : i1 to i32
    %c0_i32_0 = arith.constant 0 : i32
    %2 = arith.cmpi ne, %1, %c0_i32_0 : i32
    scf.if %2 {
      %c0_69 = arith.constant 0 : index
      %c0_70 = arith.constant 0 : index
      %221 = vector.load %arg1[%c0_69, %c0_70] : memref<128x128xf32, #tpu.memory_space<vmem>>, vector<128x128xf32>
      %c0_71 = arith.constant 0 : index
      %c0_72 = arith.constant 0 : index
      %222 = vector.load %arg17[%c0_71, %c0_72] : memref<128x128xf32, #tpu.memory_space<vmem>>, vector<128x128xf32>
      tpu.vector_store %arg17[%c0_71, %c0_72], %221 {strides = array<i32>} : memref<128x128xf32, #tpu.memory_space<vmem>>, vector<128x128xf32>,
    } else {
    }
    %c0 = arith.constant 0 : index
    %c0_1 = arith.constant 0 : index
    %3 = vector.load %arg17[%c0, %c0_1] : memref<128x128xf32, #tpu.memory_space<vmem>>, vector<128x128xf32>
    %c0_2 = arith.constant 0 : index
    %c0_3 = arith.constant 0 : index
    %4 = vector.load %arg2[%c0_2, %c0_3] : memref<1024x128xbf16, #tpu.memory_space<vmem>>, vector<1024x128xbf16>
    %c0_4 = arith.constant 0 : index
    %c0_5 = arith.constant 0 : index
    %5 = vector.load %arg4[%c0_4, %c0_5] : memref<128x1024xbf16, #tpu.memory_space<vmem>>, vector<128x1024xbf16>
    %cst = arith.constant 0.000000e+00 : f32
    %6 = vector.broadcast %cst : f32 to vector<128x1xf32>
    %7 = vector.extract_strided_slice %5 {offsets = [0, 0], sizes = [128, 128], strides = [1, 1]} : vector<128x1024xbf16> to vector<128x128xbf16>
    %8 = arith.extf %7 : vector<128x128xbf16> to vector<128x128xf32>
    %cst_6 = arith.constant dense<0.000000e+00> : vector<128xf32>
    %9 = vector.multi_reduction <add>, %8, %cst_6 [1] : vector<128x128xf32> to vector<128xf32>
    %10 = vector.shape_cast %9 : vector<128xf32> to vector<128x1xf32>
    %cst_7 = arith.constant 1.000000e+00 : f32
    %11 = vector.broadcast %cst_7 : f32 to vector<128x1xf32>
    %12 = arith.subf %10, %11 : vector<128x1xf32>
    %cst_8 = arith.constant 1.000000e+30 : f32
    %13 = vector.broadcast %cst_8 : f32 to vector<128x1xf32>
    %14 = arith.mulf %12, %13 : vector<128x1xf32>
    %15 = arith.addf %6, %10 : vector<128x1xf32>
    %16 = vector.extract_strided_slice %5 {offsets = [0, 128], sizes = [128, 128], strides = [1, 1]} : vector<128x1024xbf16> to vector<128x128xbf16>
    %17 = arith.extf %16 : vector<128x128xbf16> to vector<128x128xf32>
    %cst_9 = arith.constant dense<0.000000e+00> : vector<128xf32>
    %18 = vector.multi_reduction <add>, %17, %cst_9 [1] : vector<128x128xf32> to vector<128xf32>
    %19 = vector.shape_cast %18 : vector<128xf32> to vector<128x1xf32>
    %cst_10 = arith.constant 1.000000e+00 : f32
    %20 = vector.broadcast %cst_10 : f32 to vector<128x1xf32>
    %21 = arith.subf %19, %20 : vector<128x1xf32>
    %cst_11 = arith.constant 1.000000e+30 : f32
    %22 = vector.broadcast %cst_11 : f32 to vector<128x1xf32>
    %23 = arith.mulf %21, %22 : vector<128x1xf32>
    %24 = arith.addf %15, %19 : vector<128x1xf32>
    %25 = vector.extract_strided_slice %5 {offsets = [0, 256], sizes = [128, 128], strides = [1, 1]} : vector<128x1024xbf16> to vector<128x128xbf16>
    %26 = arith.extf %25 : vector<128x128xbf16> to vector<128x128xf32>
    %cst_12 = arith.constant dense<0.000000e+00> : vector<128xf32>
    %27 = vector.multi_reduction <add>, %26, %cst_12 [1] : vector<128x128xf32> to vector<128xf32>
    %28 = vector.shape_cast %27 : vector<128xf32> to vector<128x1xf32>
    %cst_13 = arith.constant 1.000000e+00 : f32
    %29 = vector.broadcast %cst_13 : f32 to vector<128x1xf32>
    %30 = arith.subf %28, %29 : vector<128x1xf32>
    %cst_14 = arith.constant 1.000000e+30 : f32
    %31 = vector.broadcast %cst_14 : f32 to vector<128x1xf32>
    %32 = arith.mulf %30, %31 : vector<128x1xf32>
    %33 = arith.addf %24, %28 : vector<128x1xf32>
    %34 = vector.extract_strided_slice %5 {offsets = [0, 384], sizes = [128, 128], strides = [1, 1]} : vector<128x1024xbf16> to vector<128x128xbf16>
    %35 = arith.extf %34 : vector<128x128xbf16> to vector<128x128xf32>
    %cst_15 = arith.constant dense<0.000000e+00> : vector<128xf32>
    %36 = vector.multi_reduction <add>, %35, %cst_15 [1] : vector<128x128xf32> to vector<128xf32>
    %37 = vector.shape_cast %36 : vector<128xf32> to vector<128x1xf32>
    %cst_16 = arith.constant 1.000000e+00 : f32
    %38 = vector.broadcast %cst_16 : f32 to vector<128x1xf32>
    %39 = arith.subf %37, %38 : vector<128x1xf32>
    %cst_17 = arith.constant 1.000000e+30 : f32
    %40 = vector.broadcast %cst_17 : f32 to vector<128x1xf32>
    %41 = arith.mulf %39, %40 : vector<128x1xf32>
    %42 = arith.addf %33, %37 : vector<128x1xf32>
    %43 = vector.extract_strided_slice %5 {offsets = [0, 512], sizes = [128, 128], strides = [1, 1]} : vector<128x1024xbf16> to vector<128x128xbf16>
    %44 = arith.extf %43 : vector<128x128xbf16> to vector<128x128xf32>
    %cst_18 = arith.constant dense<0.000000e+00> : vector<128xf32>
    %45 = vector.multi_reduction <add>, %44, %cst_18 [1] : vector<128x128xf32> to vector<128xf32>
    %46 = vector.shape_cast %45 : vector<128xf32> to vector<128x1xf32>
    %cst_19 = arith.constant 1.000000e+00 : f32
    %47 = vector.broadcast %cst_19 : f32 to vector<128x1xf32>
    %48 = arith.subf %46, %47 : vector<128x1xf32>
    %cst_20 = arith.constant 1.000000e+30 : f32
    %49 = vector.broadcast %cst_20 : f32 to vector<128x1xf32>
    %50 = arith.mulf %48, %49 : vector<128x1xf32>
    %51 = arith.addf %42, %46 : vector<128x1xf32>
    %52 = vector.extract_strided_slice %5 {offsets = [0, 640], sizes = [128, 128], strides = [1, 1]} : vector<128x1024xbf16> to vector<128x128xbf16>
    %53 = arith.extf %52 : vector<128x128xbf16> to vector<128x128xf32>
    %cst_21 = arith.constant dense<0.000000e+00> : vector<128xf32>
    %54 = vector.multi_reduction <add>, %53, %cst_21 [1] : vector<128x128xf32> to vector<128xf32>
    %55 = vector.shape_cast %54 : vector<128xf32> to vector<128x1xf32>
    %cst_22 = arith.constant 1.000000e+00 : f32
    %56 = vector.broadcast %cst_22 : f32 to vector<128x1xf32>
    %57 = arith.subf %55, %56 : vector<128x1xf32>
    %cst_23 = arith.constant 1.000000e+30 : f32
    %58 = vector.broadcast %cst_23 : f32 to vector<128x1xf32>
    %59 = arith.mulf %57, %58 : vector<128x1xf32>
    %60 = arith.addf %51, %55 : vector<128x1xf32>
    %61 = vector.extract_strided_slice %5 {offsets = [0, 768], sizes = [128, 128], strides = [1, 1]} : vector<128x1024xbf16> to vector<128x128xbf16>
    %62 = arith.extf %61 : vector<128x128xbf16> to vector<128x128xf32>
    %cst_24 = arith.constant dense<0.000000e+00> : vector<128xf32>
    %63 = vector.multi_reduction <add>, %62, %cst_24 [1] : vector<128x128xf32> to vector<128xf32>
    %64 = vector.shape_cast %63 : vector<128xf32> to vector<128x1xf32>
    %cst_25 = arith.constant 1.000000e+00 : f32
    %65 = vector.broadcast %cst_25 : f32 to vector<128x1xf32>
    %66 = arith.subf %64, %65 : vector<128x1xf32>
    %cst_26 = arith.constant 1.000000e+30 : f32
    %67 = vector.broadcast %cst_26 : f32 to vector<128x1xf32>
    %68 = arith.mulf %66, %67 : vector<128x1xf32>
    %69 = arith.addf %60, %64 : vector<128x1xf32>
    %70 = vector.extract_strided_slice %5 {offsets = [0, 896], sizes = [128, 128], strides = [1, 1]} : vector<128x1024xbf16> to vector<128x128xbf16>
    %71 = arith.extf %70 : vector<128x128xbf16> to vector<128x128xf32>
    %cst_27 = arith.constant dense<0.000000e+00> : vector<128xf32>
    %72 = vector.multi_reduction <add>, %71, %cst_27 [1] : vector<128x128xf32> to vector<128xf32>
    %73 = vector.shape_cast %72 : vector<128xf32> to vector<128x1xf32>
    %cst_28 = arith.constant 1.000000e+00 : f32
    %74 = vector.broadcast %cst_28 : f32 to vector<128x1xf32>
    %75 = arith.subf %73, %74 : vector<128x1xf32>
    %cst_29 = arith.constant 1.000000e+30 : f32
    %76 = vector.broadcast %cst_29 : f32 to vector<128x1xf32>
    %77 = arith.mulf %75, %76 : vector<128x1xf32>
    %78 = arith.addf %69, %73 : vector<128x1xf32>
    %cst_30 = arith.constant 0.000000e+00 : f32
    %79 = vector.broadcast %cst_30 : f32 to vector<128x1xf32>
    %80 = arith.cmpf ogt, %78, %79 : vector<128x1xf32>
    %81 = arith.extui %80 : vector<128x1xi1> to vector<128x1xi32>
    %82 = arith.sitofp %81 : vector<128x1xi32> to vector<128x1xf32>
    %cst_31 = arith.constant 1.000000e+00 : f32
    %83 = vector.broadcast %cst_31 : f32 to vector<128x1xf32>
    %84 = arith.maximumf %78, %83 : vector<128x1xf32>
    %85 = tpu.reciprocal %84 : vector<128x1xf32> -> vector<128x1xf32>
    %cst_32 = arith.constant 1.000000e+00 : f32
    %86 = vector.broadcast %cst_32 : f32 to vector<128x1xf32>
    %87 = arith.addf %84, %86 : vector<128x1xf32>
    %88 = math.log %87 : vector<128x1xf32>
    %cst_33 = arith.constant 0.72134751 : f32
    %89 = vector.broadcast %cst_33 : f32 to vector<128x1xf32>
    %90 = arith.mulf %88, %89 : vector<128x1xf32>
    %91 = tpu.reciprocal %88 {approx = true} : vector<128x1xf32> -> vector<128x1xf32>
    %cst_34 = arith.constant 1.38629436 : f32
    %92 = vector.broadcast %cst_34 : f32 to vector<128x1xf32>
    %93 = arith.mulf %92, %91 : vector<128x1xf32>
    %94 = arith.truncf %3 : vector<128x128xf32> to vector<128x128xbf16>
    %cst_35 = arith.constant dense<0.000000e+00> : vector<1024x128xf32>
    %95 = tpu.matmul %4, %94, %cst_35 {dimension_numbers = #tpu.dot_dimension_numbers<[1], [0], [0], [1], [0, 0, 1, 1], [], []>} : vector<1024x128xbf16>, vector<128x128xbf16>, vector<1024x128xf32> -> vector<1024x128xf32>
    %c0_36 = arith.constant 0 : index
    %c0_37 = arith.constant 0 : index
    %96 = vector.load %arg3[%c0_36, %c0_37] : memref<1024x128xbf16, #tpu.memory_space<vmem>>, vector<1024x128xbf16>
    %97 = arith.extf %96 : vector<1024x128xbf16> to vector<1024x128xf32>
    %98 = arith.addf %95, %97 : vector<1024x128xf32>
    %cst_38 = arith.constant 0.000000e+00 : f32
    %99 = vector.broadcast %cst_38 : f32 to vector<1024x128xf32>
    %100 = arith.maximumf %98, %99 : vector<1024x128xf32>
    %101 = arith.truncf %100 : vector<1024x128xf32> to vector<1024x128xbf16>
    %102 = arith.mulf %100, %100 : vector<1024x128xf32>
    %103 = arith.truncf %102 : vector<1024x128xf32> to vector<1024x128xbf16>
    %cst_39 = arith.constant dense<0.000000e+00> : vector<128x128xf32>
    %104 = tpu.matmul %5, %101, %cst_39 {dimension_numbers = #tpu.dot_dimension_numbers<[1], [0], [0], [1], [0, 0, 1, 1], [], []>} : vector<128x1024xbf16>, vector<1024x128xbf16>, vector<128x128xf32> -> vector<128x128xf32>
    %cst_40 = arith.constant dense<0.000000e+00> : vector<128x128xf32>
    %105 = tpu.matmul %5, %103, %cst_40 {dimension_numbers = #tpu.dot_dimension_numbers<[1], [0], [0], [1], [0, 0, 1, 1], [], []>} : vector<128x1024xbf16>, vector<1024x128xbf16>, vector<128x128xf32> -> vector<128x128xf32>
    %cst_41 = arith.constant -1.000000e+30 : f32
    %106 = vector.broadcast %cst_41 : f32 to vector<128x128xf32>
    %cst_42 = arith.constant 1.000000e+30 : f32
    %107 = vector.broadcast %cst_42 : f32 to vector<128x128xf32>
    %108 = vector.extract_strided_slice %100 {offsets = [0, 0], sizes = [128, 128], strides = [1, 1]} : vector<1024x128xf32> to vector<128x128xf32>
    %109 = vector.broadcast %14 : vector<128x1xf32> to vector<128x128xf32>
    %110 = arith.addf %108, %109 : vector<128x128xf32>
    %111 = arith.maximumf %106, %110 : vector<128x128xf32>
    %112 = vector.broadcast %14 : vector<128x1xf32> to vector<128x128xf32>
    %113 = arith.subf %108, %112 : vector<128x128xf32>
    %114 = arith.minimumf %107, %113 : vector<128x128xf32>
    %115 = vector.extract_strided_slice %100 {offsets = [128, 0], sizes = [128, 128], strides = [1, 1]} : vector<1024x128xf32> to vector<128x128xf32>
    %116 = vector.broadcast %23 : vector<128x1xf32> to vector<128x128xf32>
    %117 = arith.addf %115, %116 : vector<128x128xf32>
    %118 = arith.maximumf %111, %117 : vector<128x128xf32>
    %119 = vector.broadcast %23 : vector<128x1xf32> to vector<128x128xf32>
    %120 = arith.subf %115, %119 : vector<128x128xf32>
    %121 = arith.minimumf %114, %120 : vector<128x128xf32>
    %122 = vector.extract_strided_slice %100 {offsets = [256, 0], sizes = [128, 128], strides = [1, 1]} : vector<1024x128xf32> to vector<128x128xf32>
    %123 = vector.broadcast %32 : vector<128x1xf32> to vector<128x128xf32>
    %124 = arith.addf %122, %123 : vector<128x128xf32>
    %125 = arith.maximumf %118, %124 : vector<128x128xf32>
    %126 = vector.broadcast %32 : vector<128x1xf32> to vector<128x128xf32>
    %127 = arith.subf %122, %126 : vector<128x128xf32>
    %128 = arith.minimumf %121, %127 : vector<128x128xf32>
    %129 = vector.extract_strided_slice %100 {offsets = [384, 0], sizes = [128, 128], strides = [1, 1]} : vector<1024x128xf32> to vector<128x128xf32>
    %130 = vector.broadcast %41 : vector<128x1xf32> to vector<128x128xf32>
    %131 = arith.addf %129, %130 : vector<128x128xf32>
    %132 = arith.maximumf %125, %131 : vector<128x128xf32>
    %133 = vector.broadcast %41 : vector<128x1xf32> to vector<128x128xf32>
    %134 = arith.subf %129, %133 : vector<128x128xf32>
    %135 = arith.minimumf %128, %134 : vector<128x128xf32>
    %136 = vector.extract_strided_slice %100 {offsets = [512, 0], sizes = [128, 128], strides = [1, 1]} : vector<1024x128xf32> to vector<128x128xf32>
    %137 = vector.broadcast %50 : vector<128x1xf32> to vector<128x128xf32>
    %138 = arith.addf %136, %137 : vector<128x128xf32>
    %139 = arith.maximumf %132, %138 : vector<128x128xf32>
    %140 = vector.broadcast %50 : vector<128x1xf32> to vector<128x128xf32>
    %141 = arith.subf %136, %140 : vector<128x128xf32>
    %142 = arith.minimumf %135, %141 : vector<128x128xf32>
    %143 = vector.extract_strided_slice %100 {offsets = [640, 0], sizes = [128, 128], strides = [1, 1]} : vector<1024x128xf32> to vector<128x128xf32>
    %144 = vector.broadcast %59 : vector<128x1xf32> to vector<128x128xf32>
    %145 = arith.addf %143, %144 : vector<128x128xf32>
    %146 = arith.maximumf %139, %145 : vector<128x128xf32>
    %147 = vector.broadcast %59 : vector<128x1xf32> to vector<128x128xf32>
    %148 = arith.subf %143, %147 : vector<128x128xf32>
    %149 = arith.minimumf %142, %148 : vector<128x128xf32>
    %150 = vector.extract_strided_slice %100 {offsets = [768, 0], sizes = [128, 128], strides = [1, 1]} : vector<1024x128xf32> to vector<128x128xf32>
    %151 = vector.broadcast %68 : vector<128x1xf32> to vector<128x128xf32>
    %152 = arith.addf %150, %151 : vector<128x128xf32>
    %153 = arith.maximumf %146, %152 : vector<128x128xf32>
    %154 = vector.broadcast %68 : vector<128x1xf32> to vector<128x128xf32>
    %155 = arith.subf %150, %154 : vector<128x128xf32>
    %156 = arith.minimumf %149, %155 : vector<128x128xf32>
    %157 = vector.extract_strided_slice %100 {offsets = [896, 0], sizes = [128, 128], strides = [1, 1]} : vector<1024x128xf32> to vector<128x128xf32>
    %158 = vector.broadcast %77 : vector<128x1xf32> to vector<128x128xf32>
    %159 = arith.addf %157, %158 : vector<128x128xf32>
    %160 = arith.maximumf %153, %159 : vector<128x128xf32>
    %161 = vector.broadcast %77 : vector<128x1xf32> to vector<128x128xf32>
    %162 = arith.subf %157, %161 : vector<128x128xf32>
    %163 = arith.minimumf %156, %162 : vector<128x128xf32>
    %164 = vector.broadcast %82 : vector<128x1xf32> to vector<128x128xf32>
    %165 = arith.mulf %160, %164 : vector<128x128xf32>
    %166 = vector.broadcast %82 : vector<128x1xf32> to vector<128x128xf32>
    %167 = arith.mulf %163, %166 : vector<128x128xf32>
    %168 = vector.broadcast %85 : vector<128x1xf32> to vector<128x128xf32>
    %169 = arith.mulf %104, %168 : vector<128x128xf32>
    %170 = vector.broadcast %85 : vector<128x1xf32> to vector<128x128xf32>
    %171 = arith.mulf %105, %170 : vector<128x128xf32>
    %172 = arith.mulf %169, %169 : vector<128x128xf32>
    %173 = arith.subf %171, %172 : vector<128x128xf32>
    %cst_43 = arith.constant 0.000000e+00 : f32
    %174 = vector.broadcast %cst_43 : f32 to vector<128x128xf32>
    %175 = arith.maximumf %173, %174 : vector<128x128xf32>
    %cst_44 = arith.constant 9.99999974E-6 : f32
    %176 = vector.broadcast %cst_44 : f32 to vector<128x128xf32>
    %177 = arith.addf %175, %176 : vector<128x128xf32>
    %178 = math.sqrt %177 : vector<128x128xf32>
    %179 = vector.broadcast %82 : vector<128x1xf32> to vector<128x128xf32>
    %180 = arith.mulf %178, %179 : vector<128x128xf32>
    %181 = arith.truncf %169 : vector<128x128xf32> to vector<128x128xbf16>
    %c0_45 = arith.constant 0 : index
    %c0_46 = arith.constant 0 : index
    %182 = vector.load %arg18[%c0_45, %c0_46] : memref<128x512xbf16, #tpu.memory_space<vmem>>, vector<128x128xbf16>
    tpu.vector_store %arg18[%c0_45, %c0_46], %181 {strides = array<i32>} : memref<128x512xbf16, #tpu.memory_space<vmem>>, vector<128x128xbf16>,
    %183 = arith.truncf %167 : vector<128x128xf32> to vector<128x128xbf16>
    %c0_47 = arith.constant 0 : index
    %c128 = arith.constant 128 : index
    %184 = vector.load %arg18[%c0_47, %c128] : memref<128x512xbf16, #tpu.memory_space<vmem>>, vector<128x128xbf16>
    tpu.vector_store %arg18[%c0_47, %c128], %183 {strides = array<i32>} : memref<128x512xbf16, #tpu.memory_space<vmem>>, vector<128x128xbf16>,
    %185 = arith.truncf %165 : vector<128x128xf32> to vector<128x128xbf16>
    %c0_48 = arith.constant 0 : index
    %c256 = arith.constant 256 : index
    %186 = vector.load %arg18[%c0_48, %c256] : memref<128x512xbf16, #tpu.memory_space<vmem>>, vector<128x128xbf16>
    tpu.vector_store %arg18[%c0_48, %c256], %185 {strides = array<i32>} : memref<128x512xbf16, #tpu.memory_space<vmem>>, vector<128x128xbf16>,
    %187 = arith.truncf %180 : vector<128x128xf32> to vector<128x128xbf16>
    %c0_49 = arith.constant 0 : index
    %c384 = arith.constant 384 : index
    %188 = vector.load %arg18[%c0_49, %c384] : memref<128x512xbf16, #tpu.memory_space<vmem>>, vector<128x128xbf16>
    tpu.vector_store %arg18[%c0_49, %c384], %187 {strides = array<i32>} : memref<128x512xbf16, #tpu.memory_space<vmem>>, vector<128x128xbf16>,
    %c0_50 = arith.constant 0 : index
    %c0_51 = arith.constant 0 : index
    %189 = vector.load %arg18[%c0_50, %c0_51] : memref<128x512xbf16, #tpu.memory_space<vmem>>, vector<128x512xbf16>
    %c0_52 = arith.constant 0 : index
    %c0_53 = arith.constant 0 : index
    %c0_54 = arith.constant 0 : index
    %190 = vector.load %arg5[%c0_52, %c0_53, %c0_54] : memref<1x512x384xbf16, #tpu.memory_space<vmem>>, vector<1x512x384xbf16>
    %191 = vector.shape_cast %190 : vector<1x512x384xbf16> to vector<512x384xbf16>
    %cst_55 = arith.constant dense<0.000000e+00> : vector<128x384xf32>
    %192 = tpu.matmul %189, %191, %cst_55 {dimension_numbers = #tpu.dot_dimension_numbers<[1], [0], [0], [1], [0, 0, 1, 1], [], []>} : vector<128x512xbf16>, vector<512x384xbf16>, vector<128x384xf32> -> vector<128x384xf32>
    %193 = vector.extract_strided_slice %192 {offsets = [0, 0], sizes = [128, 128], strides = [1, 1]} : vector<128x384xf32> to vector<128x128xf32>
    %194 = vector.extract_strided_slice %192 {offsets = [0, 128], sizes = [128, 128], strides = [1, 1]} : vector<128x384xf32> to vector<128x128xf32>
    %195 = vector.broadcast %90 : vector<128x1xf32> to vector<128x128xf32>
    %196 = arith.mulf %195, %194 : vector<128x128xf32>
    %197 = arith.addf %193, %196 : vector<128x128xf32>
    %198 = vector.extract_strided_slice %192 {offsets = [0, 256], sizes = [128, 128], strides = [1, 1]} : vector<128x384xf32> to vector<128x128xf32>
    %199 = vector.broadcast %93 : vector<128x1xf32> to vector<128x128xf32>
    %200 = arith.mulf %199, %198 : vector<128x128xf32>
    %201 = arith.addf %197, %200 : vector<128x128xf32>
    %c0_56 = arith.constant 0 : index
    %c0_57 = arith.constant 0 : index
    %c0_58 = arith.constant 0 : index
    %202 = vector.load %arg6[%c0_56, %c0_57, %c0_58] : memref<1x1x128xf32, #tpu.memory_space<vmem>>, vector<1x1x128xf32>
    %203 = vector.shape_cast %202 : vector<1x1x128xf32> to vector<1x128xf32>
    %204 = vector.broadcast %203 : vector<1x128xf32> to vector<128x128xf32>
    %205 = arith.addf %201, %204 : vector<128x128xf32>
    %c0_59 = arith.constant 0 : index
    %c0_60 = arith.constant 0 : index
    %c0_61 = arith.constant 0 : index
    %206 = vector.load %arg7[%c0_59, %c0_60, %c0_61] : memref<1x1x128xf32, #tpu.memory_space<vmem>>, vector<1x1x128xf32>
    %207 = vector.shape_cast %206 : vector<1x1x128xf32> to vector<1x128xf32>
    %208 = vector.broadcast %207 : vector<1x128xf32> to vector<128x128xf32>
    %209 = arith.mulf %205, %208 : vector<128x128xf32>
    %c0_62 = arith.constant 0 : index
    %c0_63 = arith.constant 0 : index
    %c0_64 = arith.constant 0 : index
    %210 = vector.load %arg8[%c0_62, %c0_63, %c0_64] : memref<1x1x128xf32, #tpu.memory_space<vmem>>, vector<1x1x128xf32>
    %211 = vector.shape_cast %210 : vector<1x1x128xf32> to vector<1x128xf32>
    %212 = vector.broadcast %211 : vector<1x128xf32> to vector<128x128xf32>
    %213 = arith.addf %209, %212 : vector<128x128xf32>
    %cst_65 = arith.constant 0.000000e+00 : f32
    %214 = vector.broadcast %cst_65 : f32 to vector<128x128xf32>
    %215 = arith.maximumf %213, %214 : vector<128x128xf32>
    %216 = arith.addf %215, %3 : vector<128x128xf32>
    %c0_66 = arith.constant 0 : index
    %c0_67 = arith.constant 0 : index
    %217 = vector.load %arg17[%c0_66, %c0_67] : memref<128x128xf32, #tpu.memory_space<vmem>>, vector<128x128xf32>
    tpu.vector_store %arg17[%c0_66, %c0_67], %216 {strides = array<i32>} : memref<128x128xf32, #tpu.memory_space<vmem>>, vector<128x128xf32>,
    %c3_i32 = arith.constant 3 : i32
    %218 = arith.cmpi eq, %arg0, %c3_i32 : i32
    %219 = arith.extui %218 : i1 to i32
    %c0_i32_68 = arith.constant 0 : i32
    %220 = arith.cmpi ne, %219, %c0_i32_68 : i32
    scf.if %220 {
      %c0_69 = arith.constant 0 : index
      %c0_70 = arith.constant 0 : index
      %221 = vector.load %arg9[%c0_69, %c0_70] : memref<16x128xf32, #tpu.memory_space<vmem>>, vector<16x128xf32>
      %c0_71 = arith.constant 0 : index
      %c0_72 = arith.constant 0 : index
      %222 = vector.load %arg17[%c0_71, %c0_72] : memref<128x128xf32, #tpu.memory_space<vmem>>, vector<128x128xf32>
      %cst_73 = arith.constant dense<0.000000e+00> : vector<16x128xf32>
      %223 = tpu.matmul %221, %222, %cst_73 {dimension_numbers = #tpu.dot_dimension_numbers<[1], [0], [0], [1], [0, 0, 1, 1], [], []>} : vector<16x128xf32>, vector<128x128xf32>, vector<16x128xf32> -> vector<16x128xf32>
      %c0_74 = arith.constant 0 : index
      %c0_75 = arith.constant 0 : index
      %224 = vector.load %arg10[%c0_74, %c0_75] : memref<128x128xf32, #tpu.memory_space<vmem>>, vector<128x128xf32>
      %cst_76 = arith.constant dense<0.000000e+00> : vector<16x128xf32>
      %225 = tpu.matmul %223, %224, %cst_76 {dimension_numbers = #tpu.dot_dimension_numbers<[1], [0], [0], [1], [0, 0, 1, 1], [], []>} : vector<16x128xf32>, vector<128x128xf32>, vector<16x128xf32> -> vector<16x128xf32>
      %c0_77 = arith.constant 0 : index
      %c0_78 = arith.constant 0 : index
      %226 = vector.load %arg11[%c0_77, %c0_78] : memref<1x128xf32, #tpu.memory_space<vmem>>, vector<1x128xf32>
      %227 = vector.broadcast %226 : vector<1x128xf32> to vector<16x128xf32>
      %228 = arith.addf %225, %227 : vector<16x128xf32>
      %cst_79 = arith.constant 0.000000e+00 : f32
      %229 = vector.broadcast %cst_79 : f32 to vector<16x128xf32>
      %230 = arith.maximumf %228, %229 : vector<16x128xf32>
      %c0_80 = arith.constant 0 : index
      %c0_81 = arith.constant 0 : index
      %231 = vector.load %arg12[%c0_80, %c0_81] : memref<128x128xf32, #tpu.memory_space<vmem>>, vector<128x128xf32>
      %cst_82 = arith.constant dense<0.000000e+00> : vector<16x128xf32>
      %232 = tpu.matmul %230, %231, %cst_82 {dimension_numbers = #tpu.dot_dimension_numbers<[1], [0], [0], [1], [0, 0, 1, 1], [], []>} : vector<16x128xf32>, vector<128x128xf32>, vector<16x128xf32> -> vector<16x128xf32>
      %c0_83 = arith.constant 0 : index
      %c0_84 = arith.constant 0 : index
      %233 = vector.load %arg13[%c0_83, %c0_84] : memref<1x128xf32, #tpu.memory_space<vmem>>, vector<1x128xf32>
      %234 = vector.broadcast %233 : vector<1x128xf32> to vector<16x128xf32>
      %235 = arith.addf %232, %234 : vector<16x128xf32>
      %cst_85 = arith.constant 0.000000e+00 : f32
      %236 = vector.broadcast %cst_85 : f32 to vector<16x128xf32>
      %237 = arith.maximumf %235, %236 : vector<16x128xf32>
      %c0_86 = arith.constant 0 : index
      %c0_87 = arith.constant 0 : index
      %238 = vector.load %arg14[%c0_86, %c0_87] : memref<128x128xf32, #tpu.memory_space<vmem>>, vector<128x128xf32>
      %cst_88 = arith.constant dense<0.000000e+00> : vector<16x128xf32>
      %239 = tpu.matmul %237, %238, %cst_88 {dimension_numbers = #tpu.dot_dimension_numbers<[1], [0], [0], [1], [0, 0, 1, 1], [], []>} : vector<16x128xf32>, vector<128x128xf32>, vector<16x128xf32> -> vector<16x128xf32>
      %c0_89 = arith.constant 0 : index
      %c0_90 = arith.constant 0 : index
      %240 = vector.load %arg15[%c0_89, %c0_90] : memref<1x128xf32, #tpu.memory_space<vmem>>, vector<1x128xf32>
      %241 = vector.broadcast %240 : vector<1x128xf32> to vector<16x128xf32>
      %242 = arith.addf %239, %241 : vector<16x128xf32>
      %c0_91 = arith.constant 0 : index
      %c0_92 = arith.constant 0 : index
      %243 = vector.load %arg16[%c0_91, %c0_92] : memref<16x128xf32, #tpu.memory_space<vmem>>, vector<16x128xf32>
      tpu.vector_store %arg16[%c0_91, %c0_92], %242 {strides = array<i32>} : memref<16x128xf32, #tpu.memory_space<vmem>>, vector<16x128xf32>,
    } else {
    }
    return
  }
  func.func @transform_0(%arg0: i32) -> (i32, i32) {
    %c0_i32 = arith.constant 0 : i32
    %c0_i32_0 = arith.constant 0 : i32
    %c0_i32_1 = arith.constant 0 : i32
    return %c0_i32, %c0_i32_0 : i32, i32
  }
  func.func @transform_1(%arg0: i32) -> (i32, i32) {
    %c0_i32 = arith.constant 0 : i32
    %c0_i32_0 = arith.constant 0 : i32
    %c0_i32_1 = arith.constant 0 : i32
    return %c0_i32, %c0_i32_0 : i32, i32
  }
  func.func @transform_2(%arg0: i32) -> (i32, i32) {
    %c0_i32 = arith.constant 0 : i32
    %c0_i32_0 = arith.constant 0 : i32
    %c0_i32_1 = arith.constant 0 : i32
    return %c0_i32, %c0_i32_0 : i32, i32
  }
  func.func @transform_3(%arg0: i32) -> (i32, i32) {
    %c0_i32 = arith.constant 0 : i32
    %c0_i32_0 = arith.constant 0 : i32
    %c0_i32_1 = arith.constant 0 : i32
    return %c0_i32, %c0_i32_0 : i32, i32
  }
  func.func @transform_4(%arg0: i32) -> (i32, i32, i32) {
    %c0_i32 = arith.constant 0 : i32
    %c0_i32_0 = arith.constant 0 : i32
    %c0_i32_1 = arith.constant 0 : i32
    return %arg0, %c0_i32, %c0_i32_0 : i32, i32, i32
  }
  func.func @transform_5(%arg0: i32) -> (i32, i32, i32) {
    %c0_i32 = arith.constant 0 : i32
    %c0_i32_0 = arith.constant 0 : i32
    %c0_i32_1 = arith.constant 0 : i32
    return %arg0, %c0_i32, %c0_i32_0 : i32, i32, i32
  }
  func.func @transform_6(%arg0: i32) -> (i32, i32, i32) {
    %c0_i32 = arith.constant 0 : i32
    %c0_i32_0 = arith.constant 0 : i32
    %c0_i32_1 = arith.constant 0 : i32
    return %arg0, %c0_i32, %c0_i32_0 : i32, i32, i32
  }
  func.func @transform_7(%arg0: i32) -> (i32, i32, i32) {
    %c0_i32 = arith.constant 0 : i32
    %c0_i32_0 = arith.constant 0 : i32
    %c0_i32_1 = arith.constant 0 : i32
    return %arg0, %c0_i32, %c0_i32_0 : i32, i32, i32
  }
  func.func @transform_8(%arg0: i32) -> (i32, i32) {
    %c0_i32 = arith.constant 0 : i32
    %c0_i32_0 = arith.constant 0 : i32
    %c0_i32_1 = arith.constant 0 : i32
    return %c0_i32, %c0_i32_0 : i32, i32
  }
  func.func @transform_9(%arg0: i32) -> (i32, i32) {
    %c0_i32 = arith.constant 0 : i32
    %c0_i32_0 = arith.constant 0 : i32
    %c0_i32_1 = arith.constant 0 : i32
    return %c0_i32, %c0_i32_0 : i32, i32
  }
  func.func @transform_10(%arg0: i32) -> (i32, i32) {
    %c0_i32 = arith.constant 0 : i32
    %c0_i32_0 = arith.constant 0 : i32
    %c0_i32_1 = arith.constant 0 : i32
    return %c0_i32, %c0_i32_0 : i32, i32
  }
  func.func @transform_11(%arg0: i32) -> (i32, i32) {
    %c0_i32 = arith.constant 0 : i32
    %c0_i32_0 = arith.constant 0 : i32
    %c0_i32_1 = arith.constant 0 : i32
    return %c0_i32, %c0_i32_0 : i32, i32
  }
  func.func @transform_12(%arg0: i32) -> (i32, i32) {
    %c0_i32 = arith.constant 0 : i32
    %c0_i32_0 = arith.constant 0 : i32
    %c0_i32_1 = arith.constant 0 : i32
    return %c0_i32, %c0_i32_0 : i32, i32
  }
  func.func @transform_13(%arg0: i32) -> (i32, i32) {
    %c0_i32 = arith.constant 0 : i32
    %c0_i32_0 = arith.constant 0 : i32
    %c0_i32_1 = arith.constant 0 : i32
    return %c0_i32, %c0_i32_0 : i32, i32
  }
  func.func @transform_14(%arg0: i32) -> (i32, i32) {
    %c0_i32 = arith.constant 0 : i32
    %c0_i32_0 = arith.constant 0 : i32
    %c0_i32_1 = arith.constant 0 : i32
    return %c0_i32, %c0_i32_0 : i32, i32
  }
  func.func @transform_15(%arg0: i32) -> (i32, i32) {
    %c0_i32 = arith.constant 0 : i32
    %c0_i32_0 = arith.constant 0 : i32
    %c0_i32_1 = arith.constant 0 : i32
    return %c0_i32, %c0_i32_0 : i32, i32
  }
}

</mosaic_0001>

<llo_original>
// kernel: tpu_custom_call.1
$region0: #{tpu_custom_call.1}
  #allocation0 [shape = 'u32[]', space=smem, size = 0x4, offset = 0x4, fixed_abs, tag = 'smem constant byte address 0x4 - core index']
  #allocation1 [shape = 'u32[144,128]{1,0:T(1,128)}', space=vmem, size = 0x12000, scoped, tag = 'internal scratch']
  #allocation2 [shape = 'f32[128,128]{1,0:T(8,128)}', space=vmem, size = 0x10000, scoped, tag = 'scratch operand']
  #allocation3 [shape = 'bf16[128,512]{1,0:T(16,128)(2,1)}', space=vmem, size = 0x20000, scoped, tag = 'scratch operand']
  %s0 = inlined_call_operand.hbm [shape: f32[128,128], index: 0, kind: input, shape index: {}]
  %s1 = inlined_call_operand.hbm [shape: bf16[1024,128], index: 1, kind: input, shape index: {}]
  %s2 = inlined_call_operand.hbm [shape: bf16[1024,128], index: 2, kind: input, shape index: {}]
  %s3 = inlined_call_operand.hbm [shape: bf16[128,1024], index: 3, kind: input, shape index: {}]
  %s4 = inlined_call_operand.hbm [shape: bf16[4,512,384], index: 4, kind: input, shape index: {}]
  %s5 = inlined_call_operand.hbm [shape: f32[4,1,128], index: 5, kind: input, shape index: {}]
  %s6 = inlined_call_operand.hbm [shape: f32[4,1,128], index: 6, kind: input, shape index: {}]
  %s7 = inlined_call_operand.hbm [shape: f32[4,1,128], index: 7, kind: input, shape index: {}]
  %s8 = inlined_call_operand.hbm [shape: f32[16,128], index: 8, kind: input, shape index: {}]
  %s9 = inlined_call_operand.hbm [shape: f32[128,128], index: 9, kind: input, shape index: {}]
  %s10 = inlined_call_operand.hbm [shape: f32[1,128], index: 10, kind: input, shape index: {}]
  %s11 = inlined_call_operand.hbm [shape: f32[128,128], index: 11, kind: input, shape index: {}]
  %s12 = inlined_call_operand.hbm [shape: f32[1,128], index: 12, kind: input, shape index: {}]
  %s13 = inlined_call_operand.hbm [shape: f32[128,128], index: 13, kind: input, shape index: {}]
  %s14 = inlined_call_operand.hbm [shape: f32[1,128], index: 14, kind: input, shape index: {}]
  %s15 = inlined_call_operand.hbm [shape: f32[16,128], index: 15, kind: output, shape index: {}]
  %s16 = sld [smem:[#allocation0]]
  $region161: #{tpu_custom_call.1} parent=0
    _
  %s18 = ssub.s32 1, %s16
  %s19 = scalar_select 0, %s18, %s16
  $region1: #{tpu_custom_call.1} parent=0
    #allocation4 [shape = 'u8[65536]{0}', space=vmem, size = 0x10000, scoped, tag = 'input window, operand 0, single buffered']
    #allocation5 [shape = 's32[2]{0}', space=sflag, size = 0x8, scoped, tag = 'scoped memory for tpu_custom_call.1']
    #allocation6 [shape = 's32[2]{0}', space=sflag, size = 0x8, scoped, tag = 'scoped memory for tpu_custom_call.1']
    #allocation7 [shape = 'u8[262144]{0}', space=vmem, size = 0x40000, scoped, tag = 'input window, operand 1, single buffered']
    #allocation8 [shape = 's32[1]{0}', space=sflag, size = 0x4, scoped, tag = 'scoped memory for tpu_custom_call.1']
    #allocation9 [shape = 'u8[262144]{0}', space=vmem, size = 0x40000, scoped, tag = 'input window, operand 2, single buffered']
    #allocation10 [shape = 'u8[262144]{0}', space=vmem, size = 0x40000, scoped, tag = 'input window, operand 3, single buffered']
    #allocation11 [shape = 's32[1]{0}', space=sflag, size = 0x4, scoped, tag = 'scoped memory for tpu_custom_call.1']
    #allocation12 [shape = 'u8[786432]{0}', space=vmem, size = 0xc0000, scoped, tag = 'input window, operand 4']
    #allocation13 [shape = 'u8[1024]{0}', space=vmem, size = 0x400, scoped, tag = 'input window, operand 5']
    #allocation14 [shape = 'u8[1024]{0}', space=vmem, size = 0x400, scoped, tag = 'input window, operand 6']
    #allocation15 [shape = 'u8[1024]{0}', space=vmem, size = 0x400, scoped, tag = 'input window, operand 7']
    #allocation16 [shape = 'u8[8192]{0}', space=vmem, size = 0x2000, scoped, tag = 'input window, operand 8, single buffered']
    #allocation17 [shape = 'u8[65536]{0}', space=vmem, size = 0x10000, scoped, tag = 'input window, operand 9, single buffered']
    #allocation18 [shape = 'u8[512]{0}', space=vmem, size = 0x400, scoped, tag = 'input window, operand 10, single buffered']
    #allocation19 [shape = 's32[1]{0}', space=sflag, size = 0x4, scoped, tag = 'scoped memory for tpu_custom_call.1']
    #allocation20 [shape = 'u8[65536]{0}', space=vmem, size = 0x10000, scoped, tag = 'input window, operand 11, single buffered']
    #allocation21 [shape = 'u8[512]{0}', space=vmem, size = 0x400, scoped, tag = 'input window, operand 12, single buffered']
    #allocation22 [shape = 's32[1]{0}', space=sflag, size = 0x4, scoped, tag = 'scoped memory for tpu_custom_call.1']
    #allocation23 [shape = 'u8[65536]{0}', space=vmem, size = 0x10000, scoped, tag = 'input window, operand 13, single buffered']
    #allocation24 [shape = 'u8[512]{0}', space=vmem, size = 0x400, scoped, tag = 'input window, operand 14, single buffered']
    #allocation25 [shape = 's32[1]{0}', space=sflag, size = 0x4, scoped, tag = 'scoped memory for tpu_custom_call.1']
    #allocation26 [shape = 'u8[8192]{0}', space=vmem, size = 0x2000, scoped, tag = 'output window, operand 0, single buffered']
    %20 = vsyncpa [#allocation5], 0
    %21 = vsyncpa [#allocation8], 0
    %22 = vsyncpa [#allocation11], 0
    %23 = vsyncpa [#allocation19], 0
    %24 = vsyncpa [#allocation22], 0
    %25 = vsyncpa [#allocation25], 0
    %26 = vsyncpa [#allocation6], 0
    loop: start=0, step=1, limit=6
    $region2: #{tpu_custom_call.1} parent=1 // loop_pre_header
      _
    $region3: #{tpu_custom_call.1} parent=1 // loop_header
      %s28 = sphi 0, %s32
      %p29 = scmp.ge.s32.totalorder %s28, 6
      %s36 = sphi 0, %s36
      %s38 = sphi 0, %s36
      %s39 = sphi 0, %s38
      %s53 = sphi 0, %s39
      %s57 = sphi 0, %s57
      %s59 = sphi 0, %s57
      %s60 = sphi 0, %s59
      %s74 = sphi 0, %s60
      %s78 = sphi 0, %s78
      %s80 = sphi 0, %s78
      %s81 = sphi 0, %s80
      %s95 = sphi 0, %s81
      %s99 = sphi 0, %s99
      %s101 = sphi 0, %s99
      %s102 = sphi 0, %s101
      %s116 = sphi 0, %s102
      %s122 = sphi 0, %s124
      %s125 = sphi 0, %s122
      %s126 = sphi 0, %s125
      %s142 = sphi 0, %s126
      %s148 = sphi 0, %s150
      %s151 = sphi 0, %s148
      %s152 = sphi 0, %s151
      %s168 = sphi 0, %s152
      %s174 = sphi 0, %s176
      %s177 = sphi 0, %s174
      %s178 = sphi 0, %s177
      %s194 = sphi 0, %s178
      %s200 = sphi 0, %s202
      %s203 = sphi 0, %s200
      %s204 = sphi 0, %s203
      %s220 = sphi 0, %s204
      %s224 = sphi 0, %s224
      %s226 = sphi 0, %s224
      %s227 = sphi 0, %s226
      %s241 = sphi 0, %s227
      %s245 = sphi 0, %s245
      %s247 = sphi 0, %s245
      %s248 = sphi 0, %s247
      %s262 = sphi 0, %s248
      %s266 = sphi 0, %s266
      %s268 = sphi 0, %s266
      %s269 = sphi 0, %s268
      %s283 = sphi 0, %s269
      %s287 = sphi 0, %s287
      %s289 = sphi 0, %s287
      %s290 = sphi 0, %s289
      %s304 = sphi 0, %s290
      %s308 = sphi 0, %s308
      %s310 = sphi 0, %s308
      %s311 = sphi 0, %s310
      %s325 = sphi 0, %s311
      %s329 = sphi 0, %s329
      %s331 = sphi 0, %s329
      %s332 = sphi 0, %s331
      %s346 = sphi 0, %s332
      %s350 = sphi 0, %s350
      %s352 = sphi 0, %s350
      %s353 = sphi 0, %s352
      %s367 = sphi 0, %s353
      %s371 = sphi 0, %s371
      %s373 = sphi 0, %s371
      %s374 = sphi 0, %s373
      %s388 = sphi 0, %s374
    $region4: #{tpu_custom_call.1} parent=1 // loop_header_branch
      %31 = sbr.rel (%p29) target = $region8
    $region5: #{tpu_custom_call.1} parent=1 // loop_body
      %s33 = ssub.s32 %s28, 1
      %s34 = ssub.s32 %s28, 2
      %s35 = sadd.s32 %s28, 1
      %s37 = sadd.s32 %s36, 1
      %p40 = scmp.eq.s32.totalorder %s28, 3
      %p41 = scmp.ne.s32.totalorder %s36, %s38
      %p42 = scmp.eq.s32.totalorder %s28, 0
      %p43 = por %p41, %p42
      %p44 = scmp.ne.s32.totalorder %s36, %s38
      %p45 = scmp.eq.s32.totalorder %s33, 3
      %p46 = por %p44, %p45
      %p47 = scmp.ne.s32.totalorder %s38, %s39
      %p48 = scmp.eq.s32.totalorder %s33, 0
      %p49 = por %p47, %p48
      %p50 = scmp.ne.s32.totalorder %s38, %s39
      %p51 = scmp.eq.s32.totalorder %s34, 3
      %p52 = por %p50, %p51
      %p54 = scmp.ne.s32.totalorder %s39, %s53
      %p55 = scmp.eq.s32.totalorder %s34, 0
      %p56 = por %p54, %p55
      %s58 = sadd.s32 %s57, 1
      %p61 = scmp.eq.s32.totalorder %s28, 3
      %p62 = scmp.ne.s32.totalorder %s57, %s59
      %p63 = scmp.eq.s32.totalorder %s28, 0
      %p64 = por %p62, %p63
      %p65 = scmp.ne.s32.totalorder %s57, %s59
      %p66 = scmp.eq.s32.totalorder %s33, 3
      %p67 = por %p65, %p66
      %p68 = scmp.ne.s32.totalorder %s59, %s60
      %p69 = scmp.eq.s32.totalorder %s33, 0
      %p70 = por %p68, %p69
      %p71 = scmp.ne.s32.totalorder %s59, %s60
      %p72 = scmp.eq.s32.totalorder %s34, 3
      %p73 = por %p71, %p72
      %p75 = scmp.ne.s32.totalorder %s60, %s74
      %p76 = scmp.eq.s32.totalorder %s34, 0
      %p77 = por %p75, %p76
      %s79 = sadd.s32 %s78, 1
      %p82 = scmp.eq.s32.totalorder %s28, 3
      %p83 = scmp.ne.s32.totalorder %s78, %s80
      %p84 = scmp.eq.s32.totalorder %s28, 0
      %p85 = por %p83, %p84
      %p86 = scmp.ne.s32.totalorder %s78, %s80
      %p87 = scmp.eq.s32.totalorder %s33, 3
      %p88 = por %p86, %p87
      %p89 = scmp.ne.s32.totalorder %s80, %s81
      %p90 = scmp.eq.s32.totalorder %s33, 0
      %p91 = por %p89, %p90
      %p92 = scmp.ne.s32.totalorder %s80, %s81
      %p93 = scmp.eq.s32.totalorder %s34, 3
      %p94 = por %p92, %p93
      %p96 = scmp.ne.s32.totalorder %s81, %s95
      %p97 = scmp.eq.s32.totalorder %s34, 0
      %p98 = por %p96, %p97
      %s100 = sadd.s32 %s99, 1
      %p103 = scmp.eq.s32.totalorder %s28, 3
      %p104 = scmp.ne.s32.totalorder %s99, %s101
      %p105 = scmp.eq.s32.totalorder %s28, 0
      %p106 = por %p104, %p105
      %p107 = scmp.ne.s32.totalorder %s99, %s101
      %p108 = scmp.eq.s32.totalorder %s33, 3
      %p109 = por %p107, %p108
      %p110 = scmp.ne.s32.totalorder %s101, %s102
      %p111 = scmp.eq.s32.totalorder %s33, 0
      %p112 = por %p110, %p111
      %p113 = scmp.ne.s32.totalorder %s101, %s102
      %p114 = scmp.eq.s32.totalorder %s34, 3
      %p115 = por %p113, %p114
      %p117 = scmp.ne.s32.totalorder %s102, %s116
      %p118 = scmp.eq.s32.totalorder %s34, 0
      %p119 = por %p117, %p118
      %s120 = ssub.s32 %s28, %s35
      %p121 = scmp.eq.s32.totalorder %s120, 0
      %s123 = sadd.s32 %s122, 1
      %s124 = scalar_select %p121, %s122, %s123
      %p127 = pneg %p121
      %p128 = scmp.eq.s32.totalorder %s28, 3
      %p129 = por %p127, %p128
      %p130 = scmp.ne.s32.totalorder %s122, %s125
      %p131 = scmp.eq.s32.totalorder %s28, 0
      %p132 = por %p130, %p131
      %p133 = scmp.ne.s32.totalorder %s122, %s125
      %p134 = scmp.eq.s32.totalorder %s33, 3
      %p135 = por %p133, %p134
      %p136 = scmp.ne.s32.totalorder %s125, %s126
      %p137 = scmp.eq.s32.totalorder %s33, 0
      %p138 = por %p136, %p137
      %p139 = scmp.ne.s32.totalorder %s125, %s126
      %p140 = scmp.eq.s32.totalorder %s34, 3
      %p141 = por %p139, %p140
      %p143 = scmp.ne.s32.totalorder %s126, %s142
      %p144 = scmp.eq.s32.totalorder %s34, 0
      %p145 = por %p143, %p144
      %s146 = ssub.s32 %s28, %s35
      %p147 = scmp.eq.s32.totalorder %s146, 0
      %s149 = sadd.s32 %s148, 1
      %s150 = scalar_select %p147, %s148, %s149
      %p153 = pneg %p147
      %p154 = scmp.eq.s32.totalorder %s28, 3
      %p155 = por %p153, %p154
      %p156 = scmp.ne.s32.totalorder %s148, %s151
      %p157 = scmp.eq.s32.totalorder %s28, 0
      %p158 = por %p156, %p157
      %p159 = scmp.ne.s32.totalorder %s148, %s151
      %p160 = scmp.eq.s32.totalorder %s33, 3
      %p161 = por %p159, %p160
      %p162 = scmp.ne.s32.totalorder %s151, %s152
      %p163 = scmp.eq.s32.totalorder %s33, 0
      %p164 = por %p162, %p163
      %p165 = scmp.ne.s32.totalorder %s151, %s152
      %p166 = scmp.eq.s32.totalorder %s34, 3
      %p167 = por %p165, %p166
      %p169 = scmp.ne.s32.totalorder %s152, %s168
      %p170 = scmp.eq.s32.totalorder %s34, 0
      %p171 = por %p169, %p170
      %s172 = ssub.s32 %s28, %s35
      %p173 = scmp.eq.s32.totalorder %s172, 0
      %s175 = sadd.s32 %s174, 1
      %s176 = scalar_select %p173, %s174, %s175
      %p179 = pneg %p173
      %p180 = scmp.eq.s32.totalorder %s28, 3
      %p181 = por %p179, %p180
      %p182 = scmp.ne.s32.totalorder %s174, %s177
      %p183 = scmp.eq.s32.totalorder %s28, 0
      %p184 = por %p182, %p183
      %p185 = scmp.ne.s32.totalorder %s174, %s177
      %p186 = scmp.eq.s32.totalorder %s33, 3
      %p187 = por %p185, %p186
      %p188 = scmp.ne.s32.totalorder %s177, %s178
      %p189 = scmp.eq.s32.totalorder %s33, 0
      %p190 = por %p188, %p189
      %p191 = scmp.ne.s32.totalorder %s177, %s178
      %p192 = scmp.eq.s32.totalorder %s34, 3
      %p193 = por %p191, %p192
      %p195 = scmp.ne.s32.totalorder %s178, %s194
      %p196 = scmp.eq.s32.totalorder %s34, 0
      %p197 = por %p195, %p196
      %s198 = ssub.s32 %s28, %s35
      %p199 = scmp.eq.s32.totalorder %s198, 0
      %s201 = sadd.s32 %s200, 1
      %s202 = scalar_select %p199, %s200, %s201
      %p205 = pneg %p199
      %p206 = scmp.eq.s32.totalorder %s28, 3
      %p207 = por %p205, %p206
      %p208 = scmp.ne.s32.totalorder %s200, %s203
      %p209 = scmp.eq.s32.totalorder %s28, 0
      %p210 = por %p208, %p209
      %p211 = scmp.ne.s32.totalorder %s200, %s203
      %p212 = scmp.eq.s32.totalorder %s33, 3
      %p213 = por %p211, %p212
      %p214 = scmp.ne.s32.totalorder %s203, %s204
      %p215 = scmp.eq.s32.totalorder %s33, 0
      %p216 = por %p214, %p215
      %p217 = scmp.ne.s32.totalorder %s203, %s204
      %p218 = scmp.eq.s32.totalorder %s34, 3
      %p219 = por %p217, %p218
      %p221 = scmp.ne.s32.totalorder %s204, %s220
      %p222 = scmp.eq.s32.totalorder %s34, 0
      %p223 = por %p221, %p222
      %s225 = sadd.s32 %s224, 1
      %p228 = scmp.eq.s32.totalorder %s28, 3
      %p229 = scmp.ne.s32.totalorder %s224, %s226
      %p230 = scmp.eq.s32.totalorder %s28, 0
      %p231 = por %p229, %p230
      %p232 = scmp.ne.s32.totalorder %s224, %s226
      %p233 = scmp.eq.s32.totalorder %s33, 3
      %p234 = por %p232, %p233
      %p235 = scmp.ne.s32.totalorder %s226, %s227
      %p236 = scmp.eq.s32.totalorder %s33, 0
      %p237 = por %p235, %p236
      %p238 = scmp.ne.s32.totalorder %s226, %s227
      %p239 = scmp.eq.s32.totalorder %s34, 3
      %p240 = por %p238, %p239
      %p242 = scmp.ne.s32.totalorder %s227, %s241
      %p243 = scmp.eq.s32.totalorder %s34, 0
      %p244 = por %p242, %p243
      %s246 = sadd.s32 %s245, 1
      %p249 = scmp.eq.s32.totalorder %s28, 3
      %p250 = scmp.ne.s32.totalorder %s245, %s247
      %p251 = scmp.eq.s32.totalorder %s28, 0
      %p252 = por %p250, %p251
      %p253 = scmp.ne.s32.totalorder %s245, %s247
      %p254 = scmp.eq.s32.totalorder %s33, 3
      %p255 = por %p253, %p254
      %p256 = scmp.ne.s32.totalorder %s247, %s248
      %p257 = scmp.eq.s32.totalorder %s33, 0
      %p258 = por %p256, %p257
      %p259 = scmp.ne.s32.totalorder %s247, %s248
      %p260 = scmp.eq.s32.totalorder %s34, 3
      %p261 = por %p259, %p260
      %p263 = scmp.ne.s32.totalorder %s248, %s262
      %p264 = scmp.eq.s32.totalorder %s34, 0
      %p265 = por %p263, %p264
      %s267 = sadd.s32 %s266, 1
      %p270 = scmp.eq.s32.totalorder %s28, 3
      %p271 = scmp.ne.s32.totalorder %s266, %s268
      %p272 = scmp.eq.s32.totalorder %s28, 0
      %p273 = por %p271, %p272
      %p274 = scmp.ne.s32.totalorder %s266, %s268
      %p275 = scmp.eq.s32.totalorder %s33, 3
      %p276 = por %p274, %p275
      %p277 = scmp.ne.s32.totalorder %s268, %s269
      %p278 = scmp.eq.s32.totalorder %s33, 0
      %p279 = por %p277, %p278
      %p280 = scmp.ne.s32.totalorder %s268, %s269
      %p281 = scmp.eq.s32.totalorder %s34, 3
      %p282 = por %p280, %p281
      %p284 = scmp.ne.s32.totalorder %s269, %s283
      %p285 = scmp.eq.s32.totalorder %s34, 0
      %p286 = por %p284, %p285
      %s288 = sadd.s32 %s287, 1
      %p291 = scmp.eq.s32.totalorder %s28, 3
      %p292 = scmp.ne.s32.totalorder %s287, %s289
      %p293 = scmp.eq.s32.totalorder %s28, 0
      %p294 = por %p292, %p293
      %p295 = scmp.ne.s32.totalorder %s287, %s289
      %p296 = scmp.eq.s32.totalorder %s33, 3
      %p297 = por %p295, %p296
      %p298 = scmp.ne.s32.totalorder %s289, %s290
      %p299 = scmp.eq.s32.totalorder %s33, 0
      %p300 = por %p298, %p299
      %p301 = scmp.ne.s32.totalorder %s289, %s290
      %p302 = scmp.eq.s32.totalorder %s34, 3
      %p303 = por %p301, %p302
      %p305 = scmp.ne.s32.totalorder %s290, %s304
      %p306 = scmp.eq.s32.totalorder %s34, 0
      %p307 = por %p305, %p306
      %s309 = sadd.s32 %s308, 1
      %p312 = scmp.eq.s32.totalorder %s28, 3
      %p313 = scmp.ne.s32.totalorder %s308, %s310
      %p314 = scmp.eq.s32.totalorder %s28, 0
      %p315 = por %p313, %p314
      %p316 = scmp.ne.s32.totalorder %s308, %s310
      %p317 = scmp.eq.s32.totalorder %s33, 3
      %p318 = por %p316, %p317
      %p319 = scmp.ne.s32.totalorder %s310, %s311
      %p320 = scmp.eq.s32.totalorder %s33, 0
      %p321 = por %p319, %p320
      %p322 = scmp.ne.s32.totalorder %s310, %s311
      %p323 = scmp.eq.s32.totalorder %s34, 3
      %p324 = por %p322, %p323
      %p326 = scmp.ne.s32.totalorder %s311, %s325
      %p327 = scmp.eq.s32.totalorder %s34, 0
      %p328 = por %p326, %p327
      %s330 = sadd.s32 %s329, 1
      %p333 = scmp.eq.s32.totalorder %s28, 3
      %p334 = scmp.ne.s32.totalorder %s329, %s331
      %p335 = scmp.eq.s32.totalorder %s28, 0
      %p336 = por %p334, %p335
      %p337 = scmp.ne.s32.totalorder %s329, %s331
      %p338 = scmp.eq.s32.totalorder %s33, 3
      %p339 = por %p337, %p338
      %p340 = scmp.ne.s32.totalorder %s331, %s332
      %p341 = scmp.eq.s32.totalorder %s33, 0
      %p342 = por %p340, %p341
      %p343 = scmp.ne.s32.totalorder %s331, %s332
      %p344 = scmp.eq.s32.totalorder %s34, 3
      %p345 = por %p343, %p344
      %p347 = scmp.ne.s32.totalorder %s332, %s346
      %p348 = scmp.eq.s32.totalorder %s34, 0
      %p349 = por %p347, %p348
      %s351 = sadd.s32 %s350, 1
      %p354 = scmp.eq.s32.totalorder %s28, 3
      %p355 = scmp.ne.s32.totalorder %s350, %s352
      %p356 = scmp.eq.s32.totalorder %s28, 0
      %p357 = por %p355, %p356
      %p358 = scmp.ne.s32.totalorder %s350, %s352
      %p359 = scmp.eq.s32.totalorder %s33, 3
      %p360 = por %p358, %p359
      %p361 = scmp.ne.s32.totalorder %s352, %s353
      %p362 = scmp.eq.s32.totalorder %s33, 0
      %p363 = por %p361, %p362
      %p364 = scmp.ne.s32.totalorder %s352, %s353
      %p365 = scmp.eq.s32.totalorder %s34, 3
      %p366 = por %p364, %p365
      %p368 = scmp.ne.s32.totalorder %s353, %s367
      %p369 = scmp.eq.s32.totalorder %s34, 0
      %p370 = por %p368, %p369
      %s372 = sadd.s32 %s371, 1
      %p375 = scmp.eq.s32.totalorder %s28, 3
      %p376 = scmp.ne.s32.totalorder %s371, %s373
      %p377 = scmp.eq.s32.totalorder %s28, 0
      %p378 = por %p376, %p377
      %p379 = scmp.ne.s32.totalorder %s371, %s373
      %p380 = scmp.eq.s32.totalorder %s33, 3
      %p381 = por %p379, %p380
      %p382 = scmp.ne.s32.totalorder %s373, %s374
      %p383 = scmp.eq.s32.totalorder %s33, 0
      %p384 = por %p382, %p383
      %p385 = scmp.ne.s32.totalorder %s373, %s374
      %p386 = scmp.eq.s32.totalorder %s34, 3
      %p387 = por %p385, %p386
      %p389 = scmp.ne.s32.totalorder %s374, %s388
      %p390 = scmp.eq.s32.totalorder %s34, 0
      %p391 = por %p389, %p390
      %p392 = scmp.le.s32.totalorder 1, %s28
      %p393 = scmp.lt.s32.totalorder %s28, 5
      %p394 = pnand %p392, %p393
      %p395 = pneg %p394
      // Predicated region
      $region9: #{tpu_custom_call.1} parent=5 // pred_check
        _
      $region10: #{tpu_custom_call.1} parent=5 // pred_check_branch
        %397 = sbr.rel (%p394) target = $region12
      $region11: #{tpu_custom_call.1} parent=5 // pred_region
        %s398 = ssub.s32 %s28, 1
        // Predicated region
        $region13: #{tpu_custom_call.1} parent=11 // pred_check
          %p399 = pneg %p49
        $region14: #{tpu_custom_call.1} parent=11 // pred_check_branch
          %401 = sbr.rel (%p399) target = $region16
        $region15: #{tpu_custom_call.1} parent=11 // pred_region
          %s403 = ssub.s32 2048, 2048
          %404 = vsyncadd [#allocation5], %s403
          %s405 = sshll.u32 [#allocation4], 4
          %s406 = int_to_ptr.vmem [resolvable:$true] %s405
          %411 = dma.hbm_to_vmem [thread:$0]  %s0, 2048, %s406, [#allocation5], 128, 128, 8
        $region16: #{tpu_custom_call.1} parent=11 // pred_fallthru
          _
        // Predicated region
        $region17: #{tpu_custom_call.1} parent=11 // pred_check
          %p412 = pneg %p70
        $region18: #{tpu_custom_call.1} parent=11 // pred_check_branch
          %414 = sbr.rel (%p412) target = $region20
        $region19: #{tpu_custom_call.1} parent=11 // pred_region
          %s416 = ssub.s32 8192, 8192
          %417 = vsyncadd [#allocation8], %s416
          %s418 = sshll.u32 [#allocation7], 4
          %s419 = int_to_ptr.vmem [resolvable:$true] %s418
          %424 = dma.hbm_to_vmem [thread:$0]  %s1, 8192, %s419, [#allocation8], 64, 64, 4
        $region20: #{tpu_custom_call.1} parent=11 // pred_fallthru
          _
        // Predicated region
        $region21: #{tpu_custom_call.1} parent=11 // pred_check
          %p425 = pneg %p91
        $region22: #{tpu_custom_call.1} parent=11 // pred_check_branch
          %427 = sbr.rel (%p425) target = $region24
        $region23: #{tpu_custom_call.1} parent=11 // pred_region
          %s429 = ssub.s32 8192, 8192
          %430 = vsyncadd [#allocation8], %s429
          %s431 = sshll.u32 [#allocation9], 4
          %s432 = int_to_ptr.vmem [resolvable:$true] %s431
          %437 = dma.hbm_to_vmem [thread:$0]  %s2, 8192, %s432, [#allocation8], 64, 64, 4
        $region24: #{tpu_custom_call.1} parent=11 // pred_fallthru
          _
        // Predicated region
        $region25: #{tpu_custom_call.1} parent=11 // pred_check
          %p438 = pneg %p112
        $region26: #{tpu_custom_call.1} parent=11 // pred_check_branch
          %440 = sbr.rel (%p438) target = $region28
        $region27: #{tpu_custom_call.1} parent=11 // pred_region
          %s442 = ssub.s32 8192, 8192
          %443 = vsyncadd [#allocation11], %s442
          %s444 = sshll.u32 [#allocation10], 4
          %s445 = int_to_ptr.vmem [resolvable:$true] %s444
          %450 = dma.hbm_to_vmem [thread:$0]  %s3, 8192, %s445, [#allocation11], 512, 512, 32
        $region28: #{tpu_custom_call.1} parent=11 // pred_fallthru
          _
        // Predicated region
        $region29: #{tpu_custom_call.1} parent=11 // pred_check
          %p451 = pneg %p237
        $region30: #{tpu_custom_call.1} parent=11 // pred_check_branch
          %453 = sbr.rel (%p451) target = $region32
        $region31: #{tpu_custom_call.1} parent=11 // pred_region
          %s455 = ssub.s32 256, 256
          %456 = vsyncadd [#allocation8], %s455
          %s457 = sshll.u32 [#allocation16], 4
          %s458 = int_to_ptr.vmem [resolvable:$true] %s457
          %463 = dma.hbm_to_vmem [thread:$0]  %s8, 256, %s458, [#allocation8], 128, 128, 8
        $region32: #{tpu_custom_call.1} parent=11 // pred_fallthru
          _
        // Predicated region
        $region33: #{tpu_custom_call.1} parent=11 // pred_check
          %p464 = pneg %p258
        $region34: #{tpu_custom_call.1} parent=11 // pred_check_branch
          %466 = sbr.rel (%p464) target = $region36
        $region35: #{tpu_custom_call.1} parent=11 // pred_region
          %s468 = ssub.s32 2048, 2048
          %469 = vsyncadd [#allocation11], %s468
          %s470 = sshll.u32 [#allocation17], 4
          %s471 = int_to_ptr.vmem [resolvable:$true] %s470
          %476 = dma.hbm_to_vmem [thread:$0]  %s9, 2048, %s471, [#allocation11], 128, 128, 8
        $region36: #{tpu_custom_call.1} parent=11 // pred_fallthru
          _
        // Predicated region
        $region37: #{tpu_custom_call.1} parent=11 // pred_check
          %p477 = pneg %p279
        $region38: #{tpu_custom_call.1} parent=11 // pred_check_branch
          %479 = sbr.rel (%p477) target = $region40
        $region39: #{tpu_custom_call.1} parent=11 // pred_region
          %s481 = ssub.s32 16, 16
          %482 = vsyncadd [#allocation19], %s481
          %s484 = sshll.u32 [#allocation18], 4
          %s485 = int_to_ptr.vmem [resolvable:$true] %s484
          %487 = dma.hbm_to_vmem [thread:$0]  %s10, 16, %s485, [#allocation19]
        $region40: #{tpu_custom_call.1} parent=11 // pred_fallthru
          _
        // Predicated region
        $region41: #{tpu_custom_call.1} parent=11 // pred_check
          %p488 = pneg %p300
        $region42: #{tpu_custom_call.1} parent=11 // pred_check_branch
          %490 = sbr.rel (%p488) target = $region44
        $region43: #{tpu_custom_call.1} parent=11 // pred_region
          %s492 = ssub.s32 2048, 2048
          %493 = vsyncadd [#allocation19], %s492
          %s494 = sshll.u32 [#allocation20], 4
          %s495 = int_to_ptr.vmem [resolvable:$true] %s494
          %500 = dma.hbm_to_vmem [thread:$0]  %s11, 2048, %s495, [#allocation19], 128, 128, 8
        $region44: #{tpu_custom_call.1} parent=11 // pred_fallthru
          _
        // Predicated region
        $region45: #{tpu_custom_call.1} parent=11 // pred_check
          %p501 = pneg %p321
        $region46: #{tpu_custom_call.1} parent=11 // pred_check_branch
          %503 = sbr.rel (%p501) target = $region48
        $region47: #{tpu_custom_call.1} parent=11 // pred_region
          %s505 = ssub.s32 16, 16
          %506 = vsyncadd [#allocation22], %s505
          %s508 = sshll.u32 [#allocation21], 4
          %s509 = int_to_ptr.vmem [resolvable:$true] %s508
          %511 = dma.hbm_to_vmem [thread:$0]  %s12, 16, %s509, [#allocation22]
        $region48: #{tpu_custom_call.1} parent=11 // pred_fallthru
          _
        // Predicated region
        $region49: #{tpu_custom_call.1} parent=11 // pred_check
          %p512 = pneg %p342
        $region50: #{tpu_custom_call.1} parent=11 // pred_check_branch
          %514 = sbr.rel (%p512) target = $region52
        $region51: #{tpu_custom_call.1} parent=11 // pred_region
          %s516 = ssub.s32 2048, 2048
          %517 = vsyncadd [#allocation22], %s516
          %s518 = sshll.u32 [#allocation23], 4
          %s519 = int_to_ptr.vmem [resolvable:$true] %s518
          %524 = dma.hbm_to_vmem [thread:$0]  %s13, 2048, %s519, [#allocation22], 128, 128, 8
        $region52: #{tpu_custom_call.1} parent=11 // pred_fallthru
          _
        // Predicated region
        $region53: #{tpu_custom_call.1} parent=11 // pred_check
          %p525 = pneg %p363
        $region54: #{tpu_custom_call.1} parent=11 // pred_check_branch
          %527 = sbr.rel (%p525) target = $region56
        $region55: #{tpu_custom_call.1} parent=11 // pred_region
          %s529 = ssub.s32 16, 16
          %530 = vsyncadd [#allocation25], %s529
          %s532 = sshll.u32 [#allocation24], 4
          %s533 = int_to_ptr.vmem [resolvable:$true] %s532
          %535 = dma.hbm_to_vmem [thread:$0]  %s14, 16, %s533, [#allocation25]
        $region56: #{tpu_custom_call.1} parent=11 // pred_fallthru
          _
      $region12: #{tpu_custom_call.1} parent=5 // pred_fallthru
        _
      %p536 = scmp.lt.s32.totalorder %s28, 4
      // Predicated region
      $region57: #{tpu_custom_call.1} parent=5 // pred_check
        %p537 = pneg %p536
      $region58: #{tpu_custom_call.1} parent=5 // pred_check_branch
        %539 = sbr.rel (%p537) target = $region60
      $region59: #{tpu_custom_call.1} parent=5 // pred_region
        // Predicated region
        $region61: #{tpu_custom_call.1} parent=59 // pred_check
          %p540 = pneg %p132
        $region62: #{tpu_custom_call.1} parent=59 // pred_check_branch
          %542 = sbr.rel (%p540) target = $region64
        $region63: #{tpu_custom_call.1} parent=59 // pred_region
          %s543 = sand.u32 %s28, 1
          %s544 = scalar_lea.sflag [#allocation5], %s543
          %s545 = sand.u32 %s122, 1
          %s546 = smul.addr %s545, 768
          %s547 = scalar_lea.vmem [#allocation12], %s546
          %s549 = ssub.s32 12288, 12288
          %550 = vsyncadd %s544, %s549
          %s551 = smul.addr %s28, 192
          %s552 = smul.addr %s551, 64
          %s553 = scalar_lea.hbm %s4, %s552
          %s554 = sshll.u32 %s547, 4
          %s555 = int_to_ptr.vmem [resolvable:$true] %s554
          %560 = dma.hbm_to_vmem [thread:$0]  %s553, 12288, %s555, %s544, 192, 192, 12
        $region64: #{tpu_custom_call.1} parent=59 // pred_fallthru
          _
        // Predicated region
        $region65: #{tpu_custom_call.1} parent=59 // pred_check
          %p561 = pneg %p158
        $region66: #{tpu_custom_call.1} parent=59 // pred_check_branch
          %563 = sbr.rel (%p561) target = $region68
        $region67: #{tpu_custom_call.1} parent=59 // pred_region
          %s564 = sand.u32 %s28, 1
          %s565 = scalar_lea.sflag [#allocation5], %s564
          %s566 = sand.u32 %s148, 1
          %s567 = scalar_lea.vmem [#allocation13], %s566
          %s569 = ssub.s32 16, 16
          %570 = vsyncadd %s565, %s569
          %s571 = smul.addr %s28, 16
          %s572 = scalar_lea.hbm %s5, %s571
          %s574 = sshll.u32 %s567, 4
          %s575 = int_to_ptr.vmem [resolvable:$true] %s574
          %577 = dma.hbm_to_vmem [thread:$0]  %s572, 16, %s575, %s565
        $region68: #{tpu_custom_call.1} parent=59 // pred_fallthru
          _
        // Predicated region
        $region69: #{tpu_custom_call.1} parent=59 // pred_check
          %p578 = pneg %p184
        $region70: #{tpu_custom_call.1} parent=59 // pred_check_branch
          %580 = sbr.rel (%p578) target = $region72
        $region71: #{tpu_custom_call.1} parent=59 // pred_region
          %s581 = sand.u32 %s28, 1
          %s582 = scalar_lea.sflag [#allocation5], %s581
          %s583 = sand.u32 %s174, 1
          %s584 = scalar_lea.vmem [#allocation14], %s583
          %s586 = ssub.s32 16, 16
          %587 = vsyncadd %s582, %s586
          %s588 = smul.addr %s28, 16
          %s589 = scalar_lea.hbm %s6, %s588
          %s591 = sshll.u32 %s584, 4
          %s592 = int_to_ptr.vmem [resolvable:$true] %s591
          %594 = dma.hbm_to_vmem [thread:$0]  %s589, 16, %s592, %s582
        $region72: #{tpu_custom_call.1} parent=59 // pred_fallthru
          _
        // Predicated region
        $region73: #{tpu_custom_call.1} parent=59 // pred_check
          %p595 = pneg %p210
        $region74: #{tpu_custom_call.1} parent=59 // pred_check_branch
          %597 = sbr.rel (%p595) target = $region76
        $region75: #{tpu_custom_call.1} parent=59 // pred_region
          %s598 = sand.u32 %s28, 1
          %s599 = scalar_lea.sflag [#allocation5], %s598
          %s600 = sand.u32 %s200, 1
          %s601 = scalar_lea.vmem [#allocation15], %s600
          %s603 = ssub.s32 16, 16
          %604 = vsyncadd %s599, %s603
          %s605 = smul.addr %s28, 16
          %s606 = scalar_lea.hbm %s7, %s605
          %s608 = sshll.u32 %s601, 4
          %s609 = int_to_ptr.vmem [resolvable:$true] %s608
          %611 = dma.hbm_to_vmem [thread:$0]  %s606, 16, %s609, %s599
        $region76: #{tpu_custom_call.1} parent=59 // pred_fallthru
          _
      $region60: #{tpu_custom_call.1} parent=5 // pred_fallthru
        _
      %p612 = scmp.le.s32.totalorder 1, %s28
      %p613 = scmp.lt.s32.totalorder %s28, 5
      %p614 = pnand %p612, %p613
      %p615 = pneg %p614
      // Predicated region
      $region77: #{tpu_custom_call.1} parent=5 // pred_check
        _
      $region78: #{tpu_custom_call.1} parent=5 // pred_check_branch
        %617 = sbr.rel (%p614) target = $region80
      $region79: #{tpu_custom_call.1} parent=5 // pred_region
        %s618 = ssub.s32 %s28, 1
        // Predicated region
        $region81: #{tpu_custom_call.1} parent=79 // pred_check
          %p619 = pneg %p49
        $region82: #{tpu_custom_call.1} parent=79 // pred_check_branch
          %621 = sbr.rel (%p619) target = $region84
        $region83: #{tpu_custom_call.1} parent=79 // pred_region
          %622 = dma.done [#allocation5], 2048
        $region84: #{tpu_custom_call.1} parent=79 // pred_fallthru
          _
        // Predicated region
        $region85: #{tpu_custom_call.1} parent=79 // pred_check
          %p623 = pneg %p70
        $region86: #{tpu_custom_call.1} parent=79 // pred_check_branch
          %625 = sbr.rel (%p623) target = $region88
        $region87: #{tpu_custom_call.1} parent=79 // pred_region
          %626 = dma.done [#allocation8], 8192
        $region88: #{tpu_custom_call.1} parent=79 // pred_fallthru
          _
        // Predicated region
        $region89: #{tpu_custom_call.1} parent=79 // pred_check
          %p627 = pneg %p91
        $region90: #{tpu_custom_call.1} parent=79 // pred_check_branch
          %629 = sbr.rel (%p627) target = $region92
        $region91: #{tpu_custom_call.1} parent=79 // pred_region
          %630 = dma.done [#allocation8], 8192
        $region92: #{tpu_custom_call.1} parent=79 // pred_fallthru
          _
        // Predicated region
        $region93: #{tpu_custom_call.1} parent=79 // pred_check
          %p631 = pneg %p112
        $region94: #{tpu_custom_call.1} parent=79 // pred_check_branch
          %633 = sbr.rel (%p631) target = $region96
        $region95: #{tpu_custom_call.1} parent=79 // pred_region
          %634 = dma.done [#allocation11], 8192
        $region96: #{tpu_custom_call.1} parent=79 // pred_fallthru
          _
        %s635 = sand.u32 %s33, 1
        %s636 = scalar_lea.sflag [#allocation5], %s635
        %s637 = sand.u32 %s125, 1
        %s638 = smul.addr %s637, 768
        %s639 = scalar_lea.vmem [#allocation12], %s638
        // Predicated region
        $region97: #{tpu_custom_call.1} parent=79 // pred_check
          %p640 = pneg %p138
        $region98: #{tpu_custom_call.1} parent=79 // pred_check_branch
          %642 = sbr.rel (%p640) target = $region100
        $region99: #{tpu_custom_call.1} parent=79 // pred_region
          %643 = dma.done %s636, 12288
        $region100: #{tpu_custom_call.1} parent=79 // pred_fallthru
          _
        %s644 = sand.u32 %s33, 1
        %s645 = scalar_lea.sflag [#allocation5], %s644
        %s646 = sand.u32 %s151, 1
        %s647 = scalar_lea.vmem [#allocation13], %s646
        // Predicated region
        $region101: #{tpu_custom_call.1} parent=79 // pred_check
          %p648 = pneg %p164
        $region102: #{tpu_custom_call.1} parent=79 // pred_check_branch
          %650 = sbr.rel (%p648) target = $region104
        $region103: #{tpu_custom_call.1} parent=79 // pred_region
          %651 = dma.done %s645, 16
        $region104: #{tpu_custom_call.1} parent=79 // pred_fallthru
          _
        %s652 = sand.u32 %s33, 1
        %s653 = scalar_lea.sflag [#allocation5], %s652
        %s654 = sand.u32 %s177, 1
        %s655 = scalar_lea.vmem [#allocation14], %s654
        // Predicated region
        $region105: #{tpu_custom_call.1} parent=79 // pred_check
          %p656 = pneg %p190
        $region106: #{tpu_custom_call.1} parent=79 // pred_check_branch
          %658 = sbr.rel (%p656) target = $region108
        $region107: #{tpu_custom_call.1} parent=79 // pred_region
          %659 = dma.done %s653, 16
        $region108: #{tpu_custom_call.1} parent=79 // pred_fallthru
          _
        %s660 = sand.u32 %s33, 1
        %s661 = scalar_lea.sflag [#allocation5], %s660
        %s662 = sand.u32 %s203, 1
        %s663 = scalar_lea.vmem [#allocation15], %s662
        // Predicated region
        $region109: #{tpu_custom_call.1} parent=79 // pred_check
          %p664 = pneg %p216
        $region110: #{tpu_custom_call.1} parent=79 // pred_check_branch
          %666 = sbr.rel (%p664) target = $region112
        $region111: #{tpu_custom_call.1} parent=79 // pred_region
          %667 = dma.done %s661, 16
        $region112: #{tpu_custom_call.1} parent=79 // pred_fallthru
          _
        // Predicated region
        $region113: #{tpu_custom_call.1} parent=79 // pred_check
          %p668 = pneg %p237
        $region114: #{tpu_custom_call.1} parent=79 // pred_check_branch
          %670 = sbr.rel (%p668) target = $region116
        $region115: #{tpu_custom_call.1} parent=79 // pred_region
          %671 = dma.done [#allocation8], 256
        $region116: #{tpu_custom_call.1} parent=79 // pred_fallthru
          _
        // Predicated region
        $region117: #{tpu_custom_call.1} parent=79 // pred_check
          %p672 = pneg %p258
        $region118: #{tpu_custom_call.1} parent=79 // pred_check_branch
          %674 = sbr.rel (%p672) target = $region120
        $region119: #{tpu_custom_call.1} parent=79 // pred_region
          %675 = dma.done [#allocation11], 2048
        $region120: #{tpu_custom_call.1} parent=79 // pred_fallthru
          _
        // Predicated region
        $region121: #{tpu_custom_call.1} parent=79 // pred_check
          %p676 = pneg %p279
        $region122: #{tpu_custom_call.1} parent=79 // pred_check_branch
          %678 = sbr.rel (%p676) target = $region124
        $region123: #{tpu_custom_call.1} parent=79 // pred_region
          %679 = dma.done [#allocation19], 16
        $region124: #{tpu_custom_call.1} parent=79 // pred_fallthru
          _
        // Predicated region
        $region125: #{tpu_custom_call.1} parent=79 // pred_check
          %p680 = pneg %p300
        $region126: #{tpu_custom_call.1} parent=79 // pred_check_branch
          %682 = sbr.rel (%p680) target = $region128
        $region127: #{tpu_custom_call.1} parent=79 // pred_region
          %683 = dma.done [#allocation19], 2048
        $region128: #{tpu_custom_call.1} parent=79 // pred_fallthru
          _
        // Predicated region
        $region129: #{tpu_custom_call.1} parent=79 // pred_check
          %p684 = pneg %p321
        $region130: #{tpu_custom_call.1} parent=79 // pred_check_branch
          %686 = sbr.rel (%p684) target = $region132
        $region131: #{tpu_custom_call.1} parent=79 // pred_region
          %687 = dma.done [#allocation22], 16
        $region132: #{tpu_custom_call.1} parent=79 // pred_fallthru
          _
        // Predicated region
        $region133: #{tpu_custom_call.1} parent=79 // pred_check
          %p688 = pneg %p342
        $region134: #{tpu_custom_call.1} parent=79 // pred_check_branch
          %690 = sbr.rel (%p688) target = $region136
        $region135: #{tpu_custom_call.1} parent=79 // pred_region
          %691 = dma.done [#allocation22], 2048
        $region136: #{tpu_custom_call.1} parent=79 // pred_fallthru
          _
        // Predicated region
        $region137: #{tpu_custom_call.1} parent=79 // pred_check
          %p692 = pneg %p363
        $region138: #{tpu_custom_call.1} parent=79 // pred_check_branch
          %694 = sbr.rel (%p692) target = $region140
        $region139: #{tpu_custom_call.1} parent=79 // pred_region
          %695 = dma.done [#allocation25], 16
        $region140: #{tpu_custom_call.1} parent=79 // pred_fallthru
          _
        %p696 = pneg %p49
        %p697 = pneg %p46
        %p698 = pneg %p70
        %p699 = pneg %p67
        %p700 = pneg %p91
        %p701 = pneg %p88
        %p702 = pneg %p112
        %p703 = pneg %p109
        %s704 = sand.u32 %s33, 1
        %s705 = scalar_lea.sflag [#allocation5], %s704
        %s706 = sand.u32 %s125, 1
        %s707 = smul.addr %s706, 768
        %s708 = scalar_lea.vmem [#allocation12], %s707
        %p709 = pneg %p138
        %p710 = pneg %p135
        %s711 = sand.u32 %s33, 1
        %s712 = scalar_lea.sflag [#allocation5], %s711
        %s713 = sand.u32 %s151, 1
        %s714 = scalar_lea.vmem [#allocation13], %s713
        %p715 = pneg %p164
        %p716 = pneg %p161
        %s717 = sand.u32 %s33, 1
        %s718 = scalar_lea.sflag [#allocation5], %s717
        %s719 = sand.u32 %s177, 1
        %s720 = scalar_lea.vmem [#allocation14], %s719
        %p721 = pneg %p190
        %p722 = pneg %p187
        %s723 = sand.u32 %s33, 1
        %s724 = scalar_lea.sflag [#allocation5], %s723
        %s725 = sand.u32 %s203, 1
        %s726 = scalar_lea.vmem [#allocation15], %s725
        %p727 = pneg %p216
        %p728 = pneg %p213
        %p729 = pneg %p237
        %p730 = pneg %p234
        %p731 = pneg %p258
        %p732 = pneg %p255
        %p733 = pneg %p279
        %p734 = pneg %p276
        %p735 = pneg %p300
        %p736 = pneg %p297
        %p737 = pneg %p321
        %p738 = pneg %p318
        %p739 = pneg %p342
        %p740 = pneg %p339
        %p741 = pneg %p363
        %p742 = pneg %p360
        %p743 = pneg %p384
        %p744 = pneg %p381
        %p746 = scmp.eq.s32.totalorder %s33, 0
        // Predicated region
        $region141: #{tpu_custom_call.1} parent=79 // pred_check
          %p747 = pneg %p746
        $region142: #{tpu_custom_call.1} parent=79 // pred_check_branch
          %749 = sbr.rel (%p747) target = $region144
        $region143: #{tpu_custom_call.1} parent=79 // pred_region
          %v750 = vld [vmem:[#allocation4] sm:$0xff]
          %v751 = vld [vmem:[#allocation4 + $0x8] sm:$0xff]
          %v752 = vld [vmem:[#allocation4 + $0x10] sm:$0xff]
          %v753 = vld [vmem:[#allocation4 + $0x18] sm:$0xff]
          %v754 = vld [vmem:[#allocation4 + $0x20] sm:$0xff]
          %v755 = vld [vmem:[#allocation4 + $0x28] sm:$0xff]
          %v756 = vld [vmem:[#allocation4 + $0x30] sm:$0xff]
          %v757 = vld [vmem:[#allocation4 + $0x38] sm:$0xff]
          %v758 = vld [vmem:[#allocation4 + $0x40] sm:$0xff]
          %v759 = vld [vmem:[#allocation4 + $0x48] sm:$0xff]
          %v760 = vld [vmem:[#allocation4 + $0x50] sm:$0xff]
          %v761 = vld [vmem:[#allocation4 + $0x58] sm:$0xff]
          %v762 = vld [vmem:[#allocation4 + $0x60] sm:$0xff]
          %v763 = vld [vmem:[#allocation4 + $0x68] sm:$0xff]
          %v764 = vld [vmem:[#allocation4 + $0x70] sm:$0xff]
          %v765 = vld [vmem:[#allocation4 + $0x78] sm:$0xff]
          %766 = vst [vmem:[#allocation2] sm:$0xff] %v750
          %767 = vst [vmem:[#allocation2 + $0x8] sm:$0xff] %v751
          %768 = vst [vmem:[#allocation2 + $0x10] sm:$0xff] %v752
          %769 = vst [vmem:[#allocation2 + $0x18] sm:$0xff] %v753
          %770 = vst [vmem:[#allocation2 + $0x20] sm:$0xff] %v754
          %771 = vst [vmem:[#allocation2 + $0x28] sm:$0xff] %v755
          %772 = vst [vmem:[#allocation2 + $0x30] sm:$0xff] %v756
          %773 = vst [vmem:[#allocation2 + $0x38] sm:$0xff] %v757
          %774 = vst [vmem:[#allocation2 + $0x40] sm:$0xff] %v758
          %775 = vst [vmem:[#allocation2 + $0x48] sm:$0xff] %v759
          %776 = vst [vmem:[#allocation2 + $0x50] sm:$0xff] %v760
          %777 = vst [vmem:[#allocation2 + $0x58] sm:$0xff] %v761
          %778 = vst [vmem:[#allocation2 + $0x60] sm:$0xff] %v762
          %779 = vst [vmem:[#allocation2 + $0x68] sm:$0xff] %v763
          %780 = vst [vmem:[#allocation2 + $0x70] sm:$0xff] %v764
          %781 = vst [vmem:[#allocation2 + $0x78] sm:$0xff] %v765
        $region144: #{tpu_custom_call.1} parent=79 // pred_fallthru
          _
        %v782 = vld [vmem:[#allocation2] sm:$0xff]
        %v783 = vld [vmem:[#allocation2 + $0x8] sm:$0xff]
        %v784 = vld [vmem:[#allocation2 + $0x10] sm:$0xff]
        %v785 = vld [vmem:[#allocation2 + $0x18] sm:$0xff]
        %v786 = vld [vmem:[#allocation2 + $0x20] sm:$0xff]
        %v787 = vld [vmem:[#allocation2 + $0x28] sm:$0xff]
        %v788 = vld [vmem:[#allocation2 + $0x30] sm:$0xff]
        %v789 = vld [vmem:[#allocation2 + $0x38] sm:$0xff]
        %v790 = vld [vmem:[#allocation2 + $0x40] sm:$0xff]
        %v791 = vld [vmem:[#allocation2 + $0x48] sm:$0xff]
        %v792 = vld [vmem:[#allocation2 + $0x50] sm:$0xff]
        %v793 = vld [vmem:[#allocation2 + $0x58] sm:$0xff]
        %v794 = vld [vmem:[#allocation2 + $0x60] sm:$0xff]
        %v795 = vld [vmem:[#allocation2 + $0x68] sm:$0xff]
        %v796 = vld [vmem:[#allocation2 + $0x70] sm:$0xff]
        %v797 = vld [vmem:[#allocation2 + $0x78] sm:$0xff]
        %v798 = vld [vmem:[#allocation7] sm:$0xf]
        %v799 = vld [vmem:[#allocation7 + $0x4] sm:$0xf]
        %v800 = vld [vmem:[#allocation7 + $0x8] sm:$0xf]
        %v801 = vld [vmem:[#allocation7 + $0xc] sm:$0xf]
        %v802 = vld [vmem:[#allocation7 + $0x10] sm:$0xf]
        %v803 = vld [vmem:[#allocation7 + $0x14] sm:$0xf]
        %v804 = vld [vmem:[#allocation7 + $0x18] sm:$0xf]
        %v805 = vld [vmem:[#allocation7 + $0x1c] sm:$0xf]
        %v806 = vld [vmem:[#allocation7 + $0x20] sm:$0xf]
        %v807 = vld [vmem:[#allocation7 + $0x24] sm:$0xf]
        %v808 = vld [vmem:[#allocation7 + $0x28] sm:$0xf]
        %v809 = vld [vmem:[#allocation7 + $0x2c] sm:$0xf]
        %v810 = vld [vmem:[#allocation7 + $0x30] sm:$0xf]
        %v811 = vld [vmem:[#allocation7 + $0x34] sm:$0xf]
        %v812 = vld [vmem:[#allocation7 + $0x38] sm:$0xf]
        %v813 = vld [vmem:[#allocation7 + $0x3c] sm:$0xf]
        %v814 = vld [vmem:[#allocation7 + $0x40] sm:$0xf]
        %v815 = vld [vmem:[#allocation7 + $0x44] sm:$0xf]
        %v816 = vld [vmem:[#allocation7 + $0x48] sm:$0xf]
        %v817 = vld [vmem:[#allocation7 + $0x4c] sm:$0xf]
        %v818 = vld [vmem:[#allocation7 + $0x50] sm:$0xf]
        %v819 = vld [vmem:[#allocation7 + $0x54] sm:$0xf]
        %v820 = vld [vmem:[#allocation7 + $0x58] sm:$0xf]
        %v821 = vld [vmem:[#allocation7 + $0x5c] sm:$0xf]
        %v822 = vld [vmem:[#allocation7 + $0x60] sm:$0xf]
        %v823 = vld [vmem:[#allocation7 + $0x64] sm:$0xf]
        %v824 = vld [vmem:[#allocation7 + $0x68] sm:$0xf]
        %v825 = vld [vmem:[#allocation7 + $0x6c] sm:$0xf]
        %v826 = vld [vmem:[#allocation7 + $0x70] sm:$0xf]
        %v827 = vld [vmem:[#allocation7 + $0x74] sm:$0xf]
        %v828 = vld [vmem:[#allocation7 + $0x78] sm:$0xf]
        %v829 = vld [vmem:[#allocation7 + $0x7c] sm:$0xf]
        %v830 = vld [vmem:[#allocation7 + $0x80] sm:$0xf]
        %v831 = vld [vmem:[#allocation7 + $0x84] sm:$0xf]
        %v832 = vld [vmem:[#allocation7 + $0x88] sm:$0xf]
        %v833 = vld [vmem:[#allocation7 + $0x8c] sm:$0xf]
        %v834 = vld [vmem:[#allocation7 + $0x90] sm:$0xf]
        %v835 = vld [vmem:[#allocation7 + $0x94] sm:$0xf]
        %v836 = vld [vmem:[#allocation7 + $0x98] sm:$0xf]
        %v837 = vld [vmem:[#allocation7 + $0x9c] sm:$0xf]
        %v838 = vld [vmem:[#allocation7 + $0xa0] sm:$0xf]
        %v839 = vld [vmem:[#allocation7 + $0xa4] sm:$0xf]
        %v840 = vld [vmem:[#allocation7 + $0xa8] sm:$0xf]
        %v841 = vld [vmem:[#allocation7 + $0xac] sm:$0xf]
        %v842 = vld [vmem:[#allocation7 + $0xb0] sm:$0xf]
        %v843 = vld [vmem:[#allocation7 + $0xb4] sm:$0xf]
        %v844 = vld [vmem:[#allocation7 + $0xb8] sm:$0xf]
        %v845 = vld [vmem:[#allocation7 + $0xbc] sm:$0xf]
        %v846 = vld [vmem:[#allocation7 + $0xc0] sm:$0xf]
        %v847 = vld [vmem:[#allocation7 + $0xc4] sm:$0xf]
        %v848 = vld [vmem:[#allocation7 + $0xc8] sm:$0xf]
        %v849 = vld [vmem:[#allocation7 + $0xcc] sm:$0xf]
        %v850 = vld [vmem:[#allocation7 + $0xd0] sm:$0xf]
        %v851 = vld [vmem:[#allocation7 + $0xd4] sm:$0xf]
        %v852 = vld [vmem:[#allocation7 + $0xd8] sm:$0xf]
        %v853 = vld [vmem:[#allocation7 + $0xdc] sm:$0xf]
        %v854 = vld [vmem:[#allocation7 + $0xe0] sm:$0xf]
        %v855 = vld [vmem:[#allocation7 + $0xe4] sm:$0xf]
        %v856 = vld [vmem:[#allocation7 + $0xe8] sm:$0xf]
        %v857 = vld [vmem:[#allocation7 + $0xec] sm:$0xf]
        %v858 = vld [vmem:[#allocation7 + $0xf0] sm:$0xf]
        %v859 = vld [vmem:[#allocation7 + $0xf4] sm:$0xf]
        %v860 = vld [vmem:[#allocation7 + $0xf8] sm:$0xf]
        %v861 = vld [vmem:[#allocation7 + $0xfc] sm:$0xf]
        %v862 = vld [vmem:[#allocation7 + $0x100] sm:$0xf]
        %v863 = vld [vmem:[#allocation7 + $0x104] sm:$0xf]
        %v864 = vld [vmem:[#allocation7 + $0x108] sm:$0xf]
        %v865 = vld [vmem:[#allocation7 + $0x10c] sm:$0xf]
        %v866 = vld [vmem:[#allocation7 + $0x110] sm:$0xf]
        %v867 = vld [vmem:[#allocation7 + $0x114] sm:$0xf]
        %v868 = vld [vmem:[#allocation7 + $0x118] sm:$0xf]
        %v869 = vld [vmem:[#allocation7 + $0x11c] sm:$0xf]
        %v870 = vld [vmem:[#allocation7 + $0x120] sm:$0xf]
        %v871 = vld [vmem:[#allocation7 + $0x124] sm:$0xf]
        %v872 = vld [vmem:[#allocation7 + $0x128] sm:$0xf]
        %v873 = vld [vmem:[#allocation7 + $0x12c] sm:$0xf]
        %v874 = vld [vmem:[#allocation7 + $0x130] sm:$0xf]
        %v875 = vld [vmem:[#allocation7 + $0x134] sm:$0xf]
        %v876 = vld [vmem:[#allocation7 + $0x138] sm:$0xf]
        %v877 = vld [vmem:[#allocation7 + $0x13c] sm:$0xf]
        %v878 = vld [vmem:[#allocation7 + $0x140] sm:$0xf]
        %v879 = vld [vmem:[#allocation7 + $0x144] sm:$0xf]
        %v880 = vld [vmem:[#allocation7 + $0x148] sm:$0xf]
        %v881 = vld [vmem:[#allocation7 + $0x14c] sm:$0xf]
        %v882 = vld [vmem:[#allocation7 + $0x150] sm:$0xf]
        %v883 = vld [vmem:[#allocation7 + $0x154] sm:$0xf]
        %v884 = vld [vmem:[#allocation7 + $0x158] sm:$0xf]
        %v885 = vld [vmem:[#allocation7 + $0x15c] sm:$0xf]
        %v886 = vld [vmem:[#allocation7 + $0x160] sm:$0xf]
        %v887 = vld [vmem:[#allocation7 + $0x164] sm:$0xf]
        %v888 = vld [vmem:[#allocation7 + $0x168] sm:$0xf]
        %v889 = vld [vmem:[#allocation7 + $0x16c] sm:$0xf]
        %v890 = vld [vmem:[#allocation7 + $0x170] sm:$0xf]
        %v891 = vld [vmem:[#allocation7 + $0x174] sm:$0xf]
        %v892 = vld [vmem:[#allocation7 + $0x178] sm:$0xf]
        %v893 = vld [vmem:[#allocation7 + $0x17c] sm:$0xf]
        %v894 = vld [vmem:[#allocation7 + $0x180] sm:$0xf]
        %v895 = vld [vmem:[#allocation7 + $0x184] sm:$0xf]
        %v896 = vld [vmem:[#allocation7 + $0x188] sm:$0xf]
        %v897 = vld [vmem:[#allocation7 + $0x18c] sm:$0xf]
        %v898 = vld [vmem:[#allocation7 + $0x190] sm:$0xf]
        %v899 = vld [vmem:[#allocation7 + $0x194] sm:$0xf]
        %v900 = vld [vmem:[#allocation7 + $0x198] sm:$0xf]
        %v901 = vld [vmem:[#allocation7 + $0x19c] sm:$0xf]
        %v902 = vld [vmem:[#allocation7 + $0x1a0] sm:$0xf]
        %v903 = vld [vmem:[#allocation7 + $0x1a4] sm:$0xf]
        %v904 = vld [vmem:[#allocation7 + $0x1a8] sm:$0xf]
        %v905 = vld [vmem:[#allocation7 + $0x1ac] sm:$0xf]
        %v906 = vld [vmem:[#allocation7 + $0x1b0] sm:$0xf]
        %v907 = vld [vmem:[#allocation7 + $0x1b4] sm:$0xf]
        %v908 = vld [vmem:[#allocation7 + $0x1b8] sm:$0xf]
        %v909 = vld [vmem:[#allocation7 + $0x1bc] sm:$0xf]
        %v910 = vld [vmem:[#allocation7 + $0x1c0] sm:$0xf]
        %v911 = vld [vmem:[#allocation7 + $0x1c4] sm:$0xf]
        %v912 = vld [vmem:[#allocation7 + $0x1c8] sm:$0xf]
        %v913 = vld [vmem:[#allocation7 + $0x1cc] sm:$0xf]
        %v914 = vld [vmem:[#allocation7 + $0x1d0] sm:$0xf]
        %v915 = vld [vmem:[#allocation7 + $0x1d4] sm:$0xf]
        %v916 = vld [vmem:[#allocation7 + $0x1d8] sm:$0xf]
        %v917 = vld [vmem:[#allocation7 + $0x1dc] sm:$0xf]
        %v918 = vld [vmem:[#allocation7 + $0x1e0] sm:$0xf]
        %v919 = vld [vmem:[#allocation7 + $0x1e4] sm:$0xf]
        %v920 = vld [vmem:[#allocation7 + $0x1e8] sm:$0xf]
        %v921 = vld [vmem:[#allocation7 + $0x1ec] sm:$0xf]
        %v922 = vld [vmem:[#allocation7 + $0x1f0] sm:$0xf]
        %v923 = vld [vmem:[#allocation7 + $0x1f4] sm:$0xf]
        %v924 = vld [vmem:[#allocation7 + $0x1f8] sm:$0xf]
        %v925 = vld [vmem:[#allocation7 + $0x1fc] sm:$0xf]
        %v926 = vld [vmem:[#allocation10] sm:$0xff]
        %v927 = vld [vmem:[#allocation10 + $0x8] sm:$0xff]
        %v928 = vld [vmem:[#allocation10 + $0x10] sm:$0xff]
        %v929 = vld [vmem:[#allocation10 + $0x18] sm:$0xff]
        %v930 = vld [vmem:[#allocation10 + $0x20] sm:$0xff]
        %v931 = vld [vmem:[#allocation10 + $0x28] sm:$0xff]
        %v932 = vld [vmem:[#allocation10 + $0x30] sm:$0xff]
        %v933 = vld [vmem:[#allocation10 + $0x38] sm:$0xff]
        %v934 = vld [vmem:[#allocation10 + $0x40] sm:$0xff]
        %v935 = vld [vmem:[#allocation10 + $0x48] sm:$0xff]
        %v936 = vld [vmem:[#allocation10 + $0x50] sm:$0xff]
        %v937 = vld [vmem:[#allocation10 + $0x58] sm:$0xff]
        %v938 = vld [vmem:[#allocation10 + $0x60] sm:$0xff]
        %v939 = vld [vmem:[#allocation10 + $0x68] sm:$0xff]
        %v940 = vld [vmem:[#allocation10 + $0x70] sm:$0xff]
        %v941 = vld [vmem:[#allocation10 + $0x78] sm:$0xff]
        %v942 = vld [vmem:[#allocation10 + $0x80] sm:$0xff]
        %v943 = vld [vmem:[#allocation10 + $0x88] sm:$0xff]
        %v944 = vld [vmem:[#allocation10 + $0x90] sm:$0xff]
        %v945 = vld [vmem:[#allocation10 + $0x98] sm:$0xff]
        %v946 = vld [vmem:[#allocation10 + $0xa0] sm:$0xff]
        %v947 = vld [vmem:[#allocation10 + $0xa8] sm:$0xff]
        %v948 = vld [vmem:[#allocation10 + $0xb0] sm:$0xff]
        %v949 = vld [vmem:[#allocation10 + $0xb8] sm:$0xff]
        %v950 = vld [vmem:[#allocation10 + $0xc0] sm:$0xff]
        %v951 = vld [vmem:[#allocation10 + $0xc8] sm:$0xff]
        %v952 = vld [vmem:[#allocation10 + $0xd0] sm:$0xff]
        %v953 = vld [vmem:[#allocation10 + $0xd8] sm:$0xff]
        %v954 = vld [vmem:[#allocation10 + $0xe0] sm:$0xff]
        %v955 = vld [vmem:[#allocation10 + $0xe8] sm:$0xff]
        %v956 = vld [vmem:[#allocation10 + $0xf0] sm:$0xff]
        %v957 = vld [vmem:[#allocation10 + $0xf8] sm:$0xff]
        %v958 = vld [vmem:[#allocation10 + $0x100] sm:$0xff]
        %v959 = vld [vmem:[#allocation10 + $0x108] sm:$0xff]
        %v960 = vld [vmem:[#allocation10 + $0x110] sm:$0xff]
        %v961 = vld [vmem:[#allocation10 + $0x118] sm:$0xff]
        %v962 = vld [vmem:[#allocation10 + $0x120] sm:$0xff]
        %v963 = vld [vmem:[#allocation10 + $0x128] sm:$0xff]
        %v964 = vld [vmem:[#allocation10 + $0x130] sm:$0xff]
        %v965 = vld [vmem:[#allocation10 + $0x138] sm:$0xff]
        %v966 = vld [vmem:[#allocation10 + $0x140] sm:$0xff]
        %v967 = vld [vmem:[#allocation10 + $0x148] sm:$0xff]
        %v968 = vld [vmem:[#allocation10 + $0x150] sm:$0xff]
        %v969 = vld [vmem:[#allocation10 + $0x158] sm:$0xff]
        %v970 = vld [vmem:[#allocation10 + $0x160] sm:$0xff]
        %v971 = vld [vmem:[#allocation10 + $0x168] sm:$0xff]
        %v972 = vld [vmem:[#allocation10 + $0x170] sm:$0xff]
        %v973 = vld [vmem:[#allocation10 + $0x178] sm:$0xff]
        %v974 = vld [vmem:[#allocation10 + $0x180] sm:$0xff]
        %v975 = vld [vmem:[#allocation10 + $0x188] sm:$0xff]
        %v976 = vld [vmem:[#allocation10 + $0x190] sm:$0xff]
        %v977 = vld [vmem:[#allocation10 + $0x198] sm:$0xff]
        %v978 = vld [vmem:[#allocation10 + $0x1a0] sm:$0xff]
        %v979 = vld [vmem:[#allocation10 + $0x1a8] sm:$0xff]
        %v980 = vld [vmem:[#allocation10 + $0x1b0] sm:$0xff]
        %v981 = vld [vmem:[#allocation10 + $0x1b8] sm:$0xff]
        %v982 = vld [vmem:[#allocation10 + $0x1c0] sm:$0xff]
        %v983 = vld [vmem:[#allocation10 + $0x1c8] sm:$0xff]
        %v984 = vld [vmem:[#allocation10 + $0x1d0] sm:$0xff]
        %v985 = vld [vmem:[#allocation10 + $0x1d8] sm:$0xff]
        %v986 = vld [vmem:[#allocation10 + $0x1e0] sm:$0xff]
        %v987 = vld [vmem:[#allocation10 + $0x1e8] sm:$0xff]
        %v988 = vld [vmem:[#allocation10 + $0x1f0] sm:$0xff]
        %v989 = vld [vmem:[#allocation10 + $0x1f8] sm:$0xff]
        %v990 = vunpack.c.l.bf16 %v926
        %v991 = vunpack.c.l.bf16 %v930
        %v992 = vunpack.c.l.bf16 %v934
        %v993 = vunpack.c.l.bf16 %v938
        %v994 = vunpack.c.l.bf16 %v942
        %v995 = vunpack.c.l.bf16 %v946
        %v996 = vunpack.c.l.bf16 %v950
        %v997 = vunpack.c.l.bf16 %v954
        %v998 = vunpack.c.l.bf16 %v958
        %v999 = vunpack.c.l.bf16 %v962
        %v1000 = vunpack.c.l.bf16 %v966
        %v1001 = vunpack.c.l.bf16 %v970
        %v1002 = vunpack.c.l.bf16 %v974
        %v1003 = vunpack.c.l.bf16 %v978
        %v1004 = vunpack.c.l.bf16 %v982
        %v1005 = vunpack.c.l.bf16 %v986
        %1006 = vadd.xlane.f32.xlu0 %v990
        %v1007 = vpop.xlane.xlu0 %1006
        %1008 = vadd.xlane.f32.xlu0 %v991
        %v1009 = vpop.xlane.xlu0 %1008
        %1010 = vadd.xlane.f32.xlu0 %v992
        %v1011 = vpop.xlane.xlu0 %1010
        %1012 = vadd.xlane.f32.xlu0 %v993
        %v1013 = vpop.xlane.xlu0 %1012
        %1014 = vadd.xlane.f32.xlu0 %v994
        %v1015 = vpop.xlane.xlu0 %1014
        %1016 = vadd.xlane.f32.xlu0 %v995
        %v1017 = vpop.xlane.xlu0 %1016
        %1018 = vadd.xlane.f32.xlu0 %v996
        %v1019 = vpop.xlane.xlu0 %1018
        %1020 = vadd.xlane.f32.xlu0 %v997
        %v1021 = vpop.xlane.xlu0 %1020
        %1022 = vadd.xlane.f32.xlu0 %v998
        %v1023 = vpop.xlane.xlu0 %1022
        %1024 = vadd.xlane.f32.xlu0 %v999
        %v1025 = vpop.xlane.xlu0 %1024
        %1026 = vadd.xlane.f32.xlu0 %v1000
        %v1027 = vpop.xlane.xlu0 %1026
        %1028 = vadd.xlane.f32.xlu0 %v1001
        %v1029 = vpop.xlane.xlu0 %1028
        %1030 = vadd.xlane.f32.xlu0 %v1002
        %v1031 = vpop.xlane.xlu0 %1030
        %1032 = vadd.xlane.f32.xlu0 %v1003
        %v1033 = vpop.xlane.xlu0 %1032
        %1034 = vadd.xlane.f32.xlu0 %v1004
        %v1035 = vpop.xlane.xlu0 %1034
        %1036 = vadd.xlane.f32.xlu0 %v1005
        %v1037 = vpop.xlane.xlu0 %1036
        %v1038 = vsub.f32 %v1007, 1.0
        %v1039 = vsub.f32 %v1009, 1.0
        %v1040 = vsub.f32 %v1011, 1.0
        %v1041 = vsub.f32 %v1013, 1.0
        %v1042 = vsub.f32 %v1015, 1.0
        %v1043 = vsub.f32 %v1017, 1.0
        %v1044 = vsub.f32 %v1019, 1.0
        %v1045 = vsub.f32 %v1021, 1.0
        %v1046 = vsub.f32 %v1023, 1.0
        %v1047 = vsub.f32 %v1025, 1.0
        %v1048 = vsub.f32 %v1027, 1.0
        %v1049 = vsub.f32 %v1029, 1.0
        %v1050 = vsub.f32 %v1031, 1.0
        %v1051 = vsub.f32 %v1033, 1.0
        %v1052 = vsub.f32 %v1035, 1.0
        %v1053 = vsub.f32 %v1037, 1.0
        %v1054 = vmul.f32 %v1038, 1e+30
        %v1055 = vmul.f32 %v1039, 1e+30
        %v1056 = vmul.f32 %v1040, 1e+30
        %v1057 = vmul.f32 %v1041, 1e+30
        %v1058 = vmul.f32 %v1042, 1e+30
        %v1059 = vmul.f32 %v1043, 1e+30
        %v1060 = vmul.f32 %v1044, 1e+30
        %v1061 = vmul.f32 %v1045, 1e+30
        %v1062 = vmul.f32 %v1046, 1e+30
        %v1063 = vmul.f32 %v1047, 1e+30
        %v1064 = vmul.f32 %v1048, 1e+30
        %v1065 = vmul.f32 %v1049, 1e+30
        %v1066 = vmul.f32 %v1050, 1e+30
        %v1067 = vmul.f32 %v1051, 1e+30
        %v1068 = vmul.f32 %v1052, 1e+30
        %v1069 = vmul.f32 %v1053, 1e+30
        %v1070 = vadd.f32 %v1007, 0.0
        %v1071 = vadd.f32 %v1009, 0.0
        %v1072 = vadd.f32 %v1011, 0.0
        %v1073 = vadd.f32 %v1013, 0.0
        %v1074 = vadd.f32 %v1015, 0.0
        %v1075 = vadd.f32 %v1017, 0.0
        %v1076 = vadd.f32 %v1019, 0.0
        %v1077 = vadd.f32 %v1021, 0.0
        %v1078 = vadd.f32 %v1023, 0.0
        %v1079 = vadd.f32 %v1025, 0.0
        %v1080 = vadd.f32 %v1027, 0.0
        %v1081 = vadd.f32 %v1029, 0.0
        %v1082 = vadd.f32 %v1031, 0.0
        %v1083 = vadd.f32 %v1033, 0.0
        %v1084 = vadd.f32 %v1035, 0.0
        %v1085 = vadd.f32 %v1037, 0.0
        %v1102 = vrot.slane %v926, 4
        %v1103 = vrot.slane %v930, 4
        %v1104 = vrot.slane %v934, 4
        %v1105 = vrot.slane %v938, 4
        %v1106 = vrot.slane %v942, 4
        %v1107 = vrot.slane %v946, 4
        %v1108 = vrot.slane %v950, 4
        %v1109 = vrot.slane %v954, 4
        %v1110 = vrot.slane %v958, 4
        %v1111 = vrot.slane %v962, 4
        %v1112 = vrot.slane %v966, 4
        %v1113 = vrot.slane %v970, 4
        %v1114 = vrot.slane %v974, 4
        %v1115 = vrot.slane %v978, 4
        %v1116 = vrot.slane %v982, 4
        %v1117 = vrot.slane %v986, 4
        %v1134 = vunpack.c.l.bf16 %v1102
        %v1135 = vunpack.c.l.bf16 %v1103
        %v1136 = vunpack.c.l.bf16 %v1104
        %v1137 = vunpack.c.l.bf16 %v1105
        %v1138 = vunpack.c.l.bf16 %v1106
        %v1139 = vunpack.c.l.bf16 %v1107
        %v1140 = vunpack.c.l.bf16 %v1108
        %v1141 = vunpack.c.l.bf16 %v1109
        %v1142 = vunpack.c.l.bf16 %v1110
        %v1143 = vunpack.c.l.bf16 %v1111
        %v1144 = vunpack.c.l.bf16 %v1112
        %v1145 = vunpack.c.l.bf16 %v1113
        %v1146 = vunpack.c.l.bf16 %v1114
        %v1147 = vunpack.c.l.bf16 %v1115
        %v1148 = vunpack.c.l.bf16 %v1116
        %v1149 = vunpack.c.l.bf16 %v1117
        %1150 = vadd.xlane.f32.xlu0 %v1134
        %v1151 = vpop.xlane.xlu0 %1150
        %1152 = vadd.xlane.f32.xlu0 %v1135
        %v1153 = vpop.xlane.xlu0 %1152
        %1154 = vadd.xlane.f32.xlu0 %v1136
        %v1155 = vpop.xlane.xlu0 %1154
        %1156 = vadd.xlane.f32.xlu0 %v1137
        %v1157 = vpop.xlane.xlu0 %1156
        %1158 = vadd.xlane.f32.xlu0 %v1138
        %v1159 = vpop.xlane.xlu0 %1158
        %1160 = vadd.xlane.f32.xlu0 %v1139
        %v1161 = vpop.xlane.xlu0 %1160
        %1162 = vadd.xlane.f32.xlu0 %v1140
        %v1163 = vpop.xlane.xlu0 %1162
        %1164 = vadd.xlane.f32.xlu0 %v1141
        %v1165 = vpop.xlane.xlu0 %1164
        %1166 = vadd.xlane.f32.xlu0 %v1142
        %v1167 = vpop.xlane.xlu0 %1166
        %1168 = vadd.xlane.f32.xlu0 %v1143
        %v1169 = vpop.xlane.xlu0 %1168
        %1170 = vadd.xlane.f32.xlu0 %v1144
        %v1171 = vpop.xlane.xlu0 %1170
        %1172 = vadd.xlane.f32.xlu0 %v1145
        %v1173 = vpop.xlane.xlu0 %1172
        %1174 = vadd.xlane.f32.xlu0 %v1146
        %v1175 = vpop.xlane.xlu0 %1174
        %1176 = vadd.xlane.f32.xlu0 %v1147
        %v1177 = vpop.xlane.xlu0 %1176
        %1178 = vadd.xlane.f32.xlu0 %v1148
        %v1179 = vpop.xlane.xlu0 %1178
        %1180 = vadd.xlane.f32.xlu0 %v1149
        %v1181 = vpop.xlane.xlu0 %1180
        %v1182 = vsub.f32 %v1151, 1.0
        %v1183 = vsub.f32 %v1153, 1.0
        %v1184 = vsub.f32 %v1155, 1.0
        %v1185 = vsub.f32 %v1157, 1.0
        %v1186 = vsub.f32 %v1159, 1.0
        %v1187 = vsub.f32 %v1161, 1.0
        %v1188 = vsub.f32 %v1163, 1.0
        %v1189 = vsub.f32 %v1165, 1.0
        %v1190 = vsub.f32 %v1167, 1.0
        %v1191 = vsub.f32 %v1169, 1.0
        %v1192 = vsub.f32 %v1171, 1.0
        %v1193 = vsub.f32 %v1173, 1.0
        %v1194 = vsub.f32 %v1175, 1.0
        %v1195 = vsub.f32 %v1177, 1.0
        %v1196 = vsub.f32 %v1179, 1.0
        %v1197 = vsub.f32 %v1181, 1.0
        %v1198 = vmul.f32 %v1182, 1e+30
        %v1199 = vmul.f32 %v1183, 1e+30
        %v1200 = vmul.f32 %v1184, 1e+30
        %v1201 = vmul.f32 %v1185, 1e+30
        %v1202 = vmul.f32 %v1186, 1e+30
        %v1203 = vmul.f32 %v1187, 1e+30
        %v1204 = vmul.f32 %v1188, 1e+30
        %v1205 = vmul.f32 %v1189, 1e+30
        %v1206 = vmul.f32 %v1190, 1e+30
        %v1207 = vmul.f32 %v1191, 1e+30
        %v1208 = vmul.f32 %v1192, 1e+30
        %v1209 = vmul.f32 %v1193, 1e+30
        %v1210 = vmul.f32 %v1194, 1e+30
        %v1211 = vmul.f32 %v1195, 1e+30
        %v1212 = vmul.f32 %v1196, 1e+30
        %v1213 = vmul.f32 %v1197, 1e+30
        %v1214 = vadd.f32 %v1070, %v1151
        %v1215 = vadd.f32 %v1071, %v1153
        %v1216 = vadd.f32 %v1072, %v1155
        %v1217 = vadd.f32 %v1073, %v1157
        %v1218 = vadd.f32 %v1074, %v1159
        %v1219 = vadd.f32 %v1075, %v1161
        %v1220 = vadd.f32 %v1076, %v1163
        %v1221 = vadd.f32 %v1077, %v1165
        %v1222 = vadd.f32 %v1078, %v1167
        %v1223 = vadd.f32 %v1079, %v1169
        %v1224 = vadd.f32 %v1080, %v1171
        %v1225 = vadd.f32 %v1081, %v1173
        %v1226 = vadd.f32 %v1082, %v1175
        %v1227 = vadd.f32 %v1083, %v1177
        %v1228 = vadd.f32 %v1084, %v1179
        %v1229 = vadd.f32 %v1085, %v1181
        %v1230 = vunpack.c.l.bf16 %v927
        %v1231 = vunpack.c.l.bf16 %v931
        %v1232 = vunpack.c.l.bf16 %v935
        %v1233 = vunpack.c.l.bf16 %v939
        %v1234 = vunpack.c.l.bf16 %v943
        %v1235 = vunpack.c.l.bf16 %v947
        %v1236 = vunpack.c.l.bf16 %v951
        %v1237 = vunpack.c.l.bf16 %v955
        %v1238 = vunpack.c.l.bf16 %v959
        %v1239 = vunpack.c.l.bf16 %v963
        %v1240 = vunpack.c.l.bf16 %v967
        %v1241 = vunpack.c.l.bf16 %v971
        %v1242 = vunpack.c.l.bf16 %v975
        %v1243 = vunpack.c.l.bf16 %v979
        %v1244 = vunpack.c.l.bf16 %v983
        %v1245 = vunpack.c.l.bf16 %v987
        %1246 = vadd.xlane.f32.xlu0 %v1230
        %v1247 = vpop.xlane.xlu0 %1246
        %1248 = vadd.xlane.f32.xlu0 %v1231
        %v1249 = vpop.xlane.xlu0 %1248
        %1250 = vadd.xlane.f32.xlu0 %v1232
        %v1251 = vpop.xlane.xlu0 %1250
        %1252 = vadd.xlane.f32.xlu0 %v1233
        %v1253 = vpop.xlane.xlu0 %1252
        %1254 = vadd.xlane.f32.xlu0 %v1234
        %v1255 = vpop.xlane.xlu0 %1254
        %1256 = vadd.xlane.f32.xlu0 %v1235
        %v1257 = vpop.xlane.xlu0 %1256
        %1258 = vadd.xlane.f32.xlu0 %v1236
        %v1259 = vpop.xlane.xlu0 %1258
        %1260 = vadd.xlane.f32.xlu0 %v1237
        %v1261 = vpop.xlane.xlu0 %1260
        %1262 = vadd.xlane.f32.xlu0 %v1238
        %v1263 = vpop.xlane.xlu0 %1262
        %1264 = vadd.xlane.f32.xlu0 %v1239
        %v1265 = vpop.xlane.xlu0 %1264
        %1266 = vadd.xlane.f32.xlu0 %v1240
        %v1267 = vpop.xlane.xlu0 %1266
        %1268 = vadd.xlane.f32.xlu0 %v1241
        %v1269 = vpop.xlane.xlu0 %1268
        %1270 = vadd.xlane.f32.xlu0 %v1242
        %v1271 = vpop.xlane.xlu0 %1270
        %1272 = vadd.xlane.f32.xlu0 %v1243
        %v1273 = vpop.xlane.xlu0 %1272
        %1274 = vadd.xlane.f32.xlu0 %v1244
        %v1275 = vpop.xlane.xlu0 %1274
        %1276 = vadd.xlane.f32.xlu0 %v1245
        %v1277 = vpop.xlane.xlu0 %1276
        %v1278 = vsub.f32 %v1247, 1.0
        %v1279 = vsub.f32 %v1249, 1.0
        %v1280 = vsub.f32 %v1251, 1.0
        %v1281 = vsub.f32 %v1253, 1.0
        %v1282 = vsub.f32 %v1255, 1.0
        %v1283 = vsub.f32 %v1257, 1.0
        %v1284 = vsub.f32 %v1259, 1.0
        %v1285 = vsub.f32 %v1261, 1.0
        %v1286 = vsub.f32 %v1263, 1.0
        %v1287 = vsub.f32 %v1265, 1.0
        %v1288 = vsub.f32 %v1267, 1.0
        %v1289 = vsub.f32 %v1269, 1.0
        %v1290 = vsub.f32 %v1271, 1.0
        %v1291 = vsub.f32 %v1273, 1.0
        %v1292 = vsub.f32 %v1275, 1.0
        %v1293 = vsub.f32 %v1277, 1.0
        %v1294 = vmul.f32 %v1278, 1e+30
        %v1295 = vmul.f32 %v1279, 1e+30
        %v1296 = vmul.f32 %v1280, 1e+30
        %v1297 = vmul.f32 %v1281, 1e+30
        %v1298 = vmul.f32 %v1282, 1e+30
        %v1299 = vmul.f32 %v1283, 1e+30
        %v1300 = vmul.f32 %v1284, 1e+30
        %v1301 = vmul.f32 %v1285, 1e+30
        %v1302 = vmul.f32 %v1286, 1e+30
        %v1303 = vmul.f32 %v1287, 1e+30
        %v1304 = vmul.f32 %v1288, 1e+30
        %v1305 = vmul.f32 %v1289, 1e+30
        %v1306 = vmul.f32 %v1290, 1e+30
        %v1307 = vmul.f32 %v1291, 1e+30
        %v1308 = vmul.f32 %v1292, 1e+30
        %v1309 = vmul.f32 %v1293, 1e+30
        %v1310 = vadd.f32 %v1214, %v1247
        %v1311 = vadd.f32 %v1215, %v1249
        %v1312 = vadd.f32 %v1216, %v1251
        %v1313 = vadd.f32 %v1217, %v1253
        %v1314 = vadd.f32 %v1218, %v1255
        %v1315 = vadd.f32 %v1219, %v1257
        %v1316 = vadd.f32 %v1220, %v1259
        %v1317 = vadd.f32 %v1221, %v1261
        %v1318 = vadd.f32 %v1222, %v1263
        %v1319 = vadd.f32 %v1223, %v1265
        %v1320 = vadd.f32 %v1224, %v1267
        %v1321 = vadd.f32 %v1225, %v1269
        %v1322 = vadd.f32 %v1226, %v1271
        %v1323 = vadd.f32 %v1227, %v1273
        %v1324 = vadd.f32 %v1228, %v1275
        %v1325 = vadd.f32 %v1229, %v1277
        %v1342 = vrot.slane %v927, 4
        %v1343 = vrot.slane %v931, 4
        %v1344 = vrot.slane %v935, 4
        %v1345 = vrot.slane %v939, 4
        %v1346 = vrot.slane %v943, 4
        %v1347 = vrot.slane %v947, 4
        %v1348 = vrot.slane %v951, 4
        %v1349 = vrot.slane %v955, 4
        %v1350 = vrot.slane %v959, 4
        %v1351 = vrot.slane %v963, 4
        %v1352 = vrot.slane %v967, 4
        %v1353 = vrot.slane %v971, 4
        %v1354 = vrot.slane %v975, 4
        %v1355 = vrot.slane %v979, 4
        %v1356 = vrot.slane %v983, 4
        %v1357 = vrot.slane %v987, 4
        %v1374 = vunpack.c.l.bf16 %v1342
        %v1375 = vunpack.c.l.bf16 %v1343
        %v1376 = vunpack.c.l.bf16 %v1344
        %v1377 = vunpack.c.l.bf16 %v1345
        %v1378 = vunpack.c.l.bf16 %v1346
        %v1379 = vunpack.c.l.bf16 %v1347
        %v1380 = vunpack.c.l.bf16 %v1348
        %v1381 = vunpack.c.l.bf16 %v1349
        %v1382 = vunpack.c.l.bf16 %v1350
        %v1383 = vunpack.c.l.bf16 %v1351
        %v1384 = vunpack.c.l.bf16 %v1352
        %v1385 = vunpack.c.l.bf16 %v1353
        %v1386 = vunpack.c.l.bf16 %v1354
        %v1387 = vunpack.c.l.bf16 %v1355
        %v1388 = vunpack.c.l.bf16 %v1356
        %v1389 = vunpack.c.l.bf16 %v1357
        %1390 = vadd.xlane.f32.xlu0 %v1374
        %v1391 = vpop.xlane.xlu0 %1390
        %1392 = vadd.xlane.f32.xlu0 %v1375
        %v1393 = vpop.xlane.xlu0 %1392
        %1394 = vadd.xlane.f32.xlu0 %v1376
        %v1395 = vpop.xlane.xlu0 %1394
        %1396 = vadd.xlane.f32.xlu0 %v1377
        %v1397 = vpop.xlane.xlu0 %1396
        %1398 = vadd.xlane.f32.xlu0 %v1378
        %v1399 = vpop.xlane.xlu0 %1398
        %1400 = vadd.xlane.f32.xlu0 %v1379
        %v1401 = vpop.xlane.xlu0 %1400
        %1402 = vadd.xlane.f32.xlu0 %v1380
        %v1403 = vpop.xlane.xlu0 %1402
        %1404 = vadd.xlane.f32.xlu0 %v1381
        %v1405 = vpop.xlane.xlu0 %1404
        %1406 = vadd.xlane.f32.xlu0 %v1382
        %v1407 = vpop.xlane.xlu0 %1406
        %1408 = vadd.xlane.f32.xlu0 %v1383
        %v1409 = vpop.xlane.xlu0 %1408
        %1410 = vadd.xlane.f32.xlu0 %v1384
        %v1411 = vpop.xlane.xlu0 %1410
        %1412 = vadd.xlane.f32.xlu0 %v1385
        %v1413 = vpop.xlane.xlu0 %1412
        %1414 = vadd.xlane.f32.xlu0 %v1386
        %v1415 = vpop.xlane.xlu0 %1414
        %1416 = vadd.xlane.f32.xlu0 %v1387
        %v1417 = vpop.xlane.xlu0 %1416
        %1418 = vadd.xlane.f32.xlu0 %v1388
        %v1419 = vpop.xlane.xlu0 %1418
        %1420 = vadd.xlane.f32.xlu0 %v1389
        %v1421 = vpop.xlane.xlu0 %1420
        %v1422 = vsub.f32 %v1391, 1.0
        %v1423 = vsub.f32 %v1393, 1.0
        %v1424 = vsub.f32 %v1395, 1.0
        %v1425 = vsub.f32 %v1397, 1.0
        %v1426 = vsub.f32 %v1399, 1.0
        %v1427 = vsub.f32 %v1401, 1.0
        %v1428 = vsub.f32 %v1403, 1.0
        %v1429 = vsub.f32 %v1405, 1.0
        %v1430 = vsub.f32 %v1407, 1.0
        %v1431 = vsub.f32 %v1409, 1.0
        %v1432 = vsub.f32 %v1411, 1.0
        %v1433 = vsub.f32 %v1413, 1.0
        %v1434 = vsub.f32 %v1415, 1.0
        %v1435 = vsub.f32 %v1417, 1.0
        %v1436 = vsub.f32 %v1419, 1.0
        %v1437 = vsub.f32 %v1421, 1.0
        %v1438 = vmul.f32 %v1422, 1e+30
        %v1439 = vmul.f32 %v1423, 1e+30
        %v1440 = vmul.f32 %v1424, 1e+30
        %v1441 = vmul.f32 %v1425, 1e+30
        %v1442 = vmul.f32 %v1426, 1e+30
        %v1443 = vmul.f32 %v1427, 1e+30
        %v1444 = vmul.f32 %v1428, 1e+30
        %v1445 = vmul.f32 %v1429, 1e+30
        %v1446 = vmul.f32 %v1430, 1e+30
        %v1447 = vmul.f32 %v1431, 1e+30
        %v1448 = vmul.f32 %v1432, 1e+30
        %v1449 = vmul.f32 %v1433, 1e+30
        %v1450 = vmul.f32 %v1434, 1e+30
        %v1451 = vmul.f32 %v1435, 1e+30
        %v1452 = vmul.f32 %v1436, 1e+30
        %v1453 = vmul.f32 %v1437, 1e+30
        %v1454 = vadd.f32 %v1310, %v1391
        %v1455 = vadd.f32 %v1311, %v1393
        %v1456 = vadd.f32 %v1312, %v1395
        %v1457 = vadd.f32 %v1313, %v1397
        %v1458 = vadd.f32 %v1314, %v1399
        %v1459 = vadd.f32 %v1315, %v1401
        %v1460 = vadd.f32 %v1316, %v1403
        %v1461 = vadd.f32 %v1317, %v1405
        %v1462 = vadd.f32 %v1318, %v1407
        %v1463 = vadd.f32 %v1319, %v1409
        %v1464 = vadd.f32 %v1320, %v1411
        %v1465 = vadd.f32 %v1321, %v1413
        %v1466 = vadd.f32 %v1322, %v1415
        %v1467 = vadd.f32 %v1323, %v1417
        %v1468 = vadd.f32 %v1324, %v1419
        %v1469 = vadd.f32 %v1325, %v1421
        %v1470 = vunpack.c.l.bf16 %v928
        %v1471 = vunpack.c.l.bf16 %v932
        %v1472 = vunpack.c.l.bf16 %v936
        %v1473 = vunpack.c.l.bf16 %v940
        %v1474 = vunpack.c.l.bf16 %v944
        %v1475 = vunpack.c.l.bf16 %v948
        %v1476 = vunpack.c.l.bf16 %v952
        %v1477 = vunpack.c.l.bf16 %v956
        %v1478 = vunpack.c.l.bf16 %v960
        %v1479 = vunpack.c.l.bf16 %v964
        %v1480 = vunpack.c.l.bf16 %v968
        %v1481 = vunpack.c.l.bf16 %v972
        %v1482 = vunpack.c.l.bf16 %v976
        %v1483 = vunpack.c.l.bf16 %v980
        %v1484 = vunpack.c.l.bf16 %v984
        %v1485 = vunpack.c.l.bf16 %v988
        %1486 = vadd.xlane.f32.xlu0 %v1470
        %v1487 = vpop.xlane.xlu0 %1486
        %1488 = vadd.xlane.f32.xlu0 %v1471
        %v1489 = vpop.xlane.xlu0 %1488
        %1490 = vadd.xlane.f32.xlu0 %v1472
        %v1491 = vpop.xlane.xlu0 %1490
        %1492 = vadd.xlane.f32.xlu0 %v1473
        %v1493 = vpop.xlane.xlu0 %1492
        %1494 = vadd.xlane.f32.xlu0 %v1474
        %v1495 = vpop.xlane.xlu0 %1494
        %1496 = vadd.xlane.f32.xlu0 %v1475
        %v1497 = vpop.xlane.xlu0 %1496
        %1498 = vadd.xlane.f32.xlu0 %v1476
        %v1499 = vpop.xlane.xlu0 %1498
        %1500 = vadd.xlane.f32.xlu0 %v1477
        %v1501 = vpop.xlane.xlu0 %1500
        %1502 = vadd.xlane.f32.xlu0 %v1478
        %v1503 = vpop.xlane.xlu0 %1502
        %1504 = vadd.xlane.f32.xlu0 %v1479
        %v1505 = vpop.xlane.xlu0 %1504
        %1506 = vadd.xlane.f32.xlu0 %v1480
        %v1507 = vpop.xlane.xlu0 %1506
        %1508 = vadd.xlane.f32.xlu0 %v1481
        %v1509 = vpop.xlane.xlu0 %1508
        %1510 = vadd.xlane.f32.xlu0 %v1482
        %v1511 = vpop.xlane.xlu0 %1510
        %1512 = vadd.xlane.f32.xlu0 %v1483
        %v1513 = vpop.xlane.xlu0 %1512
        %1514 = vadd.xlane.f32.xlu0 %v1484
        %v1515 = vpop.xlane.xlu0 %1514
        %1516 = vadd.xlane.f32.xlu0 %v1485
        %v1517 = vpop.xlane.xlu0 %1516
        %v1518 = vsub.f32 %v1487, 1.0
        %v1519 = vsub.f32 %v1489, 1.0
        %v1520 = vsub.f32 %v1491, 1.0
        %v1521 = vsub.f32 %v1493, 1.0
        %v1522 = vsub.f32 %v1495, 1.0
        %v1523 = vsub.f32 %v1497, 1.0
        %v1524 = vsub.f32 %v1499, 1.0
        %v1525 = vsub.f32 %v1501, 1.0
        %v1526 = vsub.f32 %v1503, 1.0
        %v1527 = vsub.f32 %v1505, 1.0
        %v1528 = vsub.f32 %v1507, 1.0
        %v1529 = vsub.f32 %v1509, 1.0
        %v1530 = vsub.f32 %v1511, 1.0
        %v1531 = vsub.f32 %v1513, 1.0
        %v1532 = vsub.f32 %v1515, 1.0
        %v1533 = vsub.f32 %v1517, 1.0
        %v1534 = vmul.f32 %v1518, 1e+30
        %v1535 = vmul.f32 %v1519, 1e+30
        %v1536 = vmul.f32 %v1520, 1e+30
        %v1537 = vmul.f32 %v1521, 1e+30
        %v1538 = vmul.f32 %v1522, 1e+30
        %v1539 = vmul.f32 %v1523, 1e+30
        %v1540 = vmul.f32 %v1524, 1e+30
        %v1541 = vmul.f32 %v1525, 1e+30
        %v1542 = vmul.f32 %v1526, 1e+30
        %v1543 = vmul.f32 %v1527, 1e+30
        %v1544 = vmul.f32 %v1528, 1e+30
        %v1545 = vmul.f32 %v1529, 1e+30
        %v1546 = vmul.f32 %v1530, 1e+30
        %v1547 = vmul.f32 %v1531, 1e+30
        %v1548 = vmul.f32 %v1532, 1e+30
        %v1549 = vmul.f32 %v1533, 1e+30
        %v1550 = vadd.f32 %v1454, %v1487
        %v1551 = vadd.f32 %v1455, %v1489
        %v1552 = vadd.f32 %v1456, %v1491
        %v1553 = vadd.f32 %v1457, %v1493
        %v1554 = vadd.f32 %v1458, %v1495
        %v1555 = vadd.f32 %v1459, %v1497
        %v1556 = vadd.f32 %v1460, %v1499
        %v1557 = vadd.f32 %v1461, %v1501
        %v1558 = vadd.f32 %v1462, %v1503
        %v1559 = vadd.f32 %v1463, %v1505
        %v1560 = vadd.f32 %v1464, %v1507
        %v1561 = vadd.f32 %v1465, %v1509
        %v1562 = vadd.f32 %v1466, %v1511
        %v1563 = vadd.f32 %v1467, %v1513
        %v1564 = vadd.f32 %v1468, %v1515
        %v1565 = vadd.f32 %v1469, %v1517
        %v1582 = vrot.slane %v928, 4
        %v1583 = vrot.slane %v932, 4
        %v1584 = vrot.slane %v936, 4
        %v1585 = vrot.slane %v940, 4
        %v1586 = vrot.slane %v944, 4
        %v1587 = vrot.slane %v948, 4
        %v1588 = vrot.slane %v952, 4
        %v1589 = vrot.slane %v956, 4
        %v1590 = vrot.slane %v960, 4
        %v1591 = vrot.slane %v964, 4
        %v1592 = vrot.slane %v968, 4
        %v1593 = vrot.slane %v972, 4
        %v1594 = vrot.slane %v976, 4
        %v1595 = vrot.slane %v980, 4
        %v1596 = vrot.slane %v984, 4
        %v1597 = vrot.slane %v988, 4
        %v1614 = vunpack.c.l.bf16 %v1582
        %v1615 = vunpack.c.l.bf16 %v1583
        %v1616 = vunpack.c.l.bf16 %v1584
        %v1617 = vunpack.c.l.bf16 %v1585
        %v1618 = vunpack.c.l.bf16 %v1586
        %v1619 = vunpack.c.l.bf16 %v1587
        %v1620 = vunpack.c.l.bf16 %v1588
        %v1621 = vunpack.c.l.bf16 %v1589
        %v1622 = vunpack.c.l.bf16 %v1590
        %v1623 = vunpack.c.l.bf16 %v1591
        %v1624 = vunpack.c.l.bf16 %v1592
        %v1625 = vunpack.c.l.bf16 %v1593
        %v1626 = vunpack.c.l.bf16 %v1594
        %v1627 = vunpack.c.l.bf16 %v1595
        %v1628 = vunpack.c.l.bf16 %v1596
        %v1629 = vunpack.c.l.bf16 %v1597
        %1630 = vadd.xlane.f32.xlu0 %v1614
        %v1631 = vpop.xlane.xlu0 %1630
        %1632 = vadd.xlane.f32.xlu0 %v1615
        %v1633 = vpop.xlane.xlu0 %1632
        %1634 = vadd.xlane.f32.xlu0 %v1616
        %v1635 = vpop.xlane.xlu0 %1634
        %1636 = vadd.xlane.f32.xlu0 %v1617
        %v1637 = vpop.xlane.xlu0 %1636
        %1638 = vadd.xlane.f32.xlu0 %v1618
        %v1639 = vpop.xlane.xlu0 %1638
        %1640 = vadd.xlane.f32.xlu0 %v1619
        %v1641 = vpop.xlane.xlu0 %1640
        %1642 = vadd.xlane.f32.xlu0 %v1620
        %v1643 = vpop.xlane.xlu0 %1642
        %1644 = vadd.xlane.f32.xlu0 %v1621
        %v1645 = vpop.xlane.xlu0 %1644
        %1646 = vadd.xlane.f32.xlu0 %v1622
        %v1647 = vpop.xlane.xlu0 %1646
        %1648 = vadd.xlane.f32.xlu0 %v1623
        %v1649 = vpop.xlane.xlu0 %1648
        %1650 = vadd.xlane.f32.xlu0 %v1624
        %v1651 = vpop.xlane.xlu0 %1650
        %1652 = vadd.xlane.f32.xlu0 %v1625
        %v1653 = vpop.xlane.xlu0 %1652
        %1654 = vadd.xlane.f32.xlu0 %v1626
        %v1655 = vpop.xlane.xlu0 %1654
        %1656 = vadd.xlane.f32.xlu0 %v1627
        %v1657 = vpop.xlane.xlu0 %1656
        %1658 = vadd.xlane.f32.xlu0 %v1628
        %v1659 = vpop.xlane.xlu0 %1658
        %1660 = vadd.xlane.f32.xlu0 %v1629
        %v1661 = vpop.xlane.xlu0 %1660
        %v1662 = vsub.f32 %v1631, 1.0
        %v1663 = vsub.f32 %v1633, 1.0
        %v1664 = vsub.f32 %v1635, 1.0
        %v1665 = vsub.f32 %v1637, 1.0
        %v1666 = vsub.f32 %v1639, 1.0
        %v1667 = vsub.f32 %v1641, 1.0
        %v1668 = vsub.f32 %v1643, 1.0
        %v1669 = vsub.f32 %v1645, 1.0
        %v1670 = vsub.f32 %v1647, 1.0
        %v1671 = vsub.f32 %v1649, 1.0
        %v1672 = vsub.f32 %v1651, 1.0
        %v1673 = vsub.f32 %v1653, 1.0
        %v1674 = vsub.f32 %v1655, 1.0
        %v1675 = vsub.f32 %v1657, 1.0
        %v1676 = vsub.f32 %v1659, 1.0
        %v1677 = vsub.f32 %v1661, 1.0
        %v1678 = vmul.f32 %v1662, 1e+30
        %v1679 = vmul.f32 %v1663, 1e+30
        %v1680 = vmul.f32 %v1664, 1e+30
        %v1681 = vmul.f32 %v1665, 1e+30
        %v1682 = vmul.f32 %v1666, 1e+30
        %v1683 = vmul.f32 %v1667, 1e+30
        %v1684 = vmul.f32 %v1668, 1e+30
        %v1685 = vmul.f32 %v1669, 1e+30
        %v1686 = vmul.f32 %v1670, 1e+30
        %v1687 = vmul.f32 %v1671, 1e+30
        %v1688 = vmul.f32 %v1672, 1e+30
        %v1689 = vmul.f32 %v1673, 1e+30
        %v1690 = vmul.f32 %v1674, 1e+30
        %v1691 = vmul.f32 %v1675, 1e+30
        %v1692 = vmul.f32 %v1676, 1e+30
        %v1693 = vmul.f32 %v1677, 1e+30
        %v1694 = vadd.f32 %v1550, %v1631
        %v1695 = vadd.f32 %v1551, %v1633
        %v1696 = vadd.f32 %v1552, %v1635
        %v1697 = vadd.f32 %v1553, %v1637
        %v1698 = vadd.f32 %v1554, %v1639
        %v1699 = vadd.f32 %v1555, %v1641
        %v1700 = vadd.f32 %v1556, %v1643
        %v1701 = vadd.f32 %v1557, %v1645
        %v1702 = vadd.f32 %v1558, %v1647
        %v1703 = vadd.f32 %v1559, %v1649
        %v1704 = vadd.f32 %v1560, %v1651
        %v1705 = vadd.f32 %v1561, %v1653
        %v1706 = vadd.f32 %v1562, %v1655
        %v1707 = vadd.f32 %v1563, %v1657
        %v1708 = vadd.f32 %v1564, %v1659
        %v1709 = vadd.f32 %v1565, %v1661
        %v1710 = vunpack.c.l.bf16 %v929
        %v1711 = vunpack.c.l.bf16 %v933
        %v1712 = vunpack.c.l.bf16 %v937
        %v1713 = vunpack.c.l.bf16 %v941
        %v1714 = vunpack.c.l.bf16 %v945
        %v1715 = vunpack.c.l.bf16 %v949
        %v1716 = vunpack.c.l.bf16 %v953
        %v1717 = vunpack.c.l.bf16 %v957
        %v1718 = vunpack.c.l.bf16 %v961
        %v1719 = vunpack.c.l.bf16 %v965
        %v1720 = vunpack.c.l.bf16 %v969
        %v1721 = vunpack.c.l.bf16 %v973
        %v1722 = vunpack.c.l.bf16 %v977
        %v1723 = vunpack.c.l.bf16 %v981
        %v1724 = vunpack.c.l.bf16 %v985
        %v1725 = vunpack.c.l.bf16 %v989
        %1726 = vadd.xlane.f32.xlu0 %v1710
        %v1727 = vpop.xlane.xlu0 %1726
        %1728 = vadd.xlane.f32.xlu0 %v1711
        %v1729 = vpop.xlane.xlu0 %1728
        %1730 = vadd.xlane.f32.xlu0 %v1712
        %v1731 = vpop.xlane.xlu0 %1730
        %1732 = vadd.xlane.f32.xlu0 %v1713
        %v1733 = vpop.xlane.xlu0 %1732
        %1734 = vadd.xlane.f32.xlu0 %v1714
        %v1735 = vpop.xlane.xlu0 %1734
        %1736 = vadd.xlane.f32.xlu0 %v1715
        %v1737 = vpop.xlane.xlu0 %1736
        %1738 = vadd.xlane.f32.xlu0 %v1716
        %v1739 = vpop.xlane.xlu0 %1738
        %1740 = vadd.xlane.f32.xlu0 %v1717
        %v1741 = vpop.xlane.xlu0 %1740
        %1742 = vadd.xlane.f32.xlu0 %v1718
        %v1743 = vpop.xlane.xlu0 %1742
        %1744 = vadd.xlane.f32.xlu0 %v1719
        %v1745 = vpop.xlane.xlu0 %1744
        %1746 = vadd.xlane.f32.xlu0 %v1720
        %v1747 = vpop.xlane.xlu0 %1746
        %1748 = vadd.xlane.f32.xlu0 %v1721
        %v1749 = vpop.xlane.xlu0 %1748
        %1750 = vadd.xlane.f32.xlu0 %v1722
        %v1751 = vpop.xlane.xlu0 %1750
        %1752 = vadd.xlane.f32.xlu0 %v1723
        %v1753 = vpop.xlane.xlu0 %1752
        %1754 = vadd.xlane.f32.xlu0 %v1724
        %v1755 = vpop.xlane.xlu0 %1754
        %1756 = vadd.xlane.f32.xlu0 %v1725
        %v1757 = vpop.xlane.xlu0 %1756
        %v1758 = vsub.f32 %v1727, 1.0
        %v1759 = vsub.f32 %v1729, 1.0
        %v1760 = vsub.f32 %v1731, 1.0
        %v1761 = vsub.f32 %v1733, 1.0
        %v1762 = vsub.f32 %v1735, 1.0
        %v1763 = vsub.f32 %v1737, 1.0
        %v1764 = vsub.f32 %v1739, 1.0
        %v1765 = vsub.f32 %v1741, 1.0
        %v1766 = vsub.f32 %v1743, 1.0
        %v1767 = vsub.f32 %v1745, 1.0
        %v1768 = vsub.f32 %v1747, 1.0
        %v1769 = vsub.f32 %v1749, 1.0
        %v1770 = vsub.f32 %v1751, 1.0
        %v1771 = vsub.f32 %v1753, 1.0
        %v1772 = vsub.f32 %v1755, 1.0
        %v1773 = vsub.f32 %v1757, 1.0
        %v1774 = vmul.f32 %v1758, 1e+30
        %v1775 = vmul.f32 %v1759, 1e+30
        %v1776 = vmul.f32 %v1760, 1e+30
        %v1777 = vmul.f32 %v1761, 1e+30
        %v1778 = vmul.f32 %v1762, 1e+30
        %v1779 = vmul.f32 %v1763, 1e+30
        %v1780 = vmul.f32 %v1764, 1e+30
        %v1781 = vmul.f32 %v1765, 1e+30
        %v1782 = vmul.f32 %v1766, 1e+30
        %v1783 = vmul.f32 %v1767, 1e+30
        %v1784 = vmul.f32 %v1768, 1e+30
        %v1785 = vmul.f32 %v1769, 1e+30
        %v1786 = vmul.f32 %v1770, 1e+30
        %v1787 = vmul.f32 %v1771, 1e+30
        %v1788 = vmul.f32 %v1772, 1e+30
        %v1789 = vmul.f32 %v1773, 1e+30
        %v1790 = vadd.f32 %v1694, %v1727
        %v1791 = vadd.f32 %v1695, %v1729
        %v1792 = vadd.f32 %v1696, %v1731
        %v1793 = vadd.f32 %v1697, %v1733
        %v1794 = vadd.f32 %v1698, %v1735
        %v1795 = vadd.f32 %v1699, %v1737
        %v1796 = vadd.f32 %v1700, %v1739
        %v1797 = vadd.f32 %v1701, %v1741
        %v1798 = vadd.f32 %v1702, %v1743
        %v1799 = vadd.f32 %v1703, %v1745
        %v1800 = vadd.f32 %v1704, %v1747
        %v1801 = vadd.f32 %v1705, %v1749
        %v1802 = vadd.f32 %v1706, %v1751
        %v1803 = vadd.f32 %v1707, %v1753
        %v1804 = vadd.f32 %v1708, %v1755
        %v1805 = vadd.f32 %v1709, %v1757
        %v1822 = vrot.slane %v929, 4
        %v1823 = vrot.slane %v933, 4
        %v1824 = vrot.slane %v937, 4
        %v1825 = vrot.slane %v941, 4
        %v1826 = vrot.slane %v945, 4
        %v1827 = vrot.slane %v949, 4
        %v1828 = vrot.slane %v953, 4
        %v1829 = vrot.slane %v957, 4
        %v1830 = vrot.slane %v961, 4
        %v1831 = vrot.slane %v965, 4
        %v1832 = vrot.slane %v969, 4
        %v1833 = vrot.slane %v973, 4
        %v1834 = vrot.slane %v977, 4
        %v1835 = vrot.slane %v981, 4
        %v1836 = vrot.slane %v985, 4
        %v1837 = vrot.slane %v989, 4
        %v1854 = vunpack.c.l.bf16 %v1822
        %v1855 = vunpack.c.l.bf16 %v1823
        %v1856 = vunpack.c.l.bf16 %v1824
        %v1857 = vunpack.c.l.bf16 %v1825
        %v1858 = vunpack.c.l.bf16 %v1826
        %v1859 = vunpack.c.l.bf16 %v1827
        %v1860 = vunpack.c.l.bf16 %v1828
        %v1861 = vunpack.c.l.bf16 %v1829
        %v1862 = vunpack.c.l.bf16 %v1830
        %v1863 = vunpack.c.l.bf16 %v1831
        %v1864 = vunpack.c.l.bf16 %v1832
        %v1865 = vunpack.c.l.bf16 %v1833
        %v1866 = vunpack.c.l.bf16 %v1834
        %v1867 = vunpack.c.l.bf16 %v1835
        %v1868 = vunpack.c.l.bf16 %v1836
        %v1869 = vunpack.c.l.bf16 %v1837
        %1870 = vadd.xlane.f32.xlu0 %v1854
        %v1871 = vpop.xlane.xlu0 %1870
        %1872 = vadd.xlane.f32.xlu0 %v1855
        %v1873 = vpop.xlane.xlu0 %1872
        %1874 = vadd.xlane.f32.xlu0 %v1856
        %v1875 = vpop.xlane.xlu0 %1874
        %1876 = vadd.xlane.f32.xlu0 %v1857
        %v1877 = vpop.xlane.xlu0 %1876
        %1878 = vadd.xlane.f32.xlu0 %v1858
        %v1879 = vpop.xlane.xlu0 %1878
        %1880 = vadd.xlane.f32.xlu0 %v1859
        %v1881 = vpop.xlane.xlu0 %1880
        %1882 = vadd.xlane.f32.xlu0 %v1860
        %v1883 = vpop.xlane.xlu0 %1882
        %1884 = vadd.xlane.f32.xlu0 %v1861
        %v1885 = vpop.xlane.xlu0 %1884
        %1886 = vadd.xlane.f32.xlu0 %v1862
        %v1887 = vpop.xlane.xlu0 %1886
        %1888 = vadd.xlane.f32.xlu0 %v1863
        %v1889 = vpop.xlane.xlu0 %1888
        %1890 = vadd.xlane.f32.xlu0 %v1864
        %v1891 = vpop.xlane.xlu0 %1890
        %1892 = vadd.xlane.f32.xlu0 %v1865
        %v1893 = vpop.xlane.xlu0 %1892
        %1894 = vadd.xlane.f32.xlu0 %v1866
        %v1895 = vpop.xlane.xlu0 %1894
        %1896 = vadd.xlane.f32.xlu0 %v1867
        %v1897 = vpop.xlane.xlu0 %1896
        %1898 = vadd.xlane.f32.xlu0 %v1868
        %v1899 = vpop.xlane.xlu0 %1898
        %1900 = vadd.xlane.f32.xlu0 %v1869
        %v1901 = vpop.xlane.xlu0 %1900
        %v1902 = vsub.f32 %v1871, 1.0
        %v1903 = vsub.f32 %v1873, 1.0
        %v1904 = vsub.f32 %v1875, 1.0
        %v1905 = vsub.f32 %v1877, 1.0
        %v1906 = vsub.f32 %v1879, 1.0
        %v1907 = vsub.f32 %v1881, 1.0
        %v1908 = vsub.f32 %v1883, 1.0
        %v1909 = vsub.f32 %v1885, 1.0
        %v1910 = vsub.f32 %v1887, 1.0
        %v1911 = vsub.f32 %v1889, 1.0
        %v1912 = vsub.f32 %v1891, 1.0
        %v1913 = vsub.f32 %v1893, 1.0
        %v1914 = vsub.f32 %v1895, 1.0
        %v1915 = vsub.f32 %v1897, 1.0
        %v1916 = vsub.f32 %v1899, 1.0
        %v1917 = vsub.f32 %v1901, 1.0
        %v1918 = vmul.f32 %v1902, 1e+30
        %v1919 = vmul.f32 %v1903, 1e+30
        %v1920 = vmul.f32 %v1904, 1e+30
        %v1921 = vmul.f32 %v1905, 1e+30
        %v1922 = vmul.f32 %v1906, 1e+30
        %v1923 = vmul.f32 %v1907, 1e+30
        %v1924 = vmul.f32 %v1908, 1e+30
        %v1925 = vmul.f32 %v1909, 1e+30
        %v1926 = vmul.f32 %v1910, 1e+30
        %v1927 = vmul.f32 %v1911, 1e+30
        %v1928 = vmul.f32 %v1912, 1e+30
        %v1929 = vmul.f32 %v1913, 1e+30
        %v1930 = vmul.f32 %v1914, 1e+30
        %v1931 = vmul.f32 %v1915, 1e+30
        %v1932 = vmul.f32 %v1916, 1e+30
        %v1933 = vmul.f32 %v1917, 1e+30
        %v1934 = vadd.f32 %v1790, %v1871
        %v1935 = vadd.f32 %v1791, %v1873
        %v1936 = vadd.f32 %v1792, %v1875
        %v1937 = vadd.f32 %v1793, %v1877
        %v1938 = vadd.f32 %v1794, %v1879
        %v1939 = vadd.f32 %v1795, %v1881
        %v1940 = vadd.f32 %v1796, %v1883
        %v1941 = vadd.f32 %v1797, %v1885
        %v1942 = vadd.f32 %v1798, %v1887
        %v1943 = vadd.f32 %v1799, %v1889
        %v1944 = vadd.f32 %v1800, %v1891
        %v1945 = vadd.f32 %v1801, %v1893
        %v1946 = vadd.f32 %v1802, %v1895
        %v1947 = vadd.f32 %v1803, %v1897
        %v1948 = vadd.f32 %v1804, %v1899
        %v1949 = vadd.f32 %v1805, %v1901
        %vm1950 = vcmp.gt.f32.partialorder %v1934, 0.0
        %vm1951 = vcmp.gt.f32.partialorder %v1935, 0.0
        %vm1952 = vcmp.gt.f32.partialorder %v1936, 0.0
        %vm1953 = vcmp.gt.f32.partialorder %v1937, 0.0
        %vm1954 = vcmp.gt.f32.partialorder %v1938, 0.0
        %vm1955 = vcmp.gt.f32.partialorder %v1939, 0.0
        %vm1956 = vcmp.gt.f32.partialorder %v1940, 0.0
        %vm1957 = vcmp.gt.f32.partialorder %v1941, 0.0
        %vm1958 = vcmp.gt.f32.partialorder %v1942, 0.0
        %vm1959 = vcmp.gt.f32.partialorder %v1943, 0.0
        %vm1960 = vcmp.gt.f32.partialorder %v1944, 0.0
        %vm1961 = vcmp.gt.f32.partialorder %v1945, 0.0
        %vm1962 = vcmp.gt.f32.partialorder %v1946, 0.0
        %vm1963 = vcmp.gt.f32.partialorder %v1947, 0.0
        %vm1964 = vcmp.gt.f32.partialorder %v1948, 0.0
        %vm1965 = vcmp.gt.f32.partialorder %v1949, 0.0
        %v1966 = vsel %vm1950, 1, 0
        %v1967 = vsel %vm1951, 1, 0
        %v1968 = vsel %vm1952, 1, 0
        %v1969 = vsel %vm1953, 1, 0
        %v1970 = vsel %vm1954, 1, 0
        %v1971 = vsel %vm1955, 1, 0
        %v1972 = vsel %vm1956, 1, 0
        %v1973 = vsel %vm1957, 1, 0
        %v1974 = vsel %vm1958, 1, 0
        %v1975 = vsel %vm1959, 1, 0
        %v1976 = vsel %vm1960, 1, 0
        %v1977 = vsel %vm1961, 1, 0
        %v1978 = vsel %vm1962, 1, 0
        %v1979 = vsel %vm1963, 1, 0
        %v1980 = vsel %vm1964, 1, 0
        %v1981 = vsel %vm1965, 1, 0
        %v1982 = vcvt.s32.f32 %v1966
        %v1983 = vcvt.s32.f32 %v1967
        %v1984 = vcvt.s32.f32 %v1968
        %v1985 = vcvt.s32.f32 %v1969
        %v1986 = vcvt.s32.f32 %v1970
        %v1987 = vcvt.s32.f32 %v1971
        %v1988 = vcvt.s32.f32 %v1972
        %v1989 = vcvt.s32.f32 %v1973
        %v1990 = vcvt.s32.f32 %v1974
        %v1991 = vcvt.s32.f32 %v1975
        %v1992 = vcvt.s32.f32 %v1976
        %v1993 = vcvt.s32.f32 %v1977
        %v1994 = vcvt.s32.f32 %v1978
        %v1995 = vcvt.s32.f32 %v1979
        %v1996 = vcvt.s32.f32 %v1980
        %v1997 = vcvt.s32.f32 %v1981
        %v1998 = vmax.f32 %v1934, 1.0
        %v1999 = vmax.f32 %v1935, 1.0
        %v2000 = vmax.f32 %v1936, 1.0
        %v2001 = vmax.f32 %v1937, 1.0
        %v2002 = vmax.f32 %v1938, 1.0
        %v2003 = vmax.f32 %v1939, 1.0
        %v2004 = vmax.f32 %v1940, 1.0
        %v2005 = vmax.f32 %v1941, 1.0
        %v2006 = vmax.f32 %v1942, 1.0
        %v2007 = vmax.f32 %v1943, 1.0
        %v2008 = vmax.f32 %v1944, 1.0
        %v2009 = vmax.f32 %v1945, 1.0
        %v2010 = vmax.f32 %v1946, 1.0
        %v2011 = vmax.f32 %v1947, 1.0
        %v2012 = vmax.f32 %v1948, 1.0
        %v2013 = vmax.f32 %v1949, 1.0
        %v2014 = vrcp.pop %v1998
        %v2015 = vrcp.pop %v1999
        %v2016 = vrcp.pop %v2000
        %v2017 = vrcp.pop %v2001
        %v2018 = vrcp.pop %v2002
        %v2019 = vrcp.pop %v2003
        %v2020 = vrcp.pop %v2004
        %v2021 = vrcp.pop %v2005
        %v2022 = vrcp.pop %v2006
        %v2023 = vrcp.pop %v2007
        %v2024 = vrcp.pop %v2008
        %v2025 = vrcp.pop %v2009
        %v2026 = vrcp.pop %v2010
        %v2027 = vrcp.pop %v2011
        %v2028 = vrcp.pop %v2012
        %v2029 = vrcp.pop %v2013
        %v2030 = vadd.f32 %v1998, 1.0
        %v2031 = vadd.f32 %v1999, 1.0
        %v2032 = vadd.f32 %v2000, 1.0
        %v2033 = vadd.f32 %v2001, 1.0
        %v2034 = vadd.f32 %v2002, 1.0
        %v2035 = vadd.f32 %v2003, 1.0
        %v2036 = vadd.f32 %v2004, 1.0
        %v2037 = vadd.f32 %v2005, 1.0
        %v2038 = vadd.f32 %v2006, 1.0
        %v2039 = vadd.f32 %v2007, 1.0
        %v2040 = vadd.f32 %v2008, 1.0
        %v2041 = vadd.f32 %v2009, 1.0
        %v2042 = vadd.f32 %v2010, 1.0
        %v2043 = vadd.f32 %v2011, 1.0
        %v2044 = vadd.f32 %v2012, 1.0
        %v2045 = vadd.f32 %v2013, 1.0
        %v2046 = vlog2.pop %v2030
        %v2047 = vmul.f32 %v2046, 0.6931472
        %v2048 = vlog2.pop %v2031
        %v2049 = vmul.f32 %v2048, 0.6931472
        %v2050 = vlog2.pop %v2032
        %v2051 = vmul.f32 %v2050, 0.6931472
        %v2052 = vlog2.pop %v2033
        %v2053 = vmul.f32 %v2052, 0.6931472
        %v2054 = vlog2.pop %v2034
        %v2055 = vmul.f32 %v2054, 0.6931472
        %v2056 = vlog2.pop %v2035
        %v2057 = vmul.f32 %v2056, 0.6931472
        %v2058 = vlog2.pop %v2036
        %v2059 = vmul.f32 %v2058, 0.6931472
        %v2060 = vlog2.pop %v2037
        %v2061 = vmul.f32 %v2060, 0.6931472
        %v2062 = vlog2.pop %v2038
        %v2063 = vmul.f32 %v2062, 0.6931472
        %v2064 = vlog2.pop %v2039
        %v2065 = vmul.f32 %v2064, 0.6931472
        %v2066 = vlog2.pop %v2040
        %v2067 = vmul.f32 %v2066, 0.6931472
        %v2068 = vlog2.pop %v2041
        %v2069 = vmul.f32 %v2068, 0.6931472
        %v2070 = vlog2.pop %v2042
        %v2071 = vmul.f32 %v2070, 0.6931472
        %v2072 = vlog2.pop %v2043
        %v2073 = vmul.f32 %v2072, 0.6931472
        %v2074 = vlog2.pop %v2044
        %v2075 = vmul.f32 %v2074, 0.6931472
        %v2076 = vlog2.pop %v2045
        %v2077 = vmul.f32 %v2076, 0.6931472
        %v2078 = vmul.f32 %v2047, 0.7213475
        %v2079 = vmul.f32 %v2049, 0.7213475
        %v2080 = vmul.f32 %v2051, 0.7213475
        %v2081 = vmul.f32 %v2053, 0.7213475
        %v2082 = vmul.f32 %v2055, 0.7213475
        %v2083 = vmul.f32 %v2057, 0.7213475
        %v2084 = vmul.f32 %v2059, 0.7213475
        %v2085 = vmul.f32 %v2061, 0.7213475
        %v2086 = vmul.f32 %v2063, 0.7213475
        %v2087 = vmul.f32 %v2065, 0.7213475
        %v2088 = vmul.f32 %v2067, 0.7213475
        %v2089 = vmul.f32 %v2069, 0.7213475
        %v2090 = vmul.f32 %v2071, 0.7213475
        %v2091 = vmul.f32 %v2073, 0.7213475
        %v2092 = vmul.f32 %v2075, 0.7213475
        %v2093 = vmul.f32 %v2077, 0.7213475
        %v2094 = vrcp.pop %v2047
        %v2095 = vrcp.pop %v2049
        %v2096 = vrcp.pop %v2051
        %v2097 = vrcp.pop %v2053
        %v2098 = vrcp.pop %v2055
        %v2099 = vrcp.pop %v2057
        %v2100 = vrcp.pop %v2059
        %v2101 = vrcp.pop %v2061
        %v2102 = vrcp.pop %v2063
        %v2103 = vrcp.pop %v2065
        %v2104 = vrcp.pop %v2067
        %v2105 = vrcp.pop %v2069
        %v2106 = vrcp.pop %v2071
        %v2107 = vrcp.pop %v2073
        %v2108 = vrcp.pop %v2075
        %v2109 = vrcp.pop %v2077
        %v2110 = vmul.f32 %v2094, 1.3862944
        %v2111 = vmul.f32 %v2095, 1.3862944
        %v2112 = vmul.f32 %v2096, 1.3862944
        %v2113 = vmul.f32 %v2097, 1.3862944
        %v2114 = vmul.f32 %v2098, 1.3862944
        %v2115 = vmul.f32 %v2099, 1.3862944
        %v2116 = vmul.f32 %v2100, 1.3862944
        %v2117 = vmul.f32 %v2101, 1.3862944
        %v2118 = vmul.f32 %v2102, 1.3862944
        %v2119 = vmul.f32 %v2103, 1.3862944
        %v2120 = vmul.f32 %v2104, 1.3862944
        %v2121 = vmul.f32 %v2105, 1.3862944
        %v2122 = vmul.f32 %v2106, 1.3862944
        %v2123 = vmul.f32 %v2107, 1.3862944
        %v2124 = vmul.f32 %v2108, 1.3862944
        %v2125 = vmul.f32 %v2109, 1.3862944
        %v2126 = vpack.c.bf16 %v783, %v782
        %v2127 = vpack.c.bf16 %v785, %v784
        %v2128 = vpack.c.bf16 %v787, %v786
        %v2129 = vpack.c.bf16 %v789, %v788
        %v2130 = vpack.c.bf16 %v791, %v790
        %v2131 = vpack.c.bf16 %v793, %v792
        %v2132 = vpack.c.bf16 %v795, %v794
        %v2133 = vpack.c.bf16 %v797, %v796
        %v2134 = vld [vmem:[#allocation9] sm:$0xf]
        %v2135 = vld [vmem:[#allocation9 + $0x4] sm:$0xf]
        %v2136 = vld [vmem:[#allocation9 + $0x8] sm:$0xf]
        %v2137 = vld [vmem:[#allocation9 + $0xc] sm:$0xf]
        %v2138 = vld [vmem:[#allocation9 + $0x10] sm:$0xf]
        %v2139 = vld [vmem:[#allocation9 + $0x14] sm:$0xf]
        %v2140 = vld [vmem:[#allocation9 + $0x18] sm:$0xf]
        %v2141 = vld [vmem:[#allocation9 + $0x1c] sm:$0xf]
        %v2142 = vld [vmem:[#allocation9 + $0x20] sm:$0xf]
        %v2143 = vld [vmem:[#allocation9 + $0x24] sm:$0xf]
        %v2144 = vld [vmem:[#allocation9 + $0x28] sm:$0xf]
        %v2145 = vld [vmem:[#allocation9 + $0x2c] sm:$0xf]
        %v2146 = vld [vmem:[#allocation9 + $0x30] sm:$0xf]
        %v2147 = vld [vmem:[#allocation9 + $0x34] sm:$0xf]
        %v2148 = vld [vmem:[#allocation9 + $0x38] sm:$0xf]
        %v2149 = vld [vmem:[#allocation9 + $0x3c] sm:$0xf]
        %v2150 = vld [vmem:[#allocation9 + $0x40] sm:$0xf]
        %v2151 = vld [vmem:[#allocation9 + $0x44] sm:$0xf]
        %v2152 = vld [vmem:[#allocation9 + $0x48] sm:$0xf]
        %v2153 = vld [vmem:[#allocation9 + $0x4c] sm:$0xf]
        %v2154 = vld [vmem:[#allocation9 + $0x50] sm:$0xf]
        %v2155 = vld [vmem:[#allocation9 + $0x54] sm:$0xf]
        %v2156 = vld [vmem:[#allocation9 + $0x58] sm:$0xf]
        %v2157 = vld [vmem:[#allocation9 + $0x5c] sm:$0xf]
        %v2158 = vld [vmem:[#allocation9 + $0x60] sm:$0xf]
        %v2159 = vld [vmem:[#allocation9 + $0x64] sm:$0xf]
        %v2160 = vld [vmem:[#allocation9 + $0x68] sm:$0xf]
        %v2161 = vld [vmem:[#allocation9 + $0x6c] sm:$0xf]
        %v2162 = vld [vmem:[#allocation9 + $0x70] sm:$0xf]
        %v2163 = vld [vmem:[#allocation9 + $0x74] sm:$0xf]
        %v2164 = vld [vmem:[#allocation9 + $0x78] sm:$0xf]
        %v2165 = vld [vmem:[#allocation9 + $0x7c] sm:$0xf]
        %v2166 = vld [vmem:[#allocation9 + $0x80] sm:$0xf]
        %v2167 = vld [vmem:[#allocation9 + $0x84] sm:$0xf]
        %v2168 = vld [vmem:[#allocation9 + $0x88] sm:$0xf]
        %v2169 = vld [vmem:[#allocation9 + $0x8c] sm:$0xf]
        %v2170 = vld [vmem:[#allocation9 + $0x90] sm:$0xf]
        %v2171 = vld [vmem:[#allocation9 + $0x94] sm:$0xf]
        %v2172 = vld [vmem:[#allocation9 + $0x98] sm:$0xf]
        %v2173 = vld [vmem:[#allocation9 + $0x9c] sm:$0xf]
        %v2174 = vld [vmem:[#allocation9 + $0xa0] sm:$0xf]
        %v2175 = vld [vmem:[#allocation9 + $0xa4] sm:$0xf]
        %v2176 = vld [vmem:[#allocation9 + $0xa8] sm:$0xf]
        %v2177 = vld [vmem:[#allocation9 + $0xac] sm:$0xf]
        %v2178 = vld [vmem:[#allocation9 + $0xb0] sm:$0xf]
        %v2179 = vld [vmem:[#allocation9 + $0xb4] sm:$0xf]
        %v2180 = vld [vmem:[#allocation9 + $0xb8] sm:$0xf]
        %v2181 = vld [vmem:[#allocation9 + $0xbc] sm:$0xf]
        %v2182 = vld [vmem:[#allocation9 + $0xc0] sm:$0xf]
        %v2183 = vld [vmem:[#allocation9 + $0xc4] sm:$0xf]
        %v2184 = vld [vmem:[#allocation9 + $0xc8] sm:$0xf]
        %v2185 = vld [vmem:[#allocation9 + $0xcc] sm:$0xf]
        %v2186 = vld [vmem:[#allocation9 + $0xd0] sm:$0xf]
        %v2187 = vld [vmem:[#allocation9 + $0xd4] sm:$0xf]
        %v2188 = vld [vmem:[#allocation9 + $0xd8] sm:$0xf]
        %v2189 = vld [vmem:[#allocation9 + $0xdc] sm:$0xf]
        %v2190 = vld [vmem:[#allocation9 + $0xe0] sm:$0xf]
        %v2191 = vld [vmem:[#allocation9 + $0xe4] sm:$0xf]
        %v2192 = vld [vmem:[#allocation9 + $0xe8] sm:$0xf]
        %v2193 = vld [vmem:[#allocation9 + $0xec] sm:$0xf]
        %v2194 = vld [vmem:[#allocation9 + $0xf0] sm:$0xf]
        %v2195 = vld [vmem:[#allocation9 + $0xf4] sm:$0xf]
        %v2196 = vld [vmem:[#allocation9 + $0xf8] sm:$0xf]
        %v2197 = vld [vmem:[#allocation9 + $0xfc] sm:$0xf]
        %v2198 = vld [vmem:[#allocation9 + $0x100] sm:$0xf]
        %v2199 = vld [vmem:[#allocation9 + $0x104] sm:$0xf]
        %v2200 = vld [vmem:[#allocation9 + $0x108] sm:$0xf]
        %v2201 = vld [vmem:[#allocation9 + $0x10c] sm:$0xf]
        %v2202 = vld [vmem:[#allocation9 + $0x110] sm:$0xf]
        %v2203 = vld [vmem:[#allocation9 + $0x114] sm:$0xf]
        %v2204 = vld [vmem:[#allocation9 + $0x118] sm:$0xf]
        %v2205 = vld [vmem:[#allocation9 + $0x11c] sm:$0xf]
        %v2206 = vld [vmem:[#allocation9 + $0x120] sm:$0xf]
        %v2207 = vld [vmem:[#allocation9 + $0x124] sm:$0xf]
        %v2208 = vld [vmem:[#allocation9 + $0x128] sm:$0xf]
        %v2209 = vld [vmem:[#allocation9 + $0x12c] sm:$0xf]
        %v2210 = vld [vmem:[#allocation9 + $0x130] sm:$0xf]
        %v2211 = vld [vmem:[#allocation9 + $0x134] sm:$0xf]
        %v2212 = vld [vmem:[#allocation9 + $0x138] sm:$0xf]
        %v2213 = vld [vmem:[#allocation9 + $0x13c] sm:$0xf]
        %v2214 = vld [vmem:[#allocation9 + $0x140] sm:$0xf]
        %v2215 = vld [vmem:[#allocation9 + $0x144] sm:$0xf]
        %v2216 = vld [vmem:[#allocation9 + $0x148] sm:$0xf]
        %v2217 = vld [vmem:[#allocation9 + $0x14c] sm:$0xf]
        %v2218 = vld [vmem:[#allocation9 + $0x150] sm:$0xf]
        %v2219 = vld [vmem:[#allocation9 + $0x154] sm:$0xf]
        %v2220 = vld [vmem:[#allocation9 + $0x158] sm:$0xf]
        %v2221 = vld [vmem:[#allocation9 + $0x15c] sm:$0xf]
        %v2222 = vld [vmem:[#allocation9 + $0x160] sm:$0xf]
        %v2223 = vld [vmem:[#allocation9 + $0x164] sm:$0xf]
        %v2224 = vld [vmem:[#allocation9 + $0x168] sm:$0xf]
        %v2225 = vld [vmem:[#allocation9 + $0x16c] sm:$0xf]
        %v2226 = vld [vmem:[#allocation9 + $0x170] sm:$0xf]
        %v2227 = vld [vmem:[#allocation9 + $0x174] sm:$0xf]
        %v2228 = vld [vmem:[#allocation9 + $0x178] sm:$0xf]
        %v2229 = vld [vmem:[#allocation9 + $0x17c] sm:$0xf]
        %v2230 = vld [vmem:[#allocation9 + $0x180] sm:$0xf]
        %v2231 = vld [vmem:[#allocation9 + $0x184] sm:$0xf]
        %v2232 = vld [vmem:[#allocation9 + $0x188] sm:$0xf]
        %v2233 = vld [vmem:[#allocation9 + $0x18c] sm:$0xf]
        %v2234 = vld [vmem:[#allocation9 + $0x190] sm:$0xf]
        %v2235 = vld [vmem:[#allocation9 + $0x194] sm:$0xf]
        %v2236 = vld [vmem:[#allocation9 + $0x198] sm:$0xf]
        %v2237 = vld [vmem:[#allocation9 + $0x19c] sm:$0xf]
        %v2238 = vld [vmem:[#allocation9 + $0x1a0] sm:$0xf]
        %v2239 = vld [vmem:[#allocation9 + $0x1a4] sm:$0xf]
        %v2240 = vld [vmem:[#allocation9 + $0x1a8] sm:$0xf]
        %v2241 = vld [vmem:[#allocation9 + $0x1ac] sm:$0xf]
        %v2242 = vld [vmem:[#allocation9 + $0x1b0] sm:$0xf]
        %v2243 = vld [vmem:[#allocation9 + $0x1b4] sm:$0xf]
        %v2244 = vld [vmem:[#allocation9 + $0x1b8] sm:$0xf]
        %v2245 = vld [vmem:[#allocation9 + $0x1bc] sm:$0xf]
        %v2246 = vld [vmem:[#allocation9 + $0x1c0] sm:$0xf]
        %v2247 = vld [vmem:[#allocation9 + $0x1c4] sm:$0xf]
        %v2248 = vld [vmem:[#allocation9 + $0x1c8] sm:$0xf]
        %v2249 = vld [vmem:[#allocation9 + $0x1cc] sm:$0xf]
        %v2250 = vld [vmem:[#allocation9 + $0x1d0] sm:$0xf]
        %v2251 = vld [vmem:[#allocation9 + $0x1d4] sm:$0xf]
        %v2252 = vld [vmem:[#allocation9 + $0x1d8] sm:$0xf]
        %v2253 = vld [vmem:[#allocation9 + $0x1dc] sm:$0xf]
        %v2254 = vld [vmem:[#allocation9 + $0x1e0] sm:$0xf]
        %v2255 = vld [vmem:[#allocation9 + $0x1e4] sm:$0xf]
        %v2256 = vld [vmem:[#allocation9 + $0x1e8] sm:$0xf]
        %v2257 = vld [vmem:[#allocation9 + $0x1ec] sm:$0xf]
        %v2258 = vld [vmem:[#allocation9 + $0x1f0] sm:$0xf]
        %v2259 = vld [vmem:[#allocation9 + $0x1f4] sm:$0xf]
        %v2260 = vld [vmem:[#allocation9 + $0x1f8] sm:$0xf]
        %v2261 = vld [vmem:[#allocation9 + $0x1fc] sm:$0xf]
        %v2262 = vunpack.c.l.bf16 %v2134
        %v2263 = vunpack.c.l.bf16 %v2135
        %v2264 = vunpack.c.l.bf16 %v2136
        %v2265 = vunpack.c.l.bf16 %v2137
        %v2266 = vunpack.c.l.bf16 %v2138
        %v2267 = vunpack.c.l.bf16 %v2139
        %v2268 = vunpack.c.l.bf16 %v2140
        %v2269 = vunpack.c.l.bf16 %v2141
        %v2270 = vunpack.c.l.bf16 %v2142
        %v2271 = vunpack.c.l.bf16 %v2143
        %v2272 = vunpack.c.l.bf16 %v2144
        %v2273 = vunpack.c.l.bf16 %v2145
        %v2274 = vunpack.c.l.bf16 %v2146
        %v2275 = vunpack.c.l.bf16 %v2147
        %v2276 = vunpack.c.l.bf16 %v2148
        %v2277 = vunpack.c.l.bf16 %v2149
        %v2278 = vunpack.c.l.bf16 %v2150
        %v2279 = vunpack.c.l.bf16 %v2151
        %v2280 = vunpack.c.l.bf16 %v2152
        %v2281 = vunpack.c.l.bf16 %v2153
        %v2282 = vunpack.c.l.bf16 %v2154
        %v2283 = vunpack.c.l.bf16 %v2155
        %v2284 = vunpack.c.l.bf16 %v2156
        %v2285 = vunpack.c.l.bf16 %v2157
        %v2286 = vunpack.c.l.bf16 %v2158
        %v2287 = vunpack.c.l.bf16 %v2159
        %v2288 = vunpack.c.l.bf16 %v2160
        %v2289 = vunpack.c.l.bf16 %v2161
        %v2290 = vunpack.c.l.bf16 %v2162
        %v2291 = vunpack.c.l.bf16 %v2163
        %v2292 = vunpack.c.l.bf16 %v2164
        %v2293 = vunpack.c.l.bf16 %v2165
        %v2294 = vunpack.c.l.bf16 %v2166
        %v2295 = vunpack.c.l.bf16 %v2167
        %v2296 = vunpack.c.l.bf16 %v2168
        %v2297 = vunpack.c.l.bf16 %v2169
        %v2298 = vunpack.c.l.bf16 %v2170
        %v2299 = vunpack.c.l.bf16 %v2171
        %v2300 = vunpack.c.l.bf16 %v2172
        %v2301 = vunpack.c.l.bf16 %v2173
        %v2302 = vunpack.c.l.bf16 %v2174
        %v2303 = vunpack.c.l.bf16 %v2175
        %v2304 = vunpack.c.l.bf16 %v2176
        %v2305 = vunpack.c.l.bf16 %v2177
        %v2306 = vunpack.c.l.bf16 %v2178
        %v2307 = vunpack.c.l.bf16 %v2179
        %v2308 = vunpack.c.l.bf16 %v2180
        %v2309 = vunpack.c.l.bf16 %v2181
        %v2310 = vunpack.c.l.bf16 %v2182
        %v2311 = vunpack.c.l.bf16 %v2183
        %v2312 = vunpack.c.l.bf16 %v2184
        %v2313 = vunpack.c.l.bf16 %v2185
        %v2314 = vunpack.c.l.bf16 %v2186
        %v2315 = vunpack.c.l.bf16 %v2187
        %v2316 = vunpack.c.l.bf16 %v2188
        %v2317 = vunpack.c.l.bf16 %v2189
        %v2318 = vunpack.c.l.bf16 %v2190
        %v2319 = vunpack.c.l.bf16 %v2191
        %v2320 = vunpack.c.l.bf16 %v2192
        %v2321 = vunpack.c.l.bf16 %v2193
        %v2322 = vunpack.c.l.bf16 %v2194
        %v2323 = vunpack.c.l.bf16 %v2195
        %v2324 = vunpack.c.l.bf16 %v2196
        %v2325 = vunpack.c.l.bf16 %v2197
        %v2326 = vunpack.c.l.bf16 %v2198
        %v2327 = vunpack.c.l.bf16 %v2199
        %v2328 = vunpack.c.l.bf16 %v2200
        %v2329 = vunpack.c.l.bf16 %v2201
        %v2330 = vunpack.c.l.bf16 %v2202
        %v2331 = vunpack.c.l.bf16 %v2203
        %v2332 = vunpack.c.l.bf16 %v2204
        %v2333 = vunpack.c.l.bf16 %v2205
        %v2334 = vunpack.c.l.bf16 %v2206
        %v2335 = vunpack.c.l.bf16 %v2207
        %v2336 = vunpack.c.l.bf16 %v2208
        %v2337 = vunpack.c.l.bf16 %v2209
        %v2338 = vunpack.c.l.bf16 %v2210
        %v2339 = vunpack.c.l.bf16 %v2211
        %v2340 = vunpack.c.l.bf16 %v2212
        %v2341 = vunpack.c.l.bf16 %v2213
        %v2342 = vunpack.c.l.bf16 %v2214
        %v2343 = vunpack.c.l.bf16 %v2215
        %v2344 = vunpack.c.l.bf16 %v2216
        %v2345 = vunpack.c.l.bf16 %v2217
        %v2346 = vunpack.c.l.bf16 %v2218
        %v2347 = vunpack.c.l.bf16 %v2219
        %v2348 = vunpack.c.l.bf16 %v2220
        %v2349 = vunpack.c.l.bf16 %v2221
        %v2350 = vunpack.c.l.bf16 %v2222
        %v2351 = vunpack.c.l.bf16 %v2223
        %v2352 = vunpack.c.l.bf16 %v2224
        %v2353 = vunpack.c.l.bf16 %v2225
        %v2354 = vunpack.c.l.bf16 %v2226
        %v2355 = vunpack.c.l.bf16 %v2227
        %v2356 = vunpack.c.l.bf16 %v2228
        %v2357 = vunpack.c.l.bf16 %v2229
        %v2358 = vunpack.c.l.bf16 %v2230
        %v2359 = vunpack.c.l.bf16 %v2231
        %v2360 = vunpack.c.l.bf16 %v2232
        %v2361 = vunpack.c.l.bf16 %v2233
        %v2362 = vunpack.c.l.bf16 %v2234
        %v2363 = vunpack.c.l.bf16 %v2235
        %v2364 = vunpack.c.l.bf16 %v2236
        %v2365 = vunpack.c.l.bf16 %v2237
        %v2366 = vunpack.c.l.bf16 %v2238
        %v2367 = vunpack.c.l.bf16 %v2239
        %v2368 = vunpack.c.l.bf16 %v2240
        %v2369 = vunpack.c.l.bf16 %v2241
        %v2370 = vunpack.c.l.bf16 %v2242
        %v2371 = vunpack.c.l.bf16 %v2243
        %v2372 = vunpack.c.l.bf16 %v2244
        %v2373 = vunpack.c.l.bf16 %v2245
        %v2374 = vunpack.c.l.bf16 %v2246
        %v2375 = vunpack.c.l.bf16 %v2247
        %v2376 = vunpack.c.l.bf16 %v2248
        %v2377 = vunpack.c.l.bf16 %v2249
        %v2378 = vunpack.c.l.bf16 %v2250
        %v2379 = vunpack.c.l.bf16 %v2251
        %v2380 = vunpack.c.l.bf16 %v2252
        %v2381 = vunpack.c.l.bf16 %v2253
        %v2382 = vunpack.c.l.bf16 %v2254
        %v2383 = vunpack.c.l.bf16 %v2255
        %v2384 = vunpack.c.l.bf16 %v2256
        %v2385 = vunpack.c.l.bf16 %v2257
        %v2386 = vunpack.c.l.bf16 %v2258
        %v2387 = vunpack.c.l.bf16 %v2259
        %v2388 = vunpack.c.l.bf16 %v2260
        %v2389 = vunpack.c.l.bf16 %v2261
        %v2518 = vunpack.c.l.b16 %v798
        %v2519 = vunpack.c.l.b16 %v799
        %v2520 = vunpack.c.l.b16 %v800
        %v2521 = vunpack.c.l.b16 %v801
        %v2522 = vunpack.c.l.b16 %v802
        %v2523 = vunpack.c.l.b16 %v803
        %v2524 = vunpack.c.l.b16 %v804
        %v2525 = vunpack.c.l.b16 %v805
        %v2526 = vunpack.c.l.b16 %v806
        %v2527 = vunpack.c.l.b16 %v807
        %v2528 = vunpack.c.l.b16 %v808
        %v2529 = vunpack.c.l.b16 %v809
        %v2530 = vunpack.c.l.b16 %v810
        %v2531 = vunpack.c.l.b16 %v811
        %v2532 = vunpack.c.l.b16 %v812
        %v2533 = vunpack.c.l.b16 %v813
        %v2534 = vunpack.c.l.b16 %v814
        %v2535 = vunpack.c.l.b16 %v815
        %v2536 = vunpack.c.l.b16 %v816
        %v2537 = vunpack.c.l.b16 %v817
        %v2538 = vunpack.c.l.b16 %v818
        %v2539 = vunpack.c.l.b16 %v819
        %v2540 = vunpack.c.l.b16 %v820
        %v2541 = vunpack.c.l.b16 %v821
        %v2542 = vunpack.c.l.b16 %v822
        %v2543 = vunpack.c.l.b16 %v823
        %v2544 = vunpack.c.l.b16 %v824
        %v2545 = vunpack.c.l.b16 %v825
        %v2546 = vunpack.c.l.b16 %v826
        %v2547 = vunpack.c.l.b16 %v827
        %v2548 = vunpack.c.l.b16 %v828
        %v2549 = vunpack.c.l.b16 %v829
        %v2550 = vunpack.c.l.b16 %v830
        %v2551 = vunpack.c.l.b16 %v831
        %v2552 = vunpack.c.l.b16 %v832
        %v2553 = vunpack.c.l.b16 %v833
        %v2554 = vunpack.c.l.b16 %v834
        %v2555 = vunpack.c.l.b16 %v835
        %v2556 = vunpack.c.l.b16 %v836
        %v2557 = vunpack.c.l.b16 %v837
        %v2558 = vunpack.c.l.b16 %v838
        %v2559 = vunpack.c.l.b16 %v839
        %v2560 = vunpack.c.l.b16 %v840
        %v2561 = vunpack.c.l.b16 %v841
        %v2562 = vunpack.c.l.b16 %v842
        %v2563 = vunpack.c.l.b16 %v843
        %v2564 = vunpack.c.l.b16 %v844
        %v2565 = vunpack.c.l.b16 %v845
        %v2566 = vunpack.c.l.b16 %v846
        %v2567 = vunpack.c.l.b16 %v847
        %v2568 = vunpack.c.l.b16 %v848
        %v2569 = vunpack.c.l.b16 %v849
        %v2570 = vunpack.c.l.b16 %v850
        %v2571 = vunpack.c.l.b16 %v851
        %v2572 = vunpack.c.l.b16 %v852
        %v2573 = vunpack.c.l.b16 %v853
        %v2574 = vunpack.c.l.b16 %v854
        %v2575 = vunpack.c.l.b16 %v855
        %v2576 = vunpack.c.l.b16 %v856
        %v2577 = vunpack.c.l.b16 %v857
        %v2578 = vunpack.c.l.b16 %v858
        %v2579 = vunpack.c.l.b16 %v859
        %v2580 = vunpack.c.l.b16 %v860
        %v2581 = vunpack.c.l.b16 %v861
        %v2582 = vunpack.c.l.b16 %v862
        %v2583 = vunpack.c.l.b16 %v863
        %v2584 = vunpack.c.l.b16 %v864
        %v2585 = vunpack.c.l.b16 %v865
        %v2586 = vunpack.c.l.b16 %v866
        %v2587 = vunpack.c.l.b16 %v867
        %v2588 = vunpack.c.l.b16 %v868
        %v2589 = vunpack.c.l.b16 %v869
        %v2590 = vunpack.c.l.b16 %v870
        %v2591 = vunpack.c.l.b16 %v871
        %v2592 = vunpack.c.l.b16 %v872
        %v2593 = vunpack.c.l.b16 %v873
        %v2594 = vunpack.c.l.b16 %v874
        %v2595 = vunpack.c.l.b16 %v875
        %v2596 = vunpack.c.l.b16 %v876
        %v2597 = vunpack.c.l.b16 %v877
        %v2598 = vunpack.c.l.b16 %v878
        %v2599 = vunpack.c.l.b16 %v879
        %v2600 = vunpack.c.l.b16 %v880
        %v2601 = vunpack.c.l.b16 %v881
        %v2602 = vunpack.c.l.b16 %v882
        %v2603 = vunpack.c.l.b16 %v883
        %v2604 = vunpack.c.l.b16 %v884
        %v2605 = vunpack.c.l.b16 %v885
        %v2606 = vunpack.c.l.b16 %v886
        %v2607 = vunpack.c.l.b16 %v887
        %v2608 = vunpack.c.l.b16 %v888
        %v2609 = vunpack.c.l.b16 %v889
        %v2610 = vunpack.c.l.b16 %v890
        %v2611 = vunpack.c.l.b16 %v891
        %v2612 = vunpack.c.l.b16 %v892
        %v2613 = vunpack.c.l.b16 %v893
        %v2614 = vunpack.c.l.b16 %v894
        %v2615 = vunpack.c.l.b16 %v895
        %v2616 = vunpack.c.l.b16 %v896
        %v2617 = vunpack.c.l.b16 %v897
        %v2618 = vunpack.c.l.b16 %v898
        %v2619 = vunpack.c.l.b16 %v899
        %v2620 = vunpack.c.l.b16 %v900
        %v2621 = vunpack.c.l.b16 %v901
        %v2622 = vunpack.c.l.b16 %v902
        %v2623 = vunpack.c.l.b16 %v903
        %v2624 = vunpack.c.l.b16 %v904
        %v2625 = vunpack.c.l.b16 %v905
        %v2626 = vunpack.c.l.b16 %v906
        %v2627 = vunpack.c.l.b16 %v907
        %v2628 = vunpack.c.l.b16 %v908
        %v2629 = vunpack.c.l.b16 %v909
        %v2630 = vunpack.c.l.b16 %v910
        %v2631 = vunpack.c.l.b16 %v911
        %v2632 = vunpack.c.l.b16 %v912
        %v2633 = vunpack.c.l.b16 %v913
        %v2634 = vunpack.c.l.b16 %v914
        %v2635 = vunpack.c.l.b16 %v915
        %v2636 = vunpack.c.l.b16 %v916
        %v2637 = vunpack.c.l.b16 %v917
        %v2638 = vunpack.c.l.b16 %v918
        %v2639 = vunpack.c.l.b16 %v919
        %v2640 = vunpack.c.l.b16 %v920
        %v2641 = vunpack.c.l.b16 %v921
        %v2642 = vunpack.c.l.b16 %v922
        %v2643 = vunpack.c.l.b16 %v923
        %v2644 = vunpack.c.l.b16 %v924
        %v2645 = vunpack.c.l.b16 %v925
        %v2646 = vpack.c.b16 %v2519, %v2518
        %v2647 = vpack.c.b16 %v2521, %v2520
        %v2648 = vpack.c.b16 %v2523, %v2522
        %v2649 = vpack.c.b16 %v2525, %v2524
        %v2650 = vpack.c.b16 %v2527, %v2526
        %v2651 = vpack.c.b16 %v2529, %v2528
        %v2652 = vpack.c.b16 %v2531, %v2530
        %v2653 = vpack.c.b16 %v2533, %v2532
        %v2654 = vpack.c.b16 %v2535, %v2534
        %v2655 = vpack.c.b16 %v2537, %v2536
        %v2656 = vpack.c.b16 %v2539, %v2538
        %v2657 = vpack.c.b16 %v2541, %v2540
        %v2658 = vpack.c.b16 %v2543, %v2542
        %v2659 = vpack.c.b16 %v2545, %v2544
        %v2660 = vpack.c.b16 %v2547, %v2546
        %v2661 = vpack.c.b16 %v2549, %v2548
        %v2662 = vpack.c.b16 %v2551, %v2550
        %v2663 = vpack.c.b16 %v2553, %v2552
        %v2664 = vpack.c.b16 %v2555, %v2554
        %v2665 = vpack.c.b16 %v2557, %v2556
        %v2666 = vpack.c.b16 %v2559, %v2558
        %v2667 = vpack.c.b16 %v2561, %v2560
        %v2668 = vpack.c.b16 %v2563, %v2562
        %v2669 = vpack.c.b16 %v2565, %v2564
        %v2670 = vpack.c.b16 %v2567, %v2566
        %v2671 = vpack.c.b16 %v2569, %v2568
        %v2672 = vpack.c.b16 %v2571, %v2570
        %v2673 = vpack.c.b16 %v2573, %v2572
        %v2674 = vpack.c.b16 %v2575, %v2574
        %v2675 = vpack.c.b16 %v2577, %v2576
        %v2676 = vpack.c.b16 %v2579, %v2578
        %v2677 = vpack.c.b16 %v2581, %v2580
        %v2678 = vpack.c.b16 %v2583, %v2582
        %v2679 = vpack.c.b16 %v2585, %v2584
        %v2680 = vpack.c.b16 %v2587, %v2586
        %v2681 = vpack.c.b16 %v2589, %v2588
        %v2682 = vpack.c.b16 %v2591, %v2590
        %v2683 = vpack.c.b16 %v2593, %v2592
        %v2684 = vpack.c.b16 %v2595, %v2594
        %v2685 = vpack.c.b16 %v2597, %v2596
        %v2686 = vpack.c.b16 %v2599, %v2598
        %v2687 = vpack.c.b16 %v2601, %v2600
        %v2688 = vpack.c.b16 %v2603, %v2602
        %v2689 = vpack.c.b16 %v2605, %v2604
        %v2690 = vpack.c.b16 %v2607, %v2606
        %v2691 = vpack.c.b16 %v2609, %v2608
        %v2692 = vpack.c.b16 %v2611, %v2610
        %v2693 = vpack.c.b16 %v2613, %v2612
        %v2694 = vpack.c.b16 %v2615, %v2614
        %v2695 = vpack.c.b16 %v2617, %v2616
        %v2696 = vpack.c.b16 %v2619, %v2618
        %v2697 = vpack.c.b16 %v2621, %v2620
        %v2698 = vpack.c.b16 %v2623, %v2622
        %v2699 = vpack.c.b16 %v2625, %v2624
        %v2700 = vpack.c.b16 %v2627, %v2626
        %v2701 = vpack.c.b16 %v2629, %v2628
        %v2702 = vpack.c.b16 %v2631, %v2630
        %v2703 = vpack.c.b16 %v2633, %v2632
        %v2704 = vpack.c.b16 %v2635, %v2634
        %v2705 = vpack.c.b16 %v2637, %v2636
        %v2706 = vpack.c.b16 %v2639, %v2638
        %v2707 = vpack.c.b16 %v2641, %v2640
        %v2708 = vpack.c.b16 %v2643, %v2642
        %v2709 = vpack.c.b16 %v2645, %v2644
        %2774 = vmatprep.subr.bf16.mxu0 0
        %2775 = vmatpush1.bf16.msra.mxu0 %v2126
        %2776 = vmatprep.subr.bf16.mxu0 0
        %2777 = vmatpush1.bf16.msra.mxu0 %v2127
        %2778 = vmatprep.subr.bf16.mxu0 0
        %2779 = vmatpush1.bf16.msra.mxu0 %v2128
        %2780 = vmatprep.subr.bf16.mxu0 0
        %2781 = vmatpush1.bf16.msra.mxu0 %v2129
        %2782 = vmatprep.subr.bf16.mxu0 0
        %2783 = vmatpush1.bf16.msra.mxu0 %v2130
        %2784 = vmatprep.subr.bf16.mxu0 0
        %2785 = vmatpush1.bf16.msra.mxu0 %v2131
        %2786 = vmatprep.subr.bf16.mxu0 0
        %2787 = vmatpush1.bf16.msra.mxu0 %v2132
        %2788 = vmatprep.subr.bf16.mxu0 0
        %2789 = vmatpush1.bf16.msra.mxu0 %v2133
        %2790 = vmatprep.subr.bf16.mxu0 0
        %2791 = vmatpush1.bf16.msra.mxu0 0
        %2792 = vmatprep.subr.bf16.mxu0 0
        %2793 = vmatpush1.bf16.msra.mxu0 0
        %2794 = vmatprep.subr.bf16.mxu0 0
        %2795 = vmatpush1.bf16.msra.mxu0 0
        %2796 = vmatprep.subr.bf16.mxu0 0
        %2797 = vmatpush1.bf16.msra.mxu0 0
        %2798 = vmatprep.subr.bf16.mxu0 0
        %2799 = vmatpush1.bf16.msra.mxu0 0
        %2800 = vmatprep.subr.bf16.mxu0 0
        %2801 = vmatpush1.bf16.msra.mxu0 0
        %2802 = vmatprep.subr.bf16.mxu0 0
        %2803 = vmatpush1.bf16.msra.mxu0 0
        %2804 = vmatprep.subr.bf16.mxu0 0
        %2805 = vmatpush1.bf16.msra.mxu0 0
        %2806 = vmatprep.mubr.bf16.mxu0 0
        %2807 = vmatmul.mubr.bf16.gmra.mrb[0].mxu0 %v2646
        %v2808 = vpop.f32.mrb[0].mxu0
        %v2809 = vadd.f32 %v2262, %v2808
        %v2810 = vpop.f32.mrb[0].mxu0
        %v2811 = vpop.f32.mrb[0].mxu0
        %v2812 = vadd.f32 %v2263, %v2811
        %v2813 = vpop.f32.mrb[0].mxu0
        %2814 = vmatprep.mubr.bf16.mxu0 0
        %2815 = vmatmul.mubr.bf16.gmra.mrb[0].mxu0 %v2647
        %v2816 = vpop.f32.mrb[0].mxu0
        %v2817 = vadd.f32 %v2264, %v2816
        %v2818 = vpop.f32.mrb[0].mxu0
        %v2819 = vpop.f32.mrb[0].mxu0
        %v2820 = vadd.f32 %v2265, %v2819
        %v2821 = vpop.f32.mrb[0].mxu0
        %2822 = vmatprep.mubr.bf16.mxu0 0
        %2823 = vmatmul.mubr.bf16.gmra.mrb[0].mxu0 %v2648
        %v2824 = vpop.f32.mrb[0].mxu0
        %v2825 = vadd.f32 %v2266, %v2824
        %v2826 = vpop.f32.mrb[0].mxu0
        %v2827 = vpop.f32.mrb[0].mxu0
        %v2828 = vadd.f32 %v2267, %v2827
        %v2829 = vpop.f32.mrb[0].mxu0
        %2830 = vmatprep.mubr.bf16.mxu0 0
        %2831 = vmatmul.mubr.bf16.gmra.mrb[0].mxu0 %v2649
        %v2832 = vpop.f32.mrb[0].mxu0
        %v2833 = vadd.f32 %v2268, %v2832
        %v2834 = vpop.f32.mrb[0].mxu0
        %v2835 = vpop.f32.mrb[0].mxu0
        %v2836 = vadd.f32 %v2269, %v2835
        %v2837 = vpop.f32.mrb[0].mxu0
        %2838 = vmatprep.mubr.bf16.mxu0 0
        %2839 = vmatmul.mubr.bf16.gmra.mrb[0].mxu0 %v2650
        %v2840 = vpop.f32.mrb[0].mxu0
        %v2841 = vadd.f32 %v2270, %v2840
        %v2842 = vpop.f32.mrb[0].mxu0
        %v2843 = vpop.f32.mrb[0].mxu0
        %v2844 = vadd.f32 %v2271, %v2843
        %v2845 = vpop.f32.mrb[0].mxu0
        %2846 = vmatprep.mubr.bf16.mxu0 0
        %2847 = vmatmul.mubr.bf16.gmra.mrb[0].mxu0 %v2651
        %v2848 = vpop.f32.mrb[0].mxu0
        %v2849 = vadd.f32 %v2272, %v2848
        %v2850 = vpop.f32.mrb[0].mxu0
        %v2851 = vpop.f32.mrb[0].mxu0
        %v2852 = vadd.f32 %v2273, %v2851
        %v2853 = vpop.f32.mrb[0].mxu0
        %2854 = vmatprep.mubr.bf16.mxu0 0
        %2855 = vmatmul.mubr.bf16.gmra.mrb[0].mxu0 %v2652
        %v2856 = vpop.f32.mrb[0].mxu0
        %v2857 = vadd.f32 %v2274, %v2856
        %v2858 = vpop.f32.mrb[0].mxu0
        %v2859 = vpop.f32.mrb[0].mxu0
        %v2860 = vadd.f32 %v2275, %v2859
        %v2861 = vpop.f32.mrb[0].mxu0
        %2862 = vmatprep.mubr.bf16.mxu0 0
        %2863 = vmatmul.mubr.bf16.gmra.mrb[0].mxu0 %v2653
        %v2864 = vpop.f32.mrb[0].mxu0
        %v2865 = vadd.f32 %v2276, %v2864
        %v2866 = vpop.f32.mrb[0].mxu0
        %v2867 = vpop.f32.mrb[0].mxu0
        %v2868 = vadd.f32 %v2277, %v2867
        %v2869 = vpop.f32.mrb[0].mxu0
        %2870 = vmatprep.mubr.bf16.mxu0 0
        %2871 = vmatmul.mubr.bf16.gmra.mrb[0].mxu0 %v2654
        %v2872 = vpop.f32.mrb[0].mxu0
        %v2873 = vadd.f32 %v2278, %v2872
        %v2874 = vpop.f32.mrb[0].mxu0
        %v2875 = vpop.f32.mrb[0].mxu0
        %v2876 = vadd.f32 %v2279, %v2875
        %v2877 = vpop.f32.mrb[0].mxu0
        %2878 = vmatprep.mubr.bf16.mxu0 0
        %2879 = vmatmul.mubr.bf16.gmra.mrb[0].mxu0 %v2655
        %v2880 = vpop.f32.mrb[0].mxu0
        %v2881 = vadd.f32 %v2280, %v2880
        %v2882 = vpop.f32.mrb[0].mxu0
        %v2883 = vpop.f32.mrb[0].mxu0
        %v2884 = vadd.f32 %v2281, %v2883
        %v2885 = vpop.f32.mrb[0].mxu0
        %2886 = vmatprep.mubr.bf16.mxu0 0
        %2887 = vmatmul.mubr.bf16.gmra.mrb[0].mxu0 %v2656
        %v2888 = vpop.f32.mrb[0].mxu0
        %v2889 = vadd.f32 %v2282, %v2888
        %v2890 = vpop.f32.mrb[0].mxu0
        %v2891 = vpop.f32.mrb[0].mxu0
        %v2892 = vadd.f32 %v2283, %v2891
        %v2893 = vpop.f32.mrb[0].mxu0
        %2894 = vmatprep.mubr.bf16.mxu0 0
        %2895 = vmatmul.mubr.bf16.gmra.mrb[0].mxu0 %v2657
        %v2896 = vpop.f32.mrb[0].mxu0
        %v2897 = vadd.f32 %v2284, %v2896
        %v2898 = vpop.f32.mrb[0].mxu0
        %v2899 = vpop.f32.mrb[0].mxu0
        %v2900 = vadd.f32 %v2285, %v2899
        %v2901 = vpop.f32.mrb[0].mxu0
        %2902 = vmatprep.mubr.bf16.mxu0 0
        %2903 = vmatmul.mubr.bf16.gmra.mrb[0].mxu0 %v2658
        %v2904 = vpop.f32.mrb[0].mxu0
        %v2905 = vadd.f32 %v2286, %v2904
        %v2906 = vpop.f32.mrb[0].mxu0
        %v2907 = vpop.f32.mrb[0].mxu0
        %v2908 = vadd.f32 %v2287, %v2907
        %v2909 = vpop.f32.mrb[0].mxu0
        %2910 = vmatprep.mubr.bf16.mxu0 0
        %2911 = vmatmul.mubr.bf16.gmra.mrb[0].mxu0 %v2659
        %v2912 = vpop.f32.mrb[0].mxu0
        %v2913 = vadd.f32 %v2288, %v2912
        %v2914 = vpop.f32.mrb[0].mxu0
        %v2915 = vpop.f32.mrb[0].mxu0
        %v2916 = vadd.f32 %v2289, %v2915
        %v2917 = vpop.f32.mrb[0].mxu0
        %2918 = vmatprep.mubr.bf16.mxu0 0
        %2919 = vmatmul.mubr.bf16.gmra.mrb[0].mxu0 %v2660
        %v2920 = vpop.f32.mrb[0].mxu0
        %v2921 = vadd.f32 %v2290, %v2920
        %v2922 = vpop.f32.mrb[0].mxu0
        %v2923 = vpop.f32.mrb[0].mxu0
        %v2924 = vadd.f32 %v2291, %v2923
        %v2925 = vpop.f32.mrb[0].mxu0
        %2926 = vmatprep.mubr.bf16.mxu0 0
        %2927 = vmatmul.mubr.bf16.gmra.mrb[0].mxu0 %v2661
        %v2928 = vpop.f32.mrb[0].mxu0
        %v2929 = vadd.f32 %v2292, %v2928
        %v2930 = vpop.f32.mrb[0].mxu0
        %v2931 = vpop.f32.mrb[0].mxu0
        %v2932 = vadd.f32 %v2293, %v2931
        %v2933 = vpop.f32.mrb[0].mxu0
        %2934 = vmatprep.mubr.bf16.mxu0 0
        %2935 = vmatmul.mubr.bf16.gmra.mrb[0].mxu0 %v2662
        %v2936 = vpop.f32.mrb[0].mxu0
        %v2937 = vadd.f32 %v2294, %v2936
        %v2938 = vpop.f32.mrb[0].mxu0
        %v2939 = vpop.f32.mrb[0].mxu0
        %v2940 = vadd.f32 %v2295, %v2939
        %v2941 = vpop.f32.mrb[0].mxu0
        %2942 = vmatprep.mubr.bf16.mxu0 0
        %2943 = vmatmul.mubr.bf16.gmra.mrb[0].mxu0 %v2663
        %v2944 = vpop.f32.mrb[0].mxu0
        %v2945 = vadd.f32 %v2296, %v2944
        %v2946 = vpop.f32.mrb[0].mxu0
        %v2947 = vpop.f32.mrb[0].mxu0
        %v2948 = vadd.f32 %v2297, %v2947
        %v2949 = vpop.f32.mrb[0].mxu0
        %2950 = vmatprep.mubr.bf16.mxu0 0
        %2951 = vmatmul.mubr.bf16.gmra.mrb[0].mxu0 %v2664
        %v2952 = vpop.f32.mrb[0].mxu0
        %v2953 = vadd.f32 %v2298, %v2952
        %v2954 = vpop.f32.mrb[0].mxu0
        %v2955 = vpop.f32.mrb[0].mxu0
        %v2956 = vadd.f32 %v2299, %v2955
        %v2957 = vpop.f32.mrb[0].mxu0
        %2958 = vmatprep.mubr.bf16.mxu0 0
        %2959 = vmatmul.mubr.bf16.gmra.mrb[0].mxu0 %v2665
        %v2960 = vpop.f32.mrb[0].mxu0
        %v2961 = vadd.f32 %v2300, %v2960
        %v2962 = vpop.f32.mrb[0].mxu0
        %v2963 = vpop.f32.mrb[0].mxu0
        %v2964 = vadd.f32 %v2301, %v2963
        %v2965 = vpop.f32.mrb[0].mxu0
        %2966 = vmatprep.mubr.bf16.mxu0 0
        %2967 = vmatmul.mubr.bf16.gmra.mrb[0].mxu0 %v2666
        %v2968 = vpop.f32.mrb[0].mxu0
        %v2969 = vadd.f32 %v2302, %v2968
        %v2970 = vpop.f32.mrb[0].mxu0
        %v2971 = vpop.f32.mrb[0].mxu0
        %v2972 = vadd.f32 %v2303, %v2971
        %v2973 = vpop.f32.mrb[0].mxu0
        %2974 = vmatprep.mubr.bf16.mxu0 0
        %2975 = vmatmul.mubr.bf16.gmra.mrb[0].mxu0 %v2667
        %v2976 = vpop.f32.mrb[0].mxu0
        %v2977 = vadd.f32 %v2304, %v2976
        %v2978 = vpop.f32.mrb[0].mxu0
        %v2979 = vpop.f32.mrb[0].mxu0
        %v2980 = vadd.f32 %v2305, %v2979
        %v2981 = vpop.f32.mrb[0].mxu0
        %2982 = vmatprep.mubr.bf16.mxu0 0
        %2983 = vmatmul.mubr.bf16.gmra.mrb[0].mxu0 %v2668
        %v2984 = vpop.f32.mrb[0].mxu0
        %v2985 = vadd.f32 %v2306, %v2984
        %v2986 = vpop.f32.mrb[0].mxu0
        %v2987 = vpop.f32.mrb[0].mxu0
        %v2988 = vadd.f32 %v2307, %v2987
        %v2989 = vpop.f32.mrb[0].mxu0
        %2990 = vmatprep.mubr.bf16.mxu0 0
        %2991 = vmatmul.mubr.bf16.gmra.mrb[0].mxu0 %v2669
        %v2992 = vpop.f32.mrb[0].mxu0
        %v2993 = vadd.f32 %v2308, %v2992
        %v2994 = vpop.f32.mrb[0].mxu0
        %v2995 = vpop.f32.mrb[0].mxu0
        %v2996 = vadd.f32 %v2309, %v2995
        %v2997 = vpop.f32.mrb[0].mxu0
        %2998 = vmatprep.mubr.bf16.mxu0 0
        %2999 = vmatmul.mubr.bf16.gmra.mrb[0].mxu0 %v2670
        %v3000 = vpop.f32.mrb[0].mxu0
        %v3001 = vadd.f32 %v2310, %v3000
        %v3002 = vpop.f32.mrb[0].mxu0
        %v3003 = vpop.f32.mrb[0].mxu0
        %v3004 = vadd.f32 %v2311, %v3003
        %v3005 = vpop.f32.mrb[0].mxu0
        %3006 = vmatprep.mubr.bf16.mxu0 0
        %3007 = vmatmul.mubr.bf16.gmra.mrb[0].mxu0 %v2671
        %v3008 = vpop.f32.mrb[0].mxu0
        %v3009 = vadd.f32 %v2312, %v3008
        %v3010 = vpop.f32.mrb[0].mxu0
        %v3011 = vpop.f32.mrb[0].mxu0
        %v3012 = vadd.f32 %v2313, %v3011
        %v3013 = vpop.f32.mrb[0].mxu0
        %3014 = vmatprep.mubr.bf16.mxu0 0
        %3015 = vmatmul.mubr.bf16.gmra.mrb[0].mxu0 %v2672
        %v3016 = vpop.f32.mrb[0].mxu0
        %v3017 = vadd.f32 %v2314, %v3016
        %v3018 = vpop.f32.mrb[0].mxu0
        %v3019 = vpop.f32.mrb[0].mxu0
        %v3020 = vadd.f32 %v2315, %v3019
        %v3021 = vpop.f32.mrb[0].mxu0
        %3022 = vmatprep.mubr.bf16.mxu0 0
        %3023 = vmatmul.mubr.bf16.gmra.mrb[0].mxu0 %v2673
        %v3024 = vpop.f32.mrb[0].mxu0
        %v3025 = vadd.f32 %v2316, %v3024
        %v3026 = vpop.f32.mrb[0].mxu0
        %v3027 = vpop.f32.mrb[0].mxu0
        %v3028 = vadd.f32 %v2317, %v3027
        %v3029 = vpop.f32.mrb[0].mxu0
        %3030 = vmatprep.mubr.bf16.mxu0 0
        %3031 = vmatmul.mubr.bf16.gmra.mrb[0].mxu0 %v2674
        %v3032 = vpop.f32.mrb[0].mxu0
        %v3033 = vadd.f32 %v2318, %v3032
        %v3034 = vpop.f32.mrb[0].mxu0
        %v3035 = vpop.f32.mrb[0].mxu0
        %v3036 = vadd.f32 %v2319, %v3035
        %v3037 = vpop.f32.mrb[0].mxu0
        %3038 = vmatprep.mubr.bf16.mxu0 0
        %3039 = vmatmul.mubr.bf16.gmra.mrb[0].mxu0 %v2675
        %v3040 = vpop.f32.mrb[0].mxu0
        %v3041 = vadd.f32 %v2320, %v3040
        %v3042 = vpop.f32.mrb[0].mxu0
        %v3043 = vpop.f32.mrb[0].mxu0
        %v3044 = vadd.f32 %v2321, %v3043
        %v3045 = vpop.f32.mrb[0].mxu0
        %3046 = vmatprep.mubr.bf16.mxu0 0
        %3047 = vmatmul.mubr.bf16.gmra.mrb[0].mxu0 %v2676
        %v3048 = vpop.f32.mrb[0].mxu0
        %v3049 = vadd.f32 %v2322, %v3048
        %v3050 = vpop.f32.mrb[0].mxu0
        %v3051 = vpop.f32.mrb[0].mxu0
        %v3052 = vadd.f32 %v2323, %v3051
        %v3053 = vpop.f32.mrb[0].mxu0
        %3054 = vmatprep.mubr.bf16.mxu0 0
        %3055 = vmatmul.mubr.bf16.gmra.mrb[0].mxu0 %v2677
        %v3056 = vpop.f32.mrb[0].mxu0
        %v3057 = vadd.f32 %v2324, %v3056
        %v3058 = vpop.f32.mrb[0].mxu0
        %v3059 = vpop.f32.mrb[0].mxu0
        %v3060 = vadd.f32 %v2325, %v3059
        %v3061 = vpop.f32.mrb[0].mxu0
        %3062 = vmatprep.mubr.bf16.mxu0 0
        %3063 = vmatmul.mubr.bf16.gmra.mrb[0].mxu0 %v2678
        %v3064 = vpop.f32.mrb[0].mxu0
        %v3065 = vadd.f32 %v2326, %v3064
        %v3066 = vpop.f32.mrb[0].mxu0
        %v3067 = vpop.f32.mrb[0].mxu0
        %v3068 = vadd.f32 %v2327, %v3067
        %v3069 = vpop.f32.mrb[0].mxu0
        %3070 = vmatprep.mubr.bf16.mxu0 0
        %3071 = vmatmul.mubr.bf16.gmra.mrb[0].mxu0 %v2679
        %v3072 = vpop.f32.mrb[0].mxu0
        %v3073 = vadd.f32 %v2328, %v3072
        %v3074 = vpop.f32.mrb[0].mxu0
        %v3075 = vpop.f32.mrb[0].mxu0
        %v3076 = vadd.f32 %v2329, %v3075
        %v3077 = vpop.f32.mrb[0].mxu0
        %3078 = vmatprep.mubr.bf16.mxu0 0
        %3079 = vmatmul.mubr.bf16.gmra.mrb[0].mxu0 %v2680
        %v3080 = vpop.f32.mrb[0].mxu0
        %v3081 = vadd.f32 %v2330, %v3080
        %v3082 = vpop.f32.mrb[0].mxu0
        %v3083 = vpop.f32.mrb[0].mxu0
        %v3084 = vadd.f32 %v2331, %v3083
        %v3085 = vpop.f32.mrb[0].mxu0
        %3086 = vmatprep.mubr.bf16.mxu0 0
        %3087 = vmatmul.mubr.bf16.gmra.mrb[0].mxu0 %v2681
        %v3088 = vpop.f32.mrb[0].mxu0
        %v3089 = vadd.f32 %v2332, %v3088
        %v3090 = vpop.f32.mrb[0].mxu0
        %v3091 = vpop.f32.mrb[0].mxu0
        %v3092 = vadd.f32 %v2333, %v3091
        %v3093 = vpop.f32.mrb[0].mxu0
        %3094 = vmatprep.mubr.bf16.mxu0 0
        %3095 = vmatmul.mubr.bf16.gmra.mrb[0].mxu0 %v2682
        %v3096 = vpop.f32.mrb[0].mxu0
        %v3097 = vadd.f32 %v2334, %v3096
        %v3098 = vpop.f32.mrb[0].mxu0
        %v3099 = vpop.f32.mrb[0].mxu0
        %v3100 = vadd.f32 %v2335, %v3099
        %v3101 = vpop.f32.mrb[0].mxu0
        %3102 = vmatprep.mubr.bf16.mxu0 0
        %3103 = vmatmul.mubr.bf16.gmra.mrb[0].mxu0 %v2683
        %v3104 = vpop.f32.mrb[0].mxu0
        %v3105 = vadd.f32 %v2336, %v3104
        %v3106 = vpop.f32.mrb[0].mxu0
        %v3107 = vpop.f32.mrb[0].mxu0
        %v3108 = vadd.f32 %v2337, %v3107
        %v3109 = vpop.f32.mrb[0].mxu0
        %3110 = vmatprep.mubr.bf16.mxu0 0
        %3111 = vmatmul.mubr.bf16.gmra.mrb[0].mxu0 %v2684
        %v3112 = vpop.f32.mrb[0].mxu0
        %v3113 = vadd.f32 %v2338, %v3112
        %v3114 = vpop.f32.mrb[0].mxu0
        %v3115 = vpop.f32.mrb[0].mxu0
        %v3116 = vadd.f32 %v2339, %v3115
        %v3117 = vpop.f32.mrb[0].mxu0
        %3118 = vmatprep.mubr.bf16.mxu0 0
        %3119 = vmatmul.mubr.bf16.gmra.mrb[0].mxu0 %v2685
        %v3120 = vpop.f32.mrb[0].mxu0
        %v3121 = vadd.f32 %v2340, %v3120
        %v3122 = vpop.f32.mrb[0].mxu0
        %v3123 = vpop.f32.mrb[0].mxu0
        %v3124 = vadd.f32 %v2341, %v3123
        %v3125 = vpop.f32.mrb[0].mxu0
        %3126 = vmatprep.mubr.bf16.mxu0 0
        %3127 = vmatmul.mubr.bf16.gmra.mrb[0].mxu0 %v2686
        %v3128 = vpop.f32.mrb[0].mxu0
        %v3129 = vadd.f32 %v2342, %v3128
        %v3130 = vpop.f32.mrb[0].mxu0
        %v3131 = vpop.f32.mrb[0].mxu0
        %v3132 = vadd.f32 %v2343, %v3131
        %v3133 = vpop.f32.mrb[0].mxu0
        %3134 = vmatprep.mubr.bf16.mxu0 0
        %3135 = vmatmul.mubr.bf16.gmra.mrb[0].mxu0 %v2687
        %v3136 = vpop.f32.mrb[0].mxu0
        %v3137 = vadd.f32 %v2344, %v3136
        %v3138 = vpop.f32.mrb[0].mxu0
        %v3139 = vpop.f32.mrb[0].mxu0
        %v3140 = vadd.f32 %v2345, %v3139
        %v3141 = vpop.f32.mrb[0].mxu0
        %3142 = vmatprep.mubr.bf16.mxu0 0
        %3143 = vmatmul.mubr.bf16.gmra.mrb[0].mxu0 %v2688
        %v3144 = vpop.f32.mrb[0].mxu0
        %v3145 = vadd.f32 %v2346, %v3144
        %v3146 = vpop.f32.mrb[0].mxu0
        %v3147 = vpop.f32.mrb[0].mxu0
        %v3148 = vadd.f32 %v2347, %v3147
        %v3149 = vpop.f32.mrb[0].mxu0
        %3150 = vmatprep.mubr.bf16.mxu0 0
        %3151 = vmatmul.mubr.bf16.gmra.mrb[0].mxu0 %v2689
        %v3152 = vpop.f32.mrb[0].mxu0
        %v3153 = vadd.f32 %v2348, %v3152
        %v3154 = vpop.f32.mrb[0].mxu0
        %v3155 = vpop.f32.mrb[0].mxu0
        %v3156 = vadd.f32 %v2349, %v3155
        %v3157 = vpop.f32.mrb[0].mxu0
        %3158 = vmatprep.mubr.bf16.mxu0 0
        %3159 = vmatmul.mubr.bf16.gmra.mrb[0].mxu0 %v2690
        %v3160 = vpop.f32.mrb[0].mxu0
        %v3161 = vadd.f32 %v2350, %v3160
        %v3162 = vpop.f32.mrb[0].mxu0
        %v3163 = vpop.f32.mrb[0].mxu0
        %v3164 = vadd.f32 %v2351, %v3163
        %v3165 = vpop.f32.mrb[0].mxu0
        %3166 = vmatprep.mubr.bf16.mxu0 0
        %3167 = vmatmul.mubr.bf16.gmra.mrb[0].mxu0 %v2691
        %v3168 = vpop.f32.mrb[0].mxu0
        %v3169 = vadd.f32 %v2352, %v3168
        %v3170 = vpop.f32.mrb[0].mxu0
        %v3171 = vpop.f32.mrb[0].mxu0
        %v3172 = vadd.f32 %v2353, %v3171
        %v3173 = vpop.f32.mrb[0].mxu0
        %3174 = vmatprep.mubr.bf16.mxu0 0
        %3175 = vmatmul.mubr.bf16.gmra.mrb[0].mxu0 %v2692
        %v3176 = vpop.f32.mrb[0].mxu0
        %v3177 = vadd.f32 %v2354, %v3176
        %v3178 = vpop.f32.mrb[0].mxu0
        %v3179 = vpop.f32.mrb[0].mxu0
        %v3180 = vadd.f32 %v2355, %v3179
        %v3181 = vpop.f32.mrb[0].mxu0
        %3182 = vmatprep.mubr.bf16.mxu0 0
        %3183 = vmatmul.mubr.bf16.gmra.mrb[0].mxu0 %v2693
        %v3184 = vpop.f32.mrb[0].mxu0
        %v3185 = vadd.f32 %v2356, %v3184
        %v3186 = vpop.f32.mrb[0].mxu0
        %v3187 = vpop.f32.mrb[0].mxu0
        %v3188 = vadd.f32 %v2357, %v3187
        %v3189 = vpop.f32.mrb[0].mxu0
        %3190 = vmatprep.mubr.bf16.mxu0 0
        %3191 = vmatmul.mubr.bf16.gmra.mrb[0].mxu0 %v2694
        %v3192 = vpop.f32.mrb[0].mxu0
        %v3193 = vadd.f32 %v2358, %v3192
        %v3194 = vpop.f32.mrb[0].mxu0
        %v3195 = vpop.f32.mrb[0].mxu0
        %v3196 = vadd.f32 %v2359, %v3195
        %v3197 = vpop.f32.mrb[0].mxu0
        %3198 = vmatprep.mubr.bf16.mxu0 0
        %3199 = vmatmul.mubr.bf16.gmra.mrb[0].mxu0 %v2695
        %v3200 = vpop.f32.mrb[0].mxu0
        %v3201 = vadd.f32 %v2360, %v3200
        %v3202 = vpop.f32.mrb[0].mxu0
        %v3203 = vpop.f32.mrb[0].mxu0
        %v3204 = vadd.f32 %v2361, %v3203
        %v3205 = vpop.f32.mrb[0].mxu0
        %3206 = vmatprep.mubr.bf16.mxu0 0
        %3207 = vmatmul.mubr.bf16.gmra.mrb[0].mxu0 %v2696
        %v3208 = vpop.f32.mrb[0].mxu0
        %v3209 = vadd.f32 %v2362, %v3208
        %v3210 = vpop.f32.mrb[0].mxu0
        %v3211 = vpop.f32.mrb[0].mxu0
        %v3212 = vadd.f32 %v2363, %v3211
        %v3213 = vpop.f32.mrb[0].mxu0
        %3214 = vmatprep.mubr.bf16.mxu0 0
        %3215 = vmatmul.mubr.bf16.gmra.mrb[0].mxu0 %v2697
        %v3216 = vpop.f32.mrb[0].mxu0
        %v3217 = vadd.f32 %v2364, %v3216
        %v3218 = vpop.f32.mrb[0].mxu0
        %v3219 = vpop.f32.mrb[0].mxu0
        %v3220 = vadd.f32 %v2365, %v3219
        %v3221 = vpop.f32.mrb[0].mxu0
        %3222 = vmatprep.mubr.bf16.mxu0 0
        %3223 = vmatmul.mubr.bf16.gmra.mrb[0].mxu0 %v2698
        %v3224 = vpop.f32.mrb[0].mxu0
        %v3225 = vadd.f32 %v2366, %v3224
        %v3226 = vpop.f32.mrb[0].mxu0
        %v3227 = vpop.f32.mrb[0].mxu0
        %v3228 = vadd.f32 %v2367, %v3227
        %v3229 = vpop.f32.mrb[0].mxu0
        %3230 = vmatprep.mubr.bf16.mxu0 0
        %3231 = vmatmul.mubr.bf16.gmra.mrb[0].mxu0 %v2699
        %v3232 = vpop.f32.mrb[0].mxu0
        %v3233 = vadd.f32 %v2368, %v3232
        %v3234 = vpop.f32.mrb[0].mxu0
        %v3235 = vpop.f32.mrb[0].mxu0
        %v3236 = vadd.f32 %v2369, %v3235
        %v3237 = vpop.f32.mrb[0].mxu0
        %3238 = vmatprep.mubr.bf16.mxu0 0
        %3239 = vmatmul.mubr.bf16.gmra.mrb[0].mxu0 %v2700
        %v3240 = vpop.f32.mrb[0].mxu0
        %v3241 = vadd.f32 %v2370, %v3240
        %v3242 = vpop.f32.mrb[0].mxu0
        %v3243 = vpop.f32.mrb[0].mxu0
        %v3244 = vadd.f32 %v2371, %v3243
        %v3245 = vpop.f32.mrb[0].mxu0
        %3246 = vmatprep.mubr.bf16.mxu0 0
        %3247 = vmatmul.mubr.bf16.gmra.mrb[0].mxu0 %v2701
        %v3248 = vpop.f32.mrb[0].mxu0
        %v3249 = vadd.f32 %v2372, %v3248
        %v3250 = vpop.f32.mrb[0].mxu0
        %v3251 = vpop.f32.mrb[0].mxu0
        %v3252 = vadd.f32 %v2373, %v3251
        %v3253 = vpop.f32.mrb[0].mxu0
        %3254 = vmatprep.mubr.bf16.mxu0 0
        %3255 = vmatmul.mubr.bf16.gmra.mrb[0].mxu0 %v2702
        %v3256 = vpop.f32.mrb[0].mxu0
        %v3257 = vadd.f32 %v2374, %v3256
        %v3258 = vpop.f32.mrb[0].mxu0
        %v3259 = vpop.f32.mrb[0].mxu0
        %v3260 = vadd.f32 %v2375, %v3259
        %v3261 = vpop.f32.mrb[0].mxu0
        %3262 = vmatprep.mubr.bf16.mxu0 0
        %3263 = vmatmul.mubr.bf16.gmra.mrb[0].mxu0 %v2703
        %v3264 = vpop.f32.mrb[0].mxu0
        %v3265 = vadd.f32 %v2376, %v3264
        %v3266 = vpop.f32.mrb[0].mxu0
        %v3267 = vpop.f32.mrb[0].mxu0
        %v3268 = vadd.f32 %v2377, %v3267
        %v3269 = vpop.f32.mrb[0].mxu0
        %3270 = vmatprep.mubr.bf16.mxu0 0
        %3271 = vmatmul.mubr.bf16.gmra.mrb[0].mxu0 %v2704
        %v3272 = vpop.f32.mrb[0].mxu0
        %v3273 = vadd.f32 %v2378, %v3272
        %v3274 = vpop.f32.mrb[0].mxu0
        %v3275 = vpop.f32.mrb[0].mxu0
        %v3276 = vadd.f32 %v2379, %v3275
        %v3277 = vpop.f32.mrb[0].mxu0
        %3278 = vmatprep.mubr.bf16.mxu0 0
        %3279 = vmatmul.mubr.bf16.gmra.mrb[0].mxu0 %v2705
        %v3280 = vpop.f32.mrb[0].mxu0
        %v3281 = vadd.f32 %v2380, %v3280
        %v3282 = vpop.f32.mrb[0].mxu0
        %v3283 = vpop.f32.mrb[0].mxu0
        %v3284 = vadd.f32 %v2381, %v3283
        %v3285 = vpop.f32.mrb[0].mxu0
        %3286 = vmatprep.mubr.bf16.mxu0 0
        %3287 = vmatmul.mubr.bf16.gmra.mrb[0].mxu0 %v2706
        %v3288 = vpop.f32.mrb[0].mxu0
        %v3289 = vadd.f32 %v2382, %v3288
        %v3290 = vpop.f32.mrb[0].mxu0
        %v3291 = vpop.f32.mrb[0].mxu0
        %v3292 = vadd.f32 %v2383, %v3291
        %v3293 = vpop.f32.mrb[0].mxu0
        %3294 = vmatprep.mubr.bf16.mxu0 0
        %3295 = vmatmul.mubr.bf16.gmra.mrb[0].mxu0 %v2707
        %v3296 = vpop.f32.mrb[0].mxu0
        %v3297 = vadd.f32 %v2384, %v3296
        %v3298 = vpop.f32.mrb[0].mxu0
        %v3299 = vpop.f32.mrb[0].mxu0
        %v3300 = vadd.f32 %v2385, %v3299
        %v3301 = vpop.f32.mrb[0].mxu0
        %3302 = vmatprep.mubr.bf16.mxu0 0
        %3303 = vmatmul.mubr.bf16.gmra.mrb[0].mxu0 %v2708
        %v3304 = vpop.f32.mrb[0].mxu0
        %v3305 = vadd.f32 %v2386, %v3304
        %v3306 = vpop.f32.mrb[0].mxu0
        %v3307 = vpop.f32.mrb[0].mxu0
        %v3308 = vadd.f32 %v2387, %v3307
        %v3309 = vpop.f32.mrb[0].mxu0
        %3310 = vmatprep.mubr.bf16.mxu0 0
        %3311 = vmatmul.mubr.bf16.gmra.mrb[0].mxu0 %v2709
        %v3312 = vpop.f32.mrb[0].mxu0
        %v3313 = vadd.f32 %v2388, %v3312
        %v3314 = vpop.f32.mrb[0].mxu0
        %v3315 = vpop.f32.mrb[0].mxu0
        %v3316 = vadd.f32 %v2389, %v3315
        %v3317 = vpop.f32.mrb[0].mxu0
        %3318 = vdwg.mxu0
        %v3319 = vmax.f32 %v2809, 0.0
        %v3320 = vmax.f32 %v2812, 0.0
        %v3321 = vmax.f32 %v2817, 0.0
        %v3322 = vmax.f32 %v2820, 0.0
        %v3323 = vmax.f32 %v2825, 0.0
        %v3324 = vmax.f32 %v2828, 0.0
        %v3325 = vmax.f32 %v2833, 0.0
        %v3326 = vmax.f32 %v2836, 0.0
        %v3327 = vmax.f32 %v2841, 0.0
        %v3328 = vmax.f32 %v2844, 0.0
        %v3329 = vmax.f32 %v2849, 0.0
        %v3330 = vmax.f32 %v2852, 0.0
        %v3331 = vmax.f32 %v2857, 0.0
        %v3332 = vmax.f32 %v2860, 0.0
        %v3333 = vmax.f32 %v2865, 0.0
        %v3334 = vmax.f32 %v2868, 0.0
        %v3335 = vmax.f32 %v2873, 0.0
        %v3336 = vmax.f32 %v2876, 0.0
        %v3337 = vmax.f32 %v2881, 0.0
        %v3338 = vmax.f32 %v2884, 0.0
        %v3339 = vmax.f32 %v2889, 0.0
        %v3340 = vmax.f32 %v2892, 0.0
        %v3341 = vmax.f32 %v2897, 0.0
        %v3342 = vmax.f32 %v2900, 0.0
        %v3343 = vmax.f32 %v2905, 0.0
        %v3344 = vmax.f32 %v2908, 0.0
        %v3345 = vmax.f32 %v2913, 0.0
        %v3346 = vmax.f32 %v2916, 0.0
        %v3347 = vmax.f32 %v2921, 0.0
        %v3348 = vmax.f32 %v2924, 0.0
        %v3349 = vmax.f32 %v2929, 0.0
        %v3350 = vmax.f32 %v2932, 0.0
        %v3351 = vmax.f32 %v2937, 0.0
        %v3352 = vmax.f32 %v2940, 0.0
        %v3353 = vmax.f32 %v2945, 0.0
        %v3354 = vmax.f32 %v2948, 0.0
        %v3355 = vmax.f32 %v2953, 0.0
        %v3356 = vmax.f32 %v2956, 0.0
        %v3357 = vmax.f32 %v2961, 0.0
        %v3358 = vmax.f32 %v2964, 0.0
        %v3359 = vmax.f32 %v2969, 0.0
        %v3360 = vmax.f32 %v2972, 0.0
        %v3361 = vmax.f32 %v2977, 0.0
        %v3362 = vmax.f32 %v2980, 0.0
        %v3363 = vmax.f32 %v2985, 0.0
        %v3364 = vmax.f32 %v2988, 0.0
        %v3365 = vmax.f32 %v2993, 0.0
        %v3366 = vmax.f32 %v2996, 0.0
        %v3367 = vmax.f32 %v3001, 0.0
        %v3368 = vmax.f32 %v3004, 0.0
        %v3369 = vmax.f32 %v3009, 0.0
        %v3370 = vmax.f32 %v3012, 0.0
        %v3371 = vmax.f32 %v3017, 0.0
        %v3372 = vmax.f32 %v3020, 0.0
        %v3373 = vmax.f32 %v3025, 0.0
        %v3374 = vmax.f32 %v3028, 0.0
        %v3375 = vmax.f32 %v3033, 0.0
        %v3376 = vmax.f32 %v3036, 0.0
        %v3377 = vmax.f32 %v3041, 0.0
        %v3378 = vmax.f32 %v3044, 0.0
        %v3379 = vmax.f32 %v3049, 0.0
        %v3380 = vmax.f32 %v3052, 0.0
        %v3381 = vmax.f32 %v3057, 0.0
        %v3382 = vmax.f32 %v3060, 0.0
        %v3383 = vmax.f32 %v3065, 0.0
        %v3384 = vmax.f32 %v3068, 0.0
        %v3385 = vmax.f32 %v3073, 0.0
        %v3386 = vmax.f32 %v3076, 0.0
        %v3387 = vmax.f32 %v3081, 0.0
        %v3388 = vmax.f32 %v3084, 0.0
        %v3389 = vmax.f32 %v3089, 0.0
        %v3390 = vmax.f32 %v3092, 0.0
        %v3391 = vmax.f32 %v3097, 0.0
        %v3392 = vmax.f32 %v3100, 0.0
        %v3393 = vmax.f32 %v3105, 0.0
        %v3394 = vmax.f32 %v3108, 0.0
        %v3395 = vmax.f32 %v3113, 0.0
        %v3396 = vmax.f32 %v3116, 0.0
        %v3397 = vmax.f32 %v3121, 0.0
        %v3398 = vmax.f32 %v3124, 0.0
        %v3399 = vmax.f32 %v3129, 0.0
        %v3400 = vmax.f32 %v3132, 0.0
        %v3401 = vmax.f32 %v3137, 0.0
        %v3402 = vmax.f32 %v3140, 0.0
        %v3403 = vmax.f32 %v3145, 0.0
        %v3404 = vmax.f32 %v3148, 0.0
        %v3405 = vmax.f32 %v3153, 0.0
        %v3406 = vmax.f32 %v3156, 0.0
        %v3407 = vmax.f32 %v3161, 0.0
        %v3408 = vmax.f32 %v3164, 0.0
        %v3409 = vmax.f32 %v3169, 0.0
        %v3410 = vmax.f32 %v3172, 0.0
        %v3411 = vmax.f32 %v3177, 0.0
        %v3412 = vmax.f32 %v3180, 0.0
        %v3413 = vmax.f32 %v3185, 0.0
        %v3414 = vmax.f32 %v3188, 0.0
        %v3415 = vmax.f32 %v3193, 0.0
        %v3416 = vmax.f32 %v3196, 0.0
        %v3417 = vmax.f32 %v3201, 0.0
        %v3418 = vmax.f32 %v3204, 0.0
        %v3419 = vmax.f32 %v3209, 0.0
        %v3420 = vmax.f32 %v3212, 0.0
        %v3421 = vmax.f32 %v3217, 0.0
        %v3422 = vmax.f32 %v3220, 0.0
        %v3423 = vmax.f32 %v3225, 0.0
        %v3424 = vmax.f32 %v3228, 0.0
        %v3425 = vmax.f32 %v3233, 0.0
        %v3426 = vmax.f32 %v3236, 0.0
        %v3427 = vmax.f32 %v3241, 0.0
        %v3428 = vmax.f32 %v3244, 0.0
        %v3429 = vmax.f32 %v3249, 0.0
        %v3430 = vmax.f32 %v3252, 0.0
        %v3431 = vmax.f32 %v3257, 0.0
        %v3432 = vmax.f32 %v3260, 0.0
        %v3433 = vmax.f32 %v3265, 0.0
        %v3434 = vmax.f32 %v3268, 0.0
        %v3435 = vmax.f32 %v3273, 0.0
        %v3436 = vmax.f32 %v3276, 0.0
        %v3437 = vmax.f32 %v3281, 0.0
        %v3438 = vmax.f32 %v3284, 0.0
        %v3439 = vmax.f32 %v3289, 0.0
        %v3440 = vmax.f32 %v3292, 0.0
        %v3441 = vmax.f32 %v3297, 0.0
        %v3442 = vmax.f32 %v3300, 0.0
        %v3443 = vmax.f32 %v3305, 0.0
        %v3444 = vmax.f32 %v3308, 0.0
        %v3445 = vmax.f32 %v3313, 0.0
        %v3446 = vmax.f32 %v3316, 0.0
        %v3447 = vpack.c.bf16 %v3320, %v3319
        %v3448 = vpack.c.bf16 %v3322, %v3321
        %v3449 = vpack.c.bf16 %v3324, %v3323
        %v3450 = vpack.c.bf16 %v3326, %v3325
        %v3451 = vpack.c.bf16 %v3328, %v3327
        %v3452 = vpack.c.bf16 %v3330, %v3329
        %v3453 = vpack.c.bf16 %v3332, %v3331
        %v3454 = vpack.c.bf16 %v3334, %v3333
        %v3455 = vpack.c.bf16 %v3336, %v3335
        %v3456 = vpack.c.bf16 %v3338, %v3337
        %v3457 = vpack.c.bf16 %v3340, %v3339
        %v3458 = vpack.c.bf16 %v3342, %v3341
        %v3459 = vpack.c.bf16 %v3344, %v3343
        %v3460 = vpack.c.bf16 %v3346, %v3345
        %v3461 = vpack.c.bf16 %v3348, %v3347
        %v3462 = vpack.c.bf16 %v3350, %v3349
        %v3463 = vpack.c.bf16 %v3352, %v3351
        %v3464 = vpack.c.bf16 %v3354, %v3353
        %v3465 = vpack.c.bf16 %v3356, %v3355
        %v3466 = vpack.c.bf16 %v3358, %v3357
        %v3467 = vpack.c.bf16 %v3360, %v3359
        %v3468 = vpack.c.bf16 %v3362, %v3361
        %v3469 = vpack.c.bf16 %v3364, %v3363
        %v3470 = vpack.c.bf16 %v3366, %v3365
        %v3471 = vpack.c.bf16 %v3368, %v3367
        %v3472 = vpack.c.bf16 %v3370, %v3369
        %v3473 = vpack.c.bf16 %v3372, %v3371
        %v3474 = vpack.c.bf16 %v3374, %v3373
        %v3475 = vpack.c.bf16 %v3376, %v3375
        %v3476 = vpack.c.bf16 %v3378, %v3377
        %v3477 = vpack.c.bf16 %v3380, %v3379
        %v3478 = vpack.c.bf16 %v3382, %v3381
        %v3479 = vpack.c.bf16 %v3384, %v3383
        %v3480 = vpack.c.bf16 %v3386, %v3385
        %v3481 = vpack.c.bf16 %v3388, %v3387
        %v3482 = vpack.c.bf16 %v3390, %v3389
        %v3483 = vpack.c.bf16 %v3392, %v3391
        %v3484 = vpack.c.bf16 %v3394, %v3393
        %v3485 = vpack.c.bf16 %v3396, %v3395
        %v3486 = vpack.c.bf16 %v3398, %v3397
        %v3487 = vpack.c.bf16 %v3400, %v3399
        %v3488 = vpack.c.bf16 %v3402, %v3401
        %v3489 = vpack.c.bf16 %v3404, %v3403
        %v3490 = vpack.c.bf16 %v3406, %v3405
        %v3491 = vpack.c.bf16 %v3408, %v3407
        %v3492 = vpack.c.bf16 %v3410, %v3409
        %v3493 = vpack.c.bf16 %v3412, %v3411
        %v3494 = vpack.c.bf16 %v3414, %v3413
        %v3495 = vpack.c.bf16 %v3416, %v3415
        %v3496 = vpack.c.bf16 %v3418, %v3417
        %v3497 = vpack.c.bf16 %v3420, %v3419
        %v3498 = vpack.c.bf16 %v3422, %v3421
        %v3499 = vpack.c.bf16 %v3424, %v3423
        %v3500 = vpack.c.bf16 %v3426, %v3425
        %v3501 = vpack.c.bf16 %v3428, %v3427
        %v3502 = vpack.c.bf16 %v3430, %v3429
        %v3503 = vpack.c.bf16 %v3432, %v3431
        %v3504 = vpack.c.bf16 %v3434, %v3433
        %v3505 = vpack.c.bf16 %v3436, %v3435
        %v3506 = vpack.c.bf16 %v3438, %v3437
        %v3507 = vpack.c.bf16 %v3440, %v3439
        %v3508 = vpack.c.bf16 %v3442, %v3441
        %v3509 = vpack.c.bf16 %v3444, %v3443
        %v3510 = vpack.c.bf16 %v3446, %v3445
        %v3511 = vmul.f32 %v3319, %v3319
        %v3512 = vmul.f32 %v3320, %v3320
        %v3513 = vmul.f32 %v3321, %v3321
        %v3514 = vmul.f32 %v3322, %v3322
        %v3515 = vmul.f32 %v3323, %v3323
        %v3516 = vmul.f32 %v3324, %v3324
        %v3517 = vmul.f32 %v3325, %v3325
        %v3518 = vmul.f32 %v3326, %v3326
        %v3519 = vmul.f32 %v3327, %v3327
        %v3520 = vmul.f32 %v3328, %v3328
        %v3521 = vmul.f32 %v3329, %v3329
        %v3522 = vmul.f32 %v3330, %v3330
        %v3523 = vmul.f32 %v3331, %v3331
        %v3524 = vmul.f32 %v3332, %v3332
        %v3525 = vmul.f32 %v3333, %v3333
        %v3526 = vmul.f32 %v3334, %v3334
        %v3527 = vmul.f32 %v3335, %v3335
        %v3528 = vmul.f32 %v3336, %v3336
        %v3529 = vmul.f32 %v3337, %v3337
        %v3530 = vmul.f32 %v3338, %v3338
        %v3531 = vmul.f32 %v3339, %v3339
        %v3532 = vmul.f32 %v3340, %v3340
        %v3533 = vmul.f32 %v3341, %v3341
        %v3534 = vmul.f32 %v3342, %v3342
        %v3535 = vmul.f32 %v3343, %v3343
        %v3536 = vmul.f32 %v3344, %v3344
        %v3537 = vmul.f32 %v3345, %v3345
        %v3538 = vmul.f32 %v3346, %v3346
        %v3539 = vmul.f32 %v3347, %v3347
        %v3540 = vmul.f32 %v3348, %v3348
        %v3541 = vmul.f32 %v3349, %v3349
        %v3542 = vmul.f32 %v3350, %v3350
        %v3543 = vmul.f32 %v3351, %v3351
        %v3544 = vmul.f32 %v3352, %v3352
        %v3545 = vmul.f32 %v3353, %v3353
        %v3546 = vmul.f32 %v3354, %v3354
        %v3547 = vmul.f32 %v3355, %v3355
        %v3548 = vmul.f32 %v3356, %v3356
        %v3549 = vmul.f32 %v3357, %v3357
        %v3550 = vmul.f32 %v3358, %v3358
        %v3551 = vmul.f32 %v3359, %v3359
        %v3552 = vmul.f32 %v3360, %v3360
        %v3553 = vmul.f32 %v3361, %v3361
        %v3554 = vmul.f32 %v3362, %v3362
        %v3555 = vmul.f32 %v3363, %v3363
        %v3556 = vmul.f32 %v3364, %v3364
        %v3557 = vmul.f32 %v3365, %v3365
        %v3558 = vmul.f32 %v3366, %v3366
        %v3559 = vmul.f32 %v3367, %v3367
        %v3560 = vmul.f32 %v3368, %v3368
        %v3561 = vmul.f32 %v3369, %v3369
        %v3562 = vmul.f32 %v3370, %v3370
        %v3563 = vmul.f32 %v3371, %v3371
        %v3564 = vmul.f32 %v3372, %v3372
        %v3565 = vmul.f32 %v3373, %v3373
        %v3566 = vmul.f32 %v3374, %v3374
        %v3567 = vmul.f32 %v3375, %v3375
        %v3568 = vmul.f32 %v3376, %v3376
        %v3569 = vmul.f32 %v3377, %v3377
        %v3570 = vmul.f32 %v3378, %v3378
        %v3571 = vmul.f32 %v3379, %v3379
        %v3572 = vmul.f32 %v3380, %v3380
        %v3573 = vmul.f32 %v3381, %v3381
        %v3574 = vmul.f32 %v3382, %v3382
        %v3575 = vmul.f32 %v3383, %v3383
        %v3576 = vmul.f32 %v3384, %v3384
        %v3577 = vmul.f32 %v3385, %v3385
        %v3578 = vmul.f32 %v3386, %v3386
        %v3579 = vmul.f32 %v3387, %v3387
        %v3580 = vmul.f32 %v3388, %v3388
        %v3581 = vmul.f32 %v3389, %v3389
        %v3582 = vmul.f32 %v3390, %v3390
        %v3583 = vmul.f32 %v3391, %v3391
        %v3584 = vmul.f32 %v3392, %v3392
        %v3585 = vmul.f32 %v3393, %v3393
        %v3586 = vmul.f32 %v3394, %v3394
        %v3587 = vmul.f32 %v3395, %v3395
        %v3588 = vmul.f32 %v3396, %v3396
        %v3589 = vmul.f32 %v3397, %v3397
        %v3590 = vmul.f32 %v3398, %v3398
        %v3591 = vmul.f32 %v3399, %v3399
        %v3592 = vmul.f32 %v3400, %v3400
        %v3593 = vmul.f32 %v3401, %v3401
        %v3594 = vmul.f32 %v3402, %v3402
        %v3595 = vmul.f32 %v3403, %v3403
        %v3596 = vmul.f32 %v3404, %v3404
        %v3597 = vmul.f32 %v3405, %v3405
        %v3598 = vmul.f32 %v3406, %v3406
        %v3599 = vmul.f32 %v3407, %v3407
        %v3600 = vmul.f32 %v3408, %v3408
        %v3601 = vmul.f32 %v3409, %v3409
        %v3602 = vmul.f32 %v3410, %v3410
        %v3603 = vmul.f32 %v3411, %v3411
        %v3604 = vmul.f32 %v3412, %v3412
        %v3605 = vmul.f32 %v3413, %v3413
        %v3606 = vmul.f32 %v3414, %v3414
        %v3607 = vmul.f32 %v3415, %v3415
        %v3608 = vmul.f32 %v3416, %v3416
        %v3609 = vmul.f32 %v3417, %v3417
        %v3610 = vmul.f32 %v3418, %v3418
        %v3611 = vmul.f32 %v3419, %v3419
        %v3612 = vmul.f32 %v3420, %v3420
        %v3613 = vmul.f32 %v3421, %v3421
        %v3614 = vmul.f32 %v3422, %v3422
        %v3615 = vmul.f32 %v3423, %v3423
        %v3616 = vmul.f32 %v3424, %v3424
        %v3617 = vmul.f32 %v3425, %v3425
        %v3618 = vmul.f32 %v3426, %v3426
        %v3619 = vmul.f32 %v3427, %v3427
        %v3620 = vmul.f32 %v3428, %v3428
        %v3621 = vmul.f32 %v3429, %v3429
        %v3622 = vmul.f32 %v3430, %v3430
        %v3623 = vmul.f32 %v3431, %v3431
        %v3624 = vmul.f32 %v3432, %v3432
        %v3625 = vmul.f32 %v3433, %v3433
        %v3626 = vmul.f32 %v3434, %v3434
        %v3627 = vmul.f32 %v3435, %v3435
        %v3628 = vmul.f32 %v3436, %v3436
        %v3629 = vmul.f32 %v3437, %v3437
        %v3630 = vmul.f32 %v3438, %v3438
        %v3631 = vmul.f32 %v3439, %v3439
        %v3632 = vmul.f32 %v3440, %v3440
        %v3633 = vmul.f32 %v3441, %v3441
        %v3634 = vmul.f32 %v3442, %v3442
        %v3635 = vmul.f32 %v3443, %v3443
        %v3636 = vmul.f32 %v3444, %v3444
        %v3637 = vmul.f32 %v3445, %v3445
        %v3638 = vmul.f32 %v3446, %v3446
        %v3639 = vpack.c.bf16 %v3512, %v3511
        %v3640 = vpack.c.bf16 %v3514, %v3513
        %v3641 = vpack.c.bf16 %v3516, %v3515
        %v3642 = vpack.c.bf16 %v3518, %v3517
        %v3643 = vpack.c.bf16 %v3520, %v3519
        %v3644 = vpack.c.bf16 %v3522, %v3521
        %v3645 = vpack.c.bf16 %v3524, %v3523
        %v3646 = vpack.c.bf16 %v3526, %v3525
        %v3647 = vpack.c.bf16 %v3528, %v3527
        %v3648 = vpack.c.bf16 %v3530, %v3529
        %v3649 = vpack.c.bf16 %v3532, %v3531
        %v3650 = vpack.c.bf16 %v3534, %v3533
        %v3651 = vpack.c.bf16 %v3536, %v3535
        %v3652 = vpack.c.bf16 %v3538, %v3537
        %v3653 = vpack.c.bf16 %v3540, %v3539
        %v3654 = vpack.c.bf16 %v3542, %v3541
        %v3655 = vpack.c.bf16 %v3544, %v3543
        %v3656 = vpack.c.bf16 %v3546, %v3545
        %v3657 = vpack.c.bf16 %v3548, %v3547
        %v3658 = vpack.c.bf16 %v3550, %v3549
        %v3659 = vpack.c.bf16 %v3552, %v3551
        %v3660 = vpack.c.bf16 %v3554, %v3553
        %v3661 = vpack.c.bf16 %v3556, %v3555
        %v3662 = vpack.c.bf16 %v3558, %v3557
        %v3663 = vpack.c.bf16 %v3560, %v3559
        %v3664 = vpack.c.bf16 %v3562, %v3561
        %v3665 = vpack.c.bf16 %v3564, %v3563
        %v3666 = vpack.c.bf16 %v3566, %v3565
        %v3667 = vpack.c.bf16 %v3568, %v3567
        %v3668 = vpack.c.bf16 %v3570, %v3569
        %v3669 = vpack.c.bf16 %v3572, %v3571
        %v3670 = vpack.c.bf16 %v3574, %v3573
        %v3671 = vpack.c.bf16 %v3576, %v3575
        %v3672 = vpack.c.bf16 %v3578, %v3577
        %v3673 = vpack.c.bf16 %v3580, %v3579
        %v3674 = vpack.c.bf16 %v3582, %v3581
        %v3675 = vpack.c.bf16 %v3584, %v3583
        %v3676 = vpack.c.bf16 %v3586, %v3585
        %v3677 = vpack.c.bf16 %v3588, %v3587
        %v3678 = vpack.c.bf16 %v3590, %v3589
        %v3679 = vpack.c.bf16 %v3592, %v3591
        %v3680 = vpack.c.bf16 %v3594, %v3593
        %v3681 = vpack.c.bf16 %v3596, %v3595
        %v3682 = vpack.c.bf16 %v3598, %v3597
        %v3683 = vpack.c.bf16 %v3600, %v3599
        %v3684 = vpack.c.bf16 %v3602, %v3601
        %v3685 = vpack.c.bf16 %v3604, %v3603
        %v3686 = vpack.c.bf16 %v3606, %v3605
        %v3687 = vpack.c.bf16 %v3608, %v3607
        %v3688 = vpack.c.bf16 %v3610, %v3609
        %v3689 = vpack.c.bf16 %v3612, %v3611
        %v3690 = vpack.c.bf16 %v3614, %v3613
        %v3691 = vpack.c.bf16 %v3616, %v3615
        %v3692 = vpack.c.bf16 %v3618, %v3617
        %v3693 = vpack.c.bf16 %v3620, %v3619
        %v3694 = vpack.c.bf16 %v3622, %v3621
        %v3695 = vpack.c.bf16 %v3624, %v3623
        %v3696 = vpack.c.bf16 %v3626, %v3625
        %v3697 = vpack.c.bf16 %v3628, %v3627
        %v3698 = vpack.c.bf16 %v3630, %v3629
        %v3699 = vpack.c.bf16 %v3632, %v3631
        %v3700 = vpack.c.bf16 %v3634, %v3633
        %v3701 = vpack.c.bf16 %v3636, %v3635
        %v3702 = vpack.c.bf16 %v3638, %v3637
        %v3703 = vunpack.c.l.b16 %v926
        %v3704 = vunpack.c.h.b16 %v926
        %v3705 = vunpack.c.l.b16 %v927
        %v3706 = vunpack.c.h.b16 %v927
        %v3707 = vunpack.c.l.b16 %v928
        %v3708 = vunpack.c.h.b16 %v928
        %v3709 = vunpack.c.l.b16 %v929
        %v3710 = vunpack.c.h.b16 %v929
        %v3711 = vunpack.c.l.b16 %v930
        %v3712 = vunpack.c.h.b16 %v930
        %v3713 = vunpack.c.l.b16 %v931
        %v3714 = vunpack.c.h.b16 %v931
        %v3715 = vunpack.c.l.b16 %v932
        %v3716 = vunpack.c.h.b16 %v932
        %v3717 = vunpack.c.l.b16 %v933
        %v3718 = vunpack.c.h.b16 %v933
        %v3719 = vunpack.c.l.b16 %v934
        %v3720 = vunpack.c.h.b16 %v934
        %v3721 = vunpack.c.l.b16 %v935
        %v3722 = vunpack.c.h.b16 %v935
        %v3723 = vunpack.c.l.b16 %v936
        %v3724 = vunpack.c.h.b16 %v936
        %v3725 = vunpack.c.l.b16 %v937
        %v3726 = vunpack.c.h.b16 %v937
        %v3727 = vunpack.c.l.b16 %v938
        %v3728 = vunpack.c.h.b16 %v938
        %v3729 = vunpack.c.l.b16 %v939
        %v3730 = vunpack.c.h.b16 %v939
        %v3731 = vunpack.c.l.b16 %v940
        %v3732 = vunpack.c.h.b16 %v940
        %v3733 = vunpack.c.l.b16 %v941
        %v3734 = vunpack.c.h.b16 %v941
        %v3735 = vunpack.c.l.b16 %v942
        %v3736 = vunpack.c.h.b16 %v942
        %v3737 = vunpack.c.l.b16 %v943
        %v3738 = vunpack.c.h.b16 %v943
        %v3739 = vunpack.c.l.b16 %v944
        %v3740 = vunpack.c.h.b16 %v944
        %v3741 = vunpack.c.l.b16 %v945
        %v3742 = vunpack.c.h.b16 %v945
        %v3743 = vunpack.c.l.b16 %v946
        %v3744 = vunpack.c.h.b16 %v946
        %v3745 = vunpack.c.l.b16 %v947
        %v3746 = vunpack.c.h.b16 %v947
        %v3747 = vunpack.c.l.b16 %v948
        %v3748 = vunpack.c.h.b16 %v948
        %v3749 = vunpack.c.l.b16 %v949
        %v3750 = vunpack.c.h.b16 %v949
        %v3751 = vunpack.c.l.b16 %v950
        %v3752 = vunpack.c.h.b16 %v950
        %v3753 = vunpack.c.l.b16 %v951
        %v3754 = vunpack.c.h.b16 %v951
        %v3755 = vunpack.c.l.b16 %v952
        %v3756 = vunpack.c.h.b16 %v952
        %v3757 = vunpack.c.l.b16 %v953
        %v3758 = vunpack.c.h.b16 %v953
        %v3759 = vunpack.c.l.b16 %v954
        %v3760 = vunpack.c.h.b16 %v954
        %v3761 = vunpack.c.l.b16 %v955
        %v3762 = vunpack.c.h.b16 %v955
        %v3763 = vunpack.c.l.b16 %v956
        %v3764 = vunpack.c.h.b16 %v956
        %v3765 = vunpack.c.l.b16 %v957
        %v3766 = vunpack.c.h.b16 %v957
        %v3767 = vunpack.c.l.b16 %v958
        %v3768 = vunpack.c.h.b16 %v958
        %v3769 = vunpack.c.l.b16 %v959
        %v3770 = vunpack.c.h.b16 %v959
        %v3771 = vunpack.c.l.b16 %v960
        %v3772 = vunpack.c.h.b16 %v960
        %v3773 = vunpack.c.l.b16 %v961
        %v3774 = vunpack.c.h.b16 %v961
        %v3775 = vunpack.c.l.b16 %v962
        %v3776 = vunpack.c.h.b16 %v962
        %v3777 = vunpack.c.l.b16 %v963
        %v3778 = vunpack.c.h.b16 %v963
        %v3779 = vunpack.c.l.b16 %v964
        %v3780 = vunpack.c.h.b16 %v964
        %v3781 = vunpack.c.l.b16 %v965
        %v3782 = vunpack.c.h.b16 %v965
        %v3783 = vunpack.c.l.b16 %v966
        %v3784 = vunpack.c.h.b16 %v966
        %v3785 = vunpack.c.l.b16 %v967
        %v3786 = vunpack.c.h.b16 %v967
        %v3787 = vunpack.c.l.b16 %v968
        %v3788 = vunpack.c.h.b16 %v968
        %v3789 = vunpack.c.l.b16 %v969
        %v3790 = vunpack.c.h.b16 %v969
        %v3791 = vunpack.c.l.b16 %v970
        %v3792 = vunpack.c.h.b16 %v970
        %v3793 = vunpack.c.l.b16 %v971
        %v3794 = vunpack.c.h.b16 %v971
        %v3795 = vunpack.c.l.b16 %v972
        %v3796 = vunpack.c.h.b16 %v972
        %v3797 = vunpack.c.l.b16 %v973
        %v3798 = vunpack.c.h.b16 %v973
        %v3799 = vunpack.c.l.b16 %v974
        %v3800 = vunpack.c.h.b16 %v974
        %v3801 = vunpack.c.l.b16 %v975
        %v3802 = vunpack.c.h.b16 %v975
        %v3803 = vunpack.c.l.b16 %v976
        %v3804 = vunpack.c.h.b16 %v976
        %v3805 = vunpack.c.l.b16 %v977
        %v3806 = vunpack.c.h.b16 %v977
        %v3807 = vunpack.c.l.b16 %v978
        %v3808 = vunpack.c.h.b16 %v978
        %v3809 = vunpack.c.l.b16 %v979
        %v3810 = vunpack.c.h.b16 %v979
        %v3811 = vunpack.c.l.b16 %v980
        %v3812 = vunpack.c.h.b16 %v980
        %v3813 = vunpack.c.l.b16 %v981
        %v3814 = vunpack.c.h.b16 %v981
        %v3815 = vunpack.c.l.b16 %v982
        %v3816 = vunpack.c.h.b16 %v982
        %v3817 = vunpack.c.l.b16 %v983
        %v3818 = vunpack.c.h.b16 %v983
        %v3819 = vunpack.c.l.b16 %v984
        %v3820 = vunpack.c.h.b16 %v984
        %v3821 = vunpack.c.l.b16 %v985
        %v3822 = vunpack.c.h.b16 %v985
        %v3823 = vunpack.c.l.b16 %v986
        %v3824 = vunpack.c.h.b16 %v986
        %v3825 = vunpack.c.l.b16 %v987
        %v3826 = vunpack.c.h.b16 %v987
        %v3827 = vunpack.c.l.b16 %v988
        %v3828 = vunpack.c.h.b16 %v988
        %v3829 = vunpack.c.l.b16 %v989
        %v3830 = vunpack.c.h.b16 %v989
        %v3831 = vpack.c.b16 %v3711, %v3703
        %v3832 = vpack.c.b16 %v3712, %v3704
        %v3833 = vpack.c.b16 %v3713, %v3705
        %v3834 = vpack.c.b16 %v3714, %v3706
        %v3835 = vpack.c.b16 %v3715, %v3707
        %v3836 = vpack.c.b16 %v3716, %v3708
        %v3837 = vpack.c.b16 %v3717, %v3709
        %v3838 = vpack.c.b16 %v3718, %v3710
        %v3839 = vpack.c.b16 %v3727, %v3719
        %v3840 = vpack.c.b16 %v3728, %v3720
        %v3841 = vpack.c.b16 %v3729, %v3721
        %v3842 = vpack.c.b16 %v3730, %v3722
        %v3843 = vpack.c.b16 %v3731, %v3723
        %v3844 = vpack.c.b16 %v3732, %v3724
        %v3845 = vpack.c.b16 %v3733, %v3725
        %v3846 = vpack.c.b16 %v3734, %v3726
        %v3847 = vpack.c.b16 %v3743, %v3735
        %v3848 = vpack.c.b16 %v3744, %v3736
        %v3849 = vpack.c.b16 %v3745, %v3737
        %v3850 = vpack.c.b16 %v3746, %v3738
        %v3851 = vpack.c.b16 %v3747, %v3739
        %v3852 = vpack.c.b16 %v3748, %v3740
        %v3853 = vpack.c.b16 %v3749, %v3741
        %v3854 = vpack.c.b16 %v3750, %v3742
        %v3855 = vpack.c.b16 %v3759, %v3751
        %v3856 = vpack.c.b16 %v3760, %v3752
        %v3857 = vpack.c.b16 %v3761, %v3753
        %v3858 = vpack.c.b16 %v3762, %v3754
        %v3859 = vpack.c.b16 %v3763, %v3755
        %v3860 = vpack.c.b16 %v3764, %v3756
        %v3861 = vpack.c.b16 %v3765, %v3757
        %v3862 = vpack.c.b16 %v3766, %v3758
        %v3863 = vpack.c.b16 %v3775, %v3767
        %v3864 = vpack.c.b16 %v3776, %v3768
        %v3865 = vpack.c.b16 %v3777, %v3769
        %v3866 = vpack.c.b16 %v3778, %v3770
        %v3867 = vpack.c.b16 %v3779, %v3771
        %v3868 = vpack.c.b16 %v3780, %v3772
        %v3869 = vpack.c.b16 %v3781, %v3773
        %v3870 = vpack.c.b16 %v3782, %v3774
        %v3871 = vpack.c.b16 %v3791, %v3783
        %v3872 = vpack.c.b16 %v3792, %v3784
        %v3873 = vpack.c.b16 %v3793, %v3785
        %v3874 = vpack.c.b16 %v3794, %v3786
        %v3875 = vpack.c.b16 %v3795, %v3787
        %v3876 = vpack.c.b16 %v3796, %v3788
        %v3877 = vpack.c.b16 %v3797, %v3789
        %v3878 = vpack.c.b16 %v3798, %v3790
        %v3879 = vpack.c.b16 %v3807, %v3799
        %v3880 = vpack.c.b16 %v3808, %v3800
        %v3881 = vpack.c.b16 %v3809, %v3801
        %v3882 = vpack.c.b16 %v3810, %v3802
        %v3883 = vpack.c.b16 %v3811, %v3803
        %v3884 = vpack.c.b16 %v3812, %v3804
        %v3885 = vpack.c.b16 %v3813, %v3805
        %v3886 = vpack.c.b16 %v3814, %v3806
        %v3887 = vpack.c.b16 %v3823, %v3815
        %v3888 = vpack.c.b16 %v3824, %v3816
        %v3889 = vpack.c.b16 %v3825, %v3817
        %v3890 = vpack.c.b16 %v3826, %v3818
        %v3891 = vpack.c.b16 %v3827, %v3819
        %v3892 = vpack.c.b16 %v3828, %v3820
        %v3893 = vpack.c.b16 %v3829, %v3821
        %v3894 = vpack.c.b16 %v3830, %v3822
        %3959 = vmatprep.subr.bf16.mxu0 0
        %3960 = vmatpush1.bf16.msra.mxu0 %v3447
        %3961 = vmatprep.subr.bf16.mxu0 0
        %3962 = vmatpush1.bf16.msra.mxu0 %v3448
        %3963 = vmatprep.subr.bf16.mxu0 0
        %3964 = vmatpush1.bf16.msra.mxu0 %v3449
        %3965 = vmatprep.subr.bf16.mxu0 0
        %3966 = vmatpush1.bf16.msra.mxu0 %v3450
        %3967 = vmatprep.subr.bf16.mxu0 0
        %3968 = vmatpush1.bf16.msra.mxu0 %v3451
        %3969 = vmatprep.subr.bf16.mxu0 0
        %3970 = vmatpush1.bf16.msra.mxu0 %v3452
        %3971 = vmatprep.subr.bf16.mxu0 0
        %3972 = vmatpush1.bf16.msra.mxu0 %v3453
        %3973 = vmatprep.subr.bf16.mxu0 0
        %3974 = vmatpush1.bf16.msra.mxu0 %v3454
        %3975 = vmatprep.subr.bf16.mxu0 0
        %3976 = vmatpush1.bf16.msra.mxu0 %v3455
        %3977 = vmatprep.subr.bf16.mxu0 0
        %3978 = vmatpush1.bf16.msra.mxu0 %v3456
        %3979 = vmatprep.subr.bf16.mxu0 0
        %3980 = vmatpush1.bf16.msra.mxu0 %v3457
        %3981 = vmatprep.subr.bf16.mxu0 0
        %3982 = vmatpush1.bf16.msra.mxu0 %v3458
        %3983 = vmatprep.subr.bf16.mxu0 0
        %3984 = vmatpush1.bf16.msra.mxu0 %v3459
        %3985 = vmatprep.subr.bf16.mxu0 0
        %3986 = vmatpush1.bf16.msra.mxu0 %v3460
        %3987 = vmatprep.subr.bf16.mxu0 0
        %3988 = vmatpush1.bf16.msra.mxu0 %v3461
        %3989 = vmatprep.subr.bf16.mxu0 0
        %3990 = vmatpush1.bf16.msra.mxu0 %v3462
        %3991 = vmatprep.mubr.bf16.mxu0 %v3832
        %3992 = vmatmul.mubr.bf16.gmra.mrb[0].mxu0 %v3831
        %v3993 = vpop.f32.mrb[0].mxu0
        %v3994 = vadd.f32 0.0, %v3993
        %v3995 = vpop.f32.mrb[0].mxu0
        %v3996 = vpop.f32.mrb[0].mxu0
        %v3997 = vadd.f32 0.0, %v3996
        %v3998 = vpop.f32.mrb[0].mxu0
        %3999 = vmatprep.mubr.bf16.mxu0 %v3840
        %4000 = vmatmul.mubr.bf16.gmra.mrb[0].mxu0 %v3839
        %v4001 = vpop.f32.mrb[0].mxu0
        %v4002 = vadd.f32 0.0, %v4001
        %v4003 = vpop.f32.mrb[0].mxu0
        %v4004 = vpop.f32.mrb[0].mxu0
        %v4005 = vadd.f32 0.0, %v4004
        %v4006 = vpop.f32.mrb[0].mxu0
        %4007 = vmatprep.mubr.bf16.mxu0 %v3848
        %4008 = vmatmul.mubr.bf16.gmra.mrb[0].mxu0 %v3847
        %v4009 = vpop.f32.mrb[0].mxu0
        %v4010 = vadd.f32 0.0, %v4009
        %v4011 = vpop.f32.mrb[0].mxu0
        %v4012 = vpop.f32.mrb[0].mxu0
        %v4013 = vadd.f32 0.0, %v4012
        %v4014 = vpop.f32.mrb[0].mxu0
        %4015 = vmatprep.mubr.bf16.mxu0 %v3856
        %4016 = vmatmul.mubr.bf16.gmra.mrb[0].mxu0 %v3855
        %v4017 = vpop.f32.mrb[0].mxu0
        %v4018 = vadd.f32 0.0, %v4017
        %v4019 = vpop.f32.mrb[0].mxu0
        %v4020 = vpop.f32.mrb[0].mxu0
        %v4021 = vadd.f32 0.0, %v4020
        %v4022 = vpop.f32.mrb[0].mxu0
        %4023 = vmatprep.mubr.bf16.mxu0 %v3864
        %4024 = vmatmul.mubr.bf16.gmra.mrb[0].mxu0 %v3863
        %v4025 = vpop.f32.mrb[0].mxu0
        %v4026 = vadd.f32 0.0, %v4025
        %v4027 = vpop.f32.mrb[0].mxu0
        %v4028 = vpop.f32.mrb[0].mxu0
        %v4029 = vadd.f32 0.0, %v4028
        %v4030 = vpop.f32.mrb[0].mxu0
        %4031 = vmatprep.mubr.bf16.mxu0 %v3872
        %4032 = vmatmul.mubr.bf16.gmra.mrb[0].mxu0 %v3871
        %v4033 = vpop.f32.mrb[0].mxu0
        %v4034 = vadd.f32 0.0, %v4033
        %v4035 = vpop.f32.mrb[0].mxu0
        %v4036 = vpop.f32.mrb[0].mxu0
        %v4037 = vadd.f32 0.0, %v4036
        %v4038 = vpop.f32.mrb[0].mxu0
        %4039 = vmatprep.mubr.bf16.mxu0 %v3880
        %4040 = vmatmul.mubr.bf16.gmra.mrb[0].mxu0 %v3879
        %v4041 = vpop.f32.mrb[0].mxu0
        %v4042 = vadd.f32 0.0, %v4041
        %v4043 = vpop.f32.mrb[0].mxu0
        %v4044 = vpop.f32.mrb[0].mxu0
        %v4045 = vadd.f32 0.0, %v4044
        %v4046 = vpop.f32.mrb[0].mxu0
        %4047 = vmatprep.mubr.bf16.mxu0 %v3888
        %4048 = vmatmul.mubr.bf16.gmra.mrb[0].mxu0 %v3887
        %v4049 = vpop.f32.mrb[0].mxu0
        %v4050 = vadd.f32 0.0, %v4049
        %v4051 = vpop.f32.mrb[0].mxu0
        %v4052 = vpop.f32.mrb[0].mxu0
        %v4053 = vadd.f32 0.0, %v4052
        %v4054 = vpop.f32.mrb[0].mxu0
        %4055 = vdwg.mxu0
        %4056 = vmatprep.subr.bf16.mxu0 0
        %4057 = vmatpush1.bf16.msra.mxu0 %v3463
        %4058 = vmatprep.subr.bf16.mxu0 0
        %4059 = vmatpush1.bf16.msra.mxu0 %v3464
        %4060 = vmatprep.subr.bf16.mxu0 0
        %4061 = vmatpush1.bf16.msra.mxu0 %v3465
        %4062 = vmatprep.subr.bf16.mxu0 0
        %4063 = vmatpush1.bf16.msra.mxu0 %v3466
        %4064 = vmatprep.subr.bf16.mxu0 0
        %4065 = vmatpush1.bf16.msra.mxu0 %v3467
        %4066 = vmatprep.subr.bf16.mxu0 0
        %4067 = vmatpush1.bf16.msra.mxu0 %v3468
        %4068 = vmatprep.subr.bf16.mxu0 0
        %4069 = vmatpush1.bf16.msra.mxu0 %v3469
        %4070 = vmatprep.subr.bf16.mxu0 0
        %4071 = vmatpush1.bf16.msra.mxu0 %v3470
        %4072 = vmatprep.subr.bf16.mxu0 0
        %4073 = vmatpush1.bf16.msra.mxu0 %v3471
        %4074 = vmatprep.subr.bf16.mxu0 0
        %4075 = vmatpush1.bf16.msra.mxu0 %v3472
        %4076 = vmatprep.subr.bf16.mxu0 0
        %4077 = vmatpush1.bf16.msra.mxu0 %v3473
        %4078 = vmatprep.subr.bf16.mxu0 0
        %4079 = vmatpush1.bf16.msra.mxu0 %v3474
        %4080 = vmatprep.subr.bf16.mxu0 0
        %4081 = vmatpush1.bf16.msra.mxu0 %v3475
        %4082 = vmatprep.subr.bf16.mxu0 0
        %4083 = vmatpush1.bf16.msra.mxu0 %v3476
        %4084 = vmatprep.subr.bf16.mxu0 0
        %4085 = vmatpush1.bf16.msra.mxu0 %v3477
        %4086 = vmatprep.subr.bf16.mxu0 0
        %4087 = vmatpush1.bf16.msra.mxu0 %v3478
        %4088 = vmatprep.mubr.bf16.mxu0 %v3834
        %4089 = vmatmul.mubr.bf16.gmra.mrb[0].mxu0 %v3833
        %v4090 = vpop.f32.mrb[0].mxu0
        %v4091 = vadd.f32 %v3994, %v4090
        %v4092 = vpop.f32.mrb[0].mxu0
        %v4093 = vpop.f32.mrb[0].mxu0
        %v4094 = vadd.f32 %v3997, %v4093
        %v4095 = vpop.f32.mrb[0].mxu0
        %4096 = vmatprep.mubr.bf16.mxu0 %v3842
        %4097 = vmatmul.mubr.bf16.gmra.mrb[0].mxu0 %v3841
        %v4098 = vpop.f32.mrb[0].mxu0
        %v4099 = vadd.f32 %v4002, %v4098
        %v4100 = vpop.f32.mrb[0].mxu0
        %v4101 = vpop.f32.mrb[0].mxu0
        %v4102 = vadd.f32 %v4005, %v4101
        %v4103 = vpop.f32.mrb[0].mxu0
        %4104 = vmatprep.mubr.bf16.mxu0 %v3850
        %4105 = vmatmul.mubr.bf16.gmra.mrb[0].mxu0 %v3849
        %v4106 = vpop.f32.mrb[0].mxu0
        %v4107 = vadd.f32 %v4010, %v4106
        %v4108 = vpop.f32.mrb[0].mxu0
        %v4109 = vpop.f32.mrb[0].mxu0
        %v4110 = vadd.f32 %v4013, %v4109
        %v4111 = vpop.f32.mrb[0].mxu0
        %4112 = vmatprep.mubr.bf16.mxu0 %v3858
        %4113 = vmatmul.mubr.bf16.gmra.mrb[0].mxu0 %v3857
        %v4114 = vpop.f32.mrb[0].mxu0
        %v4115 = vadd.f32 %v4018, %v4114
        %v4116 = vpop.f32.mrb[0].mxu0
        %v4117 = vpop.f32.mrb[0].mxu0
        %v4118 = vadd.f32 %v4021, %v4117
        %v4119 = vpop.f32.mrb[0].mxu0
        %4120 = vmatprep.mubr.bf16.mxu0 %v3866
        %4121 = vmatmul.mubr.bf16.gmra.mrb[0].mxu0 %v3865
        %v4122 = vpop.f32.mrb[0].mxu0
        %v4123 = vadd.f32 %v4026, %v4122
        %v4124 = vpop.f32.mrb[0].mxu0
        %v4125 = vpop.f32.mrb[0].mxu0
        %v4126 = vadd.f32 %v4029, %v4125
        %v4127 = vpop.f32.mrb[0].mxu0
        %4128 = vmatprep.mubr.bf16.mxu0 %v3874
        %4129 = vmatmul.mubr.bf16.gmra.mrb[0].mxu0 %v3873
        %v4130 = vpop.f32.mrb[0].mxu0
        %v4131 = vadd.f32 %v4034, %v4130
        %v4132 = vpop.f32.mrb[0].mxu0
        %v4133 = vpop.f32.mrb[0].mxu0
        %v4134 = vadd.f32 %v4037, %v4133
        %v4135 = vpop.f32.mrb[0].mxu0
        %4136 = vmatprep.mubr.bf16.mxu0 %v3882
        %4137 = vmatmul.mubr.bf16.gmra.mrb[0].mxu0 %v3881
        %v4138 = vpop.f32.mrb[0].mxu0
        %v4139 = vadd.f32 %v4042, %v4138
        %v4140 = vpop.f32.mrb[0].mxu0
        %v4141 = vpop.f32.mrb[0].mxu0
        %v4142 = vadd.f32 %v4045, %v4141
        %v4143 = vpop.f32.mrb[0].mxu0
        %4144 = vmatprep.mubr.bf16.mxu0 %v3890
        %4145 = vmatmul.mubr.bf16.gmra.mrb[0].mxu0 %v3889
        %v4146 = vpop.f32.mrb[0].mxu0
        %v4147 = vadd.f32 %v4050, %v4146
        %v4148 = vpop.f32.mrb[0].mxu0
        %v4149 = vpop.f32.mrb[0].mxu0
        %v4150 = vadd.f32 %v4053, %v4149
        %v4151 = vpop.f32.mrb[0].mxu0
        %4152 = vdwg.mxu0
        %4153 = vmatprep.subr.bf16.mxu0 0
        %4154 = vmatpush1.bf16.msra.mxu0 %v3479
        %4155 = vmatprep.subr.bf16.mxu0 0
        %4156 = vmatpush1.bf16.msra.mxu0 %v3480
        %4157 = vmatprep.subr.bf16.mxu0 0
        %4158 = vmatpush1.bf16.msra.mxu0 %v3481
        %4159 = vmatprep.subr.bf16.mxu0 0
        %4160 = vmatpush1.bf16.msra.mxu0 %v3482
        %4161 = vmatprep.subr.bf16.mxu0 0
        %4162 = vmatpush1.bf16.msra.mxu0 %v3483
        %4163 = vmatprep.subr.bf16.mxu0 0
        %4164 = vmatpush1.bf16.msra.mxu0 %v3484
        %4165 = vmatprep.subr.bf16.mxu0 0
        %4166 = vmatpush1.bf16.msra.mxu0 %v3485
        %4167 = vmatprep.subr.bf16.mxu0 0
        %4168 = vmatpush1.bf16.msra.mxu0 %v3486
        %4169 = vmatprep.subr.bf16.mxu0 0
        %4170 = vmatpush1.bf16.msra.mxu0 %v3487
        %4171 = vmatprep.subr.bf16.mxu0 0
        %4172 = vmatpush1.bf16.msra.mxu0 %v3488
        %4173 = vmatprep.subr.bf16.mxu0 0
        %4174 = vmatpush1.bf16.msra.mxu0 %v3489
        %4175 = vmatprep.subr.bf16.mxu0 0
        %4176 = vmatpush1.bf16.msra.mxu0 %v3490
        %4177 = vmatprep.subr.bf16.mxu0 0
        %4178 = vmatpush1.bf16.msra.mxu0 %v3491
        %4179 = vmatprep.subr.bf16.mxu0 0
        %4180 = vmatpush1.bf16.msra.mxu0 %v3492
        %4181 = vmatprep.subr.bf16.mxu0 0
        %4182 = vmatpush1.bf16.msra.mxu0 %v3493
        %4183 = vmatprep.subr.bf16.mxu0 0
        %4184 = vmatpush1.bf16.msra.mxu0 %v3494
        %4185 = vmatprep.mubr.bf16.mxu0 %v3836
        %4186 = vmatmul.mubr.bf16.gmra.mrb[0].mxu0 %v3835
        %v4187 = vpop.f32.mrb[0].mxu0
        %v4188 = vadd.f32 %v4091, %v4187
        %v4189 = vpop.f32.mrb[0].mxu0
        %v4190 = vpop.f32.mrb[0].mxu0
        %v4191 = vadd.f32 %v4094, %v4190
        %v4192 = vpop.f32.mrb[0].mxu0
        %4193 = vmatprep.mubr.bf16.mxu0 %v3844
        %4194 = vmatmul.mubr.bf16.gmra.mrb[0].mxu0 %v3843
        %v4195 = vpop.f32.mrb[0].mxu0
        %v4196 = vadd.f32 %v4099, %v4195
        %v4197 = vpop.f32.mrb[0].mxu0
        %v4198 = vpop.f32.mrb[0].mxu0
        %v4199 = vadd.f32 %v4102, %v4198
        %v4200 = vpop.f32.mrb[0].mxu0
        %4201 = vmatprep.mubr.bf16.mxu0 %v3852
        %4202 = vmatmul.mubr.bf16.gmra.mrb[0].mxu0 %v3851
        %v4203 = vpop.f32.mrb[0].mxu0
        %v4204 = vadd.f32 %v4107, %v4203
        %v4205 = vpop.f32.mrb[0].mxu0
        %v4206 = vpop.f32.mrb[0].mxu0
        %v4207 = vadd.f32 %v4110, %v4206
        %v4208 = vpop.f32.mrb[0].mxu0
        %4209 = vmatprep.mubr.bf16.mxu0 %v3860
        %4210 = vmatmul.mubr.bf16.gmra.mrb[0].mxu0 %v3859
        %v4211 = vpop.f32.mrb[0].mxu0
        %v4212 = vadd.f32 %v4115, %v4211
        %v4213 = vpop.f32.mrb[0].mxu0
        %v4214 = vpop.f32.mrb[0].mxu0
        %v4215 = vadd.f32 %v4118, %v4214
        %v4216 = vpop.f32.mrb[0].mxu0
        %4217 = vmatprep.mubr.bf16.mxu0 %v3868
        %4218 = vmatmul.mubr.bf16.gmra.mrb[0].mxu0 %v3867
        %v4219 = vpop.f32.mrb[0].mxu0
        %v4220 = vadd.f32 %v4123, %v4219
        %v4221 = vpop.f32.mrb[0].mxu0
        %v4222 = vpop.f32.mrb[0].mxu0
        %v4223 = vadd.f32 %v4126, %v4222
        %v4224 = vpop.f32.mrb[0].mxu0
        %4225 = vmatprep.mubr.bf16.mxu0 %v3876
        %4226 = vmatmul.mubr.bf16.gmra.mrb[0].mxu0 %v3875
        %v4227 = vpop.f32.mrb[0].mxu0
        %v4228 = vadd.f32 %v4131, %v4227
        %v4229 = vpop.f32.mrb[0].mxu0
        %v4230 = vpop.f32.mrb[0].mxu0
        %v4231 = vadd.f32 %v4134, %v4230
        %v4232 = vpop.f32.mrb[0].mxu0
        %4233 = vmatprep.mubr.bf16.mxu0 %v3884
        %4234 = vmatmul.mubr.bf16.gmra.mrb[0].mxu0 %v3883
        %v4235 = vpop.f32.mrb[0].mxu0
        %v4236 = vadd.f32 %v4139, %v4235
        %v4237 = vpop.f32.mrb[0].mxu0
        %v4238 = vpop.f32.mrb[0].mxu0
        %v4239 = vadd.f32 %v4142, %v4238
        %v4240 = vpop.f32.mrb[0].mxu0
        %4241 = vmatprep.mubr.bf16.mxu0 %v3892
        %4242 = vmatmul.mubr.bf16.gmra.mrb[0].mxu0 %v3891
        %v4243 = vpop.f32.mrb[0].mxu0
        %v4244 = vadd.f32 %v4147, %v4243
        %v4245 = vpop.f32.mrb[0].mxu0
        %v4246 = vpop.f32.mrb[0].mxu0
        %v4247 = vadd.f32 %v4150, %v4246
        %v4248 = vpop.f32.mrb[0].mxu0
        %4249 = vdwg.mxu0
        %4250 = vmatprep.subr.bf16.mxu0 0
        %4251 = vmatpush1.bf16.msra.mxu0 %v3495
        %4252 = vmatprep.subr.bf16.mxu0 0
        %4253 = vmatpush1.bf16.msra.mxu0 %v3496
        %4254 = vmatprep.subr.bf16.mxu0 0
        %4255 = vmatpush1.bf16.msra.mxu0 %v3497
        %4256 = vmatprep.subr.bf16.mxu0 0
        %4257 = vmatpush1.bf16.msra.mxu0 %v3498
        %4258 = vmatprep.subr.bf16.mxu0 0
        %4259 = vmatpush1.bf16.msra.mxu0 %v3499
        %4260 = vmatprep.subr.bf16.mxu0 0
        %4261 = vmatpush1.bf16.msra.mxu0 %v3500
        %4262 = vmatprep.subr.bf16.mxu0 0
        %4263 = vmatpush1.bf16.msra.mxu0 %v3501
        %4264 = vmatprep.subr.bf16.mxu0 0
        %4265 = vmatpush1.bf16.msra.mxu0 %v3502
        %4266 = vmatprep.subr.bf16.mxu0 0
        %4267 = vmatpush1.bf16.msra.mxu0 %v3503
        %4268 = vmatprep.subr.bf16.mxu0 0
        %4269 = vmatpush1.bf16.msra.mxu0 %v3504
        %4270 = vmatprep.subr.bf16.mxu0 0
        %4271 = vmatpush1.bf16.msra.mxu0 %v3505
        %4272 = vmatprep.subr.bf16.mxu0 0
        %4273 = vmatpush1.bf16.msra.mxu0 %v3506
        %4274 = vmatprep.subr.bf16.mxu0 0
        %4275 = vmatpush1.bf16.msra.mxu0 %v3507
        %4276 = vmatprep.subr.bf16.mxu0 0
        %4277 = vmatpush1.bf16.msra.mxu0 %v3508
        %4278 = vmatprep.subr.bf16.mxu0 0
        %4279 = vmatpush1.bf16.msra.mxu0 %v3509
        %4280 = vmatprep.subr.bf16.mxu0 0
        %4281 = vmatpush1.bf16.msra.mxu0 %v3510
        %4282 = vmatprep.mubr.bf16.mxu0 %v3838
        %4283 = vmatmul.mubr.bf16.gmra.mrb[0].mxu0 %v3837
        %v4284 = vpop.f32.mrb[0].mxu0
        %v4285 = vadd.f32 %v4188, %v4284
        %v4286 = vpop.f32.mrb[0].mxu0
        %v4287 = vpop.f32.mrb[0].mxu0
        %v4288 = vadd.f32 %v4191, %v4287
        %v4289 = vpop.f32.mrb[0].mxu0
        %4290 = vmatprep.mubr.bf16.mxu0 %v3846
        %4291 = vmatmul.mubr.bf16.gmra.mrb[0].mxu0 %v3845
        %v4292 = vpop.f32.mrb[0].mxu0
        %v4293 = vadd.f32 %v4196, %v4292
        %v4294 = vpop.f32.mrb[0].mxu0
        %v4295 = vpop.f32.mrb[0].mxu0
        %v4296 = vadd.f32 %v4199, %v4295
        %v4297 = vpop.f32.mrb[0].mxu0
        %4298 = vmatprep.mubr.bf16.mxu0 %v3854
        %4299 = vmatmul.mubr.bf16.gmra.mrb[0].mxu0 %v3853
        %v4300 = vpop.f32.mrb[0].mxu0
        %v4301 = vadd.f32 %v4204, %v4300
        %v4302 = vpop.f32.mrb[0].mxu0
        %v4303 = vpop.f32.mrb[0].mxu0
        %v4304 = vadd.f32 %v4207, %v4303
        %v4305 = vpop.f32.mrb[0].mxu0
        %4306 = vmatprep.mubr.bf16.mxu0 %v3862
        %4307 = vmatmul.mubr.bf16.gmra.mrb[0].mxu0 %v3861
        %v4308 = vpop.f32.mrb[0].mxu0
        %v4309 = vadd.f32 %v4212, %v4308
        %v4310 = vpop.f32.mrb[0].mxu0
        %v4311 = vpop.f32.mrb[0].mxu0
        %v4312 = vadd.f32 %v4215, %v4311
        %v4313 = vpop.f32.mrb[0].mxu0
        %4314 = vmatprep.mubr.bf16.mxu0 %v3870
        %4315 = vmatmul.mubr.bf16.gmra.mrb[0].mxu0 %v3869
        %v4316 = vpop.f32.mrb[0].mxu0
        %v4317 = vadd.f32 %v4220, %v4316
        %v4318 = vpop.f32.mrb[0].mxu0
        %v4319 = vpop.f32.mrb[0].mxu0
        %v4320 = vadd.f32 %v4223, %v4319
        %v4321 = vpop.f32.mrb[0].mxu0
        %4322 = vmatprep.mubr.bf16.mxu0 %v3878
        %4323 = vmatmul.mubr.bf16.gmra.mrb[0].mxu0 %v3877
        %v4324 = vpop.f32.mrb[0].mxu0
        %v4325 = vadd.f32 %v4228, %v4324
        %v4326 = vpop.f32.mrb[0].mxu0
        %v4327 = vpop.f32.mrb[0].mxu0
        %v4328 = vadd.f32 %v4231, %v4327
        %v4329 = vpop.f32.mrb[0].mxu0
        %4330 = vmatprep.mubr.bf16.mxu0 %v3886
        %4331 = vmatmul.mubr.bf16.gmra.mrb[0].mxu0 %v3885
        %v4332 = vpop.f32.mrb[0].mxu0
        %v4333 = vadd.f32 %v4236, %v4332
        %v4334 = vpop.f32.mrb[0].mxu0
        %v4335 = vpop.f32.mrb[0].mxu0
        %v4336 = vadd.f32 %v4239, %v4335
        %v4337 = vpop.f32.mrb[0].mxu0
        %4338 = vmatprep.mubr.bf16.mxu0 %v3894
        %4339 = vmatmul.mubr.bf16.gmra.mrb[0].mxu0 %v3893
        %v4340 = vpop.f32.mrb[0].mxu0
        %v4341 = vadd.f32 %v4244, %v4340
        %v4342 = vpop.f32.mrb[0].mxu0
        %v4343 = vpop.f32.mrb[0].mxu0
        %v4344 = vadd.f32 %v4247, %v4343
        %v4345 = vpop.f32.mrb[0].mxu0
        %4346 = vdwg.mxu0
        %4347 = vmatprep.subr.bf16.mxu0 0
        %4348 = vmatpush1.bf16.msra.mxu0 %v3639
        %4349 = vmatprep.subr.bf16.mxu0 0
        %4350 = vmatpush1.bf16.msra.mxu0 %v3640
        %4351 = vmatprep.subr.bf16.mxu0 0
        %4352 = vmatpush1.bf16.msra.mxu0 %v3641
        %4353 = vmatprep.subr.bf16.mxu0 0
        %4354 = vmatpush1.bf16.msra.mxu0 %v3642
        %4355 = vmatprep.subr.bf16.mxu0 0
        %4356 = vmatpush1.bf16.msra.mxu0 %v3643
        %4357 = vmatprep.subr.bf16.mxu0 0
        %4358 = vmatpush1.bf16.msra.mxu0 %v3644
        %4359 = vmatprep.subr.bf16.mxu0 0
        %4360 = vmatpush1.bf16.msra.mxu0 %v3645
        %4361 = vmatprep.subr.bf16.mxu0 0
        %4362 = vmatpush1.bf16.msra.mxu0 %v3646
        %4363 = vmatprep.subr.bf16.mxu0 0
        %4364 = vmatpush1.bf16.msra.mxu0 %v3647
        %4365 = vmatprep.subr.bf16.mxu0 0
        %4366 = vmatpush1.bf16.msra.mxu0 %v3648
        %4367 = vmatprep.subr.bf16.mxu0 0
        %4368 = vmatpush1.bf16.msra.mxu0 %v3649
        %4369 = vmatprep.subr.bf16.mxu0 0
        %4370 = vmatpush1.bf16.msra.mxu0 %v3650
        %4371 = vmatprep.subr.bf16.mxu0 0
        %4372 = vmatpush1.bf16.msra.mxu0 %v3651
        %4373 = vmatprep.subr.bf16.mxu0 0
        %4374 = vmatpush1.bf16.msra.mxu0 %v3652
        %4375 = vmatprep.subr.bf16.mxu0 0
        %4376 = vmatpush1.bf16.msra.mxu0 %v3653
        %4377 = vmatprep.subr.bf16.mxu0 0
        %4378 = vmatpush1.bf16.msra.mxu0 %v3654
        %4379 = vmatprep.mubr.bf16.mxu0 %v3832
        %4380 = vmatmul.mubr.bf16.gmra.mrb[0].mxu0 %v3831
        %v4381 = vpop.f32.mrb[0].mxu0
        %v4382 = vadd.f32 0.0, %v4381
        %v4383 = vpop.f32.mrb[0].mxu0
        %v4384 = vpop.f32.mrb[0].mxu0
        %v4385 = vadd.f32 0.0, %v4384
        %v4386 = vpop.f32.mrb[0].mxu0
        %4387 = vmatprep.mubr.bf16.mxu0 %v3840
        %4388 = vmatmul.mubr.bf16.gmra.mrb[0].mxu0 %v3839
        %v4389 = vpop.f32.mrb[0].mxu0
        %v4390 = vadd.f32 0.0, %v4389
        %v4391 = vpop.f32.mrb[0].mxu0
        %v4392 = vpop.f32.mrb[0].mxu0
        %v4393 = vadd.f32 0.0, %v4392
        %v4394 = vpop.f32.mrb[0].mxu0
        %4395 = vmatprep.mubr.bf16.mxu0 %v3848
        %4396 = vmatmul.mubr.bf16.gmra.mrb[0].mxu0 %v3847
        %v4397 = vpop.f32.mrb[0].mxu0
        %v4398 = vadd.f32 0.0, %v4397
        %v4399 = vpop.f32.mrb[0].mxu0
        %v4400 = vpop.f32.mrb[0].mxu0
        %v4401 = vadd.f32 0.0, %v4400
        %v4402 = vpop.f32.mrb[0].mxu0
        %4403 = vmatprep.mubr.bf16.mxu0 %v3856
        %4404 = vmatmul.mubr.bf16.gmra.mrb[0].mxu0 %v3855
        %v4405 = vpop.f32.mrb[0].mxu0
        %v4406 = vadd.f32 0.0, %v4405
        %v4407 = vpop.f32.mrb[0].mxu0
        %v4408 = vpop.f32.mrb[0].mxu0
        %v4409 = vadd.f32 0.0, %v4408
        %v4410 = vpop.f32.mrb[0].mxu0
        %4411 = vmatprep.mubr.bf16.mxu0 %v3864
        %4412 = vmatmul.mubr.bf16.gmra.mrb[0].mxu0 %v3863
        %v4413 = vpop.f32.mrb[0].mxu0
        %v4414 = vadd.f32 0.0, %v4413
        %v4415 = vpop.f32.mrb[0].mxu0
        %v4416 = vpop.f32.mrb[0].mxu0
        %v4417 = vadd.f32 0.0, %v4416
        %v4418 = vpop.f32.mrb[0].mxu0
        %4419 = vmatprep.mubr.bf16.mxu0 %v3872
        %4420 = vmatmul.mubr.bf16.gmra.mrb[0].mxu0 %v3871
        %v4421 = vpop.f32.mrb[0].mxu0
        %v4422 = vadd.f32 0.0, %v4421
        %v4423 = vpop.f32.mrb[0].mxu0
        %v4424 = vpop.f32.mrb[0].mxu0
        %v4425 = vadd.f32 0.0, %v4424
        %v4426 = vpop.f32.mrb[0].mxu0
        %4427 = vmatprep.mubr.bf16.mxu0 %v3880
        %4428 = vmatmul.mubr.bf16.gmra.mrb[0].mxu0 %v3879
        %v4429 = vpop.f32.mrb[0].mxu0
        %v4430 = vadd.f32 0.0, %v4429
        %v4431 = vpop.f32.mrb[0].mxu0
        %v4432 = vpop.f32.mrb[0].mxu0
        %v4433 = vadd.f32 0.0, %v4432
        %v4434 = vpop.f32.mrb[0].mxu0
        %4435 = vmatprep.mubr.bf16.mxu0 %v3888
        %4436 = vmatmul.mubr.bf16.gmra.mrb[0].mxu0 %v3887
        %v4437 = vpop.f32.mrb[0].mxu0
        %v4438 = vadd.f32 0.0, %v4437
        %v4439 = vpop.f32.mrb[0].mxu0
        %v4440 = vpop.f32.mrb[0].mxu0
        %v4441 = vadd.f32 0.0, %v4440
        %v4442 = vpop.f32.mrb[0].mxu0
        %4443 = vdwg.mxu0
        %4444 = vmatprep.subr.bf16.mxu0 0
        %4445 = vmatpush1.bf16.msra.mxu0 %v3655
        %4446 = vmatprep.subr.bf16.mxu0 0
        %4447 = vmatpush1.bf16.msra.mxu0 %v3656
        %4448 = vmatprep.subr.bf16.mxu0 0
        %4449 = vmatpush1.bf16.msra.mxu0 %v3657
        %4450 = vmatprep.subr.bf16.mxu0 0
        %4451 = vmatpush1.bf16.msra.mxu0 %v3658
        %4452 = vmatprep.subr.bf16.mxu0 0
        %4453 = vmatpush1.bf16.msra.mxu0 %v3659
        %4454 = vmatprep.subr.bf16.mxu0 0
        %4455 = vmatpush1.bf16.msra.mxu0 %v3660
        %4456 = vmatprep.subr.bf16.mxu0 0
        %4457 = vmatpush1.bf16.msra.mxu0 %v3661
        %4458 = vmatprep.subr.bf16.mxu0 0
        %4459 = vmatpush1.bf16.msra.mxu0 %v3662
        %4460 = vmatprep.subr.bf16.mxu0 0
        %4461 = vmatpush1.bf16.msra.mxu0 %v3663
        %4462 = vmatprep.subr.bf16.mxu0 0
        %4463 = vmatpush1.bf16.msra.mxu0 %v3664
        %4464 = vmatprep.subr.bf16.mxu0 0
        %4465 = vmatpush1.bf16.msra.mxu0 %v3665
        %4466 = vmatprep.subr.bf16.mxu0 0
        %4467 = vmatpush1.bf16.msra.mxu0 %v3666
        %4468 = vmatprep.subr.bf16.mxu0 0
        %4469 = vmatpush1.bf16.msra.mxu0 %v3667
        %4470 = vmatprep.subr.bf16.mxu0 0
        %4471 = vmatpush1.bf16.msra.mxu0 %v3668
        %4472 = vmatprep.subr.bf16.mxu0 0
        %4473 = vmatpush1.bf16.msra.mxu0 %v3669
        %4474 = vmatprep.subr.bf16.mxu0 0
        %4475 = vmatpush1.bf16.msra.mxu0 %v3670
        %4476 = vmatprep.mubr.bf16.mxu0 %v3834
        %4477 = vmatmul.mubr.bf16.gmra.mrb[0].mxu0 %v3833
        %v4478 = vpop.f32.mrb[0].mxu0
        %v4479 = vadd.f32 %v4382, %v4478
        %v4480 = vpop.f32.mrb[0].mxu0
        %v4481 = vpop.f32.mrb[0].mxu0
        %v4482 = vadd.f32 %v4385, %v4481
        %v4483 = vpop.f32.mrb[0].mxu0
        %4484 = vmatprep.mubr.bf16.mxu0 %v3842
        %4485 = vmatmul.mubr.bf16.gmra.mrb[0].mxu0 %v3841
        %v4486 = vpop.f32.mrb[0].mxu0
        %v4487 = vadd.f32 %v4390, %v4486
        %v4488 = vpop.f32.mrb[0].mxu0
        %v4489 = vpop.f32.mrb[0].mxu0
        %v4490 = vadd.f32 %v4393, %v4489
        %v4491 = vpop.f32.mrb[0].mxu0
        %4492 = vmatprep.mubr.bf16.mxu0 %v3850
        %4493 = vmatmul.mubr.bf16.gmra.mrb[0].mxu0 %v3849
        %v4494 = vpop.f32.mrb[0].mxu0
        %v4495 = vadd.f32 %v4398, %v4494
        %v4496 = vpop.f32.mrb[0].mxu0
        %v4497 = vpop.f32.mrb[0].mxu0
        %v4498 = vadd.f32 %v4401, %v4497
        %v4499 = vpop.f32.mrb[0].mxu0
        %4500 = vmatprep.mubr.bf16.mxu0 %v3858
        %4501 = vmatmul.mubr.bf16.gmra.mrb[0].mxu0 %v3857
        %v4502 = vpop.f32.mrb[0].mxu0
        %v4503 = vadd.f32 %v4406, %v4502
        %v4504 = vpop.f32.mrb[0].mxu0
        %v4505 = vpop.f32.mrb[0].mxu0
        %v4506 = vadd.f32 %v4409, %v4505
        %v4507 = vpop.f32.mrb[0].mxu0
        %4508 = vmatprep.mubr.bf16.mxu0 %v3866
        %4509 = vmatmul.mubr.bf16.gmra.mrb[0].mxu0 %v3865
        %v4510 = vpop.f32.mrb[0].mxu0
        %v4511 = vadd.f32 %v4414, %v4510
        %v4512 = vpop.f32.mrb[0].mxu0
        %v4513 = vpop.f32.mrb[0].mxu0
        %v4514 = vadd.f32 %v4417, %v4513
        %v4515 = vpop.f32.mrb[0].mxu0
        %4516 = vmatprep.mubr.bf16.mxu0 %v3874
        %4517 = vmatmul.mubr.bf16.gmra.mrb[0].mxu0 %v3873
        %v4518 = vpop.f32.mrb[0].mxu0
        %v4519 = vadd.f32 %v4422, %v4518
        %v4520 = vpop.f32.mrb[0].mxu0
        %v4521 = vpop.f32.mrb[0].mxu0
        %v4522 = vadd.f32 %v4425, %v4521
        %v4523 = vpop.f32.mrb[0].mxu0
        %4524 = vmatprep.mubr.bf16.mxu0 %v3882
        %4525 = vmatmul.mubr.bf16.gmra.mrb[0].mxu0 %v3881
        %v4526 = vpop.f32.mrb[0].mxu0
        %v4527 = vadd.f32 %v4430, %v4526
        %v4528 = vpop.f32.mrb[0].mxu0
        %v4529 = vpop.f32.mrb[0].mxu0
        %v4530 = vadd.f32 %v4433, %v4529
        %v4531 = vpop.f32.mrb[0].mxu0
        %4532 = vmatprep.mubr.bf16.mxu0 %v3890
        %4533 = vmatmul.mubr.bf16.gmra.mrb[0].mxu0 %v3889
        %v4534 = vpop.f32.mrb[0].mxu0
        %v4535 = vadd.f32 %v4438, %v4534
        %v4536 = vpop.f32.mrb[0].mxu0
        %v4537 = vpop.f32.mrb[0].mxu0
        %v4538 = vadd.f32 %v4441, %v4537
        %v4539 = vpop.f32.mrb[0].mxu0
        %4540 = vdwg.mxu0
        %4541 = vmatprep.subr.bf16.mxu0 0
        %4542 = vmatpush1.bf16.msra.mxu0 %v3671
        %4543 = vmatprep.subr.bf16.mxu0 0
        %4544 = vmatpush1.bf16.msra.mxu0 %v3672
        %4545 = vmatprep.subr.bf16.mxu0 0
        %4546 = vmatpush1.bf16.msra.mxu0 %v3673
        %4547 = vmatprep.subr.bf16.mxu0 0
        %4548 = vmatpush1.bf16.msra.mxu0 %v3674
        %4549 = vmatprep.subr.bf16.mxu0 0
        %4550 = vmatpush1.bf16.msra.mxu0 %v3675
        %4551 = vmatprep.subr.bf16.mxu0 0
        %4552 = vmatpush1.bf16.msra.mxu0 %v3676
        %4553 = vmatprep.subr.bf16.mxu0 0
        %4554 = vmatpush1.bf16.msra.mxu0 %v3677
        %4555 = vmatprep.subr.bf16.mxu0 0
        %4556 = vmatpush1.bf16.msra.mxu0 %v3678
        %4557 = vmatprep.subr.bf16.mxu0 0
        %4558 = vmatpush1.bf16.msra.mxu0 %v3679
        %4559 = vmatprep.subr.bf16.mxu0 0
        %4560 = vmatpush1.bf16.msra.mxu0 %v3680
        %4561 = vmatprep.subr.bf16.mxu0 0
        %4562 = vmatpush1.bf16.msra.mxu0 %v3681
        %4563 = vmatprep.subr.bf16.mxu0 0
        %4564 = vmatpush1.bf16.msra.mxu0 %v3682
        %4565 = vmatprep.subr.bf16.mxu0 0
        %4566 = vmatpush1.bf16.msra.mxu0 %v3683
        %4567 = vmatprep.subr.bf16.mxu0 0
        %4568 = vmatpush1.bf16.msra.mxu0 %v3684
        %4569 = vmatprep.subr.bf16.mxu0 0
        %4570 = vmatpush1.bf16.msra.mxu0 %v3685
        %4571 = vmatprep.subr.bf16.mxu0 0
        %4572 = vmatpush1.bf16.msra.mxu0 %v3686
        %4573 = vmatprep.mubr.bf16.mxu0 %v3836
        %4574 = vmatmul.mubr.bf16.gmra.mrb[0].mxu0 %v3835
        %v4575 = vpop.f32.mrb[0].mxu0
        %v4576 = vadd.f32 %v4479, %v4575
        %v4577 = vpop.f32.mrb[0].mxu0
        %v4578 = vpop.f32.mrb[0].mxu0
        %v4579 = vadd.f32 %v4482, %v4578
        %v4580 = vpop.f32.mrb[0].mxu0
        %4581 = vmatprep.mubr.bf16.mxu0 %v3844
        %4582 = vmatmul.mubr.bf16.gmra.mrb[0].mxu0 %v3843
        %v4583 = vpop.f32.mrb[0].mxu0
        %v4584 = vadd.f32 %v4487, %v4583
        %v4585 = vpop.f32.mrb[0].mxu0
        %v4586 = vpop.f32.mrb[0].mxu0
        %v4587 = vadd.f32 %v4490, %v4586
        %v4588 = vpop.f32.mrb[0].mxu0
        %4589 = vmatprep.mubr.bf16.mxu0 %v3852
        %4590 = vmatmul.mubr.bf16.gmra.mrb[0].mxu0 %v3851
        %v4591 = vpop.f32.mrb[0].mxu0
        %v4592 = vadd.f32 %v4495, %v4591
        %v4593 = vpop.f32.mrb[0].mxu0
        %v4594 = vpop.f32.mrb[0].mxu0
        %v4595 = vadd.f32 %v4498, %v4594
        %v4596 = vpop.f32.mrb[0].mxu0
        %4597 = vmatprep.mubr.bf16.mxu0 %v3860
        %4598 = vmatmul.mubr.bf16.gmra.mrb[0].mxu0 %v3859
        %v4599 = vpop.f32.mrb[0].mxu0
        %v4600 = vadd.f32 %v4503, %v4599
        %v4601 = vpop.f32.mrb[0].mxu0
        %v4602 = vpop.f32.mrb[0].mxu0
        %v4603 = vadd.f32 %v4506, %v4602
        %v4604 = vpop.f32.mrb[0].mxu0
        %4605 = vmatprep.mubr.bf16.mxu0 %v3868
        %4606 = vmatmul.mubr.bf16.gmra.mrb[0].mxu0 %v3867
        %v4607 = vpop.f32.mrb[0].mxu0
        %v4608 = vadd.f32 %v4511, %v4607
        %v4609 = vpop.f32.mrb[0].mxu0
        %v4610 = vpop.f32.mrb[0].mxu0
        %v4611 = vadd.f32 %v4514, %v4610
        %v4612 = vpop.f32.mrb[0].mxu0
        %4613 = vmatprep.mubr.bf16.mxu0 %v3876
        %4614 = vmatmul.mubr.bf16.gmra.mrb[0].mxu0 %v3875
        %v4615 = vpop.f32.mrb[0].mxu0
        %v4616 = vadd.f32 %v4519, %v4615
        %v4617 = vpop.f32.mrb[0].mxu0
        %v4618 = vpop.f32.mrb[0].mxu0
        %v4619 = vadd.f32 %v4522, %v4618
        %v4620 = vpop.f32.mrb[0].mxu0
        %4621 = vmatprep.mubr.bf16.mxu0 %v3884
        %4622 = vmatmul.mubr.bf16.gmra.mrb[0].mxu0 %v3883
        %v4623 = vpop.f32.mrb[0].mxu0
        %v4624 = vadd.f32 %v4527, %v4623
        %v4625 = vpop.f32.mrb[0].mxu0
        %v4626 = vpop.f32.mrb[0].mxu0
        %v4627 = vadd.f32 %v4530, %v4626
        %v4628 = vpop.f32.mrb[0].mxu0
        %4629 = vmatprep.mubr.bf16.mxu0 %v3892
        %4630 = vmatmul.mubr.bf16.gmra.mrb[0].mxu0 %v3891
        %v4631 = vpop.f32.mrb[0].mxu0
        %v4632 = vadd.f32 %v4535, %v4631
        %v4633 = vpop.f32.mrb[0].mxu0
        %v4634 = vpop.f32.mrb[0].mxu0
        %v4635 = vadd.f32 %v4538, %v4634
        %v4636 = vpop.f32.mrb[0].mxu0
        %4637 = vdwg.mxu0
        %4638 = vmatprep.subr.bf16.mxu0 0
        %4639 = vmatpush1.bf16.msra.mxu0 %v3687
        %4640 = vmatprep.subr.bf16.mxu0 0
        %4641 = vmatpush1.bf16.msra.mxu0 %v3688
        %4642 = vmatprep.subr.bf16.mxu0 0
        %4643 = vmatpush1.bf16.msra.mxu0 %v3689
        %4644 = vmatprep.subr.bf16.mxu0 0
        %4645 = vmatpush1.bf16.msra.mxu0 %v3690
        %4646 = vmatprep.subr.bf16.mxu0 0
        %4647 = vmatpush1.bf16.msra.mxu0 %v3691
        %4648 = vmatprep.subr.bf16.mxu0 0
        %4649 = vmatpush1.bf16.msra.mxu0 %v3692
        %4650 = vmatprep.subr.bf16.mxu0 0
        %4651 = vmatpush1.bf16.msra.mxu0 %v3693
        %4652 = vmatprep.subr.bf16.mxu0 0
        %4653 = vmatpush1.bf16.msra.mxu0 %v3694
        %4654 = vmatprep.subr.bf16.mxu0 0
        %4655 = vmatpush1.bf16.msra.mxu0 %v3695
        %4656 = vmatprep.subr.bf16.mxu0 0
        %4657 = vmatpush1.bf16.msra.mxu0 %v3696
        %4658 = vmatprep.subr.bf16.mxu0 0
        %4659 = vmatpush1.bf16.msra.mxu0 %v3697
        %4660 = vmatprep.subr.bf16.mxu0 0
        %4661 = vmatpush1.bf16.msra.mxu0 %v3698
        %4662 = vmatprep.subr.bf16.mxu0 0
        %4663 = vmatpush1.bf16.msra.mxu0 %v3699
        %4664 = vmatprep.subr.bf16.mxu0 0
        %4665 = vmatpush1.bf16.msra.mxu0 %v3700
        %4666 = vmatprep.subr.bf16.mxu0 0
        %4667 = vmatpush1.bf16.msra.mxu0 %v3701
        %4668 = vmatprep.subr.bf16.mxu0 0
        %4669 = vmatpush1.bf16.msra.mxu0 %v3702
        %4670 = vmatprep.mubr.bf16.mxu0 %v3838
        %4671 = vmatmul.mubr.bf16.gmra.mrb[0].mxu0 %v3837
        %v4672 = vpop.f32.mrb[0].mxu0
        %v4673 = vadd.f32 %v4576, %v4672
        %v4674 = vpop.f32.mrb[0].mxu0
        %v4675 = vpop.f32.mrb[0].mxu0
        %v4676 = vadd.f32 %v4579, %v4675
        %v4677 = vpop.f32.mrb[0].mxu0
        %4678 = vmatprep.mubr.bf16.mxu0 %v3846
        %4679 = vmatmul.mubr.bf16.gmra.mrb[0].mxu0 %v3845
        %v4680 = vpop.f32.mrb[0].mxu0
        %v4681 = vadd.f32 %v4584, %v4680
        %v4682 = vpop.f32.mrb[0].mxu0
        %v4683 = vpop.f32.mrb[0].mxu0
        %v4684 = vadd.f32 %v4587, %v4683
        %v4685 = vpop.f32.mrb[0].mxu0
        %4686 = vmatprep.mubr.bf16.mxu0 %v3854
        %4687 = vmatmul.mubr.bf16.gmra.mrb[0].mxu0 %v3853
        %v4688 = vpop.f32.mrb[0].mxu0
        %v4689 = vadd.f32 %v4592, %v4688
        %v4690 = vpop.f32.mrb[0].mxu0
        %v4691 = vpop.f32.mrb[0].mxu0
        %v4692 = vadd.f32 %v4595, %v4691
        %v4693 = vpop.f32.mrb[0].mxu0
        %4694 = vmatprep.mubr.bf16.mxu0 %v3862
        %4695 = vmatmul.mubr.bf16.gmra.mrb[0].mxu0 %v3861
        %v4696 = vpop.f32.mrb[0].mxu0
        %v4697 = vadd.f32 %v4600, %v4696
        %v4698 = vpop.f32.mrb[0].mxu0
        %v4699 = vpop.f32.mrb[0].mxu0
        %v4700 = vadd.f32 %v4603, %v4699
        %v4701 = vpop.f32.mrb[0].mxu0
        %4702 = vmatprep.mubr.bf16.mxu0 %v3870
        %4703 = vmatmul.mubr.bf16.gmra.mrb[0].mxu0 %v3869
        %v4704 = vpop.f32.mrb[0].mxu0
        %v4705 = vadd.f32 %v4608, %v4704
        %v4706 = vpop.f32.mrb[0].mxu0
        %v4707 = vpop.f32.mrb[0].mxu0
        %v4708 = vadd.f32 %v4611, %v4707
        %v4709 = vpop.f32.mrb[0].mxu0
        %4710 = vmatprep.mubr.bf16.mxu0 %v3878
        %4711 = vmatmul.mubr.bf16.gmra.mrb[0].mxu0 %v3877
        %v4712 = vpop.f32.mrb[0].mxu0
        %v4713 = vadd.f32 %v4616, %v4712
        %v4714 = vpop.f32.mrb[0].mxu0
        %v4715 = vpop.f32.mrb[0].mxu0
        %v4716 = vadd.f32 %v4619, %v4715
        %v4717 = vpop.f32.mrb[0].mxu0
        %4718 = vmatprep.mubr.bf16.mxu0 %v3886
        %4719 = vmatmul.mubr.bf16.gmra.mrb[0].mxu0 %v3885
        %v4720 = vpop.f32.mrb[0].mxu0
        %v4721 = vadd.f32 %v4624, %v4720
        %v4722 = vpop.f32.mrb[0].mxu0
        %v4723 = vpop.f32.mrb[0].mxu0
        %v4724 = vadd.f32 %v4627, %v4723
        %v4725 = vpop.f32.mrb[0].mxu0
        %4726 = vmatprep.mubr.bf16.mxu0 %v3894
        %4727 = vmatmul.mubr.bf16.gmra.mrb[0].mxu0 %v3893
        %v4728 = vpop.f32.mrb[0].mxu0
        %v4729 = vadd.f32 %v4632, %v4728
        %v4730 = vpop.f32.mrb[0].mxu0
        %v4731 = vpop.f32.mrb[0].mxu0
        %v4732 = vadd.f32 %v4635, %v4731
        %v4733 = vpop.f32.mrb[0].mxu0
        %4734 = vdwg.mxu0
        %v4735 = vadd.f32 %v3319, %v1054
        %v4736 = vadd.f32 %v3320, %v1055
        %v4737 = vadd.f32 %v3321, %v1056
        %v4738 = vadd.f32 %v3322, %v1057
        %v4739 = vadd.f32 %v3323, %v1058
        %v4740 = vadd.f32 %v3324, %v1059
        %v4741 = vadd.f32 %v3325, %v1060
        %v4742 = vadd.f32 %v3326, %v1061
        %v4743 = vadd.f32 %v3327, %v1062
        %v4744 = vadd.f32 %v3328, %v1063
        %v4745 = vadd.f32 %v3329, %v1064
        %v4746 = vadd.f32 %v3330, %v1065
        %v4747 = vadd.f32 %v3331, %v1066
        %v4748 = vadd.f32 %v3332, %v1067
        %v4749 = vadd.f32 %v3333, %v1068
        %v4750 = vadd.f32 %v3334, %v1069
        %v4751 = vmax.f32 %v4735, -1e+30
        %v4752 = vmax.f32 %v4736, -1e+30
        %v4753 = vmax.f32 %v4737, -1e+30
        %v4754 = vmax.f32 %v4738, -1e+30
        %v4755 = vmax.f32 %v4739, -1e+30
        %v4756 = vmax.f32 %v4740, -1e+30
        %v4757 = vmax.f32 %v4741, -1e+30
        %v4758 = vmax.f32 %v4742, -1e+30
        %v4759 = vmax.f32 %v4743, -1e+30
        %v4760 = vmax.f32 %v4744, -1e+30
        %v4761 = vmax.f32 %v4745, -1e+30
        %v4762 = vmax.f32 %v4746, -1e+30
        %v4763 = vmax.f32 %v4747, -1e+30
        %v4764 = vmax.f32 %v4748, -1e+30
        %v4765 = vmax.f32 %v4749, -1e+30
        %v4766 = vmax.f32 %v4750, -1e+30
        %v4767 = vsub.f32 %v3319, %v1054
        %v4768 = vsub.f32 %v3320, %v1055
        %v4769 = vsub.f32 %v3321, %v1056
        %v4770 = vsub.f32 %v3322, %v1057
        %v4771 = vsub.f32 %v3323, %v1058
        %v4772 = vsub.f32 %v3324, %v1059
        %v4773 = vsub.f32 %v3325, %v1060
        %v4774 = vsub.f32 %v3326, %v1061
        %v4775 = vsub.f32 %v3327, %v1062
        %v4776 = vsub.f32 %v3328, %v1063
        %v4777 = vsub.f32 %v3329, %v1064
        %v4778 = vsub.f32 %v3330, %v1065
        %v4779 = vsub.f32 %v3331, %v1066
        %v4780 = vsub.f32 %v3332, %v1067
        %v4781 = vsub.f32 %v3333, %v1068
        %v4782 = vsub.f32 %v3334, %v1069
        %v4783 = vmin.f32 %v4767, 1e+30
        %v4784 = vmin.f32 %v4768, 1e+30
        %v4785 = vmin.f32 %v4769, 1e+30
        %v4786 = vmin.f32 %v4770, 1e+30
        %v4787 = vmin.f32 %v4771, 1e+30
        %v4788 = vmin.f32 %v4772, 1e+30
        %v4789 = vmin.f32 %v4773, 1e+30
        %v4790 = vmin.f32 %v4774, 1e+30
        %v4791 = vmin.f32 %v4775, 1e+30
        %v4792 = vmin.f32 %v4776, 1e+30
        %v4793 = vmin.f32 %v4777, 1e+30
        %v4794 = vmin.f32 %v4778, 1e+30
        %v4795 = vmin.f32 %v4779, 1e+30
        %v4796 = vmin.f32 %v4780, 1e+30
        %v4797 = vmin.f32 %v4781, 1e+30
        %v4798 = vmin.f32 %v4782, 1e+30
        %v4799 = vadd.f32 %v3335, %v1198
        %v4800 = vadd.f32 %v3336, %v1199
        %v4801 = vadd.f32 %v3337, %v1200
        %v4802 = vadd.f32 %v3338, %v1201
        %v4803 = vadd.f32 %v3339, %v1202
        %v4804 = vadd.f32 %v3340, %v1203
        %v4805 = vadd.f32 %v3341, %v1204
        %v4806 = vadd.f32 %v3342, %v1205
        %v4807 = vadd.f32 %v3343, %v1206
        %v4808 = vadd.f32 %v3344, %v1207
        %v4809 = vadd.f32 %v3345, %v1208
        %v4810 = vadd.f32 %v3346, %v1209
        %v4811 = vadd.f32 %v3347, %v1210
        %v4812 = vadd.f32 %v3348, %v1211
        %v4813 = vadd.f32 %v3349, %v1212
        %v4814 = vadd.f32 %v3350, %v1213
        %v4815 = vmax.f32 %v4751, %v4799
        %v4816 = vmax.f32 %v4752, %v4800
        %v4817 = vmax.f32 %v4753, %v4801
        %v4818 = vmax.f32 %v4754, %v4802
        %v4819 = vmax.f32 %v4755, %v4803
        %v4820 = vmax.f32 %v4756, %v4804
        %v4821 = vmax.f32 %v4757, %v4805
        %v4822 = vmax.f32 %v4758, %v4806
        %v4823 = vmax.f32 %v4759, %v4807
        %v4824 = vmax.f32 %v4760, %v4808
        %v4825 = vmax.f32 %v4761, %v4809
        %v4826 = vmax.f32 %v4762, %v4810
        %v4827 = vmax.f32 %v4763, %v4811
        %v4828 = vmax.f32 %v4764, %v4812
        %v4829 = vmax.f32 %v4765, %v4813
        %v4830 = vmax.f32 %v4766, %v4814
        %v4831 = vsub.f32 %v3335, %v1198
        %v4832 = vsub.f32 %v3336, %v1199
        %v4833 = vsub.f32 %v3337, %v1200
        %v4834 = vsub.f32 %v3338, %v1201
        %v4835 = vsub.f32 %v3339, %v1202
        %v4836 = vsub.f32 %v3340, %v1203
        %v4837 = vsub.f32 %v3341, %v1204
        %v4838 = vsub.f32 %v3342, %v1205
        %v4839 = vsub.f32 %v3343, %v1206
        %v4840 = vsub.f32 %v3344, %v1207
        %v4841 = vsub.f32 %v3345, %v1208
        %v4842 = vsub.f32 %v3346, %v1209
        %v4843 = vsub.f32 %v3347, %v1210
        %v4844 = vsub.f32 %v3348, %v1211
        %v4845 = vsub.f32 %v3349, %v1212
        %v4846 = vsub.f32 %v3350, %v1213
        %v4847 = vmin.f32 %v4783, %v4831
        %v4848 = vmin.f32 %v4784, %v4832
        %v4849 = vmin.f32 %v4785, %v4833
        %v4850 = vmin.f32 %v4786, %v4834
        %v4851 = vmin.f32 %v4787, %v4835
        %v4852 = vmin.f32 %v4788, %v4836
        %v4853 = vmin.f32 %v4789, %v4837
        %v4854 = vmin.f32 %v4790, %v4838
        %v4855 = vmin.f32 %v4791, %v4839
        %v4856 = vmin.f32 %v4792, %v4840
        %v4857 = vmin.f32 %v4793, %v4841
        %v4858 = vmin.f32 %v4794, %v4842
        %v4859 = vmin.f32 %v4795, %v4843
        %v4860 = vmin.f32 %v4796, %v4844
        %v4861 = vmin.f32 %v4797, %v4845
        %v4862 = vmin.f32 %v4798, %v4846
        %v4863 = vadd.f32 %v3351, %v1294
        %v4864 = vadd.f32 %v3352, %v1295
        %v4865 = vadd.f32 %v3353, %v1296
        %v4866 = vadd.f32 %v3354, %v1297
        %v4867 = vadd.f32 %v3355, %v1298
        %v4868 = vadd.f32 %v3356, %v1299
        %v4869 = vadd.f32 %v3357, %v1300
        %v4870 = vadd.f32 %v3358, %v1301
        %v4871 = vadd.f32 %v3359, %v1302
        %v4872 = vadd.f32 %v3360, %v1303
        %v4873 = vadd.f32 %v3361, %v1304
        %v4874 = vadd.f32 %v3362, %v1305
        %v4875 = vadd.f32 %v3363, %v1306
        %v4876 = vadd.f32 %v3364, %v1307
        %v4877 = vadd.f32 %v3365, %v1308
        %v4878 = vadd.f32 %v3366, %v1309
        %v4879 = vmax.f32 %v4815, %v4863
        %v4880 = vmax.f32 %v4816, %v4864
        %v4881 = vmax.f32 %v4817, %v4865
        %v4882 = vmax.f32 %v4818, %v4866
        %v4883 = vmax.f32 %v4819, %v4867
        %v4884 = vmax.f32 %v4820, %v4868
        %v4885 = vmax.f32 %v4821, %v4869
        %v4886 = vmax.f32 %v4822, %v4870
        %v4887 = vmax.f32 %v4823, %v4871
        %v4888 = vmax.f32 %v4824, %v4872
        %v4889 = vmax.f32 %v4825, %v4873
        %v4890 = vmax.f32 %v4826, %v4874
        %v4891 = vmax.f32 %v4827, %v4875
        %v4892 = vmax.f32 %v4828, %v4876
        %v4893 = vmax.f32 %v4829, %v4877
        %v4894 = vmax.f32 %v4830, %v4878
        %v4895 = vsub.f32 %v3351, %v1294
        %v4896 = vsub.f32 %v3352, %v1295
        %v4897 = vsub.f32 %v3353, %v1296
        %v4898 = vsub.f32 %v3354, %v1297
        %v4899 = vsub.f32 %v3355, %v1298
        %v4900 = vsub.f32 %v3356, %v1299
        %v4901 = vsub.f32 %v3357, %v1300
        %v4902 = vsub.f32 %v3358, %v1301
        %v4903 = vsub.f32 %v3359, %v1302
        %v4904 = vsub.f32 %v3360, %v1303
        %v4905 = vsub.f32 %v3361, %v1304
        %v4906 = vsub.f32 %v3362, %v1305
        %v4907 = vsub.f32 %v3363, %v1306
        %v4908 = vsub.f32 %v3364, %v1307
        %v4909 = vsub.f32 %v3365, %v1308
        %v4910 = vsub.f32 %v3366, %v1309
        %v4911 = vmin.f32 %v4847, %v4895
        %v4912 = vmin.f32 %v4848, %v4896
        %v4913 = vmin.f32 %v4849, %v4897
        %v4914 = vmin.f32 %v4850, %v4898
        %v4915 = vmin.f32 %v4851, %v4899
        %v4916 = vmin.f32 %v4852, %v4900
        %v4917 = vmin.f32 %v4853, %v4901
        %v4918 = vmin.f32 %v4854, %v4902
        %v4919 = vmin.f32 %v4855, %v4903
        %v4920 = vmin.f32 %v4856, %v4904
        %v4921 = vmin.f32 %v4857, %v4905
        %v4922 = vmin.f32 %v4858, %v4906
        %v4923 = vmin.f32 %v4859, %v4907
        %v4924 = vmin.f32 %v4860, %v4908
        %v4925 = vmin.f32 %v4861, %v4909
        %v4926 = vmin.f32 %v4862, %v4910
        %v4927 = vadd.f32 %v3367, %v1438
        %v4928 = vadd.f32 %v3368, %v1439
        %v4929 = vadd.f32 %v3369, %v1440
        %v4930 = vadd.f32 %v3370, %v1441
        %v4931 = vadd.f32 %v3371, %v1442
        %v4932 = vadd.f32 %v3372, %v1443
        %v4933 = vadd.f32 %v3373, %v1444
        %v4934 = vadd.f32 %v3374, %v1445
        %v4935 = vadd.f32 %v3375, %v1446
        %v4936 = vadd.f32 %v3376, %v1447
        %v4937 = vadd.f32 %v3377, %v1448
        %v4938 = vadd.f32 %v3378, %v1449
        %v4939 = vadd.f32 %v3379, %v1450
        %v4940 = vadd.f32 %v3380, %v1451
        %v4941 = vadd.f32 %v3381, %v1452
        %v4942 = vadd.f32 %v3382, %v1453
        %v4943 = vmax.f32 %v4879, %v4927
        %v4944 = vmax.f32 %v4880, %v4928
        %v4945 = vmax.f32 %v4881, %v4929
        %v4946 = vmax.f32 %v4882, %v4930
        %v4947 = vmax.f32 %v4883, %v4931
        %v4948 = vmax.f32 %v4884, %v4932
        %v4949 = vmax.f32 %v4885, %v4933
        %v4950 = vmax.f32 %v4886, %v4934
        %v4951 = vmax.f32 %v4887, %v4935
        %v4952 = vmax.f32 %v4888, %v4936
        %v4953 = vmax.f32 %v4889, %v4937
        %v4954 = vmax.f32 %v4890, %v4938
        %v4955 = vmax.f32 %v4891, %v4939
        %v4956 = vmax.f32 %v4892, %v4940
        %v4957 = vmax.f32 %v4893, %v4941
        %v4958 = vmax.f32 %v4894, %v4942
        %v4959 = vsub.f32 %v3367, %v1438
        %v4960 = vsub.f32 %v3368, %v1439
        %v4961 = vsub.f32 %v3369, %v1440
        %v4962 = vsub.f32 %v3370, %v1441
        %v4963 = vsub.f32 %v3371, %v1442
        %v4964 = vsub.f32 %v3372, %v1443
        %v4965 = vsub.f32 %v3373, %v1444
        %v4966 = vsub.f32 %v3374, %v1445
        %v4967 = vsub.f32 %v3375, %v1446
        %v4968 = vsub.f32 %v3376, %v1447
        %v4969 = vsub.f32 %v3377, %v1448
        %v4970 = vsub.f32 %v3378, %v1449
        %v4971 = vsub.f32 %v3379, %v1450
        %v4972 = vsub.f32 %v3380, %v1451
        %v4973 = vsub.f32 %v3381, %v1452
        %v4974 = vsub.f32 %v3382, %v1453
        %v4975 = vmin.f32 %v4911, %v4959
        %v4976 = vmin.f32 %v4912, %v4960
        %v4977 = vmin.f32 %v4913, %v4961
        %v4978 = vmin.f32 %v4914, %v4962
        %v4979 = vmin.f32 %v4915, %v4963
        %v4980 = vmin.f32 %v4916, %v4964
        %v4981 = vmin.f32 %v4917, %v4965
        %v4982 = vmin.f32 %v4918, %v4966
        %v4983 = vmin.f32 %v4919, %v4967
        %v4984 = vmin.f32 %v4920, %v4968
        %v4985 = vmin.f32 %v4921, %v4969
        %v4986 = vmin.f32 %v4922, %v4970
        %v4987 = vmin.f32 %v4923, %v4971
        %v4988 = vmin.f32 %v4924, %v4972
        %v4989 = vmin.f32 %v4925, %v4973
        %v4990 = vmin.f32 %v4926, %v4974
        %v4991 = vadd.f32 %v3383, %v1534
        %v4992 = vadd.f32 %v3384, %v1535
        %v4993 = vadd.f32 %v3385, %v1536
        %v4994 = vadd.f32 %v3386, %v1537
        %v4995 = vadd.f32 %v3387, %v1538
        %v4996 = vadd.f32 %v3388, %v1539
        %v4997 = vadd.f32 %v3389, %v1540
        %v4998 = vadd.f32 %v3390, %v1541
        %v4999 = vadd.f32 %v3391, %v1542
        %v5000 = vadd.f32 %v3392, %v1543
        %v5001 = vadd.f32 %v3393, %v1544
        %v5002 = vadd.f32 %v3394, %v1545
        %v5003 = vadd.f32 %v3395, %v1546
        %v5004 = vadd.f32 %v3396, %v1547
        %v5005 = vadd.f32 %v3397, %v1548
        %v5006 = vadd.f32 %v3398, %v1549
        %v5007 = vmax.f32 %v4943, %v4991
        %v5008 = vmax.f32 %v4944, %v4992
        %v5009 = vmax.f32 %v4945, %v4993
        %v5010 = vmax.f32 %v4946, %v4994
        %v5011 = vmax.f32 %v4947, %v4995
        %v5012 = vmax.f32 %v4948, %v4996
        %v5013 = vmax.f32 %v4949, %v4997
        %v5014 = vmax.f32 %v4950, %v4998
        %v5015 = vmax.f32 %v4951, %v4999
        %v5016 = vmax.f32 %v4952, %v5000
        %v5017 = vmax.f32 %v4953, %v5001
        %v5018 = vmax.f32 %v4954, %v5002
        %v5019 = vmax.f32 %v4955, %v5003
        %v5020 = vmax.f32 %v4956, %v5004
        %v5021 = vmax.f32 %v4957, %v5005
        %v5022 = vmax.f32 %v4958, %v5006
        %v5023 = vsub.f32 %v3383, %v1534
        %v5024 = vsub.f32 %v3384, %v1535
        %v5025 = vsub.f32 %v3385, %v1536
        %v5026 = vsub.f32 %v3386, %v1537
        %v5027 = vsub.f32 %v3387, %v1538
        %v5028 = vsub.f32 %v3388, %v1539
        %v5029 = vsub.f32 %v3389, %v1540
        %v5030 = vsub.f32 %v3390, %v1541
        %v5031 = vsub.f32 %v3391, %v1542
        %v5032 = vsub.f32 %v3392, %v1543
        %v5033 = vsub.f32 %v3393, %v1544
        %v5034 = vsub.f32 %v3394, %v1545
        %v5035 = vsub.f32 %v3395, %v1546
        %v5036 = vsub.f32 %v3396, %v1547
        %v5037 = vsub.f32 %v3397, %v1548
        %v5038 = vsub.f32 %v3398, %v1549
        %v5039 = vmin.f32 %v4975, %v5023
        %v5040 = vmin.f32 %v4976, %v5024
        %v5041 = vmin.f32 %v4977, %v5025
        %v5042 = vmin.f32 %v4978, %v5026
        %v5043 = vmin.f32 %v4979, %v5027
        %v5044 = vmin.f32 %v4980, %v5028
        %v5045 = vmin.f32 %v4981, %v5029
        %v5046 = vmin.f32 %v4982, %v5030
        %v5047 = vmin.f32 %v4983, %v5031
        %v5048 = vmin.f32 %v4984, %v5032
        %v5049 = vmin.f32 %v4985, %v5033
        %v5050 = vmin.f32 %v4986, %v5034
        %v5051 = vmin.f32 %v4987, %v5035
        %v5052 = vmin.f32 %v4988, %v5036
        %v5053 = vmin.f32 %v4989, %v5037
        %v5054 = vmin.f32 %v4990, %v5038
        %v5055 = vadd.f32 %v3399, %v1678
        %v5056 = vadd.f32 %v3400, %v1679
        %v5057 = vadd.f32 %v3401, %v1680
        %v5058 = vadd.f32 %v3402, %v1681
        %v5059 = vadd.f32 %v3403, %v1682
        %v5060 = vadd.f32 %v3404, %v1683
        %v5061 = vadd.f32 %v3405, %v1684
        %v5062 = vadd.f32 %v3406, %v1685
        %v5063 = vadd.f32 %v3407, %v1686
        %v5064 = vadd.f32 %v3408, %v1687
        %v5065 = vadd.f32 %v3409, %v1688
        %v5066 = vadd.f32 %v3410, %v1689
        %v5067 = vadd.f32 %v3411, %v1690
        %v5068 = vadd.f32 %v3412, %v1691
        %v5069 = vadd.f32 %v3413, %v1692
        %v5070 = vadd.f32 %v3414, %v1693
        %v5071 = vmax.f32 %v5007, %v5055
        %v5072 = vmax.f32 %v5008, %v5056
        %v5073 = vmax.f32 %v5009, %v5057
        %v5074 = vmax.f32 %v5010, %v5058
        %v5075 = vmax.f32 %v5011, %v5059
        %v5076 = vmax.f32 %v5012, %v5060
        %v5077 = vmax.f32 %v5013, %v5061
        %v5078 = vmax.f32 %v5014, %v5062
        %v5079 = vmax.f32 %v5015, %v5063
        %v5080 = vmax.f32 %v5016, %v5064
        %v5081 = vmax.f32 %v5017, %v5065
        %v5082 = vmax.f32 %v5018, %v5066
        %v5083 = vmax.f32 %v5019, %v5067
        %v5084 = vmax.f32 %v5020, %v5068
        %v5085 = vmax.f32 %v5021, %v5069
        %v5086 = vmax.f32 %v5022, %v5070
        %v5087 = vsub.f32 %v3399, %v1678
        %v5088 = vsub.f32 %v3400, %v1679
        %v5089 = vsub.f32 %v3401, %v1680
        %v5090 = vsub.f32 %v3402, %v1681
        %v5091 = vsub.f32 %v3403, %v1682
        %v5092 = vsub.f32 %v3404, %v1683
        %v5093 = vsub.f32 %v3405, %v1684
        %v5094 = vsub.f32 %v3406, %v1685
        %v5095 = vsub.f32 %v3407, %v1686
        %v5096 = vsub.f32 %v3408, %v1687
        %v5097 = vsub.f32 %v3409, %v1688
        %v5098 = vsub.f32 %v3410, %v1689
        %v5099 = vsub.f32 %v3411, %v1690
        %v5100 = vsub.f32 %v3412, %v1691
        %v5101 = vsub.f32 %v3413, %v1692
        %v5102 = vsub.f32 %v3414, %v1693
        %v5103 = vmin.f32 %v5039, %v5087
        %v5104 = vmin.f32 %v5040, %v5088
        %v5105 = vmin.f32 %v5041, %v5089
        %v5106 = vmin.f32 %v5042, %v5090
        %v5107 = vmin.f32 %v5043, %v5091
        %v5108 = vmin.f32 %v5044, %v5092
        %v5109 = vmin.f32 %v5045, %v5093
        %v5110 = vmin.f32 %v5046, %v5094
        %v5111 = vmin.f32 %v5047, %v5095
        %v5112 = vmin.f32 %v5048, %v5096
        %v5113 = vmin.f32 %v5049, %v5097
        %v5114 = vmin.f32 %v5050, %v5098
        %v5115 = vmin.f32 %v5051, %v5099
        %v5116 = vmin.f32 %v5052, %v5100
        %v5117 = vmin.f32 %v5053, %v5101
        %v5118 = vmin.f32 %v5054, %v5102
        %v5119 = vadd.f32 %v3415, %v1774
        %v5120 = vadd.f32 %v3416, %v1775
        %v5121 = vadd.f32 %v3417, %v1776
        %v5122 = vadd.f32 %v3418, %v1777
        %v5123 = vadd.f32 %v3419, %v1778
        %v5124 = vadd.f32 %v3420, %v1779
        %v5125 = vadd.f32 %v3421, %v1780
        %v5126 = vadd.f32 %v3422, %v1781
        %v5127 = vadd.f32 %v3423, %v1782
        %v5128 = vadd.f32 %v3424, %v1783
        %v5129 = vadd.f32 %v3425, %v1784
        %v5130 = vadd.f32 %v3426, %v1785
        %v5131 = vadd.f32 %v3427, %v1786
        %v5132 = vadd.f32 %v3428, %v1787
        %v5133 = vadd.f32 %v3429, %v1788
        %v5134 = vadd.f32 %v3430, %v1789
        %v5135 = vmax.f32 %v5071, %v5119
        %v5136 = vmax.f32 %v5072, %v5120
        %v5137 = vmax.f32 %v5073, %v5121
        %v5138 = vmax.f32 %v5074, %v5122
        %v5139 = vmax.f32 %v5075, %v5123
        %v5140 = vmax.f32 %v5076, %v5124
        %v5141 = vmax.f32 %v5077, %v5125
        %v5142 = vmax.f32 %v5078, %v5126
        %v5143 = vmax.f32 %v5079, %v5127
        %v5144 = vmax.f32 %v5080, %v5128
        %v5145 = vmax.f32 %v5081, %v5129
        %v5146 = vmax.f32 %v5082, %v5130
        %v5147 = vmax.f32 %v5083, %v5131
        %v5148 = vmax.f32 %v5084, %v5132
        %v5149 = vmax.f32 %v5085, %v5133
        %v5150 = vmax.f32 %v5086, %v5134
        %v5151 = vsub.f32 %v3415, %v1774
        %v5152 = vsub.f32 %v3416, %v1775
        %v5153 = vsub.f32 %v3417, %v1776
        %v5154 = vsub.f32 %v3418, %v1777
        %v5155 = vsub.f32 %v3419, %v1778
        %v5156 = vsub.f32 %v3420, %v1779
        %v5157 = vsub.f32 %v3421, %v1780
        %v5158 = vsub.f32 %v3422, %v1781
        %v5159 = vsub.f32 %v3423, %v1782
        %v5160 = vsub.f32 %v3424, %v1783
        %v5161 = vsub.f32 %v3425, %v1784
        %v5162 = vsub.f32 %v3426, %v1785
        %v5163 = vsub.f32 %v3427, %v1786
        %v5164 = vsub.f32 %v3428, %v1787
        %v5165 = vsub.f32 %v3429, %v1788
        %v5166 = vsub.f32 %v3430, %v1789
        %v5167 = vmin.f32 %v5103, %v5151
        %v5168 = vmin.f32 %v5104, %v5152
        %v5169 = vmin.f32 %v5105, %v5153
        %v5170 = vmin.f32 %v5106, %v5154
        %v5171 = vmin.f32 %v5107, %v5155
        %v5172 = vmin.f32 %v5108, %v5156
        %v5173 = vmin.f32 %v5109, %v5157
        %v5174 = vmin.f32 %v5110, %v5158
        %v5175 = vmin.f32 %v5111, %v5159
        %v5176 = vmin.f32 %v5112, %v5160
        %v5177 = vmin.f32 %v5113, %v5161
        %v5178 = vmin.f32 %v5114, %v5162
        %v5179 = vmin.f32 %v5115, %v5163
        %v5180 = vmin.f32 %v5116, %v5164
        %v5181 = vmin.f32 %v5117, %v5165
        %v5182 = vmin.f32 %v5118, %v5166
        %v5183 = vadd.f32 %v3431, %v1918
        %v5184 = vadd.f32 %v3432, %v1919
        %v5185 = vadd.f32 %v3433, %v1920
        %v5186 = vadd.f32 %v3434, %v1921
        %v5187 = vadd.f32 %v3435, %v1922
        %v5188 = vadd.f32 %v3436, %v1923
        %v5189 = vadd.f32 %v3437, %v1924
        %v5190 = vadd.f32 %v3438, %v1925
        %v5191 = vadd.f32 %v3439, %v1926
        %v5192 = vadd.f32 %v3440, %v1927
        %v5193 = vadd.f32 %v3441, %v1928
        %v5194 = vadd.f32 %v3442, %v1929
        %v5195 = vadd.f32 %v3443, %v1930
        %v5196 = vadd.f32 %v3444, %v1931
        %v5197 = vadd.f32 %v3445, %v1932
        %v5198 = vadd.f32 %v3446, %v1933
        %v5199 = vmax.f32 %v5135, %v5183
        %v5200 = vmax.f32 %v5136, %v5184
        %v5201 = vmax.f32 %v5137, %v5185
        %v5202 = vmax.f32 %v5138, %v5186
        %v5203 = vmax.f32 %v5139, %v5187
        %v5204 = vmax.f32 %v5140, %v5188
        %v5205 = vmax.f32 %v5141, %v5189
        %v5206 = vmax.f32 %v5142, %v5190
        %v5207 = vmax.f32 %v5143, %v5191
        %v5208 = vmax.f32 %v5144, %v5192
        %v5209 = vmax.f32 %v5145, %v5193
        %v5210 = vmax.f32 %v5146, %v5194
        %v5211 = vmax.f32 %v5147, %v5195
        %v5212 = vmax.f32 %v5148, %v5196
        %v5213 = vmax.f32 %v5149, %v5197
        %v5214 = vmax.f32 %v5150, %v5198
        %v5215 = vsub.f32 %v3431, %v1918
        %v5216 = vsub.f32 %v3432, %v1919
        %v5217 = vsub.f32 %v3433, %v1920
        %v5218 = vsub.f32 %v3434, %v1921
        %v5219 = vsub.f32 %v3435, %v1922
        %v5220 = vsub.f32 %v3436, %v1923
        %v5221 = vsub.f32 %v3437, %v1924
        %v5222 = vsub.f32 %v3438, %v1925
        %v5223 = vsub.f32 %v3439, %v1926
        %v5224 = vsub.f32 %v3440, %v1927
        %v5225 = vsub.f32 %v3441, %v1928
        %v5226 = vsub.f32 %v3442, %v1929
        %v5227 = vsub.f32 %v3443, %v1930
        %v5228 = vsub.f32 %v3444, %v1931
        %v5229 = vsub.f32 %v3445, %v1932
        %v5230 = vsub.f32 %v3446, %v1933
        %v5231 = vmin.f32 %v5167, %v5215
        %v5232 = vmin.f32 %v5168, %v5216
        %v5233 = vmin.f32 %v5169, %v5217
        %v5234 = vmin.f32 %v5170, %v5218
        %v5235 = vmin.f32 %v5171, %v5219
        %v5236 = vmin.f32 %v5172, %v5220
        %v5237 = vmin.f32 %v5173, %v5221
        %v5238 = vmin.f32 %v5174, %v5222
        %v5239 = vmin.f32 %v5175, %v5223
        %v5240 = vmin.f32 %v5176, %v5224
        %v5241 = vmin.f32 %v5177, %v5225
        %v5242 = vmin.f32 %v5178, %v5226
        %v5243 = vmin.f32 %v5179, %v5227
        %v5244 = vmin.f32 %v5180, %v5228
        %v5245 = vmin.f32 %v5181, %v5229
        %v5246 = vmin.f32 %v5182, %v5230
        %v5247 = vmul.f32 %v5199, %v1982
        %v5248 = vmul.f32 %v5200, %v1983
        %v5249 = vmul.f32 %v5201, %v1984
        %v5250 = vmul.f32 %v5202, %v1985
        %v5251 = vmul.f32 %v5203, %v1986
        %v5252 = vmul.f32 %v5204, %v1987
        %v5253 = vmul.f32 %v5205, %v1988
        %v5254 = vmul.f32 %v5206, %v1989
        %v5255 = vmul.f32 %v5207, %v1990
        %v5256 = vmul.f32 %v5208, %v1991
        %v5257 = vmul.f32 %v5209, %v1992
        %v5258 = vmul.f32 %v5210, %v1993
        %v5259 = vmul.f32 %v5211, %v1994
        %v5260 = vmul.f32 %v5212, %v1995
        %v5261 = vmul.f32 %v5213, %v1996
        %v5262 = vmul.f32 %v5214, %v1997
        %v5263 = vmul.f32 %v5231, %v1982
        %v5264 = vmul.f32 %v5232, %v1983
        %v5265 = vmul.f32 %v5233, %v1984
        %v5266 = vmul.f32 %v5234, %v1985
        %v5267 = vmul.f32 %v5235, %v1986
        %v5268 = vmul.f32 %v5236, %v1987
        %v5269 = vmul.f32 %v5237, %v1988
        %v5270 = vmul.f32 %v5238, %v1989
        %v5271 = vmul.f32 %v5239, %v1990
        %v5272 = vmul.f32 %v5240, %v1991
        %v5273 = vmul.f32 %v5241, %v1992
        %v5274 = vmul.f32 %v5242, %v1993
        %v5275 = vmul.f32 %v5243, %v1994
        %v5276 = vmul.f32 %v5244, %v1995
        %v5277 = vmul.f32 %v5245, %v1996
        %v5278 = vmul.f32 %v5246, %v1997
        %v5279 = vmul.f32 %v4285, %v2014
        %v5280 = vmul.f32 %v4288, %v2015
        %v5281 = vmul.f32 %v4293, %v2016
        %v5282 = vmul.f32 %v4296, %v2017
        %v5283 = vmul.f32 %v4301, %v2018
        %v5284 = vmul.f32 %v4304, %v2019
        %v5285 = vmul.f32 %v4309, %v2020
        %v5286 = vmul.f32 %v4312, %v2021
        %v5287 = vmul.f32 %v4317, %v2022
        %v5288 = vmul.f32 %v4320, %v2023
        %v5289 = vmul.f32 %v4325, %v2024
        %v5290 = vmul.f32 %v4328, %v2025
        %v5291 = vmul.f32 %v4333, %v2026
        %v5292 = vmul.f32 %v4336, %v2027
        %v5293 = vmul.f32 %v4341, %v2028
        %v5294 = vmul.f32 %v4344, %v2029
        %v5295 = vmul.f32 %v4673, %v2014
        %v5296 = vmul.f32 %v4676, %v2015
        %v5297 = vmul.f32 %v4681, %v2016
        %v5298 = vmul.f32 %v4684, %v2017
        %v5299 = vmul.f32 %v4689, %v2018
        %v5300 = vmul.f32 %v4692, %v2019
        %v5301 = vmul.f32 %v4697, %v2020
        %v5302 = vmul.f32 %v4700, %v2021
        %v5303 = vmul.f32 %v4705, %v2022
        %v5304 = vmul.f32 %v4708, %v2023
        %v5305 = vmul.f32 %v4713, %v2024
        %v5306 = vmul.f32 %v4716, %v2025
        %v5307 = vmul.f32 %v4721, %v2026
        %v5308 = vmul.f32 %v4724, %v2027
        %v5309 = vmul.f32 %v4729, %v2028
        %v5310 = vmul.f32 %v4732, %v2029
        %v5311 = vmul.f32 %v5279, %v5279
        %v5312 = vmul.f32 %v5280, %v5280
        %v5313 = vmul.f32 %v5281, %v5281
        %v5314 = vmul.f32 %v5282, %v5282
        %v5315 = vmul.f32 %v5283, %v5283
        %v5316 = vmul.f32 %v5284, %v5284
        %v5317 = vmul.f32 %v5285, %v5285
        %v5318 = vmul.f32 %v5286, %v5286
        %v5319 = vmul.f32 %v5287, %v5287
        %v5320 = vmul.f32 %v5288, %v5288
        %v5321 = vmul.f32 %v5289, %v5289
        %v5322 = vmul.f32 %v5290, %v5290
        %v5323 = vmul.f32 %v5291, %v5291
        %v5324 = vmul.f32 %v5292, %v5292
        %v5325 = vmul.f32 %v5293, %v5293
        %v5326 = vmul.f32 %v5294, %v5294
        %v5327 = vsub.f32 %v5295, %v5311
        %v5328 = vsub.f32 %v5296, %v5312
        %v5329 = vsub.f32 %v5297, %v5313
        %v5330 = vsub.f32 %v5298, %v5314
        %v5331 = vsub.f32 %v5299, %v5315
        %v5332 = vsub.f32 %v5300, %v5316
        %v5333 = vsub.f32 %v5301, %v5317
        %v5334 = vsub.f32 %v5302, %v5318
        %v5335 = vsub.f32 %v5303, %v5319
        %v5336 = vsub.f32 %v5304, %v5320
        %v5337 = vsub.f32 %v5305, %v5321
        %v5338 = vsub.f32 %v5306, %v5322
        %v5339 = vsub.f32 %v5307, %v5323
        %v5340 = vsub.f32 %v5308, %v5324
        %v5341 = vsub.f32 %v5309, %v5325
        %v5342 = vsub.f32 %v5310, %v5326
        %v5343 = vmax.f32 %v5327, 0.0
        %v5344 = vmax.f32 %v5328, 0.0
        %v5345 = vmax.f32 %v5329, 0.0
        %v5346 = vmax.f32 %v5330, 0.0
        %v5347 = vmax.f32 %v5331, 0.0
        %v5348 = vmax.f32 %v5332, 0.0
        %v5349 = vmax.f32 %v5333, 0.0
        %v5350 = vmax.f32 %v5334, 0.0
        %v5351 = vmax.f32 %v5335, 0.0
        %v5352 = vmax.f32 %v5336, 0.0
        %v5353 = vmax.f32 %v5337, 0.0
        %v5354 = vmax.f32 %v5338, 0.0
        %v5355 = vmax.f32 %v5339, 0.0
        %v5356 = vmax.f32 %v5340, 0.0
        %v5357 = vmax.f32 %v5341, 0.0
        %v5358 = vmax.f32 %v5342, 0.0
        %v5359 = vadd.f32 %v5343, 1e-05
        %v5360 = vadd.f32 %v5344, 1e-05
        %v5361 = vadd.f32 %v5345, 1e-05
        %v5362 = vadd.f32 %v5346, 1e-05
        %v5363 = vadd.f32 %v5347, 1e-05
        %v5364 = vadd.f32 %v5348, 1e-05
        %v5365 = vadd.f32 %v5349, 1e-05
        %v5366 = vadd.f32 %v5350, 1e-05
        %v5367 = vadd.f32 %v5351, 1e-05
        %v5368 = vadd.f32 %v5352, 1e-05
        %v5369 = vadd.f32 %v5353, 1e-05
        %v5370 = vadd.f32 %v5354, 1e-05
        %v5371 = vadd.f32 %v5355, 1e-05
        %v5372 = vadd.f32 %v5356, 1e-05
        %v5373 = vadd.f32 %v5357, 1e-05
        %v5374 = vadd.f32 %v5358, 1e-05
        %v5375 = vrsqrt.pop %v5359
        %v5376 = vmul.f32 %v5359, %v5375
        %vm5377 = vcmp.eq.f32.partialorder %v5359, inf
        %v5378 = vsel %vm5377, %v5359, %v5376
        %vm5379 = vcmp.eq.f32.partialorder %v5359, 0.0
        %v5380 = vand.u32 %v5359, 2147483648
        %v5381 = vsel %vm5379, %v5380, %v5378
        %v5382 = vrsqrt.pop %v5360
        %v5383 = vmul.f32 %v5360, %v5382
        %vm5384 = vcmp.eq.f32.partialorder %v5360, inf
        %v5385 = vsel %vm5384, %v5360, %v5383
        %vm5386 = vcmp.eq.f32.partialorder %v5360, 0.0
        %v5387 = vand.u32 %v5360, 2147483648
        %v5388 = vsel %vm5386, %v5387, %v5385
        %v5389 = vrsqrt.pop %v5361
        %v5390 = vmul.f32 %v5361, %v5389
        %vm5391 = vcmp.eq.f32.partialorder %v5361, inf
        %v5392 = vsel %vm5391, %v5361, %v5390
        %vm5393 = vcmp.eq.f32.partialorder %v5361, 0.0
        %v5394 = vand.u32 %v5361, 2147483648
        %v5395 = vsel %vm5393, %v5394, %v5392
        %v5396 = vrsqrt.pop %v5362
        %v5397 = vmul.f32 %v5362, %v5396
        %vm5398 = vcmp.eq.f32.partialorder %v5362, inf
        %v5399 = vsel %vm5398, %v5362, %v5397
        %vm5400 = vcmp.eq.f32.partialorder %v5362, 0.0
        %v5401 = vand.u32 %v5362, 2147483648
        %v5402 = vsel %vm5400, %v5401, %v5399
        %v5403 = vrsqrt.pop %v5363
        %v5404 = vmul.f32 %v5363, %v5403
        %vm5405 = vcmp.eq.f32.partialorder %v5363, inf
        %v5406 = vsel %vm5405, %v5363, %v5404
        %vm5407 = vcmp.eq.f32.partialorder %v5363, 0.0
        %v5408 = vand.u32 %v5363, 2147483648
        %v5409 = vsel %vm5407, %v5408, %v5406
        %v5410 = vrsqrt.pop %v5364
        %v5411 = vmul.f32 %v5364, %v5410
        %vm5412 = vcmp.eq.f32.partialorder %v5364, inf
        %v5413 = vsel %vm5412, %v5364, %v5411
        %vm5414 = vcmp.eq.f32.partialorder %v5364, 0.0
        %v5415 = vand.u32 %v5364, 2147483648
        %v5416 = vsel %vm5414, %v5415, %v5413
        %v5417 = vrsqrt.pop %v5365
        %v5418 = vmul.f32 %v5365, %v5417
        %vm5419 = vcmp.eq.f32.partialorder %v5365, inf
        %v5420 = vsel %vm5419, %v5365, %v5418
        %vm5421 = vcmp.eq.f32.partialorder %v5365, 0.0
        %v5422 = vand.u32 %v5365, 2147483648
        %v5423 = vsel %vm5421, %v5422, %v5420
        %v5424 = vrsqrt.pop %v5366
        %v5425 = vmul.f32 %v5366, %v5424
        %vm5426 = vcmp.eq.f32.partialorder %v5366, inf
        %v5427 = vsel %vm5426, %v5366, %v5425
        %vm5428 = vcmp.eq.f32.partialorder %v5366, 0.0
        %v5429 = vand.u32 %v5366, 2147483648
        %v5430 = vsel %vm5428, %v5429, %v5427
        %v5431 = vrsqrt.pop %v5367
        %v5432 = vmul.f32 %v5367, %v5431
        %vm5433 = vcmp.eq.f32.partialorder %v5367, inf
        %v5434 = vsel %vm5433, %v5367, %v5432
        %vm5435 = vcmp.eq.f32.partialorder %v5367, 0.0
        %v5436 = vand.u32 %v5367, 2147483648
        %v5437 = vsel %vm5435, %v5436, %v5434
        %v5438 = vrsqrt.pop %v5368
        %v5439 = vmul.f32 %v5368, %v5438
        %vm5440 = vcmp.eq.f32.partialorder %v5368, inf
        %v5441 = vsel %vm5440, %v5368, %v5439
        %vm5442 = vcmp.eq.f32.partialorder %v5368, 0.0
        %v5443 = vand.u32 %v5368, 2147483648
        %v5444 = vsel %vm5442, %v5443, %v5441
        %v5445 = vrsqrt.pop %v5369
        %v5446 = vmul.f32 %v5369, %v5445
        %vm5447 = vcmp.eq.f32.partialorder %v5369, inf
        %v5448 = vsel %vm5447, %v5369, %v5446
        %vm5449 = vcmp.eq.f32.partialorder %v5369, 0.0
        %v5450 = vand.u32 %v5369, 2147483648
        %v5451 = vsel %vm5449, %v5450, %v5448
        %v5452 = vrsqrt.pop %v5370
        %v5453 = vmul.f32 %v5370, %v5452
        %vm5454 = vcmp.eq.f32.partialorder %v5370, inf
        %v5455 = vsel %vm5454, %v5370, %v5453
        %vm5456 = vcmp.eq.f32.partialorder %v5370, 0.0
        %v5457 = vand.u32 %v5370, 2147483648
        %v5458 = vsel %vm5456, %v5457, %v5455
        %v5459 = vrsqrt.pop %v5371
        %v5460 = vmul.f32 %v5371, %v5459
        %vm5461 = vcmp.eq.f32.partialorder %v5371, inf
        %v5462 = vsel %vm5461, %v5371, %v5460
        %vm5463 = vcmp.eq.f32.partialorder %v5371, 0.0
        %v5464 = vand.u32 %v5371, 2147483648
        %v5465 = vsel %vm5463, %v5464, %v5462
        %v5466 = vrsqrt.pop %v5372
        %v5467 = vmul.f32 %v5372, %v5466
        %vm5468 = vcmp.eq.f32.partialorder %v5372, inf
        %v5469 = vsel %vm5468, %v5372, %v5467
        %vm5470 = vcmp.eq.f32.partialorder %v5372, 0.0
        %v5471 = vand.u32 %v5372, 2147483648
        %v5472 = vsel %vm5470, %v5471, %v5469
        %v5473 = vrsqrt.pop %v5373
        %v5474 = vmul.f32 %v5373, %v5473
        %vm5475 = vcmp.eq.f32.partialorder %v5373, inf
        %v5476 = vsel %vm5475, %v5373, %v5474
        %vm5477 = vcmp.eq.f32.partialorder %v5373, 0.0
        %v5478 = vand.u32 %v5373, 2147483648
        %v5479 = vsel %vm5477, %v5478, %v5476
        %v5480 = vrsqrt.pop %v5374
        %v5481 = vmul.f32 %v5374, %v5480
        %vm5482 = vcmp.eq.f32.partialorder %v5374, inf
        %v5483 = vsel %vm5482, %v5374, %v5481
        %vm5484 = vcmp.eq.f32.partialorder %v5374, 0.0
        %v5485 = vand.u32 %v5374, 2147483648
        %v5486 = vsel %vm5484, %v5485, %v5483
        %v5487 = vmul.f32 %v5381, %v1982
        %v5488 = vmul.f32 %v5388, %v1983
        %v5489 = vmul.f32 %v5395, %v1984
        %v5490 = vmul.f32 %v5402, %v1985
        %v5491 = vmul.f32 %v5409, %v1986
        %v5492 = vmul.f32 %v5416, %v1987
        %v5493 = vmul.f32 %v5423, %v1988
        %v5494 = vmul.f32 %v5430, %v1989
        %v5495 = vmul.f32 %v5437, %v1990
        %v5496 = vmul.f32 %v5444, %v1991
        %v5497 = vmul.f32 %v5451, %v1992
        %v5498 = vmul.f32 %v5458, %v1993
        %v5499 = vmul.f32 %v5465, %v1994
        %v5500 = vmul.f32 %v5472, %v1995
        %v5501 = vmul.f32 %v5479, %v1996
        %v5502 = vmul.f32 %v5486, %v1997
        %v5503 = vpack.c.bf16 %v5280, %v5279
        %v5504 = vpack.c.bf16 %v5282, %v5281
        %v5505 = vpack.c.bf16 %v5284, %v5283
        %v5506 = vpack.c.bf16 %v5286, %v5285
        %v5507 = vpack.c.bf16 %v5288, %v5287
        %v5508 = vpack.c.bf16 %v5290, %v5289
        %v5509 = vpack.c.bf16 %v5292, %v5291
        %v5510 = vpack.c.bf16 %v5294, %v5293
        %5511 = vst [vmem:[#allocation3] sm:$0xff] %v5503
        %5512 = vst [vmem:[#allocation3 + $0x20] sm:$0xff] %v5504
        %5513 = vst [vmem:[#allocation3 + $0x40] sm:$0xff] %v5505
        %5514 = vst [vmem:[#allocation3 + $0x60] sm:$0xff] %v5506
        %5515 = vst [vmem:[#allocation3 + $0x80] sm:$0xff] %v5507
        %5516 = vst [vmem:[#allocation3 + $0xa0] sm:$0xff] %v5508
        %5517 = vst [vmem:[#allocation3 + $0xc0] sm:$0xff] %v5509
        %5518 = vst [vmem:[#allocation3 + $0xe0] sm:$0xff] %v5510
        %v5519 = vpack.c.bf16 %v5264, %v5263
        %v5520 = vpack.c.bf16 %v5266, %v5265
        %v5521 = vpack.c.bf16 %v5268, %v5267
        %v5522 = vpack.c.bf16 %v5270, %v5269
        %v5523 = vpack.c.bf16 %v5272, %v5271
        %v5524 = vpack.c.bf16 %v5274, %v5273
        %v5525 = vpack.c.bf16 %v5276, %v5275
        %v5526 = vpack.c.bf16 %v5278, %v5277
        %5527 = vst [vmem:[#allocation3 + $0x8] sm:$0xff] %v5519
        %5528 = vst [vmem:[#allocation3 + $0x28] sm:$0xff] %v5520
        %5529 = vst [vmem:[#allocation3 + $0x48] sm:$0xff] %v5521
        %5530 = vst [vmem:[#allocation3 + $0x68] sm:$0xff] %v5522
        %5531 = vst [vmem:[#allocation3 + $0x88] sm:$0xff] %v5523
        %5532 = vst [vmem:[#allocation3 + $0xa8] sm:$0xff] %v5524
        %5533 = vst [vmem:[#allocation3 + $0xc8] sm:$0xff] %v5525
        %5534 = vst [vmem:[#allocation3 + $0xe8] sm:$0xff] %v5526
        %v5535 = vpack.c.bf16 %v5248, %v5247
        %v5536 = vpack.c.bf16 %v5250, %v5249
        %v5537 = vpack.c.bf16 %v5252, %v5251
        %v5538 = vpack.c.bf16 %v5254, %v5253
        %v5539 = vpack.c.bf16 %v5256, %v5255
        %v5540 = vpack.c.bf16 %v5258, %v5257
        %v5541 = vpack.c.bf16 %v5260, %v5259
        %v5542 = vpack.c.bf16 %v5262, %v5261
        %5543 = vst [vmem:[#allocation3 + $0x10] sm:$0xff] %v5535
        %5544 = vst [vmem:[#allocation3 + $0x30] sm:$0xff] %v5536
        %5545 = vst [vmem:[#allocation3 + $0x50] sm:$0xff] %v5537
        %5546 = vst [vmem:[#allocation3 + $0x70] sm:$0xff] %v5538
        %5547 = vst [vmem:[#allocation3 + $0x90] sm:$0xff] %v5539
        %5548 = vst [vmem:[#allocation3 + $0xb0] sm:$0xff] %v5540
        %5549 = vst [vmem:[#allocation3 + $0xd0] sm:$0xff] %v5541
        %5550 = vst [vmem:[#allocation3 + $0xf0] sm:$0xff] %v5542
        %v5551 = vpack.c.bf16 %v5488, %v5487
        %v5552 = vpack.c.bf16 %v5490, %v5489
        %v5553 = vpack.c.bf16 %v5492, %v5491
        %v5554 = vpack.c.bf16 %v5494, %v5493
        %v5555 = vpack.c.bf16 %v5496, %v5495
        %v5556 = vpack.c.bf16 %v5498, %v5497
        %v5557 = vpack.c.bf16 %v5500, %v5499
        %v5558 = vpack.c.bf16 %v5502, %v5501
        %5559 = vst [vmem:[#allocation3 + $0x18] sm:$0xff] %v5551
        %5560 = vst [vmem:[#allocation3 + $0x38] sm:$0xff] %v5552
        %5561 = vst [vmem:[#allocation3 + $0x58] sm:$0xff] %v5553
        %5562 = vst [vmem:[#allocation3 + $0x78] sm:$0xff] %v5554
        %5563 = vst [vmem:[#allocation3 + $0x98] sm:$0xff] %v5555
        %5564 = vst [vmem:[#allocation3 + $0xb8] sm:$0xff] %v5556
        %5565 = vst [vmem:[#allocation3 + $0xd8] sm:$0xff] %v5557
        %5566 = vst [vmem:[#allocation3 + $0xf8] sm:$0xff] %v5558
        %v5567 = vld [vmem:[#allocation3] sm:$0xff]
        %v5568 = vld [vmem:[#allocation3 + $0x8] sm:$0xff]
        %v5569 = vld [vmem:[#allocation3 + $0x10] sm:$0xff]
        %v5570 = vld [vmem:[#allocation3 + $0x18] sm:$0xff]
        %v5571 = vld [vmem:[#allocation3 + $0x20] sm:$0xff]
        %v5572 = vld [vmem:[#allocation3 + $0x28] sm:$0xff]
        %v5573 = vld [vmem:[#allocation3 + $0x30] sm:$0xff]
        %v5574 = vld [vmem:[#allocation3 + $0x38] sm:$0xff]
        %v5575 = vld [vmem:[#allocation3 + $0x40] sm:$0xff]
        %v5576 = vld [vmem:[#allocation3 + $0x48] sm:$0xff]
        %v5577 = vld [vmem:[#allocation3 + $0x50] sm:$0xff]
        %v5578 = vld [vmem:[#allocation3 + $0x58] sm:$0xff]
        %v5579 = vld [vmem:[#allocation3 + $0x60] sm:$0xff]
        %v5580 = vld [vmem:[#allocation3 + $0x68] sm:$0xff]
        %v5581 = vld [vmem:[#allocation3 + $0x70] sm:$0xff]
        %v5582 = vld [vmem:[#allocation3 + $0x78] sm:$0xff]
        %v5583 = vld [vmem:[#allocation3 + $0x80] sm:$0xff]
        %v5584 = vld [vmem:[#allocation3 + $0x88] sm:$0xff]
        %v5585 = vld [vmem:[#allocation3 + $0x90] sm:$0xff]
        %v5586 = vld [vmem:[#allocation3 + $0x98] sm:$0xff]
        %v5587 = vld [vmem:[#allocation3 + $0xa0] sm:$0xff]
        %v5588 = vld [vmem:[#allocation3 + $0xa8] sm:$0xff]
        %v5589 = vld [vmem:[#allocation3 + $0xb0] sm:$0xff]
        %v5590 = vld [vmem:[#allocation3 + $0xb8] sm:$0xff]
        %v5591 = vld [vmem:[#allocation3 + $0xc0] sm:$0xff]
        %v5592 = vld [vmem:[#allocation3 + $0xc8] sm:$0xff]
        %v5593 = vld [vmem:[#allocation3 + $0xd0] sm:$0xff]
        %v5594 = vld [vmem:[#allocation3 + $0xd8] sm:$0xff]
        %v5595 = vld [vmem:[#allocation3 + $0xe0] sm:$0xff]
        %v5596 = vld [vmem:[#allocation3 + $0xe8] sm:$0xff]
        %v5597 = vld [vmem:[#allocation3 + $0xf0] sm:$0xff]
        %v5598 = vld [vmem:[#allocation3 + $0xf8] sm:$0xff]
        %v5599 = vld [vmem:[%s639] sm:$0xff]
        %v5600 = vld [vmem:[%s639 + $0x8] sm:$0xf]
        %v5601 = vld [vmem:[%s639 + $0xc] sm:$0xff]
        %v5602 = vld [vmem:[%s639 + $0x14] sm:$0xf]
        %v5603 = vld [vmem:[%s639 + $0x18] sm:$0xff]
        %v5604 = vld [vmem:[%s639 + $0x20] sm:$0xf]
        %v5605 = vld [vmem:[%s639 + $0x24] sm:$0xff]
        %v5606 = vld [vmem:[%s639 + $0x2c] sm:$0xf]
        %v5607 = vld [vmem:[%s639 + $0x30] sm:$0xff]
        %v5608 = vld [vmem:[%s639 + $0x38] sm:$0xf]
        %v5609 = vld [vmem:[%s639 + $0x3c] sm:$0xff]
        %v5610 = vld [vmem:[%s639 + $0x44] sm:$0xf]
        %v5611 = vld [vmem:[%s639 + $0x48] sm:$0xff]
        %v5612 = vld [vmem:[%s639 + $0x50] sm:$0xf]
        %v5613 = vld [vmem:[%s639 + $0x54] sm:$0xff]
        %v5614 = vld [vmem:[%s639 + $0x5c] sm:$0xf]
        %v5615 = vld [vmem:[%s639 + $0x60] sm:$0xff]
        %v5616 = vld [vmem:[%s639 + $0x68] sm:$0xf]
        %v5617 = vld [vmem:[%s639 + $0x6c] sm:$0xff]
        %v5618 = vld [vmem:[%s639 + $0x74] sm:$0xf]
        %v5619 = vld [vmem:[%s639 + $0x78] sm:$0xff]
        %v5620 = vld [vmem:[%s639 + $0x80] sm:$0xf]
        %v5621 = vld [vmem:[%s639 + $0x84] sm:$0xff]
        %v5622 = vld [vmem:[%s639 + $0x8c] sm:$0xf]
        %v5623 = vld [vmem:[%s639 + $0x90] sm:$0xff]
        %v5624 = vld [vmem:[%s639 + $0x98] sm:$0xf]
        %v5625 = vld [vmem:[%s639 + $0x9c] sm:$0xff]
        %v5626 = vld [vmem:[%s639 + $0xa4] sm:$0xf]
        %v5627 = vld [vmem:[%s639 + $0xa8] sm:$0xff]
        %v5628 = vld [vmem:[%s639 + $0xb0] sm:$0xf]
        %v5629 = vld [vmem:[%s639 + $0xb4] sm:$0xff]
        %v5630 = vld [vmem:[%s639 + $0xbc] sm:$0xf]
        %v5631 = vld [vmem:[%s639 + $0xc0] sm:$0xff]
        %v5632 = vld [vmem:[%s639 + $0xc8] sm:$0xf]
        %v5633 = vld [vmem:[%s639 + $0xcc] sm:$0xff]
        %v5634 = vld [vmem:[%s639 + $0xd4] sm:$0xf]
        %v5635 = vld [vmem:[%s639 + $0xd8] sm:$0xff]
        %v5636 = vld [vmem:[%s639 + $0xe0] sm:$0xf]
        %v5637 = vld [vmem:[%s639 + $0xe4] sm:$0xff]
        %v5638 = vld [vmem:[%s639 + $0xec] sm:$0xf]
        %v5639 = vld [vmem:[%s639 + $0xf0] sm:$0xff]
        %v5640 = vld [vmem:[%s639 + $0xf8] sm:$0xf]
        %v5641 = vld [vmem:[%s639 + $0xfc] sm:$0xff]
        %v5642 = vld [vmem:[%s639 + $0x104] sm:$0xf]
        %v5643 = vld [vmem:[%s639 + $0x108] sm:$0xff]
        %v5644 = vld [vmem:[%s639 + $0x110] sm:$0xf]
        %v5645 = vld [vmem:[%s639 + $0x114] sm:$0xff]
        %v5646 = vld [vmem:[%s639 + $0x11c] sm:$0xf]
        %v5647 = vld [vmem:[%s639 + $0x120] sm:$0xff]
        %v5648 = vld [vmem:[%s639 + $0x128] sm:$0xf]
        %v5649 = vld [vmem:[%s639 + $0x12c] sm:$0xff]
        %v5650 = vld [vmem:[%s639 + $0x134] sm:$0xf]
        %v5651 = vld [vmem:[%s639 + $0x138] sm:$0xff]
        %v5652 = vld [vmem:[%s639 + $0x140] sm:$0xf]
        %v5653 = vld [vmem:[%s639 + $0x144] sm:$0xff]
        %v5654 = vld [vmem:[%s639 + $0x14c] sm:$0xf]
        %v5655 = vld [vmem:[%s639 + $0x150] sm:$0xff]
        %v5656 = vld [vmem:[%s639 + $0x158] sm:$0xf]
        %v5657 = vld [vmem:[%s639 + $0x15c] sm:$0xff]
        %v5658 = vld [vmem:[%s639 + $0x164] sm:$0xf]
        %v5659 = vld [vmem:[%s639 + $0x168] sm:$0xff]
        %v5660 = vld [vmem:[%s639 + $0x170] sm:$0xf]
        %v5661 = vld [vmem:[%s639 + $0x174] sm:$0xff]
        %v5662 = vld [vmem:[%s639 + $0x17c] sm:$0xf]
        %v5663 = vld [vmem:[%s639 + $0x180] sm:$0xff]
        %v5664 = vld [vmem:[%s639 + $0x188] sm:$0xf]
        %v5665 = vld [vmem:[%s639 + $0x18c] sm:$0xff]
        %v5666 = vld [vmem:[%s639 + $0x194] sm:$0xf]
        %v5667 = vld [vmem:[%s639 + $0x198] sm:$0xff]
        %v5668 = vld [vmem:[%s639 + $0x1a0] sm:$0xf]
        %v5669 = vld [vmem:[%s639 + $0x1a4] sm:$0xff]
        %v5670 = vld [vmem:[%s639 + $0x1ac] sm:$0xf]
        %v5671 = vld [vmem:[%s639 + $0x1b0] sm:$0xff]
        %v5672 = vld [vmem:[%s639 + $0x1b8] sm:$0xf]
        %v5673 = vld [vmem:[%s639 + $0x1bc] sm:$0xff]
        %v5674 = vld [vmem:[%s639 + $0x1c4] sm:$0xf]
        %v5675 = vld [vmem:[%s639 + $0x1c8] sm:$0xff]
        %v5676 = vld [vmem:[%s639 + $0x1d0] sm:$0xf]
        %v5677 = vld [vmem:[%s639 + $0x1d4] sm:$0xff]
        %v5678 = vld [vmem:[%s639 + $0x1dc] sm:$0xf]
        %v5679 = vld [vmem:[%s639 + $0x1e0] sm:$0xff]
        %v5680 = vld [vmem:[%s639 + $0x1e8] sm:$0xf]
        %v5681 = vld [vmem:[%s639 + $0x1ec] sm:$0xff]
        %v5682 = vld [vmem:[%s639 + $0x1f4] sm:$0xf]
        %v5683 = vld [vmem:[%s639 + $0x1f8] sm:$0xff]
        %v5684 = vld [vmem:[%s639 + $0x200] sm:$0xf]
        %v5685 = vld [vmem:[%s639 + $0x204] sm:$0xff]
        %v5686 = vld [vmem:[%s639 + $0x20c] sm:$0xf]
        %v5687 = vld [vmem:[%s639 + $0x210] sm:$0xff]
        %v5688 = vld [vmem:[%s639 + $0x218] sm:$0xf]
        %v5689 = vld [vmem:[%s639 + $0x21c] sm:$0xff]
        %v5690 = vld [vmem:[%s639 + $0x224] sm:$0xf]
        %v5691 = vld [vmem:[%s639 + $0x228] sm:$0xff]
        %v5692 = vld [vmem:[%s639 + $0x230] sm:$0xf]
        %v5693 = vld [vmem:[%s639 + $0x234] sm:$0xff]
        %v5694 = vld [vmem:[%s639 + $0x23c] sm:$0xf]
        %v5695 = vld [vmem:[%s639 + $0x240] sm:$0xff]
        %v5696 = vld [vmem:[%s639 + $0x248] sm:$0xf]
        %v5697 = vld [vmem:[%s639 + $0x24c] sm:$0xff]
        %v5698 = vld [vmem:[%s639 + $0x254] sm:$0xf]
        %v5699 = vld [vmem:[%s639 + $0x258] sm:$0xff]
        %v5700 = vld [vmem:[%s639 + $0x260] sm:$0xf]
        %v5701 = vld [vmem:[%s639 + $0x264] sm:$0xff]
        %v5702 = vld [vmem:[%s639 + $0x26c] sm:$0xf]
        %v5703 = vld [vmem:[%s639 + $0x270] sm:$0xff]
        %v5704 = vld [vmem:[%s639 + $0x278] sm:$0xf]
        %v5705 = vld [vmem:[%s639 + $0x27c] sm:$0xff]
        %v5706 = vld [vmem:[%s639 + $0x284] sm:$0xf]
        %v5707 = vld [vmem:[%s639 + $0x288] sm:$0xff]
        %v5708 = vld [vmem:[%s639 + $0x290] sm:$0xf]
        %v5709 = vld [vmem:[%s639 + $0x294] sm:$0xff]
        %v5710 = vld [vmem:[%s639 + $0x29c] sm:$0xf]
        %v5711 = vld [vmem:[%s639 + $0x2a0] sm:$0xff]
        %v5712 = vld [vmem:[%s639 + $0x2a8] sm:$0xf]
        %v5713 = vld [vmem:[%s639 + $0x2ac] sm:$0xff]
        %v5714 = vld [vmem:[%s639 + $0x2b4] sm:$0xf]
        %v5715 = vld [vmem:[%s639 + $0x2b8] sm:$0xff]
        %v5716 = vld [vmem:[%s639 + $0x2c0] sm:$0xf]
        %v5717 = vld [vmem:[%s639 + $0x2c4] sm:$0xff]
        %v5718 = vld [vmem:[%s639 + $0x2cc] sm:$0xf]
        %v5719 = vld [vmem:[%s639 + $0x2d0] sm:$0xff]
        %v5720 = vld [vmem:[%s639 + $0x2d8] sm:$0xf]
        %v5721 = vld [vmem:[%s639 + $0x2dc] sm:$0xff]
        %v5722 = vld [vmem:[%s639 + $0x2e4] sm:$0xf]
        %v5723 = vld [vmem:[%s639 + $0x2e8] sm:$0xff]
        %v5724 = vld [vmem:[%s639 + $0x2f0] sm:$0xf]
        %v5725 = vld [vmem:[%s639 + $0x2f4] sm:$0xff]
        %v5726 = vld [vmem:[%s639 + $0x2fc] sm:$0xf]
        %v5855 = vunpack.c.l.b16 %v5599
        %v5856 = vunpack.c.h.b16 %v5599
        %v5857 = vunpack.c.l.b16 %v5600
        %v5858 = vunpack.c.l.b16 %v5601
        %v5859 = vunpack.c.h.b16 %v5601
        %v5860 = vunpack.c.l.b16 %v5602
        %v5861 = vunpack.c.l.b16 %v5603
        %v5862 = vunpack.c.h.b16 %v5603
        %v5863 = vunpack.c.l.b16 %v5604
        %v5864 = vunpack.c.l.b16 %v5605
        %v5865 = vunpack.c.h.b16 %v5605
        %v5866 = vunpack.c.l.b16 %v5606
        %v5867 = vunpack.c.l.b16 %v5607
        %v5868 = vunpack.c.h.b16 %v5607
        %v5869 = vunpack.c.l.b16 %v5608
        %v5870 = vunpack.c.l.b16 %v5609
        %v5871 = vunpack.c.h.b16 %v5609
        %v5872 = vunpack.c.l.b16 %v5610
        %v5873 = vunpack.c.l.b16 %v5611
        %v5874 = vunpack.c.h.b16 %v5611
        %v5875 = vunpack.c.l.b16 %v5612
        %v5876 = vunpack.c.l.b16 %v5613
        %v5877 = vunpack.c.h.b16 %v5613
        %v5878 = vunpack.c.l.b16 %v5614
        %v5879 = vunpack.c.l.b16 %v5615
        %v5880 = vunpack.c.h.b16 %v5615
        %v5881 = vunpack.c.l.b16 %v5616
        %v5882 = vunpack.c.l.b16 %v5617
        %v5883 = vunpack.c.h.b16 %v5617
        %v5884 = vunpack.c.l.b16 %v5618
        %v5885 = vunpack.c.l.b16 %v5619
        %v5886 = vunpack.c.h.b16 %v5619
        %v5887 = vunpack.c.l.b16 %v5620
        %v5888 = vunpack.c.l.b16 %v5621
        %v5889 = vunpack.c.h.b16 %v5621
        %v5890 = vunpack.c.l.b16 %v5622
        %v5891 = vunpack.c.l.b16 %v5623
        %v5892 = vunpack.c.h.b16 %v5623
        %v5893 = vunpack.c.l.b16 %v5624
        %v5894 = vunpack.c.l.b16 %v5625
        %v5895 = vunpack.c.h.b16 %v5625
        %v5896 = vunpack.c.l.b16 %v5626
        %v5897 = vunpack.c.l.b16 %v5627
        %v5898 = vunpack.c.h.b16 %v5627
        %v5899 = vunpack.c.l.b16 %v5628
        %v5900 = vunpack.c.l.b16 %v5629
        %v5901 = vunpack.c.h.b16 %v5629
        %v5902 = vunpack.c.l.b16 %v5630
        %v5903 = vunpack.c.l.b16 %v5631
        %v5904 = vunpack.c.h.b16 %v5631
        %v5905 = vunpack.c.l.b16 %v5632
        %v5906 = vunpack.c.l.b16 %v5633
        %v5907 = vunpack.c.h.b16 %v5633
        %v5908 = vunpack.c.l.b16 %v5634
        %v5909 = vunpack.c.l.b16 %v5635
        %v5910 = vunpack.c.h.b16 %v5635
        %v5911 = vunpack.c.l.b16 %v5636
        %v5912 = vunpack.c.l.b16 %v5637
        %v5913 = vunpack.c.h.b16 %v5637
        %v5914 = vunpack.c.l.b16 %v5638
        %v5915 = vunpack.c.l.b16 %v5639
        %v5916 = vunpack.c.h.b16 %v5639
        %v5917 = vunpack.c.l.b16 %v5640
        %v5918 = vunpack.c.l.b16 %v5641
        %v5919 = vunpack.c.h.b16 %v5641
        %v5920 = vunpack.c.l.b16 %v5642
        %v5921 = vunpack.c.l.b16 %v5643
        %v5922 = vunpack.c.h.b16 %v5643
        %v5923 = vunpack.c.l.b16 %v5644
        %v5924 = vunpack.c.l.b16 %v5645
        %v5925 = vunpack.c.h.b16 %v5645
        %v5926 = vunpack.c.l.b16 %v5646
        %v5927 = vunpack.c.l.b16 %v5647
        %v5928 = vunpack.c.h.b16 %v5647
        %v5929 = vunpack.c.l.b16 %v5648
        %v5930 = vunpack.c.l.b16 %v5649
        %v5931 = vunpack.c.h.b16 %v5649
        %v5932 = vunpack.c.l.b16 %v5650
        %v5933 = vunpack.c.l.b16 %v5651
        %v5934 = vunpack.c.h.b16 %v5651
        %v5935 = vunpack.c.l.b16 %v5652
        %v5936 = vunpack.c.l.b16 %v5653
        %v5937 = vunpack.c.h.b16 %v5653
        %v5938 = vunpack.c.l.b16 %v5654
        %v5939 = vunpack.c.l.b16 %v5655
        %v5940 = vunpack.c.h.b16 %v5655
        %v5941 = vunpack.c.l.b16 %v5656
        %v5942 = vunpack.c.l.b16 %v5657
        %v5943 = vunpack.c.h.b16 %v5657
        %v5944 = vunpack.c.l.b16 %v5658
        %v5945 = vunpack.c.l.b16 %v5659
        %v5946 = vunpack.c.h.b16 %v5659
        %v5947 = vunpack.c.l.b16 %v5660
        %v5948 = vunpack.c.l.b16 %v5661
        %v5949 = vunpack.c.h.b16 %v5661
        %v5950 = vunpack.c.l.b16 %v5662
        %v5951 = vunpack.c.l.b16 %v5663
        %v5952 = vunpack.c.h.b16 %v5663
        %v5953 = vunpack.c.l.b16 %v5664
        %v5954 = vunpack.c.l.b16 %v5665
        %v5955 = vunpack.c.h.b16 %v5665
        %v5956 = vunpack.c.l.b16 %v5666
        %v5957 = vunpack.c.l.b16 %v5667
        %v5958 = vunpack.c.h.b16 %v5667
        %v5959 = vunpack.c.l.b16 %v5668
        %v5960 = vunpack.c.l.b16 %v5669
        %v5961 = vunpack.c.h.b16 %v5669
        %v5962 = vunpack.c.l.b16 %v5670
        %v5963 = vunpack.c.l.b16 %v5671
        %v5964 = vunpack.c.h.b16 %v5671
        %v5965 = vunpack.c.l.b16 %v5672
        %v5966 = vunpack.c.l.b16 %v5673
        %v5967 = vunpack.c.h.b16 %v5673
        %v5968 = vunpack.c.l.b16 %v5674
        %v5969 = vunpack.c.l.b16 %v5675
        %v5970 = vunpack.c.h.b16 %v5675
        %v5971 = vunpack.c.l.b16 %v5676
        %v5972 = vunpack.c.l.b16 %v5677
        %v5973 = vunpack.c.h.b16 %v5677
        %v5974 = vunpack.c.l.b16 %v5678
        %v5975 = vunpack.c.l.b16 %v5679
        %v5976 = vunpack.c.h.b16 %v5679
        %v5977 = vunpack.c.l.b16 %v5680
        %v5978 = vunpack.c.l.b16 %v5681
        %v5979 = vunpack.c.h.b16 %v5681
        %v5980 = vunpack.c.l.b16 %v5682
        %v5981 = vunpack.c.l.b16 %v5683
        %v5982 = vunpack.c.h.b16 %v5683
        %v5983 = vunpack.c.l.b16 %v5684
        %v5984 = vunpack.c.l.b16 %v5685
        %v5985 = vunpack.c.h.b16 %v5685
        %v5986 = vunpack.c.l.b16 %v5686
        %v5987 = vunpack.c.l.b16 %v5687
        %v5988 = vunpack.c.h.b16 %v5687
        %v5989 = vunpack.c.l.b16 %v5688
        %v5990 = vunpack.c.l.b16 %v5689
        %v5991 = vunpack.c.h.b16 %v5689
        %v5992 = vunpack.c.l.b16 %v5690
        %v5993 = vunpack.c.l.b16 %v5691
        %v5994 = vunpack.c.h.b16 %v5691
        %v5995 = vunpack.c.l.b16 %v5692
        %v5996 = vunpack.c.l.b16 %v5693
        %v5997 = vunpack.c.h.b16 %v5693
        %v5998 = vunpack.c.l.b16 %v5694
        %v5999 = vunpack.c.l.b16 %v5695
        %v6000 = vunpack.c.h.b16 %v5695
        %v6001 = vunpack.c.l.b16 %v5696
        %v6002 = vunpack.c.l.b16 %v5697
        %v6003 = vunpack.c.h.b16 %v5697
        %v6004 = vunpack.c.l.b16 %v5698
        %v6005 = vunpack.c.l.b16 %v5699
        %v6006 = vunpack.c.h.b16 %v5699
        %v6007 = vunpack.c.l.b16 %v5700
        %v6008 = vunpack.c.l.b16 %v5701
        %v6009 = vunpack.c.h.b16 %v5701
        %v6010 = vunpack.c.l.b16 %v5702
        %v6011 = vunpack.c.l.b16 %v5703
        %v6012 = vunpack.c.h.b16 %v5703
        %v6013 = vunpack.c.l.b16 %v5704
        %v6014 = vunpack.c.l.b16 %v5705
        %v6015 = vunpack.c.h.b16 %v5705
        %v6016 = vunpack.c.l.b16 %v5706
        %v6017 = vunpack.c.l.b16 %v5707
        %v6018 = vunpack.c.h.b16 %v5707
        %v6019 = vunpack.c.l.b16 %v5708
        %v6020 = vunpack.c.l.b16 %v5709
        %v6021 = vunpack.c.h.b16 %v5709
        %v6022 = vunpack.c.l.b16 %v5710
        %v6023 = vunpack.c.l.b16 %v5711
        %v6024 = vunpack.c.h.b16 %v5711
        %v6025 = vunpack.c.l.b16 %v5712
        %v6026 = vunpack.c.l.b16 %v5713
        %v6027 = vunpack.c.h.b16 %v5713
        %v6028 = vunpack.c.l.b16 %v5714
        %v6029 = vunpack.c.l.b16 %v5715
        %v6030 = vunpack.c.h.b16 %v5715
        %v6031 = vunpack.c.l.b16 %v5716
        %v6032 = vunpack.c.l.b16 %v5717
        %v6033 = vunpack.c.h.b16 %v5717
        %v6034 = vunpack.c.l.b16 %v5718
        %v6035 = vunpack.c.l.b16 %v5719
        %v6036 = vunpack.c.h.b16 %v5719
        %v6037 = vunpack.c.l.b16 %v5720
        %v6038 = vunpack.c.l.b16 %v5721
        %v6039 = vunpack.c.h.b16 %v5721
        %v6040 = vunpack.c.l.b16 %v5722
        %v6041 = vunpack.c.l.b16 %v5723
        %v6042 = vunpack.c.h.b16 %v5723
        %v6043 = vunpack.c.l.b16 %v5724
        %v6044 = vunpack.c.l.b16 %v5725
        %v6045 = vunpack.c.h.b16 %v5725
        %v6046 = vunpack.c.l.b16 %v5726
        %v6047 = vpack.c.b16 %v5858, %v5855
        %v6048 = vpack.c.b16 %v5859, %v5856
        %v6049 = vpack.c.b16 %v5860, %v5857
        %v6050 = vpack.c.b16 %v5864, %v5861
        %v6051 = vpack.c.b16 %v5865, %v5862
        %v6052 = vpack.c.b16 %v5866, %v5863
        %v6053 = vpack.c.b16 %v5870, %v5867
        %v6054 = vpack.c.b16 %v5871, %v5868
        %v6055 = vpack.c.b16 %v5872, %v5869
        %v6056 = vpack.c.b16 %v5876, %v5873
        %v6057 = vpack.c.b16 %v5877, %v5874
        %v6058 = vpack.c.b16 %v5878, %v5875
        %v6059 = vpack.c.b16 %v5882, %v5879
        %v6060 = vpack.c.b16 %v5883, %v5880
        %v6061 = vpack.c.b16 %v5884, %v5881
        %v6062 = vpack.c.b16 %v5888, %v5885
        %v6063 = vpack.c.b16 %v5889, %v5886
        %v6064 = vpack.c.b16 %v5890, %v5887
        %v6065 = vpack.c.b16 %v5894, %v5891
        %v6066 = vpack.c.b16 %v5895, %v5892
        %v6067 = vpack.c.b16 %v5896, %v5893
        %v6068 = vpack.c.b16 %v5900, %v5897
        %v6069 = vpack.c.b16 %v5901, %v5898
        %v6070 = vpack.c.b16 %v5902, %v5899
        %v6071 = vpack.c.b16 %v5906, %v5903
        %v6072 = vpack.c.b16 %v5907, %v5904
        %v6073 = vpack.c.b16 %v5908, %v5905
        %v6074 = vpack.c.b16 %v5912, %v5909
        %v6075 = vpack.c.b16 %v5913, %v5910
        %v6076 = vpack.c.b16 %v5914, %v5911
        %v6077 = vpack.c.b16 %v5918, %v5915
        %v6078 = vpack.c.b16 %v5919, %v5916
        %v6079 = vpack.c.b16 %v5920, %v5917
        %v6080 = vpack.c.b16 %v5924, %v5921
        %v6081 = vpack.c.b16 %v5925, %v5922
        %v6082 = vpack.c.b16 %v5926, %v5923
        %v6083 = vpack.c.b16 %v5930, %v5927
        %v6084 = vpack.c.b16 %v5931, %v5928
        %v6085 = vpack.c.b16 %v5932, %v5929
        %v6086 = vpack.c.b16 %v5936, %v5933
        %v6087 = vpack.c.b16 %v5937, %v5934
        %v6088 = vpack.c.b16 %v5938, %v5935
        %v6089 = vpack.c.b16 %v5942, %v5939
        %v6090 = vpack.c.b16 %v5943, %v5940
        %v6091 = vpack.c.b16 %v5944, %v5941
        %v6092 = vpack.c.b16 %v5948, %v5945
        %v6093 = vpack.c.b16 %v5949, %v5946
        %v6094 = vpack.c.b16 %v5950, %v5947
        %v6095 = vpack.c.b16 %v5954, %v5951
        %v6096 = vpack.c.b16 %v5955, %v5952
        %v6097 = vpack.c.b16 %v5956, %v5953
        %v6098 = vpack.c.b16 %v5960, %v5957
        %v6099 = vpack.c.b16 %v5961, %v5958
        %v6100 = vpack.c.b16 %v5962, %v5959
        %v6101 = vpack.c.b16 %v5966, %v5963
        %v6102 = vpack.c.b16 %v5967, %v5964
        %v6103 = vpack.c.b16 %v5968, %v5965
        %v6104 = vpack.c.b16 %v5972, %v5969
        %v6105 = vpack.c.b16 %v5973, %v5970
        %v6106 = vpack.c.b16 %v5974, %v5971
        %v6107 = vpack.c.b16 %v5978, %v5975
        %v6108 = vpack.c.b16 %v5979, %v5976
        %v6109 = vpack.c.b16 %v5980, %v5977
        %v6110 = vpack.c.b16 %v5984, %v5981
        %v6111 = vpack.c.b16 %v5985, %v5982
        %v6112 = vpack.c.b16 %v5986, %v5983
        %v6113 = vpack.c.b16 %v5990, %v5987
        %v6114 = vpack.c.b16 %v5991, %v5988
        %v6115 = vpack.c.b16 %v5992, %v5989
        %v6116 = vpack.c.b16 %v5996, %v5993
        %v6117 = vpack.c.b16 %v5997, %v5994
        %v6118 = vpack.c.b16 %v5998, %v5995
        %v6119 = vpack.c.b16 %v6002, %v5999
        %v6120 = vpack.c.b16 %v6003, %v6000
        %v6121 = vpack.c.b16 %v6004, %v6001
        %v6122 = vpack.c.b16 %v6008, %v6005
        %v6123 = vpack.c.b16 %v6009, %v6006
        %v6124 = vpack.c.b16 %v6010, %v6007
        %v6125 = vpack.c.b16 %v6014, %v6011
        %v6126 = vpack.c.b16 %v6015, %v6012
        %v6127 = vpack.c.b16 %v6016, %v6013
        %v6128 = vpack.c.b16 %v6020, %v6017
        %v6129 = vpack.c.b16 %v6021, %v6018
        %v6130 = vpack.c.b16 %v6022, %v6019
        %v6131 = vpack.c.b16 %v6026, %v6023
        %v6132 = vpack.c.b16 %v6027, %v6024
        %v6133 = vpack.c.b16 %v6028, %v6025
        %v6134 = vpack.c.b16 %v6032, %v6029
        %v6135 = vpack.c.b16 %v6033, %v6030
        %v6136 = vpack.c.b16 %v6034, %v6031
        %v6137 = vpack.c.b16 %v6038, %v6035
        %v6138 = vpack.c.b16 %v6039, %v6036
        %v6139 = vpack.c.b16 %v6040, %v6037
        %v6140 = vpack.c.b16 %v6044, %v6041
        %v6141 = vpack.c.b16 %v6045, %v6042
        %v6142 = vpack.c.b16 %v6046, %v6043
        %6239 = vmatprep.subr.bf16.mxu0 %v6048
        %6240 = vmatpush1.bf16.msra.mxu0 %v6047
        %6241 = vmatprep.subr.bf16.mxu0 %v6051
        %6242 = vmatpush1.bf16.msra.mxu0 %v6050
        %6243 = vmatprep.subr.bf16.mxu0 %v6054
        %6244 = vmatpush1.bf16.msra.mxu0 %v6053
        %6245 = vmatprep.subr.bf16.mxu0 %v6057
        %6246 = vmatpush1.bf16.msra.mxu0 %v6056
        %6247 = vmatprep.subr.bf16.mxu0 %v6060
        %6248 = vmatpush1.bf16.msra.mxu0 %v6059
        %6249 = vmatprep.subr.bf16.mxu0 %v6063
        %6250 = vmatpush1.bf16.msra.mxu0 %v6062
        %6251 = vmatprep.subr.bf16.mxu0 %v6066
        %6252 = vmatpush1.bf16.msra.mxu0 %v6065
        %6253 = vmatprep.subr.bf16.mxu0 %v6069
        %6254 = vmatpush1.bf16.msra.mxu0 %v6068
        %6255 = vmatprep.subr.bf16.mxu0 %v6072
        %6256 = vmatpush1.bf16.msra.mxu0 %v6071
        %6257 = vmatprep.subr.bf16.mxu0 %v6075
        %6258 = vmatpush1.bf16.msra.mxu0 %v6074
        %6259 = vmatprep.subr.bf16.mxu0 %v6078
        %6260 = vmatpush1.bf16.msra.mxu0 %v6077
        %6261 = vmatprep.subr.bf16.mxu0 %v6081
        %6262 = vmatpush1.bf16.msra.mxu0 %v6080
        %6263 = vmatprep.subr.bf16.mxu0 %v6084
        %6264 = vmatpush1.bf16.msra.mxu0 %v6083
        %6265 = vmatprep.subr.bf16.mxu0 %v6087
        %6266 = vmatpush1.bf16.msra.mxu0 %v6086
        %6267 = vmatprep.subr.bf16.mxu0 %v6090
        %6268 = vmatpush1.bf16.msra.mxu0 %v6089
        %6269 = vmatprep.subr.bf16.mxu0 %v6093
        %6270 = vmatpush1.bf16.msra.mxu0 %v6092
        %6271 = vmatprep.mubr.bf16.mxu0 %v5568
        %6272 = vmatmul.mubr.bf16.gmra.mrb[0].mxu0 %v5567
        %v6273 = vpop.f32.mrb[0].mxu0
        %v6274 = vadd.f32 0.0, %v6273
        %v6275 = vpop.f32.mrb[0].mxu0
        %v6276 = vadd.f32 0.0, %v6275
        %v6277 = vpop.f32.mrb[0].mxu0
        %v6278 = vadd.f32 0.0, %v6277
        %v6279 = vpop.f32.mrb[0].mxu0
        %v6280 = vadd.f32 0.0, %v6279
        %6281 = vmatprep.mubr.bf16.mxu0 %v5572
        %6282 = vmatmul.mubr.bf16.gmra.mrb[0].mxu0 %v5571
        %v6283 = vpop.f32.mrb[0].mxu0
        %v6284 = vadd.f32 0.0, %v6283
        %v6285 = vpop.f32.mrb[0].mxu0
        %v6286 = vadd.f32 0.0, %v6285
        %v6287 = vpop.f32.mrb[0].mxu0
        %v6288 = vadd.f32 0.0, %v6287
        %v6289 = vpop.f32.mrb[0].mxu0
        %v6290 = vadd.f32 0.0, %v6289
        %6291 = vmatprep.mubr.bf16.mxu0 %v5576
        %6292 = vmatmul.mubr.bf16.gmra.mrb[0].mxu0 %v5575
        %v6293 = vpop.f32.mrb[0].mxu0
        %v6294 = vadd.f32 0.0, %v6293
        %v6295 = vpop.f32.mrb[0].mxu0
        %v6296 = vadd.f32 0.0, %v6295
        %v6297 = vpop.f32.mrb[0].mxu0
        %v6298 = vadd.f32 0.0, %v6297
        %v6299 = vpop.f32.mrb[0].mxu0
        %v6300 = vadd.f32 0.0, %v6299
        %6301 = vmatprep.mubr.bf16.mxu0 %v5580
        %6302 = vmatmul.mubr.bf16.gmra.mrb[0].mxu0 %v5579
        %v6303 = vpop.f32.mrb[0].mxu0
        %v6304 = vadd.f32 0.0, %v6303
        %v6305 = vpop.f32.mrb[0].mxu0
        %v6306 = vadd.f32 0.0, %v6305
        %v6307 = vpop.f32.mrb[0].mxu0
        %v6308 = vadd.f32 0.0, %v6307
        %v6309 = vpop.f32.mrb[0].mxu0
        %v6310 = vadd.f32 0.0, %v6309
        %6311 = vmatprep.mubr.bf16.mxu0 %v5584
        %6312 = vmatmul.mubr.bf16.gmra.mrb[0].mxu0 %v5583
        %v6313 = vpop.f32.mrb[0].mxu0
        %v6314 = vadd.f32 0.0, %v6313
        %v6315 = vpop.f32.mrb[0].mxu0
        %v6316 = vadd.f32 0.0, %v6315
        %v6317 = vpop.f32.mrb[0].mxu0
        %v6318 = vadd.f32 0.0, %v6317
        %v6319 = vpop.f32.mrb[0].mxu0
        %v6320 = vadd.f32 0.0, %v6319
        %6321 = vmatprep.mubr.bf16.mxu0 %v5588
        %6322 = vmatmul.mubr.bf16.gmra.mrb[0].mxu0 %v5587
        %v6323 = vpop.f32.mrb[0].mxu0
        %v6324 = vadd.f32 0.0, %v6323
        %v6325 = vpop.f32.mrb[0].mxu0
        %v6326 = vadd.f32 0.0, %v6325
        %v6327 = vpop.f32.mrb[0].mxu0
        %v6328 = vadd.f32 0.0, %v6327
        %v6329 = vpop.f32.mrb[0].mxu0
        %v6330 = vadd.f32 0.0, %v6329
        %6331 = vmatprep.mubr.bf16.mxu0 %v5592
        %6332 = vmatmul.mubr.bf16.gmra.mrb[0].mxu0 %v5591
        %v6333 = vpop.f32.mrb[0].mxu0
        %v6334 = vadd.f32 0.0, %v6333
        %v6335 = vpop.f32.mrb[0].mxu0
        %v6336 = vadd.f32 0.0, %v6335
        %v6337 = vpop.f32.mrb[0].mxu0
        %v6338 = vadd.f32 0.0, %v6337
        %v6339 = vpop.f32.mrb[0].mxu0
        %v6340 = vadd.f32 0.0, %v6339
        %6341 = vmatprep.mubr.bf16.mxu0 %v5596
        %6342 = vmatmul.mubr.bf16.gmra.mrb[0].mxu0 %v5595
        %v6343 = vpop.f32.mrb[0].mxu0
        %v6344 = vadd.f32 0.0, %v6343
        %v6345 = vpop.f32.mrb[0].mxu0
        %v6346 = vadd.f32 0.0, %v6345
        %v6347 = vpop.f32.mrb[0].mxu0
        %v6348 = vadd.f32 0.0, %v6347
        %v6349 = vpop.f32.mrb[0].mxu0
        %v6350 = vadd.f32 0.0, %v6349
        %6351 = vdwg.mxu0
        %6352 = vmatprep.subr.bf16.mxu0 %v6096
        %6353 = vmatpush1.bf16.msra.mxu0 %v6095
        %6354 = vmatprep.subr.bf16.mxu0 %v6099
        %6355 = vmatpush1.bf16.msra.mxu0 %v6098
        %6356 = vmatprep.subr.bf16.mxu0 %v6102
        %6357 = vmatpush1.bf16.msra.mxu0 %v6101
        %6358 = vmatprep.subr.bf16.mxu0 %v6105
        %6359 = vmatpush1.bf16.msra.mxu0 %v6104
        %6360 = vmatprep.subr.bf16.mxu0 %v6108
        %6361 = vmatpush1.bf16.msra.mxu0 %v6107
        %6362 = vmatprep.subr.bf16.mxu0 %v6111
        %6363 = vmatpush1.bf16.msra.mxu0 %v6110
        %6364 = vmatprep.subr.bf16.mxu0 %v6114
        %6365 = vmatpush1.bf16.msra.mxu0 %v6113
        %6366 = vmatprep.subr.bf16.mxu0 %v6117
        %6367 = vmatpush1.bf16.msra.mxu0 %v6116
        %6368 = vmatprep.subr.bf16.mxu0 %v6120
        %6369 = vmatpush1.bf16.msra.mxu0 %v6119
        %6370 = vmatprep.subr.bf16.mxu0 %v6123
        %6371 = vmatpush1.bf16.msra.mxu0 %v6122
        %6372 = vmatprep.subr.bf16.mxu0 %v6126
        %6373 = vmatpush1.bf16.msra.mxu0 %v6125
        %6374 = vmatprep.subr.bf16.mxu0 %v6129
        %6375 = vmatpush1.bf16.msra.mxu0 %v6128
        %6376 = vmatprep.subr.bf16.mxu0 %v6132
        %6377 = vmatpush1.bf16.msra.mxu0 %v6131
        %6378 = vmatprep.subr.bf16.mxu0 %v6135
        %6379 = vmatpush1.bf16.msra.mxu0 %v6134
        %6380 = vmatprep.subr.bf16.mxu0 %v6138
        %6381 = vmatpush1.bf16.msra.mxu0 %v6137
        %6382 = vmatprep.subr.bf16.mxu0 %v6141
        %6383 = vmatpush1.bf16.msra.mxu0 %v6140
        %6384 = vmatprep.mubr.bf16.mxu0 %v5570
        %6385 = vmatmul.mubr.bf16.gmra.mrb[0].mxu0 %v5569
        %v6386 = vpop.f32.mrb[0].mxu0
        %v6387 = vadd.f32 %v6274, %v6386
        %v6388 = vpop.f32.mrb[0].mxu0
        %v6389 = vadd.f32 %v6276, %v6388
        %v6390 = vpop.f32.mrb[0].mxu0
        %v6391 = vadd.f32 %v6278, %v6390
        %v6392 = vpop.f32.mrb[0].mxu0
        %v6393 = vadd.f32 %v6280, %v6392
        %6394 = vmatprep.mubr.bf16.mxu0 %v5574
        %6395 = vmatmul.mubr.bf16.gmra.mrb[0].mxu0 %v5573
        %v6396 = vpop.f32.mrb[0].mxu0
        %v6397 = vadd.f32 %v6284, %v6396
        %v6398 = vpop.f32.mrb[0].mxu0
        %v6399 = vadd.f32 %v6286, %v6398
        %v6400 = vpop.f32.mrb[0].mxu0
        %v6401 = vadd.f32 %v6288, %v6400
        %v6402 = vpop.f32.mrb[0].mxu0
        %v6403 = vadd.f32 %v6290, %v6402
        %6404 = vmatprep.mubr.bf16.mxu0 %v5578
        %6405 = vmatmul.mubr.bf16.gmra.mrb[0].mxu0 %v5577
        %v6406 = vpop.f32.mrb[0].mxu0
        %v6407 = vadd.f32 %v6294, %v6406
        %v6408 = vpop.f32.mrb[0].mxu0
        %v6409 = vadd.f32 %v6296, %v6408
        %v6410 = vpop.f32.mrb[0].mxu0
        %v6411 = vadd.f32 %v6298, %v6410
        %v6412 = vpop.f32.mrb[0].mxu0
        %v6413 = vadd.f32 %v6300, %v6412
        %6414 = vmatprep.mubr.bf16.mxu0 %v5582
        %6415 = vmatmul.mubr.bf16.gmra.mrb[0].mxu0 %v5581
        %v6416 = vpop.f32.mrb[0].mxu0
        %v6417 = vadd.f32 %v6304, %v6416
        %v6418 = vpop.f32.mrb[0].mxu0
        %v6419 = vadd.f32 %v6306, %v6418
        %v6420 = vpop.f32.mrb[0].mxu0
        %v6421 = vadd.f32 %v6308, %v6420
        %v6422 = vpop.f32.mrb[0].mxu0
        %v6423 = vadd.f32 %v6310, %v6422
        %6424 = vmatprep.mubr.bf16.mxu0 %v5586
        %6425 = vmatmul.mubr.bf16.gmra.mrb[0].mxu0 %v5585
        %v6426 = vpop.f32.mrb[0].mxu0
        %v6427 = vadd.f32 %v6314, %v6426
        %v6428 = vpop.f32.mrb[0].mxu0
        %v6429 = vadd.f32 %v6316, %v6428
        %v6430 = vpop.f32.mrb[0].mxu0
        %v6431 = vadd.f32 %v6318, %v6430
        %v6432 = vpop.f32.mrb[0].mxu0
        %v6433 = vadd.f32 %v6320, %v6432
        %6434 = vmatprep.mubr.bf16.mxu0 %v5590
        %6435 = vmatmul.mubr.bf16.gmra.mrb[0].mxu0 %v5589
        %v6436 = vpop.f32.mrb[0].mxu0
        %v6437 = vadd.f32 %v6324, %v6436
        %v6438 = vpop.f32.mrb[0].mxu0
        %v6439 = vadd.f32 %v6326, %v6438
        %v6440 = vpop.f32.mrb[0].mxu0
        %v6441 = vadd.f32 %v6328, %v6440
        %v6442 = vpop.f32.mrb[0].mxu0
        %v6443 = vadd.f32 %v6330, %v6442
        %6444 = vmatprep.mubr.bf16.mxu0 %v5594
        %6445 = vmatmul.mubr.bf16.gmra.mrb[0].mxu0 %v5593
        %v6446 = vpop.f32.mrb[0].mxu0
        %v6447 = vadd.f32 %v6334, %v6446
        %v6448 = vpop.f32.mrb[0].mxu0
        %v6449 = vadd.f32 %v6336, %v6448
        %v6450 = vpop.f32.mrb[0].mxu0
        %v6451 = vadd.f32 %v6338, %v6450
        %v6452 = vpop.f32.mrb[0].mxu0
        %v6453 = vadd.f32 %v6340, %v6452
        %6454 = vmatprep.mubr.bf16.mxu0 %v5598
        %6455 = vmatmul.mubr.bf16.gmra.mrb[0].mxu0 %v5597
        %v6456 = vpop.f32.mrb[0].mxu0
        %v6457 = vadd.f32 %v6344, %v6456
        %v6458 = vpop.f32.mrb[0].mxu0
        %v6459 = vadd.f32 %v6346, %v6458
        %v6460 = vpop.f32.mrb[0].mxu0
        %v6461 = vadd.f32 %v6348, %v6460
        %v6462 = vpop.f32.mrb[0].mxu0
        %v6463 = vadd.f32 %v6350, %v6462
        %6464 = vdwg.mxu0
        %6465 = vmatprep.subr.bf16.mxu0 0
        %6466 = vmatpush1.bf16.msra.mxu0 %v6049
        %6467 = vmatprep.subr.bf16.mxu0 0
        %6468 = vmatpush1.bf16.msra.mxu0 %v6052
        %6469 = vmatprep.subr.bf16.mxu0 0
        %6470 = vmatpush1.bf16.msra.mxu0 %v6055
        %6471 = vmatprep.subr.bf16.mxu0 0
        %6472 = vmatpush1.bf16.msra.mxu0 %v6058
        %6473 = vmatprep.subr.bf16.mxu0 0
        %6474 = vmatpush1.bf16.msra.mxu0 %v6061
        %6475 = vmatprep.subr.bf16.mxu0 0
        %6476 = vmatpush1.bf16.msra.mxu0 %v6064
        %6477 = vmatprep.subr.bf16.mxu0 0
        %6478 = vmatpush1.bf16.msra.mxu0 %v6067
        %6479 = vmatprep.subr.bf16.mxu0 0
        %6480 = vmatpush1.bf16.msra.mxu0 %v6070
        %6481 = vmatprep.subr.bf16.mxu0 0
        %6482 = vmatpush1.bf16.msra.mxu0 %v6073
        %6483 = vmatprep.subr.bf16.mxu0 0
        %6484 = vmatpush1.bf16.msra.mxu0 %v6076
        %6485 = vmatprep.subr.bf16.mxu0 0
        %6486 = vmatpush1.bf16.msra.mxu0 %v6079
        %6487 = vmatprep.subr.bf16.mxu0 0
        %6488 = vmatpush1.bf16.msra.mxu0 %v6082
        %6489 = vmatprep.subr.bf16.mxu0 0
        %6490 = vmatpush1.bf16.msra.mxu0 %v6085
        %6491 = vmatprep.subr.bf16.mxu0 0
        %6492 = vmatpush1.bf16.msra.mxu0 %v6088
        %6493 = vmatprep.subr.bf16.mxu0 0
        %6494 = vmatpush1.bf16.msra.mxu0 %v6091
        %6495 = vmatprep.subr.bf16.mxu0 0
        %6496 = vmatpush1.bf16.msra.mxu0 %v6094
        %6497 = vmatprep.mubr.bf16.mxu0 %v5568
        %6498 = vmatmul.mubr.bf16.gmra.mrb[0].mxu0 %v5567
        %v6499 = vpop.f32.mrb[0].mxu0
        %v6500 = vadd.f32 0.0, %v6499
        %v6501 = vpop.f32.mrb[0].mxu0
        %v6502 = vpop.f32.mrb[0].mxu0
        %v6503 = vadd.f32 0.0, %v6502
        %v6504 = vpop.f32.mrb[0].mxu0
        %6505 = vmatprep.mubr.bf16.mxu0 %v5572
        %6506 = vmatmul.mubr.bf16.gmra.mrb[0].mxu0 %v5571
        %v6507 = vpop.f32.mrb[0].mxu0
        %v6508 = vadd.f32 0.0, %v6507
        %v6509 = vpop.f32.mrb[0].mxu0
        %v6510 = vpop.f32.mrb[0].mxu0
        %v6511 = vadd.f32 0.0, %v6510
        %v6512 = vpop.f32.mrb[0].mxu0
        %6513 = vmatprep.mubr.bf16.mxu0 %v5576
        %6514 = vmatmul.mubr.bf16.gmra.mrb[0].mxu0 %v5575
        %v6515 = vpop.f32.mrb[0].mxu0
        %v6516 = vadd.f32 0.0, %v6515
        %v6517 = vpop.f32.mrb[0].mxu0
        %v6518 = vpop.f32.mrb[0].mxu0
        %v6519 = vadd.f32 0.0, %v6518
        %v6520 = vpop.f32.mrb[0].mxu0
        %6521 = vmatprep.mubr.bf16.mxu0 %v5580
        %6522 = vmatmul.mubr.bf16.gmra.mrb[0].mxu0 %v5579
        %v6523 = vpop.f32.mrb[0].mxu0
        %v6524 = vadd.f32 0.0, %v6523
        %v6525 = vpop.f32.mrb[0].mxu0
        %v6526 = vpop.f32.mrb[0].mxu0
        %v6527 = vadd.f32 0.0, %v6526
        %v6528 = vpop.f32.mrb[0].mxu0
        %6529 = vmatprep.mubr.bf16.mxu0 %v5584
        %6530 = vmatmul.mubr.bf16.gmra.mrb[0].mxu0 %v5583
        %v6531 = vpop.f32.mrb[0].mxu0
        %v6532 = vadd.f32 0.0, %v6531
        %v6533 = vpop.f32.mrb[0].mxu0
        %v6534 = vpop.f32.mrb[0].mxu0
        %v6535 = vadd.f32 0.0, %v6534
        %v6536 = vpop.f32.mrb[0].mxu0
        %6537 = vmatprep.mubr.bf16.mxu0 %v5588
        %6538 = vmatmul.mubr.bf16.gmra.mrb[0].mxu0 %v5587
        %v6539 = vpop.f32.mrb[0].mxu0
        %v6540 = vadd.f32 0.0, %v6539
        %v6541 = vpop.f32.mrb[0].mxu0
        %v6542 = vpop.f32.mrb[0].mxu0
        %v6543 = vadd.f32 0.0, %v6542
        %v6544 = vpop.f32.mrb[0].mxu0
        %6545 = vmatprep.mubr.bf16.mxu0 %v5592
        %6546 = vmatmul.mubr.bf16.gmra.mrb[0].mxu0 %v5591
        %v6547 = vpop.f32.mrb[0].mxu0
        %v6548 = vadd.f32 0.0, %v6547
        %v6549 = vpop.f32.mrb[0].mxu0
        %v6550 = vpop.f32.mrb[0].mxu0
        %v6551 = vadd.f32 0.0, %v6550
        %v6552 = vpop.f32.mrb[0].mxu0
        %6553 = vmatprep.mubr.bf16.mxu0 %v5596
        %6554 = vmatmul.mubr.bf16.gmra.mrb[0].mxu0 %v5595
        %v6555 = vpop.f32.mrb[0].mxu0
        %v6556 = vadd.f32 0.0, %v6555
        %v6557 = vpop.f32.mrb[0].mxu0
        %v6558 = vpop.f32.mrb[0].mxu0
        %v6559 = vadd.f32 0.0, %v6558
        %v6560 = vpop.f32.mrb[0].mxu0
        %6561 = vdwg.mxu0
        %6562 = vmatprep.subr.bf16.mxu0 0
        %6563 = vmatpush1.bf16.msra.mxu0 %v6097
        %6564 = vmatprep.subr.bf16.mxu0 0
        %6565 = vmatpush1.bf16.msra.mxu0 %v6100
        %6566 = vmatprep.subr.bf16.mxu0 0
        %6567 = vmatpush1.bf16.msra.mxu0 %v6103
        %6568 = vmatprep.subr.bf16.mxu0 0
        %6569 = vmatpush1.bf16.msra.mxu0 %v6106
        %6570 = vmatprep.subr.bf16.mxu0 0
        %6571 = vmatpush1.bf16.msra.mxu0 %v6109
        %6572 = vmatprep.subr.bf16.mxu0 0
        %6573 = vmatpush1.bf16.msra.mxu0 %v6112
        %6574 = vmatprep.subr.bf16.mxu0 0
        %6575 = vmatpush1.bf16.msra.mxu0 %v6115
        %6576 = vmatprep.subr.bf16.mxu0 0
        %6577 = vmatpush1.bf16.msra.mxu0 %v6118
        %6578 = vmatprep.subr.bf16.mxu0 0
        %6579 = vmatpush1.bf16.msra.mxu0 %v6121
        %6580 = vmatprep.subr.bf16.mxu0 0
        %6581 = vmatpush1.bf16.msra.mxu0 %v6124
        %6582 = vmatprep.subr.bf16.mxu0 0
        %6583 = vmatpush1.bf16.msra.mxu0 %v6127
        %6584 = vmatprep.subr.bf16.mxu0 0
        %6585 = vmatpush1.bf16.msra.mxu0 %v6130
        %6586 = vmatprep.subr.bf16.mxu0 0
        %6587 = vmatpush1.bf16.msra.mxu0 %v6133
        %6588 = vmatprep.subr.bf16.mxu0 0
        %6589 = vmatpush1.bf16.msra.mxu0 %v6136
        %6590 = vmatprep.subr.bf16.mxu0 0
        %6591 = vmatpush1.bf16.msra.mxu0 %v6139
        %6592 = vmatprep.subr.bf16.mxu0 0
        %6593 = vmatpush1.bf16.msra.mxu0 %v6142
        %6594 = vmatprep.mubr.bf16.mxu0 %v5570
        %6595 = vmatmul.mubr.bf16.gmra.mrb[0].mxu0 %v5569
        %v6596 = vpop.f32.mrb[0].mxu0
        %v6597 = vadd.f32 %v6500, %v6596
        %v6598 = vpop.f32.mrb[0].mxu0
        %v6599 = vpop.f32.mrb[0].mxu0
        %v6600 = vadd.f32 %v6503, %v6599
        %v6601 = vpop.f32.mrb[0].mxu0
        %6602 = vmatprep.mubr.bf16.mxu0 %v5574
        %6603 = vmatmul.mubr.bf16.gmra.mrb[0].mxu0 %v5573
        %v6604 = vpop.f32.mrb[0].mxu0
        %v6605 = vadd.f32 %v6508, %v6604
        %v6606 = vpop.f32.mrb[0].mxu0
        %v6607 = vpop.f32.mrb[0].mxu0
        %v6608 = vadd.f32 %v6511, %v6607
        %v6609 = vpop.f32.mrb[0].mxu0
        %6610 = vmatprep.mubr.bf16.mxu0 %v5578
        %6611 = vmatmul.mubr.bf16.gmra.mrb[0].mxu0 %v5577
        %v6612 = vpop.f32.mrb[0].mxu0
        %v6613 = vadd.f32 %v6516, %v6612
        %v6614 = vpop.f32.mrb[0].mxu0
        %v6615 = vpop.f32.mrb[0].mxu0
        %v6616 = vadd.f32 %v6519, %v6615
        %v6617 = vpop.f32.mrb[0].mxu0
        %6618 = vmatprep.mubr.bf16.mxu0 %v5582
        %6619 = vmatmul.mubr.bf16.gmra.mrb[0].mxu0 %v5581
        %v6620 = vpop.f32.mrb[0].mxu0
        %v6621 = vadd.f32 %v6524, %v6620
        %v6622 = vpop.f32.mrb[0].mxu0
        %v6623 = vpop.f32.mrb[0].mxu0
        %v6624 = vadd.f32 %v6527, %v6623
        %v6625 = vpop.f32.mrb[0].mxu0
        %6626 = vmatprep.mubr.bf16.mxu0 %v5586
        %6627 = vmatmul.mubr.bf16.gmra.mrb[0].mxu0 %v5585
        %v6628 = vpop.f32.mrb[0].mxu0
        %v6629 = vadd.f32 %v6532, %v6628
        %v6630 = vpop.f32.mrb[0].mxu0
        %v6631 = vpop.f32.mrb[0].mxu0
        %v6632 = vadd.f32 %v6535, %v6631
        %v6633 = vpop.f32.mrb[0].mxu0
        %6634 = vmatprep.mubr.bf16.mxu0 %v5590
        %6635 = vmatmul.mubr.bf16.gmra.mrb[0].mxu0 %v5589
        %v6636 = vpop.f32.mrb[0].mxu0
        %v6637 = vadd.f32 %v6540, %v6636
        %v6638 = vpop.f32.mrb[0].mxu0
        %v6639 = vpop.f32.mrb[0].mxu0
        %v6640 = vadd.f32 %v6543, %v6639
        %v6641 = vpop.f32.mrb[0].mxu0
        %6642 = vmatprep.mubr.bf16.mxu0 %v5594
        %6643 = vmatmul.mubr.bf16.gmra.mrb[0].mxu0 %v5593
        %v6644 = vpop.f32.mrb[0].mxu0
        %v6645 = vadd.f32 %v6548, %v6644
        %v6646 = vpop.f32.mrb[0].mxu0
        %v6647 = vpop.f32.mrb[0].mxu0
        %v6648 = vadd.f32 %v6551, %v6647
        %v6649 = vpop.f32.mrb[0].mxu0
        %6650 = vmatprep.mubr.bf16.mxu0 %v5598
        %6651 = vmatmul.mubr.bf16.gmra.mrb[0].mxu0 %v5597
        %v6652 = vpop.f32.mrb[0].mxu0
        %v6653 = vadd.f32 %v6556, %v6652
        %v6654 = vpop.f32.mrb[0].mxu0
        %v6655 = vpop.f32.mrb[0].mxu0
        %v6656 = vadd.f32 %v6559, %v6655
        %v6657 = vpop.f32.mrb[0].mxu0
        %6658 = vdwg.mxu0
        %v6659 = vmul.f32 %v2078, %v6389
        %v6660 = vmul.f32 %v2079, %v6393
        %v6661 = vmul.f32 %v2080, %v6399
        %v6662 = vmul.f32 %v2081, %v6403
        %v6663 = vmul.f32 %v2082, %v6409
        %v6664 = vmul.f32 %v2083, %v6413
        %v6665 = vmul.f32 %v2084, %v6419
        %v6666 = vmul.f32 %v2085, %v6423
        %v6667 = vmul.f32 %v2086, %v6429
        %v6668 = vmul.f32 %v2087, %v6433
        %v6669 = vmul.f32 %v2088, %v6439
        %v6670 = vmul.f32 %v2089, %v6443
        %v6671 = vmul.f32 %v2090, %v6449
        %v6672 = vmul.f32 %v2091, %v6453
        %v6673 = vmul.f32 %v2092, %v6459
        %v6674 = vmul.f32 %v2093, %v6463
        %v6675 = vadd.f32 %v6387, %v6659
        %v6676 = vadd.f32 %v6391, %v6660
        %v6677 = vadd.f32 %v6397, %v6661
        %v6678 = vadd.f32 %v6401, %v6662
        %v6679 = vadd.f32 %v6407, %v6663
        %v6680 = vadd.f32 %v6411, %v6664
        %v6681 = vadd.f32 %v6417, %v6665
        %v6682 = vadd.f32 %v6421, %v6666
        %v6683 = vadd.f32 %v6427, %v6667
        %v6684 = vadd.f32 %v6431, %v6668
        %v6685 = vadd.f32 %v6437, %v6669
        %v6686 = vadd.f32 %v6441, %v6670
        %v6687 = vadd.f32 %v6447, %v6671
        %v6688 = vadd.f32 %v6451, %v6672
        %v6689 = vadd.f32 %v6457, %v6673
        %v6690 = vadd.f32 %v6461, %v6674
        %v6691 = vmul.f32 %v2110, %v6597
        %v6692 = vmul.f32 %v2111, %v6600
        %v6693 = vmul.f32 %v2112, %v6605
        %v6694 = vmul.f32 %v2113, %v6608
        %v6695 = vmul.f32 %v2114, %v6613
        %v6696 = vmul.f32 %v2115, %v6616
        %v6697 = vmul.f32 %v2116, %v6621
        %v6698 = vmul.f32 %v2117, %v6624
        %v6699 = vmul.f32 %v2118, %v6629
        %v6700 = vmul.f32 %v2119, %v6632
        %v6701 = vmul.f32 %v2120, %v6637
        %v6702 = vmul.f32 %v2121, %v6640
        %v6703 = vmul.f32 %v2122, %v6645
        %v6704 = vmul.f32 %v2123, %v6648
        %v6705 = vmul.f32 %v2124, %v6653
        %v6706 = vmul.f32 %v2125, %v6656
        %v6707 = vadd.f32 %v6675, %v6691
        %v6708 = vadd.f32 %v6676, %v6692
        %v6709 = vadd.f32 %v6677, %v6693
        %v6710 = vadd.f32 %v6678, %v6694
        %v6711 = vadd.f32 %v6679, %v6695
        %v6712 = vadd.f32 %v6680, %v6696
        %v6713 = vadd.f32 %v6681, %v6697
        %v6714 = vadd.f32 %v6682, %v6698
        %v6715 = vadd.f32 %v6683, %v6699
        %v6716 = vadd.f32 %v6684, %v6700
        %v6717 = vadd.f32 %v6685, %v6701
        %v6718 = vadd.f32 %v6686, %v6702
        %v6719 = vadd.f32 %v6687, %v6703
        %v6720 = vadd.f32 %v6688, %v6704
        %v6721 = vadd.f32 %v6689, %v6705
        %v6722 = vadd.f32 %v6690, %v6706
        %v6723 = vld [vmem:[%s647] sm:$0x1]
        %v6725 = vlaneseq
        %v6726 = vshrl.u32 %v6725, 7
        %v6727 = vsub.s32 0, %v6726
        %v6728 = vrot.slane %v6723, %v6727
        %v6730 = vadd.f32 %v6707, %v6728
        %v6731 = vadd.f32 %v6708, %v6728
        %v6732 = vadd.f32 %v6709, %v6728
        %v6733 = vadd.f32 %v6710, %v6728
        %v6734 = vadd.f32 %v6711, %v6728
        %v6735 = vadd.f32 %v6712, %v6728
        %v6736 = vadd.f32 %v6713, %v6728
        %v6737 = vadd.f32 %v6714, %v6728
        %v6738 = vadd.f32 %v6715, %v6728
        %v6739 = vadd.f32 %v6716, %v6728
        %v6740 = vadd.f32 %v6717, %v6728
        %v6741 = vadd.f32 %v6718, %v6728
        %v6742 = vadd.f32 %v6719, %v6728
        %v6743 = vadd.f32 %v6720, %v6728
        %v6744 = vadd.f32 %v6721, %v6728
        %v6745 = vadd.f32 %v6722, %v6728
        %v6746 = vld [vmem:[%s655] sm:$0x1]
        %v6748 = vlaneseq
        %v6749 = vshrl.u32 %v6748, 7
        %v6750 = vsub.s32 0, %v6749
        %v6751 = vrot.slane %v6746, %v6750
        %v6753 = vmul.f32 %v6730, %v6751
        %v6754 = vmul.f32 %v6731, %v6751
        %v6755 = vmul.f32 %v6732, %v6751
        %v6756 = vmul.f32 %v6733, %v6751
        %v6757 = vmul.f32 %v6734, %v6751
        %v6758 = vmul.f32 %v6735, %v6751
        %v6759 = vmul.f32 %v6736, %v6751
        %v6760 = vmul.f32 %v6737, %v6751
        %v6761 = vmul.f32 %v6738, %v6751
        %v6762 = vmul.f32 %v6739, %v6751
        %v6763 = vmul.f32 %v6740, %v6751
        %v6764 = vmul.f32 %v6741, %v6751
        %v6765 = vmul.f32 %v6742, %v6751
        %v6766 = vmul.f32 %v6743, %v6751
        %v6767 = vmul.f32 %v6744, %v6751
        %v6768 = vmul.f32 %v6745, %v6751
        %v6769 = vld [vmem:[%s663] sm:$0x1]
        %v6771 = vlaneseq
        %v6772 = vshrl.u32 %v6771, 7
        %v6773 = vsub.s32 0, %v6772
        %v6774 = vrot.slane %v6769, %v6773
        %v6776 = vadd.f32 %v6753, %v6774
        %v6777 = vadd.f32 %v6754, %v6774
        %v6778 = vadd.f32 %v6755, %v6774
        %v6779 = vadd.f32 %v6756, %v6774
        %v6780 = vadd.f32 %v6757, %v6774
        %v6781 = vadd.f32 %v6758, %v6774
        %v6782 = vadd.f32 %v6759, %v6774
        %v6783 = vadd.f32 %v6760, %v6774
        %v6784 = vadd.f32 %v6761, %v6774
        %v6785 = vadd.f32 %v6762, %v6774
        %v6786 = vadd.f32 %v6763, %v6774
        %v6787 = vadd.f32 %v6764, %v6774
        %v6788 = vadd.f32 %v6765, %v6774
        %v6789 = vadd.f32 %v6766, %v6774
        %v6790 = vadd.f32 %v6767, %v6774
        %v6791 = vadd.f32 %v6768, %v6774
        %v6792 = vmax.f32 %v6776, 0.0
        %v6793 = vmax.f32 %v6777, 0.0
        %v6794 = vmax.f32 %v6778, 0.0
        %v6795 = vmax.f32 %v6779, 0.0
        %v6796 = vmax.f32 %v6780, 0.0
        %v6797 = vmax.f32 %v6781, 0.0
        %v6798 = vmax.f32 %v6782, 0.0
        %v6799 = vmax.f32 %v6783, 0.0
        %v6800 = vmax.f32 %v6784, 0.0
        %v6801 = vmax.f32 %v6785, 0.0
        %v6802 = vmax.f32 %v6786, 0.0
        %v6803 = vmax.f32 %v6787, 0.0
        %v6804 = vmax.f32 %v6788, 0.0
        %v6805 = vmax.f32 %v6789, 0.0
        %v6806 = vmax.f32 %v6790, 0.0
        %v6807 = vmax.f32 %v6791, 0.0
        %v6808 = vadd.f32 %v6792, %v782
        %v6809 = vadd.f32 %v6793, %v783
        %v6810 = vadd.f32 %v6794, %v784
        %v6811 = vadd.f32 %v6795, %v785
        %v6812 = vadd.f32 %v6796, %v786
        %v6813 = vadd.f32 %v6797, %v787
        %v6814 = vadd.f32 %v6798, %v788
        %v6815 = vadd.f32 %v6799, %v789
        %v6816 = vadd.f32 %v6800, %v790
        %v6817 = vadd.f32 %v6801, %v791
        %v6818 = vadd.f32 %v6802, %v792
        %v6819 = vadd.f32 %v6803, %v793
        %v6820 = vadd.f32 %v6804, %v794
        %v6821 = vadd.f32 %v6805, %v795
        %v6822 = vadd.f32 %v6806, %v796
        %v6823 = vadd.f32 %v6807, %v797
        %6824 = vst [vmem:[#allocation2] sm:$0xff] %v6808
        %6825 = vst [vmem:[#allocation2 + $0x8] sm:$0xff] %v6809
        %6826 = vst [vmem:[#allocation2 + $0x10] sm:$0xff] %v6810
        %6827 = vst [vmem:[#allocation2 + $0x18] sm:$0xff] %v6811
        %6828 = vst [vmem:[#allocation2 + $0x20] sm:$0xff] %v6812
        %6829 = vst [vmem:[#allocation2 + $0x28] sm:$0xff] %v6813
        %6830 = vst [vmem:[#allocation2 + $0x30] sm:$0xff] %v6814
        %6831 = vst [vmem:[#allocation2 + $0x38] sm:$0xff] %v6815
        %6832 = vst [vmem:[#allocation2 + $0x40] sm:$0xff] %v6816
        %6833 = vst [vmem:[#allocation2 + $0x48] sm:$0xff] %v6817
        %6834 = vst [vmem:[#allocation2 + $0x50] sm:$0xff] %v6818
        %6835 = vst [vmem:[#allocation2 + $0x58] sm:$0xff] %v6819
        %6836 = vst [vmem:[#allocation2 + $0x60] sm:$0xff] %v6820
        %6837 = vst [vmem:[#allocation2 + $0x68] sm:$0xff] %v6821
        %6838 = vst [vmem:[#allocation2 + $0x70] sm:$0xff] %v6822
        %6839 = vst [vmem:[#allocation2 + $0x78] sm:$0xff] %v6823
        %p6840 = scmp.eq.s32.totalorder %s33, 3
        // Predicated region
        $region145: #{tpu_custom_call.1} parent=79 // pred_check
          %p6841 = pneg %p6840
        $region146: #{tpu_custom_call.1} parent=79 // pred_check_branch
          %6843 = sbr.rel (%p6841) target = $region148
        $region147: #{tpu_custom_call.1} parent=79 // pred_region
          %v6844 = vld [vmem:[#allocation16] sm:$0xff]
          %v6845 = vld [vmem:[#allocation16 + $0x8] sm:$0xff]
          %v6846 = vld [vmem:[#allocation2] sm:$0xff]
          %v6847 = vld [vmem:[#allocation2 + $0x8] sm:$0xff]
          %v6848 = vld [vmem:[#allocation2 + $0x10] sm:$0xff]
          %v6849 = vld [vmem:[#allocation2 + $0x18] sm:$0xff]
          %v6850 = vld [vmem:[#allocation2 + $0x20] sm:$0xff]
          %v6851 = vld [vmem:[#allocation2 + $0x28] sm:$0xff]
          %v6852 = vld [vmem:[#allocation2 + $0x30] sm:$0xff]
          %v6853 = vld [vmem:[#allocation2 + $0x38] sm:$0xff]
          %v6854 = vld [vmem:[#allocation2 + $0x40] sm:$0xff]
          %v6855 = vld [vmem:[#allocation2 + $0x48] sm:$0xff]
          %v6856 = vld [vmem:[#allocation2 + $0x50] sm:$0xff]
          %v6857 = vld [vmem:[#allocation2 + $0x58] sm:$0xff]
          %v6858 = vld [vmem:[#allocation2 + $0x60] sm:$0xff]
          %v6859 = vld [vmem:[#allocation2 + $0x68] sm:$0xff]
          %v6860 = vld [vmem:[#allocation2 + $0x70] sm:$0xff]
          %v6861 = vld [vmem:[#allocation2 + $0x78] sm:$0xff]
          %6862 = vmatprep.subr.mxu0 0.0
          %6863 = vmatpush1.msra.mxu0 %v6846
          %6864 = vmatprep.subr.mxu0 0.0
          %6865 = vmatpush1.msra.mxu0 %v6847
          %6866 = vmatprep.subr.mxu0 0.0
          %6867 = vmatpush1.msra.mxu0 %v6848
          %6868 = vmatprep.subr.mxu0 0.0
          %6869 = vmatpush1.msra.mxu0 %v6849
          %6870 = vmatprep.subr.mxu0 0.0
          %6871 = vmatpush1.msra.mxu0 %v6850
          %6872 = vmatprep.subr.mxu0 0.0
          %6873 = vmatpush1.msra.mxu0 %v6851
          %6874 = vmatprep.subr.mxu0 0.0
          %6875 = vmatpush1.msra.mxu0 %v6852
          %6876 = vmatprep.subr.mxu0 0.0
          %6877 = vmatpush1.msra.mxu0 %v6853
          %6878 = vmatprep.subr.mxu0 0.0
          %6879 = vmatpush1.msra.mxu0 %v6854
          %6880 = vmatprep.subr.mxu0 0.0
          %6881 = vmatpush1.msra.mxu0 %v6855
          %6882 = vmatprep.subr.mxu0 0.0
          %6883 = vmatpush1.msra.mxu0 %v6856
          %6884 = vmatprep.subr.mxu0 0.0
          %6885 = vmatpush1.msra.mxu0 %v6857
          %6886 = vmatprep.subr.mxu0 0.0
          %6887 = vmatpush1.msra.mxu0 %v6858
          %6888 = vmatprep.subr.mxu0 0.0
          %6889 = vmatpush1.msra.mxu0 %v6859
          %6890 = vmatprep.subr.mxu0 0.0
          %6891 = vmatpush1.msra.mxu0 %v6860
          %6892 = vmatprep.subr.mxu0 0.0
          %6893 = vmatpush1.msra.mxu0 %v6861
          %6894 = vmatprep.subr.mxu0 0.0
          %6895 = vmatpush1.msra.mxu0 0.0
          %6896 = vmatprep.subr.mxu0 0.0
          %6897 = vmatpush1.msra.mxu0 0.0
          %6898 = vmatprep.subr.mxu0 0.0
          %6899 = vmatpush1.msra.mxu0 0.0
          %6900 = vmatprep.subr.mxu0 0.0
          %6901 = vmatpush1.msra.mxu0 0.0
          %6902 = vmatprep.subr.mxu0 0.0
          %6903 = vmatpush1.msra.mxu0 0.0
          %6904 = vmatprep.subr.mxu0 0.0
          %6905 = vmatpush1.msra.mxu0 0.0
          %6906 = vmatprep.subr.mxu0 0.0
          %6907 = vmatpush1.msra.mxu0 0.0
          %6908 = vmatprep.subr.mxu0 0.0
          %6909 = vmatpush1.msra.mxu0 0.0
          %6910 = vmatprep.subr.mxu0 0.0
          %6911 = vmatpush1.msra.mxu0 0.0
          %6912 = vmatprep.subr.mxu0 0.0
          %6913 = vmatpush1.msra.mxu0 0.0
          %6914 = vmatprep.subr.mxu0 0.0
          %6915 = vmatpush1.msra.mxu0 0.0
          %6916 = vmatprep.subr.mxu0 0.0
          %6917 = vmatpush1.msra.mxu0 0.0
          %6918 = vmatprep.subr.mxu0 0.0
          %6919 = vmatpush1.msra.mxu0 0.0
          %6920 = vmatprep.subr.mxu0 0.0
          %6921 = vmatpush1.msra.mxu0 0.0
          %6922 = vmatprep.subr.mxu0 0.0
          %6923 = vmatpush1.msra.mxu0 0.0
          %6924 = vmatprep.subr.mxu0 0.0
          %6925 = vmatpush1.msra.mxu0 0.0
          %6926 = vmatprep.mubr.f32.mxu0 0.0
          %6927 = vmatmul.mubr.f32.gmra.mrb[0].mxu0 %v6844
          %v6928 = vpop.f32.mrb[0].mxu0
          %v6929 = vadd.f32 0.0, %v6928
          %v6930 = vpop.f32.mrb[0].mxu0
          %6931 = vmatprep.mubr.f32.mxu0 0.0
          %6932 = vmatmul.mubr.f32.gmra.mrb[0].mxu0 %v6845
          %v6933 = vpop.f32.mrb[0].mxu0
          %v6934 = vadd.f32 0.0, %v6933
          %v6935 = vpop.f32.mrb[0].mxu0
          %6936 = vdwg.mxu0
          %v6937 = vld [vmem:[#allocation17] sm:$0xff]
          %v6938 = vld [vmem:[#allocation17 + $0x8] sm:$0xff]
          %v6939 = vld [vmem:[#allocation17 + $0x10] sm:$0xff]
          %v6940 = vld [vmem:[#allocation17 + $0x18] sm:$0xff]
          %v6941 = vld [vmem:[#allocation17 + $0x20] sm:$0xff]
          %v6942 = vld [vmem:[#allocation17 + $0x28] sm:$0xff]
          %v6943 = vld [vmem:[#allocation17 + $0x30] sm:$0xff]
          %v6944 = vld [vmem:[#allocation17 + $0x38] sm:$0xff]
          %v6945 = vld [vmem:[#allocation17 + $0x40] sm:$0xff]
          %v6946 = vld [vmem:[#allocation17 + $0x48] sm:$0xff]
          %v6947 = vld [vmem:[#allocation17 + $0x50] sm:$0xff]
          %v6948 = vld [vmem:[#allocation17 + $0x58] sm:$0xff]
          %v6949 = vld [vmem:[#allocation17 + $0x60] sm:$0xff]
          %v6950 = vld [vmem:[#allocation17 + $0x68] sm:$0xff]
          %v6951 = vld [vmem:[#allocation17 + $0x70] sm:$0xff]
          %v6952 = vld [vmem:[#allocation17 + $0x78] sm:$0xff]
          %v6953 = vld [vmem:[#allocation18] sm:$0x1]
          %v6955 = vlaneseq
          %v6956 = vshrl.u32 %v6955, 7
          %v6957 = vsub.s32 0, %v6956
          %v6958 = vrot.slane %v6953, %v6957
          %6960 = vmatprep.subr.mxu0 0.0
          %6961 = vmatpush1.msra.mxu0 %v6937
          %6962 = vmatprep.subr.mxu0 0.0
          %6963 = vmatpush1.msra.mxu0 %v6938
          %6964 = vmatprep.subr.mxu0 0.0
          %6965 = vmatpush1.msra.mxu0 %v6939
          %6966 = vmatprep.subr.mxu0 0.0
          %6967 = vmatpush1.msra.mxu0 %v6940
          %6968 = vmatprep.subr.mxu0 0.0
          %6969 = vmatpush1.msra.mxu0 %v6941
          %6970 = vmatprep.subr.mxu0 0.0
          %6971 = vmatpush1.msra.mxu0 %v6942
          %6972 = vmatprep.subr.mxu0 0.0
          %6973 = vmatpush1.msra.mxu0 %v6943
          %6974 = vmatprep.subr.mxu0 0.0
          %6975 = vmatpush1.msra.mxu0 %v6944
          %6976 = vmatprep.subr.mxu0 0.0
          %6977 = vmatpush1.msra.mxu0 %v6945
          %6978 = vmatprep.subr.mxu0 0.0
          %6979 = vmatpush1.msra.mxu0 %v6946
          %6980 = vmatprep.subr.mxu0 0.0
          %6981 = vmatpush1.msra.mxu0 %v6947
          %6982 = vmatprep.subr.mxu0 0.0
          %6983 = vmatpush1.msra.mxu0 %v6948
          %6984 = vmatprep.subr.mxu0 0.0
          %6985 = vmatpush1.msra.mxu0 %v6949
          %6986 = vmatprep.subr.mxu0 0.0
          %6987 = vmatpush1.msra.mxu0 %v6950
          %6988 = vmatprep.subr.mxu0 0.0
          %6989 = vmatpush1.msra.mxu0 %v6951
          %6990 = vmatprep.subr.mxu0 0.0
          %6991 = vmatpush1.msra.mxu0 %v6952
          %6992 = vmatprep.subr.mxu0 0.0
          %6993 = vmatpush1.msra.mxu0 0.0
          %6994 = vmatprep.subr.mxu0 0.0
          %6995 = vmatpush1.msra.mxu0 0.0
          %6996 = vmatprep.subr.mxu0 0.0
          %6997 = vmatpush1.msra.mxu0 0.0
          %6998 = vmatprep.subr.mxu0 0.0
          %6999 = vmatpush1.msra.mxu0 0.0
          %7000 = vmatprep.subr.mxu0 0.0
          %7001 = vmatpush1.msra.mxu0 0.0
          %7002 = vmatprep.subr.mxu0 0.0
          %7003 = vmatpush1.msra.mxu0 0.0
          %7004 = vmatprep.subr.mxu0 0.0
          %7005 = vmatpush1.msra.mxu0 0.0
          %7006 = vmatprep.subr.mxu0 0.0
          %7007 = vmatpush1.msra.mxu0 0.0
          %7008 = vmatprep.subr.mxu0 0.0
          %7009 = vmatpush1.msra.mxu0 0.0
          %7010 = vmatprep.subr.mxu0 0.0
          %7011 = vmatpush1.msra.mxu0 0.0
          %7012 = vmatprep.subr.mxu0 0.0
          %7013 = vmatpush1.msra.mxu0 0.0
          %7014 = vmatprep.subr.mxu0 0.0
          %7015 = vmatpush1.msra.mxu0 0.0
          %7016 = vmatprep.subr.mxu0 0.0
          %7017 = vmatpush1.msra.mxu0 0.0
          %7018 = vmatprep.subr.mxu0 0.0
          %7019 = vmatpush1.msra.mxu0 0.0
          %7020 = vmatprep.subr.mxu0 0.0
          %7021 = vmatpush1.msra.mxu0 0.0
          %7022 = vmatprep.subr.mxu0 0.0
          %7023 = vmatpush1.msra.mxu0 0.0
          %7024 = vmatprep.mubr.f32.mxu0 0.0
          %7025 = vmatmul.mubr.f32.gmra.mrb[0].mxu0 %v6929
          %v7026 = vpop.f32.mrb[0].mxu0
          %v7027 = vadd.f32 %v6958, %v7026
          %v7028 = vpop.f32.mrb[0].mxu0
          %7029 = vmatprep.mubr.f32.mxu0 0.0
          %7030 = vmatmul.mubr.f32.gmra.mrb[0].mxu0 %v6934
          %v7031 = vpop.f32.mrb[0].mxu0
          %v7032 = vadd.f32 %v6958, %v7031
          %v7033 = vpop.f32.mrb[0].mxu0
          %7034 = vdwg.mxu0
          %v7035 = vmax.f32 %v7027, 0.0
          %v7036 = vmax.f32 %v7032, 0.0
          %v7037 = vld [vmem:[#allocation20] sm:$0xff]
          %v7038 = vld [vmem:[#allocation20 + $0x8] sm:$0xff]
          %v7039 = vld [vmem:[#allocation20 + $0x10] sm:$0xff]
          %v7040 = vld [vmem:[#allocation20 + $0x18] sm:$0xff]
          %v7041 = vld [vmem:[#allocation20 + $0x20] sm:$0xff]
          %v7042 = vld [vmem:[#allocation20 + $0x28] sm:$0xff]
          %v7043 = vld [vmem:[#allocation20 + $0x30] sm:$0xff]
          %v7044 = vld [vmem:[#allocation20 + $0x38] sm:$0xff]
          %v7045 = vld [vmem:[#allocation20 + $0x40] sm:$0xff]
          %v7046 = vld [vmem:[#allocation20 + $0x48] sm:$0xff]
          %v7047 = vld [vmem:[#allocation20 + $0x50] sm:$0xff]
          %v7048 = vld [vmem:[#allocation20 + $0x58] sm:$0xff]
          %v7049 = vld [vmem:[#allocation20 + $0x60] sm:$0xff]
          %v7050 = vld [vmem:[#allocation20 + $0x68] sm:$0xff]
          %v7051 = vld [vmem:[#allocation20 + $0x70] sm:$0xff]
          %v7052 = vld [vmem:[#allocation20 + $0x78] sm:$0xff]
          %v7053 = vld [vmem:[#allocation21] sm:$0x1]
          %v7055 = vlaneseq
          %v7056 = vshrl.u32 %v7055, 7
          %v7057 = vsub.s32 0, %v7056
          %v7058 = vrot.slane %v7053, %v7057
          %7060 = vmatprep.subr.mxu0 0.0
          %7061 = vmatpush1.msra.mxu0 %v7037
          %7062 = vmatprep.subr.mxu0 0.0
          %7063 = vmatpush1.msra.mxu0 %v7038
          %7064 = vmatprep.subr.mxu0 0.0
          %7065 = vmatpush1.msra.mxu0 %v7039
          %7066 = vmatprep.subr.mxu0 0.0
          %7067 = vmatpush1.msra.mxu0 %v7040
          %7068 = vmatprep.subr.mxu0 0.0
          %7069 = vmatpush1.msra.mxu0 %v7041
          %7070 = vmatprep.subr.mxu0 0.0
          %7071 = vmatpush1.msra.mxu0 %v7042
          %7072 = vmatprep.subr.mxu0 0.0
          %7073 = vmatpush1.msra.mxu0 %v7043
          %7074 = vmatprep.subr.mxu0 0.0
          %7075 = vmatpush1.msra.mxu0 %v7044
          %7076 = vmatprep.subr.mxu0 0.0
          %7077 = vmatpush1.msra.mxu0 %v7045
          %7078 = vmatprep.subr.mxu0 0.0
          %7079 = vmatpush1.msra.mxu0 %v7046
          %7080 = vmatprep.subr.mxu0 0.0
          %7081 = vmatpush1.msra.mxu0 %v7047
          %7082 = vmatprep.subr.mxu0 0.0
          %7083 = vmatpush1.msra.mxu0 %v7048
          %7084 = vmatprep.subr.mxu0 0.0
          %7085 = vmatpush1.msra.mxu0 %v7049
          %7086 = vmatprep.subr.mxu0 0.0
          %7087 = vmatpush1.msra.mxu0 %v7050
          %7088 = vmatprep.subr.mxu0 0.0
          %7089 = vmatpush1.msra.mxu0 %v7051
          %7090 = vmatprep.subr.mxu0 0.0
          %7091 = vmatpush1.msra.mxu0 %v7052
          %7092 = vmatprep.subr.mxu0 0.0
          %7093 = vmatpush1.msra.mxu0 0.0
          %7094 = vmatprep.subr.mxu0 0.0
          %7095 = vmatpush1.msra.mxu0 0.0
          %7096 = vmatprep.subr.mxu0 0.0
          %7097 = vmatpush1.msra.mxu0 0.0
          %7098 = vmatprep.subr.mxu0 0.0
          %7099 = vmatpush1.msra.mxu0 0.0
          %7100 = vmatprep.subr.mxu0 0.0
          %7101 = vmatpush1.msra.mxu0 0.0
          %7102 = vmatprep.subr.mxu0 0.0
          %7103 = vmatpush1.msra.mxu0 0.0
          %7104 = vmatprep.subr.mxu0 0.0
          %7105 = vmatpush1.msra.mxu0 0.0
          %7106 = vmatprep.subr.mxu0 0.0
          %7107 = vmatpush1.msra.mxu0 0.0
          %7108 = vmatprep.subr.mxu0 0.0
          %7109 = vmatpush1.msra.mxu0 0.0
          %7110 = vmatprep.subr.mxu0 0.0
          %7111 = vmatpush1.msra.mxu0 0.0
          %7112 = vmatprep.subr.mxu0 0.0
          %7113 = vmatpush1.msra.mxu0 0.0
          %7114 = vmatprep.subr.mxu0 0.0
          %7115 = vmatpush1.msra.mxu0 0.0
          %7116 = vmatprep.subr.mxu0 0.0
          %7117 = vmatpush1.msra.mxu0 0.0
          %7118 = vmatprep.subr.mxu0 0.0
          %7119 = vmatpush1.msra.mxu0 0.0
          %7120 = vmatprep.subr.mxu0 0.0
          %7121 = vmatpush1.msra.mxu0 0.0
          %7122 = vmatprep.subr.mxu0 0.0
          %7123 = vmatpush1.msra.mxu0 0.0
          %7124 = vmatprep.mubr.f32.mxu0 0.0
          %7125 = vmatmul.mubr.f32.gmra.mrb[0].mxu0 %v7035
          %v7126 = vpop.f32.mrb[0].mxu0
          %v7127 = vadd.f32 %v7058, %v7126
          %v7128 = vpop.f32.mrb[0].mxu0
          %7129 = vmatprep.mubr.f32.mxu0 0.0
          %7130 = vmatmul.mubr.f32.gmra.mrb[0].mxu0 %v7036
          %v7131 = vpop.f32.mrb[0].mxu0
          %v7132 = vadd.f32 %v7058, %v7131
          %v7133 = vpop.f32.mrb[0].mxu0
          %7134 = vdwg.mxu0
          %v7135 = vmax.f32 %v7127, 0.0
          %v7136 = vmax.f32 %v7132, 0.0
          %v7137 = vld [vmem:[#allocation23] sm:$0xff]
          %v7138 = vld [vmem:[#allocation23 + $0x8] sm:$0xff]
          %v7139 = vld [vmem:[#allocation23 + $0x10] sm:$0xff]
          %v7140 = vld [vmem:[#allocation23 + $0x18] sm:$0xff]
          %v7141 = vld [vmem:[#allocation23 + $0x20] sm:$0xff]
          %v7142 = vld [vmem:[#allocation23 + $0x28] sm:$0xff]
          %v7143 = vld [vmem:[#allocation23 + $0x30] sm:$0xff]
          %v7144 = vld [vmem:[#allocation23 + $0x38] sm:$0xff]
          %v7145 = vld [vmem:[#allocation23 + $0x40] sm:$0xff]
          %v7146 = vld [vmem:[#allocation23 + $0x48] sm:$0xff]
          %v7147 = vld [vmem:[#allocation23 + $0x50] sm:$0xff]
          %v7148 = vld [vmem:[#allocation23 + $0x58] sm:$0xff]
          %v7149 = vld [vmem:[#allocation23 + $0x60] sm:$0xff]
          %v7150 = vld [vmem:[#allocation23 + $0x68] sm:$0xff]
          %v7151 = vld [vmem:[#allocation23 + $0x70] sm:$0xff]
          %v7152 = vld [vmem:[#allocation23 + $0x78] sm:$0xff]
          %v7153 = vld [vmem:[#allocation24] sm:$0x1]
          %v7155 = vlaneseq
          %v7156 = vshrl.u32 %v7155, 7
          %v7157 = vsub.s32 0, %v7156
          %v7158 = vrot.slane %v7153, %v7157
          %7160 = vmatprep.subr.mxu0 0.0
          %7161 = vmatpush1.msra.mxu0 %v7137
          %7162 = vmatprep.subr.mxu0 0.0
          %7163 = vmatpush1.msra.mxu0 %v7138
          %7164 = vmatprep.subr.mxu0 0.0
          %7165 = vmatpush1.msra.mxu0 %v7139
          %7166 = vmatprep.subr.mxu0 0.0
          %7167 = vmatpush1.msra.mxu0 %v7140
          %7168 = vmatprep.subr.mxu0 0.0
          %7169 = vmatpush1.msra.mxu0 %v7141
          %7170 = vmatprep.subr.mxu0 0.0
          %7171 = vmatpush1.msra.mxu0 %v7142
          %7172 = vmatprep.subr.mxu0 0.0
          %7173 = vmatpush1.msra.mxu0 %v7143
          %7174 = vmatprep.subr.mxu0 0.0
          %7175 = vmatpush1.msra.mxu0 %v7144
          %7176 = vmatprep.subr.mxu0 0.0
          %7177 = vmatpush1.msra.mxu0 %v7145
          %7178 = vmatprep.subr.mxu0 0.0
          %7179 = vmatpush1.msra.mxu0 %v7146
          %7180 = vmatprep.subr.mxu0 0.0
          %7181 = vmatpush1.msra.mxu0 %v7147
          %7182 = vmatprep.subr.mxu0 0.0
          %7183 = vmatpush1.msra.mxu0 %v7148
          %7184 = vmatprep.subr.mxu0 0.0
          %7185 = vmatpush1.msra.mxu0 %v7149
          %7186 = vmatprep.subr.mxu0 0.0
          %7187 = vmatpush1.msra.mxu0 %v7150
          %7188 = vmatprep.subr.mxu0 0.0
          %7189 = vmatpush1.msra.mxu0 %v7151
          %7190 = vmatprep.subr.mxu0 0.0
          %7191 = vmatpush1.msra.mxu0 %v7152
          %7192 = vmatprep.subr.mxu0 0.0
          %7193 = vmatpush1.msra.mxu0 0.0
          %7194 = vmatprep.subr.mxu0 0.0
          %7195 = vmatpush1.msra.mxu0 0.0
          %7196 = vmatprep.subr.mxu0 0.0
          %7197 = vmatpush1.msra.mxu0 0.0
          %7198 = vmatprep.subr.mxu0 0.0
          %7199 = vmatpush1.msra.mxu0 0.0
          %7200 = vmatprep.subr.mxu0 0.0
          %7201 = vmatpush1.msra.mxu0 0.0
          %7202 = vmatprep.subr.mxu0 0.0
          %7203 = vmatpush1.msra.mxu0 0.0
          %7204 = vmatprep.subr.mxu0 0.0
          %7205 = vmatpush1.msra.mxu0 0.0
          %7206 = vmatprep.subr.mxu0 0.0
          %7207 = vmatpush1.msra.mxu0 0.0
          %7208 = vmatprep.subr.mxu0 0.0
          %7209 = vmatpush1.msra.mxu0 0.0
          %7210 = vmatprep.subr.mxu0 0.0
          %7211 = vmatpush1.msra.mxu0 0.0
          %7212 = vmatprep.subr.mxu0 0.0
          %7213 = vmatpush1.msra.mxu0 0.0
          %7214 = vmatprep.subr.mxu0 0.0
          %7215 = vmatpush1.msra.mxu0 0.0
          %7216 = vmatprep.subr.mxu0 0.0
          %7217 = vmatpush1.msra.mxu0 0.0
          %7218 = vmatprep.subr.mxu0 0.0
          %7219 = vmatpush1.msra.mxu0 0.0
          %7220 = vmatprep.subr.mxu0 0.0
          %7221 = vmatpush1.msra.mxu0 0.0
          %7222 = vmatprep.subr.mxu0 0.0
          %7223 = vmatpush1.msra.mxu0 0.0
          %7224 = vmatprep.mubr.f32.mxu0 0.0
          %7225 = vmatmul.mubr.f32.gmra.mrb[0].mxu0 %v7135
          %v7226 = vpop.f32.mrb[0].mxu0
          %v7227 = vadd.f32 %v7158, %v7226
          %v7228 = vpop.f32.mrb[0].mxu0
          %7229 = vmatprep.mubr.f32.mxu0 0.0
          %7230 = vmatmul.mubr.f32.gmra.mrb[0].mxu0 %v7136
          %v7231 = vpop.f32.mrb[0].mxu0
          %v7232 = vadd.f32 %v7158, %v7231
          %v7233 = vpop.f32.mrb[0].mxu0
          %7234 = vdwg.mxu0
          %7235 = vst [vmem:[#allocation26] sm:$0xff] %v7227
          %7236 = vst [vmem:[#allocation26 + $0x8] sm:$0xff] %v7232
        $region148: #{tpu_custom_call.1} parent=79 // pred_fallthru
          _
        // Predicated region
        $region149: #{tpu_custom_call.1} parent=79 // pred_check
          %p7237 = pneg %p381
        $region150: #{tpu_custom_call.1} parent=79 // pred_check_branch
          %7239 = sbr.rel (%p7237) target = $region152
        $region151: #{tpu_custom_call.1} parent=79 // pred_region
          %s7241 = ssub.s32 256, 256
          %7242 = vsyncadd [#allocation6], %s7241
          %s7243 = sshll.u32 [#allocation26], 4
          %s7244 = int_to_ptr.vmem [resolvable:$true] %s7243
          %7249 = dma.vmem_to_hbm [thread:$0]  %s7244, 256, %s15, [#allocation6], 128, 128, 8
        $region152: #{tpu_custom_call.1} parent=79 // pred_fallthru
          _
        // Predicated region
        $region153: #{tpu_custom_call.1} parent=79 // pred_check
          %p7250 = pneg %p381
        $region154: #{tpu_custom_call.1} parent=79 // pred_check_branch
          %7252 = sbr.rel (%p7250) target = $region156
        $region155: #{tpu_custom_call.1} parent=79 // pred_region
          %7253 = dma.done [#allocation6], 256
        $region156: #{tpu_custom_call.1} parent=79 // pred_fallthru
          _
      $region80: #{tpu_custom_call.1} parent=5 // pred_fallthru
        _
      %p7254 = scmp.le.s32.totalorder 2, %s28
      // Predicated region
      $region157: #{tpu_custom_call.1} parent=5 // pred_check
        %p7255 = pneg %p7254
      $region158: #{tpu_custom_call.1} parent=5 // pred_check_branch
        %7257 = sbr.rel (%p7255) target = $region160
      $region159: #{tpu_custom_call.1} parent=5 // pred_region
        %s7258 = ssub.s32 %s28, 2
      $region160: #{tpu_custom_call.1} parent=5 // pred_fallthru
        _
    $region6: #{tpu_custom_call.1} parent=1 // loop_footer
      %s32 = sadd.s32 1, %s28
    $region7: #{tpu_custom_call.1} parent=1 // loop_footer_branch
      %27 = sbr.rel target = $region3
    $region8: #{tpu_custom_call.1} parent=1 // loop_exit
      _
    %7259 = vsyncpa [#allocation5], 1
    %s7260 = scalar_lea.sflag [#allocation5], 1
    %7261 = vsyncpa %s7260, 1
    %7262 = vsyncpa [#allocation8], 1
    %7263 = vsyncpa [#allocation11], 1
    %7264 = vsyncpa [#allocation19], 1
    %7265 = vsyncpa [#allocation22], 1
    %7266 = vsyncpa [#allocation25], 1
    %7267 = vsyncpa [#allocation6], 1
    %s7268 = scalar_lea.sflag [#allocation6], 1
    %7269 = vsyncpa %s7268, 1

</llo_original>
